<compile_context>
chip_gen: v7x
topology: tpu7x:2x2x1
jax: 0.10.0
libtpu: 0.0.40
codegen_flags: <defaults>
</compile_context>

<pallas_src>
import functools

import jax
import jax.numpy as jnp
from jax.experimental import pallas as pl
from jax.experimental.pallas import tpu as pltpu

# ----------------------------- configuration -----------------------------
BATCH = 2
SEQ = 8
HIDDEN = 128           # 768 in the real model (kept lane-aligned: 128 lanes)
N_HEADS = 2            # 12
HEAD_DIM = HIDDEN // N_HEADS
INTERMEDIATE = 512     # 3072 (4 * HIDDEN, like BERT)
N_LAYERS = 2           # 12
VOCAB = 64             # 21128
TYPE_VOCAB = 2
MAX_POS = 16           # 512
MAX_CONTEXT_LENGTH = 6  # 447 in the real model (must be <= SEQ - 1)
HEAD_DIMS = (HIDDEN, HIDDEN // 2, HIDDEN // 4, HIDDEN // 8, 1)
LN_EPS = 1e-12
INV_SQRT2 = 0.7071067811865476

# TODO(synk): training-mode dropout (DROPOUT_RATE=0.5) not implemented; heads
# run in eval mode (dropout == identity), matching inference semantics.


# ----------------------------- helpers (traced inside the kernel) ----------
def _layernorm(x, gamma, beta):
    mu = jnp.mean(x, axis=-1, keepdims=True)
    xc = x - mu
    var = jnp.mean(xc * xc, axis=-1, keepdims=True)
    return xc * jax.lax.rsqrt(var + LN_EPS) * gamma + beta


# ----------------------------- fused encoder + heads kernel ----------------
def _encoder_kernel(mask_ref, x0_ref, embg_ref, embb_ref,
                    wqkv_ref, bqkv_ref, wo_ref, bo_ref,
                    ln1g_ref, ln1b_ref,
                    wff1_ref, bff1_ref, wff2_ref, bff2_ref,
                    ln2g_ref, ln2b_ref,
                    hw0_ref, hb0_ref, hw1_ref, hb1_ref,
                    hw2_ref, hb2_ref, hw3_ref, hb3_ref,
                    h_ref, ans_ref, start_ref, end_ref):
    layer = pl.program_id(1)
    last_layer = pl.num_programs(1) - 1

    # ---- layer 0: embedding LayerNorm seeds the residual stream.  h_ref has
    # a constant block index over the layer axis, so it stays resident in
    # VMEM and is the carry between layers (and is HBM-aliased with x0).
    @pl.when(layer == 0)
    def _init():
        h_ref[...] = _layernorm(x0_ref[...], embg_ref[...], embb_ref[...])

    x = h_ref[...]                                   # [S, H] f32 residual
    x_bf = x.astype(jnp.bfloat16)

    # Additive key mask, broadcast ONCE per layer (no per-head rebroadcast).
    addmask = mask_ref[...].reshape(1, 1, SEQ)       # [1, 1, S] f32

    # ---- fused QKV projection (1/sqrt(head_dim) folded into Wq/bq) ----
    qkv = (jnp.dot(x_bf, wqkv_ref[...], preferred_element_type=jnp.float32)
           + bqkv_ref[...])                          # [S, 3H] f32

    # 128-aligned lane slices, then split into heads for batched einsums.
    q = qkv[:, 0:HIDDEN].reshape(SEQ, N_HEADS, HEAD_DIM).astype(jnp.bfloat16)
    k = qkv[:, HIDDEN:2 * HIDDEN].reshape(
        SEQ, N_HEADS, HEAD_DIM).astype(jnp.bfloat16)
    v = qkv[:, 2 * HIDDEN:3 * HIDDEN].reshape(
        SEQ, N_HEADS, HEAD_DIM).astype(jnp.bfloat16)

    # ---- all-heads attention (softmax math kept in f32) ----
    s = jnp.einsum("qhd,khd->hqk", q, k,
                   preferred_element_type=jnp.float32)       # [nH, S, S]
    s = s + addmask
    s = s - jnp.max(s, axis=-1, keepdims=True)
    p = jnp.exp(s)
    # NOTE: approx reciprocal (EUP) — tiny deviation vs exact softmax divide;
    # acceptable for inference.
    p = p * pl.reciprocal(jnp.sum(p, axis=-1, keepdims=True), approx=True)
    ctx = jnp.einsum("hqk,khd->qhd", p.astype(jnp.bfloat16), v,
                     preferred_element_type=jnp.float32)     # [S, nH, D]
    ctx = ctx.reshape(SEQ, HIDDEN).astype(jnp.bfloat16)

    # ---- single full-width O-projection + residual + LayerNorm ----
    attn = (jnp.dot(ctx, wo_ref[...], preferred_element_type=jnp.float32)
            + bo_ref[...])
    x = _layernorm(attn + x, ln1g_ref[...], ln1b_ref[...])

    # ---- FFN (erf-GELU) + residual + LayerNorm ----
    hmid = (jnp.dot(x.astype(jnp.bfloat16), wff1_ref[...],
                    preferred_element_type=jnp.float32) + bff1_ref[...])
    hmid = 0.5 * hmid * (1.0 + jax.lax.erf(hmid * INV_SQRT2))
    ffn = (jnp.dot(hmid.astype(jnp.bfloat16), wff2_ref[...],
                   preferred_element_type=jnp.float32) + bff2_ref[...])
    x = _layernorm(ffn + x, ln2g_ref[...], ln2b_ref[...])

    h_ref[...] = x.astype(h_ref.dtype)

    # ---- QA heads fused into the final layer step (no HBM round trip) ----
    @pl.when(layer == last_layer)
    def _heads():
        head_wb = ((hw0_ref, hb0_ref), (hw1_ref, hb1_ref),
                   (hw2_ref, hb2_ref), (hw3_ref, hb3_ref))

        def head_mlp(h, idx):
            for i, (w_ref, b_ref) in enumerate(head_wb):
                h = (jnp.dot(h, w_ref[idx],
                             preferred_element_type=jnp.float32)
                     + b_ref[idx])
                if i < len(head_wb) - 1:         # Dropout(eval)=id, then ReLU
                    h = jnp.maximum(h, 0.0)
            return h

        cls_x = x[0:1, :]                               # [CLS] row
        ctx_x = x[1:MAX_CONTEXT_LENGTH + 1, :]          # context rows
        ans_ref[...] = head_mlp(cls_x, 0).astype(ans_ref.dtype)
        start_ref[...] = head_mlp(ctx_x, 1).astype(start_ref.dtype)
        end_ref[...] = head_mlp(ctx_x, 2).astype(end_ref.dtype)


def pallas_qa_forward(emb, addmask, params):
    H, I, L = HIDDEN, INTERMEDIATE, N_LAYERS
    st = params["stacked"]

    def const_spec(shape):
        nd = len(shape)
        return pl.BlockSpec(shape, lambda b, l, nd=nd: (0,) * nd)

    def per_layer(shape):
        # leading layer dim squeezed out of the kernel ref
        return pl.BlockSpec((None,) + shape, lambda b, l: (l, 0, 0))

    in_specs = [
        pl.BlockSpec((None, 1, SEQ), lambda b, l: (b, 0, 0)),   # additive mask
        pl.BlockSpec((SEQ, H), lambda b, l: (b, 0)),            # embedding sum
        const_spec((1, H)), const_spec((1, H)),                 # emb LN g, b
        per_layer((H, 3 * H)), per_layer((1, 3 * H)),           # wqkv, bqkv
        per_layer((H, H)), per_layer((1, H)),                   # wo, bo
        per_layer((1, H)), per_layer((1, H)),                   # attn LN g, b
        per_layer((H, I)), per_layer((1, I)),                   # ffn_in w, b
        per_layer((I, H)), per_layer((1, H)),                   # ffn_out w, b
        per_layer((1, H)), per_layer((1, H)),                   # ffn LN g, b
    ]
    args = [addmask, emb,
            params["emb_ln"][0].reshape(1, H), params["emb_ln"][1].reshape(1, H),
            st["wqkv"], st["bqkv"], st["wo"], st["bo"],
            st["ln1g"], st["ln1b"],
            st["wff1"], st["bff1"], st["wff2"], st["bff2"],
            st["ln2g"], st["ln2b"]]
    # QA-head weights (answerable/start/end stacked along a leading axis of 3).
    for w, b in zip(params["head_w"], params["head_b"]):
        in_specs.append(const_spec(w.shape))
        in_specs.append(const_spec(b.shape))
        args += [w, b]

    out_specs = (
        pl.BlockSpec((SEQ, H), lambda b, l: (b, 0)),                       # hidden (carry)
        pl.BlockSpec((None, 1, 1), lambda b, l: (b, 0, 0)),                # answerable
        pl.BlockSpec((None, MAX_CONTEXT_LENGTH, 1), lambda b, l: (b, 0, 0)),  # start
        pl.BlockSpec((None, MAX_CONTEXT_LENGTH, 1), lambda b, l: (b, 0, 0)),  # end
    )
    out_shape = (
        jax.ShapeDtypeStruct((BATCH * SEQ, H), jnp.float32),
        jax.ShapeDtypeStruct((BATCH, 1, 1), jnp.float32),
        jax.ShapeDtypeStruct((BATCH, MAX_CONTEXT_LENGTH, 1), jnp.float32),
        jax.ShapeDtypeStruct((BATCH, MAX_CONTEXT_LENGTH, 1), jnp.float32),
    )

    _, ans, start, end = pl.pallas_call(
        _encoder_kernel,
        grid=(BATCH, L),
        in_specs=in_specs,
        out_specs=out_specs,
        out_shape=out_shape,
        # embedding-sum input (arg 1) shares its HBM buffer with the resident
        # hidden-state output (out 0): no extra residual buffer.
        input_output_aliases={1: 0},
        compiler_params=pltpu.CompilerParams(
            dimension_semantics=("parallel", "arbitrary"),
            vmem_limit_bytes=48 * 1024 * 1024),
    )(*args)
    return ans, start, end


# ----------------------------- parameter init -----------------------------
def init_params(key):
    kit = iter(jax.random.split(key, 64))

    def dense(din, dout):
        w = jax.random.normal(next(kit), (din, dout), jnp.float32) * 0.02
        b = jnp.zeros((dout,), jnp.float32)
        return w, b

    params = {
        "word_emb": jax.random.normal(next(kit), (VOCAB, HIDDEN), jnp.float32) * 0.02,
        "pos_emb": jax.random.normal(next(kit), (MAX_POS, HIDDEN), jnp.float32) * 0.02,
        "type_emb": jax.random.normal(next(kit), (TYPE_VOCAB, HIDDEN), jnp.float32) * 0.02,
        "emb_ln": (jnp.ones((HIDDEN,), jnp.float32), jnp.zeros((HIDDEN,), jnp.float32)),
    }

    layers = []
    for _ in range(N_LAYERS):
        layers.append({
            "q": dense(HIDDEN, HIDDEN),
            "k": dense(HIDDEN, HIDDEN),
            "v": dense(HIDDEN, HIDDEN),
            "o": dense(HIDDEN, HIDDEN),
            "attn_ln": (jnp.ones((HIDDEN,), jnp.float32), jnp.zeros((HIDDEN,), jnp.float32)),
            "ffn_in": dense(HIDDEN, INTERMEDIATE),
            "ffn_out": dense(INTERMEDIATE, HIDDEN),
            "ffn_ln": (jnp.ones((HIDDEN,), jnp.float32), jnp.zeros((HIDDEN,), jnp.float32)),
        })

    # Stack per-layer params along a leading layer axis; fuse QKV weights,
    # fold the 1/sqrt(head_dim) attention scale into Wq / bq (exact), and
    # store matmul weights in bf16 (f32 MXU accumulation in-kernel).
    scale = 1.0 / float(HEAD_DIM) ** 0.5

    def stk(fn):
        return jnp.stack([fn(lyr) for lyr in layers], axis=0)

    params["stacked"] = {
        "wqkv": stk(lambda lyr: jnp.concatenate(
            [lyr["q"][0] * scale, lyr["k"][0], lyr["v"][0]],
            axis=1)).astype(jnp.bfloat16),                                 # [L,H,3H]
        "bqkv": stk(lambda lyr: jnp.concatenate(
            [lyr["q"][1] * scale, lyr["k"][1], lyr["v"][1]], axis=0)[None, :]),
        "wo": stk(lambda lyr: lyr["o"][0]).astype(jnp.bfloat16),
        "bo": stk(lambda lyr: lyr["o"][1][None, :]),
        "ln1g": stk(lambda lyr: lyr["attn_ln"][0][None, :]),
        "ln1b": stk(lambda lyr: lyr["attn_ln"][1][None, :]),
        "wff1": stk(lambda lyr: lyr["ffn_in"][0]).astype(jnp.bfloat16),
        "bff1": stk(lambda lyr: lyr["ffn_in"][1][None, :]),
        "wff2": stk(lambda lyr: lyr["ffn_out"][0]).astype(jnp.bfloat16),
        "bff2": stk(lambda lyr: lyr["ffn_out"][1][None, :]),
        "ln2g": stk(lambda lyr: lyr["ffn_ln"][0][None, :]),
        "ln2b": stk(lambda lyr: lyr["ffn_ln"][1][None, :]),
    }

    def head():
        return [dense(HEAD_DIMS[i], HEAD_DIMS[i + 1])
                for i in range(len(HEAD_DIMS) - 1)]

    # Heads kept f32 (tiny) and stacked [answerable, start, end] along a
    # leading axis of 3 so the kernel takes 8 refs instead of 24.
    ans_h, start_h, end_h = head(), head(), head()
    head_w, head_b = [], []
    for i in range(len(HEAD_DIMS) - 1):
        head_w.append(jnp.stack([ans_h[i][0], start_h[i][0], end_h[i][0]]))
        head_b.append(jnp.stack([ans_h[i][1][None, :], start_h[i][1][None, :],
                                 end_h[i][1][None, :]]))
    params["head_w"] = head_w          # [3, din_i, dout_i]
    params["head_b"] = head_b          # [3, 1, dout_i]
    return params


# ----------------------------- forward pass -----------------------------
def qa_model_forward(params, qc, segment, mask):
    B, S = qc.shape
    # Embedding gathers stay in plain JAX glue (data-dependent gather).
    emb = (params["word_emb"][qc]
           + params["pos_emb"][jnp.arange(S)][None, :, :]
           + params["type_emb"][segment]).reshape(B * S, HIDDEN)

    # Additive attention mask (HF convention): 0 where visible, -1e4 elsewhere.
    addmask = ((1.0 - mask.astype(jnp.float32)) * -10000.0).reshape(B, 1, S)

    # NOTE: BertModel's pooled output is discarded by QA_Model.forward.
    ans, start, end = pallas_qa_forward(emb, addmask, params)
    return ans.reshape(B, 1), start, end


# ----------------------------- main -----------------------------
if __name__ == "__main__":
    key = jax.random.PRNGKey(0)
    pkey, ikey, skey = jax.random.split(key, 3)

    params = init_params(pkey)

    qc = jax.random.randint(ikey, (BATCH, SEQ), 0, VOCAB, dtype=jnp.int32)
    segment = jnp.concatenate(
        [jnp.zeros((BATCH, SEQ // 2), jnp.int32),
         jnp.ones((BATCH, SEQ - SEQ // 2), jnp.int32)], axis=1)
    mask = jnp.ones((BATCH, SEQ), jnp.int32)

    fwd = jax.jit(functools.partial(qa_model_forward, params))
    answerable, ans_start, ans_end = fwd(qc, segment, mask)
    jax.block_until_ready((answerable, ans_start, ans_end))

    assert answerable.shape == (BATCH, 1)
    assert ans_start.shape == (BATCH, MAX_CONTEXT_LENGTH, 1)
    assert ans_end.shape == (BATCH, MAX_CONTEXT_LENGTH, 1)
    assert bool(jnp.all(jnp.isfinite(answerable)))
    assert bool(jnp.all(jnp.isfinite(ans_start)))
    assert bool(jnp.all(jnp.isfinite(ans_end)))
    print("KERNEL_OK")
</pallas_src>

<mosaic_0001>
module attributes {stable_mosaic.version = 11 : i64} {
  func.func @_encoder_kernel(%arg0: i32, %arg1: i32, %arg2: memref<1x1x8xf32, #tpu.memory_space<vmem>>, %arg3: memref<8x128xf32, #tpu.memory_space<vmem>>, %arg4: memref<1x128xf32, #tpu.memory_space<vmem>>, %arg5: memref<1x128xf32, #tpu.memory_space<vmem>>, %arg6: memref<1x128x384xbf16, #tpu.memory_space<vmem>>, %arg7: memref<1x1x384xf32, #tpu.memory_space<vmem>>, %arg8: memref<1x128x128xbf16, #tpu.memory_space<vmem>>, %arg9: memref<1x1x128xf32, #tpu.memory_space<vmem>>, %arg10: memref<1x1x128xf32, #tpu.memory_space<vmem>>, %arg11: memref<1x1x128xf32, #tpu.memory_space<vmem>>, %arg12: memref<1x128x512xbf16, #tpu.memory_space<vmem>>, %arg13: memref<1x1x512xf32, #tpu.memory_space<vmem>>, %arg14: memref<1x512x128xbf16, #tpu.memory_space<vmem>>, %arg15: memref<1x1x128xf32, #tpu.memory_space<vmem>>, %arg16: memref<1x1x128xf32, #tpu.memory_space<vmem>>, %arg17: memref<1x1x128xf32, #tpu.memory_space<vmem>>, %arg18: memref<3x128x64xf32, #tpu.memory_space<vmem>>, %arg19: memref<3x1x64xf32, #tpu.memory_space<vmem>>, %arg20: memref<3x64x32xf32, #tpu.memory_space<vmem>>, %arg21: memref<3x1x32xf32, #tpu.memory_space<vmem>>, %arg22: memref<3x32x16xf32, #tpu.memory_space<vmem>>, %arg23: memref<3x1x16xf32, #tpu.memory_space<vmem>>, %arg24: memref<3x16x1xf32, #tpu.memory_space<vmem>>, %arg25: memref<3x1x1xf32, #tpu.memory_space<vmem>>, %arg26: memref<8x128xf32, #tpu.memory_space<vmem>>, %arg27: memref<1x1x1xf32, #tpu.memory_space<vmem>>, %arg28: memref<1x6x1xf32, #tpu.memory_space<vmem>>, %arg29: memref<1x6x1xf32, #tpu.memory_space<vmem>>) attributes {dimension_semantics = [#tpu.dimension_semantics<parallel>, #tpu.dimension_semantics<arbitrary>], iteration_bounds = array<i64: 2, 2>, scalar_prefetch = 0 : i64, scratch_operands = 0 : i64, tpu.core_type = #tpu.core_type<tc>, window_params = [{transform_indices = @transform_0, window_bounds = array<i64: 1, 1, 8>}, {transform_indices = @transform_1, window_bounds = array<i64: 8, 128>}, {pipeline_mode = #tpu.pipeline_mode<synchronous>, transform_indices = @transform_2, window_bounds = array<i64: 1, 128>}, {pipeline_mode = #tpu.pipeline_mode<synchronous>, transform_indices = @transform_3, window_bounds = array<i64: 1, 128>}, {transform_indices = @transform_4, window_bounds = array<i64: 1, 128, 384>}, {transform_indices = @transform_5, window_bounds = array<i64: 1, 1, 384>}, {transform_indices = @transform_6, window_bounds = array<i64: 1, 128, 128>}, {transform_indices = @transform_7, window_bounds = array<i64: 1, 1, 128>}, {transform_indices = @transform_8, window_bounds = array<i64: 1, 1, 128>}, {transform_indices = @transform_9, window_bounds = array<i64: 1, 1, 128>}, {transform_indices = @transform_10, window_bounds = array<i64: 1, 128, 512>}, {transform_indices = @transform_11, window_bounds = array<i64: 1, 1, 512>}, {transform_indices = @transform_12, window_bounds = array<i64: 1, 512, 128>}, {transform_indices = @transform_13, window_bounds = array<i64: 1, 1, 128>}, {transform_indices = @transform_14, window_bounds = array<i64: 1, 1, 128>}, {transform_indices = @transform_15, window_bounds = array<i64: 1, 1, 128>}, {pipeline_mode = #tpu.pipeline_mode<synchronous>, transform_indices = @transform_16, window_bounds = array<i64: 3, 128, 64>}, {pipeline_mode = #tpu.pipeline_mode<synchronous>, transform_indices = @transform_17, window_bounds = array<i64: 3, 1, 64>}, {pipeline_mode = #tpu.pipeline_mode<synchronous>, transform_indices = @transform_18, window_bounds = array<i64: 3, 64, 32>}, {pipeline_mode = #tpu.pipeline_mode<synchronous>, transform_indices = @transform_19, window_bounds = array<i64: 3, 1, 32>}, {pipeline_mode = #tpu.pipeline_mode<synchronous>, transform_indices = @transform_20, window_bounds = array<i64: 3, 32, 16>}, {pipeline_mode = #tpu.pipeline_mode<synchronous>, transform_indices = @transform_21, window_bounds = array<i64: 3, 1, 16>}, {pipeline_mode = #tpu.pipeline_mode<synchronous>, transform_indices = @transform_22, window_bounds = array<i64: 3, 16, 1>}, {pipeline_mode = #tpu.pipeline_mode<synchronous>, transform_indices = @transform_23, window_bounds = array<i64: 3, 1, 1>}, {transform_indices = @transform_24, window_bounds = array<i64: 8, 128>}, {transform_indices = @transform_25, window_bounds = array<i64: 1, 1, 1>}, {transform_indices = @transform_26, window_bounds = array<i64: 1, 6, 1>}, {transform_indices = @transform_27, window_bounds = array<i64: 1, 6, 1>}]} {
    %c0_i32 = arith.constant 0 : i32
    %0 = arith.cmpi eq, %arg1, %c0_i32 : i32
    %1 = arith.extui %0 : i1 to i32
    %c0_i32_0 = arith.constant 0 : i32
    %2 = arith.cmpi ne, %1, %c0_i32_0 : i32
    scf.if %2 {
      %c0_64 = arith.constant 0 : index
      %c0_65 = arith.constant 0 : index
      %127 = vector.load %arg3[%c0_64, %c0_65] : memref<8x128xf32, #tpu.memory_space<vmem>>, vector<8x128xf32>
      %c0_66 = arith.constant 0 : index
      %c0_67 = arith.constant 0 : index
      %128 = vector.load %arg4[%c0_66, %c0_67] : memref<1x128xf32, #tpu.memory_space<vmem>>, vector<1x128xf32>
      %c0_68 = arith.constant 0 : index
      %c0_69 = arith.constant 0 : index
      %129 = vector.load %arg5[%c0_68, %c0_69] : memref<1x128xf32, #tpu.memory_space<vmem>>, vector<1x128xf32>
      %cst_70 = arith.constant dense<0.000000e+00> : vector<8xf32>
      %130 = vector.multi_reduction <add>, %127, %cst_70 [1] : vector<8x128xf32> to vector<8xf32>
      %131 = vector.shape_cast %130 : vector<8xf32> to vector<8x1xf32>
      %cst_71 = arith.constant 1.280000e+02 : f32
      %132 = vector.broadcast %cst_71 : f32 to vector<8x1xf32>
      %133 = arith.divf %131, %132 : vector<8x1xf32>
      %134 = vector.broadcast %133 : vector<8x1xf32> to vector<8x128xf32>
      %135 = arith.subf %127, %134 : vector<8x128xf32>
      %136 = arith.mulf %135, %135 : vector<8x128xf32>
      %cst_72 = arith.constant dense<0.000000e+00> : vector<8xf32>
      %137 = vector.multi_reduction <add>, %136, %cst_72 [1] : vector<8x128xf32> to vector<8xf32>
      %138 = vector.shape_cast %137 : vector<8xf32> to vector<8x1xf32>
      %cst_73 = arith.constant 1.280000e+02 : f32
      %139 = vector.broadcast %cst_73 : f32 to vector<8x1xf32>
      %140 = arith.divf %138, %139 : vector<8x1xf32>
      %cst_74 = arith.constant 9.99999996E-13 : f32
      %141 = vector.broadcast %cst_74 : f32 to vector<8x1xf32>
      %142 = arith.addf %140, %141 : vector<8x1xf32>
      %143 = math.rsqrt %142 : vector<8x1xf32>
      %144 = vector.broadcast %143 : vector<8x1xf32> to vector<8x128xf32>
      %145 = arith.mulf %135, %144 : vector<8x128xf32>
      %146 = vector.broadcast %128 : vector<1x128xf32> to vector<8x128xf32>
      %147 = arith.mulf %145, %146 : vector<8x128xf32>
      %148 = vector.broadcast %129 : vector<1x128xf32> to vector<8x128xf32>
      %149 = arith.addf %147, %148 : vector<8x128xf32>
      %c0_75 = arith.constant 0 : index
      %c0_76 = arith.constant 0 : index
      %150 = vector.load %arg26[%c0_75, %c0_76] : memref<8x128xf32, #tpu.memory_space<vmem>>, vector<8x128xf32>
      tpu.vector_store %arg26[%c0_75, %c0_76], %149 {strides = array<i32>} : memref<8x128xf32, #tpu.memory_space<vmem>>, vector<8x128xf32>,
    } else {
    }
    %c0 = arith.constant 0 : index
    %c0_1 = arith.constant 0 : index
    %3 = vector.load %arg26[%c0, %c0_1] : memref<8x128xf32, #tpu.memory_space<vmem>>, vector<8x128xf32>
    %4 = arith.truncf %3 : vector<8x128xf32> to vector<8x128xbf16>
    %c0_2 = arith.constant 0 : index
    %c0_3 = arith.constant 0 : index
    %c0_4 = arith.constant 0 : index
    %5 = vector.load %arg2[%c0_2, %c0_3, %c0_4] : memref<1x1x8xf32, #tpu.memory_space<vmem>>, vector<1x1x8xf32>
    %6 = vector.shape_cast %5 : vector<1x1x8xf32> to vector<1x8xf32>
    %7 = vector.shape_cast %6 : vector<1x8xf32> to vector<1x1x8xf32>
    %c0_5 = arith.constant 0 : index
    %c0_6 = arith.constant 0 : index
    %c0_7 = arith.constant 0 : index
    %8 = vector.load %arg6[%c0_5, %c0_6, %c0_7] : memref<1x128x384xbf16, #tpu.memory_space<vmem>>, vector<1x128x384xbf16>
    %9 = vector.shape_cast %8 : vector<1x128x384xbf16> to vector<128x384xbf16>
    %cst = arith.constant dense<0.000000e+00> : vector<8x384xf32>
    %10 = tpu.matmul %4, %9, %cst {dimension_numbers = #tpu.dot_dimension_numbers<[1], [0], [0], [1], [0, 0, 1, 1], [], []>} : vector<8x128xbf16>, vector<128x384xbf16>, vector<8x384xf32> -> vector<8x384xf32>
    %c0_8 = arith.constant 0 : index
    %c0_9 = arith.constant 0 : index
    %c0_10 = arith.constant 0 : index
    %11 = vector.load %arg7[%c0_8, %c0_9, %c0_10] : memref<1x1x384xf32, #tpu.memory_space<vmem>>, vector<1x1x384xf32>
    %12 = vector.shape_cast %11 : vector<1x1x384xf32> to vector<1x384xf32>
    %13 = vector.broadcast %12 : vector<1x384xf32> to vector<8x384xf32>
    %14 = arith.addf %10, %13 : vector<8x384xf32>
    %15 = vector.extract_strided_slice %14 {offsets = [0, 0], sizes = [8, 128], strides = [1, 1]} : vector<8x384xf32> to vector<8x128xf32>
    %16 = vector.shape_cast %15 : vector<8x128xf32> to vector<8x2x64xf32>
    %17 = arith.truncf %16 : vector<8x2x64xf32> to vector<8x2x64xbf16>
    %18 = vector.extract_strided_slice %14 {offsets = [0, 128], sizes = [8, 128], strides = [1, 1]} : vector<8x384xf32> to vector<8x128xf32>
    %19 = vector.shape_cast %18 : vector<8x128xf32> to vector<8x2x64xf32>
    %20 = arith.truncf %19 : vector<8x2x64xf32> to vector<8x2x64xbf16>
    %21 = vector.extract_strided_slice %14 {offsets = [0, 256], sizes = [8, 128], strides = [1, 1]} : vector<8x384xf32> to vector<8x128xf32>
    %22 = vector.shape_cast %21 : vector<8x128xf32> to vector<8x2x64xf32>
    %23 = arith.truncf %22 : vector<8x2x64xf32> to vector<8x2x64xbf16>
    "tpu.trace_start"() <{level = 10 : i32, message = "qhd,khd->hqk"}> : () -> ()
    %cst_11 = arith.constant dense<0.000000e+00> : vector<2x8x8xf32>
    %24 = tpu.matmul %17, %20, %cst_11 {dimension_numbers = #tpu.dot_dimension_numbers<[2], [2], [0], [0], [0, 1, 0, 0, 1, 0], [1], [1]>} : vector<8x2x64xbf16>, vector<8x2x64xbf16>, vector<2x8x8xf32> -> vector<2x8x8xf32>
    "tpu.trace_stop"() : () -> ()
    %25 = vector.broadcast %7 : vector<1x1x8xf32> to vector<2x8x8xf32>
    %26 = arith.addf %24, %25 : vector<2x8x8xf32>
    %cst_12 = arith.constant dense<0xFF800000> : vector<2x8xf32>
    %27 = vector.multi_reduction <maximumf>, %26, %cst_12 [2] : vector<2x8x8xf32> to vector<2x8xf32>
    %28 = vector.shape_cast %27 : vector<2x8xf32> to vector<2x8x1xf32>
    %29 = vector.broadcast %28 : vector<2x8x1xf32> to vector<2x8x8xf32>
    %30 = arith.subf %26, %29 : vector<2x8x8xf32>
    %31 = math.exp %30 : vector<2x8x8xf32>
    %cst_13 = arith.constant dense<0.000000e+00> : vector<2x8xf32>
    %32 = vector.multi_reduction <add>, %31, %cst_13 [2] : vector<2x8x8xf32> to vector<2x8xf32>
    %33 = vector.shape_cast %32 : vector<2x8xf32> to vector<2x8x1xf32>
    %34 = tpu.reciprocal %33 {approx = true} : vector<2x8x1xf32> -> vector<2x8x1xf32>
    %35 = vector.broadcast %34 : vector<2x8x1xf32> to vector<2x8x8xf32>
    %36 = arith.mulf %31, %35 : vector<2x8x8xf32>
    %37 = arith.truncf %36 : vector<2x8x8xf32> to vector<2x8x8xbf16>
    "tpu.trace_start"() <{level = 10 : i32, message = "hqk,khd->qhd"}> : () -> ()
    %cst_14 = arith.constant dense<0.000000e+00> : vector<2x64x8xf32>
    %38 = tpu.matmul %23, %37, %cst_14 {dimension_numbers = #tpu.dot_dimension_numbers<[0], [2], [2], [1], [0, 1, 0, 2, 1, 1], [1], [0]>} : vector<8x2x64xbf16>, vector<2x8x8xbf16>, vector<2x64x8xf32> -> vector<2x64x8xf32>
    %39 = tpu.transpose %38, [2, 0, 1] : vector<2x64x8xf32> -> vector<8x2x64xf32>
    "tpu.trace_stop"() : () -> ()
    %40 = vector.shape_cast %39 : vector<8x2x64xf32> to vector<8x128xf32>
    %41 = arith.truncf %40 : vector<8x128xf32> to vector<8x128xbf16>
    %c0_15 = arith.constant 0 : index
    %c0_16 = arith.constant 0 : index
    %c0_17 = arith.constant 0 : index
    %42 = vector.load %arg8[%c0_15, %c0_16, %c0_17] : memref<1x128x128xbf16, #tpu.memory_space<vmem>>, vector<1x128x128xbf16>
    %43 = vector.shape_cast %42 : vector<1x128x128xbf16> to vector<128x128xbf16>
    %cst_18 = arith.constant dense<0.000000e+00> : vector<8x128xf32>
    %44 = tpu.matmul %41, %43, %cst_18 {dimension_numbers = #tpu.dot_dimension_numbers<[1], [0], [0], [1], [0, 0, 1, 1], [], []>} : vector<8x128xbf16>, vector<128x128xbf16>, vector<8x128xf32> -> vector<8x128xf32>
    %c0_19 = arith.constant 0 : index
    %c0_20 = arith.constant 0 : index
    %c0_21 = arith.constant 0 : index
    %45 = vector.load %arg9[%c0_19, %c0_20, %c0_21] : memref<1x1x128xf32, #tpu.memory_space<vmem>>, vector<1x1x128xf32>
    %46 = vector.shape_cast %45 : vector<1x1x128xf32> to vector<1x128xf32>
    %47 = vector.broadcast %46 : vector<1x128xf32> to vector<8x128xf32>
    %48 = arith.addf %44, %47 : vector<8x128xf32>
    %49 = arith.addf %48, %3 : vector<8x128xf32>
    %c0_22 = arith.constant 0 : index
    %c0_23 = arith.constant 0 : index
    %c0_24 = arith.constant 0 : index
    %50 = vector.load %arg10[%c0_22, %c0_23, %c0_24] : memref<1x1x128xf32, #tpu.memory_space<vmem>>, vector<1x1x128xf32>
    %51 = vector.shape_cast %50 : vector<1x1x128xf32> to vector<1x128xf32>
    %c0_25 = arith.constant 0 : index
    %c0_26 = arith.constant 0 : index
    %c0_27 = arith.constant 0 : index
    %52 = vector.load %arg11[%c0_25, %c0_26, %c0_27] : memref<1x1x128xf32, #tpu.memory_space<vmem>>, vector<1x1x128xf32>
    %53 = vector.shape_cast %52 : vector<1x1x128xf32> to vector<1x128xf32>
    %cst_28 = arith.constant dense<0.000000e+00> : vector<8xf32>
    %54 = vector.multi_reduction <add>, %49, %cst_28 [1] : vector<8x128xf32> to vector<8xf32>
    %55 = vector.shape_cast %54 : vector<8xf32> to vector<8x1xf32>
    %cst_29 = arith.constant 1.280000e+02 : f32
    %56 = vector.broadcast %cst_29 : f32 to vector<8x1xf32>
    %57 = arith.divf %55, %56 : vector<8x1xf32>
    %58 = vector.broadcast %57 : vector<8x1xf32> to vector<8x128xf32>
    %59 = arith.subf %49, %58 : vector<8x128xf32>
    %60 = arith.mulf %59, %59 : vector<8x128xf32>
    %cst_30 = arith.constant dense<0.000000e+00> : vector<8xf32>
    %61 = vector.multi_reduction <add>, %60, %cst_30 [1] : vector<8x128xf32> to vector<8xf32>
    %62 = vector.shape_cast %61 : vector<8xf32> to vector<8x1xf32>
    %cst_31 = arith.constant 1.280000e+02 : f32
    %63 = vector.broadcast %cst_31 : f32 to vector<8x1xf32>
    %64 = arith.divf %62, %63 : vector<8x1xf32>
    %cst_32 = arith.constant 9.99999996E-13 : f32
    %65 = vector.broadcast %cst_32 : f32 to vector<8x1xf32>
    %66 = arith.addf %64, %65 : vector<8x1xf32>
    %67 = math.rsqrt %66 : vector<8x1xf32>
    %68 = vector.broadcast %67 : vector<8x1xf32> to vector<8x128xf32>
    %69 = arith.mulf %59, %68 : vector<8x128xf32>
    %70 = vector.broadcast %51 : vector<1x128xf32> to vector<8x128xf32>
    %71 = arith.mulf %69, %70 : vector<8x128xf32>
    %72 = vector.broadcast %53 : vector<1x128xf32> to vector<8x128xf32>
    %73 = arith.addf %71, %72 : vector<8x128xf32>
    %74 = arith.truncf %73 : vector<8x128xf32> to vector<8x128xbf16>
    %c0_33 = arith.constant 0 : index
    %c0_34 = arith.constant 0 : index
    %c0_35 = arith.constant 0 : index
    %75 = vector.load %arg12[%c0_33, %c0_34, %c0_35] : memref<1x128x512xbf16, #tpu.memory_space<vmem>>, vector<1x128x512xbf16>
    %76 = vector.shape_cast %75 : vector<1x128x512xbf16> to vector<128x512xbf16>
    %cst_36 = arith.constant dense<0.000000e+00> : vector<8x512xf32>
    %77 = tpu.matmul %74, %76, %cst_36 {dimension_numbers = #tpu.dot_dimension_numbers<[1], [0], [0], [1], [0, 0, 1, 1], [], []>} : vector<8x128xbf16>, vector<128x512xbf16>, vector<8x512xf32> -> vector<8x512xf32>
    %c0_37 = arith.constant 0 : index
    %c0_38 = arith.constant 0 : index
    %c0_39 = arith.constant 0 : index
    %78 = vector.load %arg13[%c0_37, %c0_38, %c0_39] : memref<1x1x512xf32, #tpu.memory_space<vmem>>, vector<1x1x512xf32>
    %79 = vector.shape_cast %78 : vector<1x1x512xf32> to vector<1x512xf32>
    %80 = vector.broadcast %79 : vector<1x512xf32> to vector<8x512xf32>
    %81 = arith.addf %77, %80 : vector<8x512xf32>
    %cst_40 = arith.constant 5.000000e-01 : f32
    %82 = vector.broadcast %cst_40 : f32 to vector<8x512xf32>
    %83 = arith.mulf %82, %81 : vector<8x512xf32>
    %cst_41 = arith.constant 0.707106769 : f32
    %84 = vector.broadcast %cst_41 : f32 to vector<8x512xf32>
    %85 = arith.mulf %81, %84 : vector<8x512xf32>
    %86 = math.erf %85 : vector<8x512xf32>
    %cst_42 = arith.constant 1.000000e+00 : f32
    %87 = vector.broadcast %cst_42 : f32 to vector<8x512xf32>
    %88 = arith.addf %87, %86 : vector<8x512xf32>
    %89 = arith.mulf %83, %88 : vector<8x512xf32>
    %90 = arith.truncf %89 : vector<8x512xf32> to vector<8x512xbf16>
    %c0_43 = arith.constant 0 : index
    %c0_44 = arith.constant 0 : index
    %c0_45 = arith.constant 0 : index
    %91 = vector.load %arg14[%c0_43, %c0_44, %c0_45] : memref<1x512x128xbf16, #tpu.memory_space<vmem>>, vector<1x512x128xbf16>
    %92 = vector.shape_cast %91 : vector<1x512x128xbf16> to vector<512x128xbf16>
    %cst_46 = arith.constant dense<0.000000e+00> : vector<8x128xf32>
    %93 = tpu.matmul %90, %92, %cst_46 {dimension_numbers = #tpu.dot_dimension_numbers<[1], [0], [0], [1], [0, 0, 1, 1], [], []>} : vector<8x512xbf16>, vector<512x128xbf16>, vector<8x128xf32> -> vector<8x128xf32>
    %c0_47 = arith.constant 0 : index
    %c0_48 = arith.constant 0 : index
    %c0_49 = arith.constant 0 : index
    %94 = vector.load %arg15[%c0_47, %c0_48, %c0_49] : memref<1x1x128xf32, #tpu.memory_space<vmem>>, vector<1x1x128xf32>
    %95 = vector.shape_cast %94 : vector<1x1x128xf32> to vector<1x128xf32>
    %96 = vector.broadcast %95 : vector<1x128xf32> to vector<8x128xf32>
    %97 = arith.addf %93, %96 : vector<8x128xf32>
    %98 = arith.addf %97, %73 : vector<8x128xf32>
    %c0_50 = arith.constant 0 : index
    %c0_51 = arith.constant 0 : index
    %c0_52 = arith.constant 0 : index
    %99 = vector.load %arg16[%c0_50, %c0_51, %c0_52] : memref<1x1x128xf32, #tpu.memory_space<vmem>>, vector<1x1x128xf32>
    %100 = vector.shape_cast %99 : vector<1x1x128xf32> to vector<1x128xf32>
    %c0_53 = arith.constant 0 : index
    %c0_54 = arith.constant 0 : index
    %c0_55 = arith.constant 0 : index
    %101 = vector.load %arg17[%c0_53, %c0_54, %c0_55] : memref<1x1x128xf32, #tpu.memory_space<vmem>>, vector<1x1x128xf32>
    %102 = vector.shape_cast %101 : vector<1x1x128xf32> to vector<1x128xf32>
    %cst_56 = arith.constant dense<0.000000e+00> : vector<8xf32>
    %103 = vector.multi_reduction <add>, %98, %cst_56 [1] : vector<8x128xf32> to vector<8xf32>
    %104 = vector.shape_cast %103 : vector<8xf32> to vector<8x1xf32>
    %cst_57 = arith.constant 1.280000e+02 : f32
    %105 = vector.broadcast %cst_57 : f32 to vector<8x1xf32>
    %106 = arith.divf %104, %105 : vector<8x1xf32>
    %107 = vector.broadcast %106 : vector<8x1xf32> to vector<8x128xf32>
    %108 = arith.subf %98, %107 : vector<8x128xf32>
    %109 = arith.mulf %108, %108 : vector<8x128xf32>
    %cst_58 = arith.constant dense<0.000000e+00> : vector<8xf32>
    %110 = vector.multi_reduction <add>, %109, %cst_58 [1] : vector<8x128xf32> to vector<8xf32>
    %111 = vector.shape_cast %110 : vector<8xf32> to vector<8x1xf32>
    %cst_59 = arith.constant 1.280000e+02 : f32
    %112 = vector.broadcast %cst_59 : f32 to vector<8x1xf32>
    %113 = arith.divf %111, %112 : vector<8x1xf32>
    %cst_60 = arith.constant 9.99999996E-13 : f32
    %114 = vector.broadcast %cst_60 : f32 to vector<8x1xf32>
    %115 = arith.addf %113, %114 : vector<8x1xf32>
    %116 = math.rsqrt %115 : vector<8x1xf32>
    %117 = vector.broadcast %116 : vector<8x1xf32> to vector<8x128xf32>
    %118 = arith.mulf %108, %117 : vector<8x128xf32>
    %119 = vector.broadcast %100 : vector<1x128xf32> to vector<8x128xf32>
    %120 = arith.mulf %118, %119 : vector<8x128xf32>
    %121 = vector.broadcast %102 : vector<1x128xf32> to vector<8x128xf32>
    %122 = arith.addf %120, %121 : vector<8x128xf32>
    %c0_61 = arith.constant 0 : index
    %c0_62 = arith.constant 0 : index
    %123 = vector.load %arg26[%c0_61, %c0_62] : memref<8x128xf32, #tpu.memory_space<vmem>>, vector<8x128xf32>
    tpu.vector_store %arg26[%c0_61, %c0_62], %122 {strides = array<i32>} : memref<8x128xf32, #tpu.memory_space<vmem>>, vector<8x128xf32>,
    %c1_i32 = arith.constant 1 : i32
    %124 = arith.cmpi eq, %arg1, %c1_i32 : i32
    %125 = arith.extui %124 : i1 to i32
    %c0_i32_63 = arith.constant 0 : i32
    %126 = arith.cmpi ne, %125, %c0_i32_63 : i32
    scf.if %126 {
      %127 = vector.extract_strided_slice %122 {offsets = [0, 0], sizes = [1, 128], strides = [1, 1]} : vector<8x128xf32> to vector<1x128xf32>
      %128 = vector.extract_strided_slice %122 {offsets = [1, 0], sizes = [6, 128], strides = [1, 1]} : vector<8x128xf32> to vector<6x128xf32>
      %c0_64 = arith.constant 0 : index
      %c0_65 = arith.constant 0 : index
      %c0_66 = arith.constant 0 : index
      %129 = vector.load %arg18[%c0_64, %c0_65, %c0_66] : memref<3x128x64xf32, #tpu.memory_space<vmem>>, vector<1x128x64xf32>
      %130 = vector.shape_cast %129 : vector<1x128x64xf32> to vector<128x64xf32>
      %cst_67 = arith.constant dense<0.000000e+00> : vector<1x64xf32>
      %131 = tpu.matmul %127, %130, %cst_67 {dimension_numbers = #tpu.dot_dimension_numbers<[1], [0], [0], [1], [0, 0, 1, 1], [], []>} : vector<1x128xf32>, vector<128x64xf32>, vector<1x64xf32> -> vector<1x64xf32>
      %c0_68 = arith.constant 0 : index
      %c0_69 = arith.constant 0 : index
      %c0_70 = arith.constant 0 : index
      %132 = vector.load %arg19[%c0_68, %c0_69, %c0_70] : memref<3x1x64xf32, #tpu.memory_space<vmem>>, vector<1x1x64xf32>
      %133 = vector.shape_cast %132 : vector<1x1x64xf32> to vector<1x64xf32>
      %134 = arith.addf %131, %133 : vector<1x64xf32>
      %cst_71 = arith.constant 0.000000e+00 : f32
      %135 = vector.broadcast %cst_71 : f32 to vector<1x64xf32>
      %136 = arith.maximumf %134, %135 : vector<1x64xf32>
      %c0_72 = arith.constant 0 : index
      %c0_73 = arith.constant 0 : index
      %c0_74 = arith.constant 0 : index
      %137 = vector.load %arg20[%c0_72, %c0_73, %c0_74] : memref<3x64x32xf32, #tpu.memory_space<vmem>>, vector<1x64x32xf32>
      %138 = vector.shape_cast %137 : vector<1x64x32xf32> to vector<64x32xf32>
      %cst_75 = arith.constant dense<0.000000e+00> : vector<1x32xf32>
      %139 = tpu.matmul %136, %138, %cst_75 {dimension_numbers = #tpu.dot_dimension_numbers<[1], [0], [0], [1], [0, 0, 1, 1], [], []>} : vector<1x64xf32>, vector<64x32xf32>, vector<1x32xf32> -> vector<1x32xf32>
      %c0_76 = arith.constant 0 : index
      %c0_77 = arith.constant 0 : index
      %c0_78 = arith.constant 0 : index
      %140 = vector.load %arg21[%c0_76, %c0_77, %c0_78] : memref<3x1x32xf32, #tpu.memory_space<vmem>>, vector<1x1x32xf32>
      %141 = vector.shape_cast %140 : vector<1x1x32xf32> to vector<1x32xf32>
      %142 = arith.addf %139, %141 : vector<1x32xf32>
      %cst_79 = arith.constant 0.000000e+00 : f32
      %143 = vector.broadcast %cst_79 : f32 to vector<1x32xf32>
      %144 = arith.maximumf %142, %143 : vector<1x32xf32>
      %c0_80 = arith.constant 0 : index
      %c0_81 = arith.constant 0 : index
      %c0_82 = arith.constant 0 : index
      %145 = vector.load %arg22[%c0_80, %c0_81, %c0_82] : memref<3x32x16xf32, #tpu.memory_space<vmem>>, vector<1x32x16xf32>
      %146 = vector.shape_cast %145 : vector<1x32x16xf32> to vector<32x16xf32>
      %cst_83 = arith.constant dense<0.000000e+00> : vector<1x16xf32>
      %147 = tpu.matmul %144, %146, %cst_83 {dimension_numbers = #tpu.dot_dimension_numbers<[1], [0], [0], [1], [0, 0, 1, 1], [], []>} : vector<1x32xf32>, vector<32x16xf32>, vector<1x16xf32> -> vector<1x16xf32>
      %c0_84 = arith.constant 0 : index
      %c0_85 = arith.constant 0 : index
      %c0_86 = arith.constant 0 : index
      %148 = vector.load %arg23[%c0_84, %c0_85, %c0_86] : memref<3x1x16xf32, #tpu.memory_space<vmem>>, vector<1x1x16xf32>
      %149 = vector.shape_cast %148 : vector<1x1x16xf32> to vector<1x16xf32>
      %150 = arith.addf %147, %149 : vector<1x16xf32>
      %cst_87 = arith.constant 0.000000e+00 : f32
      %151 = vector.broadcast %cst_87 : f32 to vector<1x16xf32>
      %152 = arith.maximumf %150, %151 : vector<1x16xf32>
      %c0_88 = arith.constant 0 : index
      %c0_89 = arith.constant 0 : index
      %c0_90 = arith.constant 0 : index
      %153 = vector.load %arg24[%c0_88, %c0_89, %c0_90] : memref<3x16x1xf32, #tpu.memory_space<vmem>>, vector<1x16x1xf32>
      %154 = vector.shape_cast %153 : vector<1x16x1xf32> to vector<16x1xf32>
      %cst_91 = arith.constant dense<0.000000e+00> : vector<1x1xf32>
      %155 = tpu.matmul %152, %154, %cst_91 {dimension_numbers = #tpu.dot_dimension_numbers<[1], [0], [0], [1], [0, 0, 1, 1], [], []>} : vector<1x16xf32>, vector<16x1xf32>, vector<1x1xf32> -> vector<1x1xf32>
      %c0_92 = arith.constant 0 : index
      %c0_93 = arith.constant 0 : index
      %c0_94 = arith.constant 0 : index
      %156 = vector.load %arg25[%c0_92, %c0_93, %c0_94] : memref<3x1x1xf32, #tpu.memory_space<vmem>>, vector<1x1x1xf32>
      %157 = vector.shape_cast %156 : vector<1x1x1xf32> to vector<1x1xf32>
      %158 = arith.addf %155, %157 : vector<1x1xf32>
      %c0_95 = arith.constant 0 : index
      %c0_96 = arith.constant 0 : index
      %c0_97 = arith.constant 0 : index
      %159 = vector.load %arg27[%c0_95, %c0_96, %c0_97] : memref<1x1x1xf32, #tpu.memory_space<vmem>>, vector<1x1x1xf32>
      %160 = vector.shape_cast %159 : vector<1x1x1xf32> to vector<1x1xf32>
      %161 = vector.shape_cast %158 : vector<1x1xf32> to vector<1x1x1xf32>
      tpu.vector_store %arg27[%c0_95, %c0_96, %c0_97], %161 {strides = array<i32>} : memref<1x1x1xf32, #tpu.memory_space<vmem>>, vector<1x1x1xf32>,
      %c1 = arith.constant 1 : index
      %c0_98 = arith.constant 0 : index
      %c0_99 = arith.constant 0 : index
      %162 = vector.load %arg18[%c1, %c0_98, %c0_99] : memref<3x128x64xf32, #tpu.memory_space<vmem>>, vector<1x128x64xf32>
      %163 = vector.shape_cast %162 : vector<1x128x64xf32> to vector<128x64xf32>
      %cst_100 = arith.constant dense<0.000000e+00> : vector<6x64xf32>
      %164 = tpu.matmul %128, %163, %cst_100 {dimension_numbers = #tpu.dot_dimension_numbers<[1], [0], [0], [1], [0, 0, 1, 1], [], []>} : vector<6x128xf32>, vector<128x64xf32>, vector<6x64xf32> -> vector<6x64xf32>
      %c1_101 = arith.constant 1 : index
      %c0_102 = arith.constant 0 : index
      %c0_103 = arith.constant 0 : index
      %165 = vector.load %arg19[%c1_101, %c0_102, %c0_103] : memref<3x1x64xf32, #tpu.memory_space<vmem>>, vector<1x1x64xf32>
      %166 = vector.shape_cast %165 : vector<1x1x64xf32> to vector<1x64xf32>
      %167 = vector.broadcast %166 : vector<1x64xf32> to vector<6x64xf32>
      %168 = arith.addf %164, %167 : vector<6x64xf32>
      %cst_104 = arith.constant 0.000000e+00 : f32
      %169 = vector.broadcast %cst_104 : f32 to vector<6x64xf32>
      %170 = arith.maximumf %168, %169 : vector<6x64xf32>
      %c1_105 = arith.constant 1 : index
      %c0_106 = arith.constant 0 : index
      %c0_107 = arith.constant 0 : index
      %171 = vector.load %arg20[%c1_105, %c0_106, %c0_107] : memref<3x64x32xf32, #tpu.memory_space<vmem>>, vector<1x64x32xf32>
      %172 = vector.shape_cast %171 : vector<1x64x32xf32> to vector<64x32xf32>
      %cst_108 = arith.constant dense<0.000000e+00> : vector<6x32xf32>
      %173 = tpu.matmul %170, %172, %cst_108 {dimension_numbers = #tpu.dot_dimension_numbers<[1], [0], [0], [1], [0, 0, 1, 1], [], []>} : vector<6x64xf32>, vector<64x32xf32>, vector<6x32xf32> -> vector<6x32xf32>
      %c1_109 = arith.constant 1 : index
      %c0_110 = arith.constant 0 : index
      %c0_111 = arith.constant 0 : index
      %174 = vector.load %arg21[%c1_109, %c0_110, %c0_111] : memref<3x1x32xf32, #tpu.memory_space<vmem>>, vector<1x1x32xf32>
      %175 = vector.shape_cast %174 : vector<1x1x32xf32> to vector<1x32xf32>
      %176 = vector.broadcast %175 : vector<1x32xf32> to vector<6x32xf32>
      %177 = arith.addf %173, %176 : vector<6x32xf32>
      %cst_112 = arith.constant 0.000000e+00 : f32
      %178 = vector.broadcast %cst_112 : f32 to vector<6x32xf32>
      %179 = arith.maximumf %177, %178 : vector<6x32xf32>
      %c1_113 = arith.constant 1 : index
      %c0_114 = arith.constant 0 : index
      %c0_115 = arith.constant 0 : index
      %180 = vector.load %arg22[%c1_113, %c0_114, %c0_115] : memref<3x32x16xf32, #tpu.memory_space<vmem>>, vector<1x32x16xf32>
      %181 = vector.shape_cast %180 : vector<1x32x16xf32> to vector<32x16xf32>
      %cst_116 = arith.constant dense<0.000000e+00> : vector<6x16xf32>
      %182 = tpu.matmul %179, %181, %cst_116 {dimension_numbers = #tpu.dot_dimension_numbers<[1], [0], [0], [1], [0, 0, 1, 1], [], []>} : vector<6x32xf32>, vector<32x16xf32>, vector<6x16xf32> -> vector<6x16xf32>
      %c1_117 = arith.constant 1 : index
      %c0_118 = arith.constant 0 : index
      %c0_119 = arith.constant 0 : index
      %183 = vector.load %arg23[%c1_117, %c0_118, %c0_119] : memref<3x1x16xf32, #tpu.memory_space<vmem>>, vector<1x1x16xf32>
      %184 = vector.shape_cast %183 : vector<1x1x16xf32> to vector<1x16xf32>
      %185 = vector.broadcast %184 : vector<1x16xf32> to vector<6x16xf32>
      %186 = arith.addf %182, %185 : vector<6x16xf32>
      %cst_120 = arith.constant 0.000000e+00 : f32
      %187 = vector.broadcast %cst_120 : f32 to vector<6x16xf32>
      %188 = arith.maximumf %186, %187 : vector<6x16xf32>
      %c1_121 = arith.constant 1 : index
      %c0_122 = arith.constant 0 : index
      %c0_123 = arith.constant 0 : index
      %189 = vector.load %arg24[%c1_121, %c0_122, %c0_123] : memref<3x16x1xf32, #tpu.memory_space<vmem>>, vector<1x16x1xf32>
      %190 = vector.shape_cast %189 : vector<1x16x1xf32> to vector<16x1xf32>
      %cst_124 = arith.constant dense<0.000000e+00> : vector<6x1xf32>
      %191 = tpu.matmul %188, %190, %cst_124 {dimension_numbers = #tpu.dot_dimension_numbers<[1], [0], [0], [1], [0, 0, 1, 1], [], []>} : vector<6x16xf32>, vector<16x1xf32>, vector<6x1xf32> -> vector<6x1xf32>
      %c1_125 = arith.constant 1 : index
      %c0_126 = arith.constant 0 : index
      %c0_127 = arith.constant 0 : index
      %192 = vector.load %arg25[%c1_125, %c0_126, %c0_127] : memref<3x1x1xf32, #tpu.memory_space<vmem>>, vector<1x1x1xf32>
      %193 = vector.shape_cast %192 : vector<1x1x1xf32> to vector<1x1xf32>
      %194 = vector.broadcast %193 : vector<1x1xf32> to vector<6x1xf32>
      %195 = arith.addf %191, %194 : vector<6x1xf32>
      %c0_128 = arith.constant 0 : index
      %c0_129 = arith.constant 0 : index
      %c0_130 = arith.constant 0 : index
      %196 = vector.load %arg28[%c0_128, %c0_129, %c0_130] : memref<1x6x1xf32, #tpu.memory_space<vmem>>, vector<1x6x1xf32>
      %197 = vector.shape_cast %196 : vector<1x6x1xf32> to vector<6x1xf32>
      %198 = vector.shape_cast %195 : vector<6x1xf32> to vector<1x6x1xf32>
      tpu.vector_store %arg28[%c0_128, %c0_129, %c0_130], %198 {strides = array<i32>} : memref<1x6x1xf32, #tpu.memory_space<vmem>>, vector<1x6x1xf32>,
      %c2 = arith.constant 2 : index
      %c0_131 = arith.constant 0 : index
      %c0_132 = arith.constant 0 : index
      %199 = vector.load %arg18[%c2, %c0_131, %c0_132] : memref<3x128x64xf32, #tpu.memory_space<vmem>>, vector<1x128x64xf32>
      %200 = vector.shape_cast %199 : vector<1x128x64xf32> to vector<128x64xf32>
      %cst_133 = arith.constant dense<0.000000e+00> : vector<6x64xf32>
      %201 = tpu.matmul %128, %200, %cst_133 {dimension_numbers = #tpu.dot_dimension_numbers<[1], [0], [0], [1], [0, 0, 1, 1], [], []>} : vector<6x128xf32>, vector<128x64xf32>, vector<6x64xf32> -> vector<6x64xf32>
      %c2_134 = arith.constant 2 : index
      %c0_135 = arith.constant 0 : index
      %c0_136 = arith.constant 0 : index
      %202 = vector.load %arg19[%c2_134, %c0_135, %c0_136] : memref<3x1x64xf32, #tpu.memory_space<vmem>>, vector<1x1x64xf32>
      %203 = vector.shape_cast %202 : vector<1x1x64xf32> to vector<1x64xf32>
      %204 = vector.broadcast %203 : vector<1x64xf32> to vector<6x64xf32>
      %205 = arith.addf %201, %204 : vector<6x64xf32>
      %cst_137 = arith.constant 0.000000e+00 : f32
      %206 = vector.broadcast %cst_137 : f32 to vector<6x64xf32>
      %207 = arith.maximumf %205, %206 : vector<6x64xf32>
      %c2_138 = arith.constant 2 : index
      %c0_139 = arith.constant 0 : index
      %c0_140 = arith.constant 0 : index
      %208 = vector.load %arg20[%c2_138, %c0_139, %c0_140] : memref<3x64x32xf32, #tpu.memory_space<vmem>>, vector<1x64x32xf32>
      %209 = vector.shape_cast %208 : vector<1x64x32xf32> to vector<64x32xf32>
      %cst_141 = arith.constant dense<0.000000e+00> : vector<6x32xf32>
      %210 = tpu.matmul %207, %209, %cst_141 {dimension_numbers = #tpu.dot_dimension_numbers<[1], [0], [0], [1], [0, 0, 1, 1], [], []>} : vector<6x64xf32>, vector<64x32xf32>, vector<6x32xf32> -> vector<6x32xf32>
      %c2_142 = arith.constant 2 : index
      %c0_143 = arith.constant 0 : index
      %c0_144 = arith.constant 0 : index
      %211 = vector.load %arg21[%c2_142, %c0_143, %c0_144] : memref<3x1x32xf32, #tpu.memory_space<vmem>>, vector<1x1x32xf32>
      %212 = vector.shape_cast %211 : vector<1x1x32xf32> to vector<1x32xf32>
      %213 = vector.broadcast %212 : vector<1x32xf32> to vector<6x32xf32>
      %214 = arith.addf %210, %213 : vector<6x32xf32>
      %cst_145 = arith.constant 0.000000e+00 : f32
      %215 = vector.broadcast %cst_145 : f32 to vector<6x32xf32>
      %216 = arith.maximumf %214, %215 : vector<6x32xf32>
      %c2_146 = arith.constant 2 : index
      %c0_147 = arith.constant 0 : index
      %c0_148 = arith.constant 0 : index
      %217 = vector.load %arg22[%c2_146, %c0_147, %c0_148] : memref<3x32x16xf32, #tpu.memory_space<vmem>>, vector<1x32x16xf32>
      %218 = vector.shape_cast %217 : vector<1x32x16xf32> to vector<32x16xf32>
      %cst_149 = arith.constant dense<0.000000e+00> : vector<6x16xf32>
      %219 = tpu.matmul %216, %218, %cst_149 {dimension_numbers = #tpu.dot_dimension_numbers<[1], [0], [0], [1], [0, 0, 1, 1], [], []>} : vector<6x32xf32>, vector<32x16xf32>, vector<6x16xf32> -> vector<6x16xf32>
      %c2_150 = arith.constant 2 : index
      %c0_151 = arith.constant 0 : index
      %c0_152 = arith.constant 0 : index
      %220 = vector.load %arg23[%c2_150, %c0_151, %c0_152] : memref<3x1x16xf32, #tpu.memory_space<vmem>>, vector<1x1x16xf32>
      %221 = vector.shape_cast %220 : vector<1x1x16xf32> to vector<1x16xf32>
      %222 = vector.broadcast %221 : vector<1x16xf32> to vector<6x16xf32>
      %223 = arith.addf %219, %222 : vector<6x16xf32>
      %cst_153 = arith.constant 0.000000e+00 : f32
      %224 = vector.broadcast %cst_153 : f32 to vector<6x16xf32>
      %225 = arith.maximumf %223, %224 : vector<6x16xf32>
      %c2_154 = arith.constant 2 : index
      %c0_155 = arith.constant 0 : index
      %c0_156 = arith.constant 0 : index
      %226 = vector.load %arg24[%c2_154, %c0_155, %c0_156] : memref<3x16x1xf32, #tpu.memory_space<vmem>>, vector<1x16x1xf32>
      %227 = vector.shape_cast %226 : vector<1x16x1xf32> to vector<16x1xf32>
      %cst_157 = arith.constant dense<0.000000e+00> : vector<6x1xf32>
      %228 = tpu.matmul %225, %227, %cst_157 {dimension_numbers = #tpu.dot_dimension_numbers<[1], [0], [0], [1], [0, 0, 1, 1], [], []>} : vector<6x16xf32>, vector<16x1xf32>, vector<6x1xf32> -> vector<6x1xf32>
      %c2_158 = arith.constant 2 : index
      %c0_159 = arith.constant 0 : index
      %c0_160 = arith.constant 0 : index
      %229 = vector.load %arg25[%c2_158, %c0_159, %c0_160] : memref<3x1x1xf32, #tpu.memory_space<vmem>>, vector<1x1x1xf32>
      %230 = vector.shape_cast %229 : vector<1x1x1xf32> to vector<1x1xf32>
      %231 = vector.broadcast %230 : vector<1x1xf32> to vector<6x1xf32>
      %232 = arith.addf %228, %231 : vector<6x1xf32>
      %c0_161 = arith.constant 0 : index
      %c0_162 = arith.constant 0 : index
      %c0_163 = arith.constant 0 : index
      %233 = vector.load %arg29[%c0_161, %c0_162, %c0_163] : memref<1x6x1xf32, #tpu.memory_space<vmem>>, vector<1x6x1xf32>
      %234 = vector.shape_cast %233 : vector<1x6x1xf32> to vector<6x1xf32>
      %235 = vector.shape_cast %232 : vector<6x1xf32> to vector<1x6x1xf32>
      tpu.vector_store %arg29[%c0_161, %c0_162, %c0_163], %235 {strides = array<i32>} : memref<1x6x1xf32, #tpu.memory_space<vmem>>, vector<1x6x1xf32>,
    } else {
    }
    return
  }
  func.func @transform_0(%arg0: i32, %arg1: i32) -> (i32, i32, i32) {
    %c0_i32 = arith.constant 0 : i32
    %c0_i32_0 = arith.constant 0 : i32
    %c0_i32_1 = arith.constant 0 : i32
    return %arg0, %c0_i32, %c0_i32_0 : i32, i32, i32
  }
  func.func @transform_1(%arg0: i32, %arg1: i32) -> (i32, i32) {
    %c0_i32 = arith.constant 0 : i32
    %c0_i32_0 = arith.constant 0 : i32
    return %arg0, %c0_i32 : i32, i32
  }
  func.func @transform_2(%arg0: i32, %arg1: i32) -> (i32, i32) {
    %c0_i32 = arith.constant 0 : i32
    %c0_i32_0 = arith.constant 0 : i32
    %c0_i32_1 = arith.constant 0 : i32
    return %c0_i32, %c0_i32_0 : i32, i32
  }
  func.func @transform_3(%arg0: i32, %arg1: i32) -> (i32, i32) {
    %c0_i32 = arith.constant 0 : i32
    %c0_i32_0 = arith.constant 0 : i32
    %c0_i32_1 = arith.constant 0 : i32
    return %c0_i32, %c0_i32_0 : i32, i32
  }
  func.func @transform_4(%arg0: i32, %arg1: i32) -> (i32, i32, i32) {
    %c0_i32 = arith.constant 0 : i32
    %c0_i32_0 = arith.constant 0 : i32
    %c0_i32_1 = arith.constant 0 : i32
    return %arg1, %c0_i32, %c0_i32_0 : i32, i32, i32
  }
  func.func @transform_5(%arg0: i32, %arg1: i32) -> (i32, i32, i32) {
    %c0_i32 = arith.constant 0 : i32
    %c0_i32_0 = arith.constant 0 : i32
    %c0_i32_1 = arith.constant 0 : i32
    return %arg1, %c0_i32, %c0_i32_0 : i32, i32, i32
  }
  func.func @transform_6(%arg0: i32, %arg1: i32) -> (i32, i32, i32) {
    %c0_i32 = arith.constant 0 : i32
    %c0_i32_0 = arith.constant 0 : i32
    %c0_i32_1 = arith.constant 0 : i32
    return %arg1, %c0_i32, %c0_i32_0 : i32, i32, i32
  }
  func.func @transform_7(%arg0: i32, %arg1: i32) -> (i32, i32, i32) {
    %c0_i32 = arith.constant 0 : i32
    %c0_i32_0 = arith.constant 0 : i32
    %c0_i32_1 = arith.constant 0 : i32
    return %arg1, %c0_i32, %c0_i32_0 : i32, i32, i32
  }
  func.func @transform_8(%arg0: i32, %arg1: i32) -> (i32, i32, i32) {
    %c0_i32 = arith.constant 0 : i32
    %c0_i32_0 = arith.constant 0 : i32
    %c0_i32_1 = arith.constant 0 : i32
    return %arg1, %c0_i32, %c0_i32_0 : i32, i32, i32
  }
  func.func @transform_9(%arg0: i32, %arg1: i32) -> (i32, i32, i32) {
    %c0_i32 = arith.constant 0 : i32
    %c0_i32_0 = arith.constant 0 : i32
    %c0_i32_1 = arith.constant 0 : i32
    return %arg1, %c0_i32, %c0_i32_0 : i32, i32, i32
  }
  func.func @transform_10(%arg0: i32, %arg1: i32) -> (i32, i32, i32) {
    %c0_i32 = arith.constant 0 : i32
    %c0_i32_0 = arith.constant 0 : i32
    %c0_i32_1 = arith.constant 0 : i32
    return %arg1, %c0_i32, %c0_i32_0 : i32, i32, i32
  }
  func.func @transform_11(%arg0: i32, %arg1: i32) -> (i32, i32, i32) {
    %c0_i32 = arith.constant 0 : i32
    %c0_i32_0 = arith.constant 0 : i32
    %c0_i32_1 = arith.constant 0 : i32
    return %arg1, %c0_i32, %c0_i32_0 : i32, i32, i32
  }
  func.func @transform_12(%arg0: i32, %arg1: i32) -> (i32, i32, i32) {
    %c0_i32 = arith.constant 0 : i32
    %c0_i32_0 = arith.constant 0 : i32
    %c0_i32_1 = arith.constant 0 : i32
    return %arg1, %c0_i32, %c0_i32_0 : i32, i32, i32
  }
  func.func @transform_13(%arg0: i32, %arg1: i32) -> (i32, i32, i32) {
    %c0_i32 = arith.constant 0 : i32
    %c0_i32_0 = arith.constant 0 : i32
    %c0_i32_1 = arith.constant 0 : i32
    return %arg1, %c0_i32, %c0_i32_0 : i32, i32, i32
  }
  func.func @transform_14(%arg0: i32, %arg1: i32) -> (i32, i32, i32) {
    %c0_i32 = arith.constant 0 : i32
    %c0_i32_0 = arith.constant 0 : i32
    %c0_i32_1 = arith.constant 0 : i32
    return %arg1, %c0_i32, %c0_i32_0 : i32, i32, i32
  }
  func.func @transform_15(%arg0: i32, %arg1: i32) -> (i32, i32, i32) {
    %c0_i32 = arith.constant 0 : i32
    %c0_i32_0 = arith.constant 0 : i32
    %c0_i32_1 = arith.constant 0 : i32
    return %arg1, %c0_i32, %c0_i32_0 : i32, i32, i32
  }
  func.func @transform_16(%arg0: i32, %arg1: i32) -> (i32, i32, i32) {
    %c0_i32 = arith.constant 0 : i32
    %c0_i32_0 = arith.constant 0 : i32
    %c0_i32_1 = arith.constant 0 : i32
    %c0_i32_2 = arith.constant 0 : i32
    return %c0_i32, %c0_i32_0, %c0_i32_1 : i32, i32, i32
  }
  func.func @transform_17(%arg0: i32, %arg1: i32) -> (i32, i32, i32) {
    %c0_i32 = arith.constant 0 : i32
    %c0_i32_0 = arith.constant 0 : i32
    %c0_i32_1 = arith.constant 0 : i32
    %c0_i32_2 = arith.constant 0 : i32
    return %c0_i32, %c0_i32_0, %c0_i32_1 : i32, i32, i32
  }
  func.func @transform_18(%arg0: i32, %arg1: i32) -> (i32, i32, i32) {
    %c0_i32 = arith.constant 0 : i32
    %c0_i32_0 = arith.constant 0 : i32
    %c0_i32_1 = arith.constant 0 : i32
    %c0_i32_2 = arith.constant 0 : i32
    return %c0_i32, %c0_i32_0, %c0_i32_1 : i32, i32, i32
  }
  func.func @transform_19(%arg0: i32, %arg1: i32) -> (i32, i32, i32) {
    %c0_i32 = arith.constant 0 : i32
    %c0_i32_0 = arith.constant 0 : i32
    %c0_i32_1 = arith.constant 0 : i32
    %c0_i32_2 = arith.constant 0 : i32
    return %c0_i32, %c0_i32_0, %c0_i32_1 : i32, i32, i32
  }
  func.func @transform_20(%arg0: i32, %arg1: i32) -> (i32, i32, i32) {
    %c0_i32 = arith.constant 0 : i32
    %c0_i32_0 = arith.constant 0 : i32
    %c0_i32_1 = arith.constant 0 : i32
    %c0_i32_2 = arith.constant 0 : i32
    return %c0_i32, %c0_i32_0, %c0_i32_1 : i32, i32, i32
  }
  func.func @transform_21(%arg0: i32, %arg1: i32) -> (i32, i32, i32) {
    %c0_i32 = arith.constant 0 : i32
    %c0_i32_0 = arith.constant 0 : i32
    %c0_i32_1 = arith.constant 0 : i32
    %c0_i32_2 = arith.constant 0 : i32
    return %c0_i32, %c0_i32_0, %c0_i32_1 : i32, i32, i32
  }
  func.func @transform_22(%arg0: i32, %arg1: i32) -> (i32, i32, i32) {
    %c0_i32 = arith.constant 0 : i32
    %c0_i32_0 = arith.constant 0 : i32
    %c0_i32_1 = arith.constant 0 : i32
    %c0_i32_2 = arith.constant 0 : i32
    return %c0_i32, %c0_i32_0, %c0_i32_1 : i32, i32, i32
  }
  func.func @transform_23(%arg0: i32, %arg1: i32) -> (i32, i32, i32) {
    %c0_i32 = arith.constant 0 : i32
    %c0_i32_0 = arith.constant 0 : i32
    %c0_i32_1 = arith.constant 0 : i32
    %c0_i32_2 = arith.constant 0 : i32
    return %c0_i32, %c0_i32_0, %c0_i32_1 : i32, i32, i32
  }
  func.func @transform_24(%arg0: i32, %arg1: i32) -> (i32, i32) {
    %c0_i32 = arith.constant 0 : i32
    %c0_i32_0 = arith.constant 0 : i32
    return %arg0, %c0_i32 : i32, i32
  }
  func.func @transform_25(%arg0: i32, %arg1: i32) -> (i32, i32, i32) {
    %c0_i32 = arith.constant 0 : i32
    %c0_i32_0 = arith.constant 0 : i32
    %c0_i32_1 = arith.constant 0 : i32
    return %arg0, %c0_i32, %c0_i32_0 : i32, i32, i32
  }
  func.func @transform_26(%arg0: i32, %arg1: i32) -> (i32, i32, i32) {
    %c0_i32 = arith.constant 0 : i32
    %c0_i32_0 = arith.constant 0 : i32
    %c0_i32_1 = arith.constant 0 : i32
    return %arg0, %c0_i32, %c0_i32_0 : i32, i32, i32
  }
  func.func @transform_27(%arg0: i32, %arg1: i32) -> (i32, i32, i32) {
    %c0_i32 = arith.constant 0 : i32
    %c0_i32_0 = arith.constant 0 : i32
    %c0_i32_1 = arith.constant 0 : i32
    return %arg0, %c0_i32, %c0_i32_0 : i32, i32, i32
  }
}

</mosaic_0001>

<llo_original>
// kernel: qa_model_forward.1
$region0: #{qa_model_forward.1}
  #allocation0 [shape = 'u32[]', space=smem, size = 0x4, offset = 0x4, fixed_abs, tag = 'smem constant byte address 0x4 - core index']
  #allocation1 [shape = 'u32[144,128]{1,0:T(1,128)}', space=vmem, size = 0x12000, scoped, tag = 'internal scratch']
  %s0 = inlined_call_operand.vmem [shape: f32[2,1,8], index: 0, kind: input, shape index: {}]
  %s1 = inlined_call_operand.vmem [shape: f32[16,128], index: 1, kind: input, shape index: {}, may-alias: {1,24}]
  %s2 = inlined_call_operand.vmem [shape: f32[1,128], index: 2, kind: input, shape index: {}]
  %s3 = inlined_call_operand.vmem [shape: f32[1,128], index: 3, kind: input, shape index: {}]
  %s4 = inlined_call_operand.vmem [shape: bf16[2,128,384], index: 4, kind: input, shape index: {}]
  %s5 = inlined_call_operand.vmem [shape: f32[2,1,384], index: 5, kind: input, shape index: {}]
  %s6 = inlined_call_operand.vmem [shape: bf16[2,128,128], index: 6, kind: input, shape index: {}]
  %s7 = inlined_call_operand.vmem [shape: f32[2,1,128], index: 7, kind: input, shape index: {}, may-alias: {7,9,13,15}]
  %s8 = inlined_call_operand.vmem [shape: f32[2,1,128], index: 8, kind: input, shape index: {}, may-alias: {8,14}]
  %s9 = inlined_call_operand.vmem [shape: f32[2,1,128], index: 9, kind: input, shape index: {}, may-alias: {7,9,13,15}]
  %s10 = inlined_call_operand.vmem [shape: bf16[2,128,512], index: 10, kind: input, shape index: {}]
  %s11 = inlined_call_operand.vmem [shape: f32[2,1,512], index: 11, kind: input, shape index: {}]
  %s12 = inlined_call_operand.vmem [shape: bf16[2,512,128], index: 12, kind: input, shape index: {}]
  %s13 = inlined_call_operand.vmem [shape: f32[2,1,128], index: 13, kind: input, shape index: {}, may-alias: {7,9,13,15}]
  %s14 = inlined_call_operand.vmem [shape: f32[2,1,128], index: 14, kind: input, shape index: {}, may-alias: {8,14}]
  %s15 = inlined_call_operand.vmem [shape: f32[2,1,128], index: 15, kind: input, shape index: {}, may-alias: {7,9,13,15}]
  %s16 = inlined_call_operand.vmem [shape: f32[3,128,64], index: 16, kind: input, shape index: {}]
  %s17 = inlined_call_operand.vmem [shape: f32[3,1,64], index: 17, kind: input, shape index: {}]
  %s18 = inlined_call_operand.vmem [shape: f32[3,64,32], index: 18, kind: input, shape index: {}]
  %s19 = inlined_call_operand.vmem [shape: f32[3,1,32], index: 19, kind: input, shape index: {}]
  %s20 = inlined_call_operand.vmem [shape: f32[3,32,16], index: 20, kind: input, shape index: {}]
  %s21 = inlined_call_operand.vmem [shape: f32[3,1,16], index: 21, kind: input, shape index: {}]
  %s22 = inlined_call_operand.vmem [shape: f32[3,16,1], index: 22, kind: input, shape index: {}]
  %s23 = inlined_call_operand.vmem [shape: f32[3,1,1], index: 23, kind: input, shape index: {}]
  %s24 = inlined_call_operand.vmem [shape: f32[16,128], index: 24, kind: output, shape index: {0}, may-alias: {1,24}]
  %s25 = inlined_call_operand.vmem [shape: f32[2,1,1], index: 25, kind: output, shape index: {1}]
  %s26 = inlined_call_operand.vmem [shape: f32[2,6,1], index: 26, kind: output, shape index: {2}]
  %s27 = inlined_call_operand.vmem [shape: f32[2,6,1], index: 27, kind: output, shape index: {3}]
  %28 = xla_tuple %s24, %s25, %s26, %s27
  %s29 = sld [smem:[#allocation0]]
  $region161: #{qa_model_forward.1} parent=0
    _
  %s31 = ssub.s32 1, %s29
  %s32 = scalar_select 0, %s31, %s29
  loop: start=0, step=1, limit=6
  $region2: #{qa_model_forward.1} parent=0 // loop_pre_header
    _
  $region3: #{qa_model_forward.1} parent=0 // loop_header
    %s34 = sphi 0, %s38
    %p35 = scmp.ge.s32.totalorder %s34, 6
    %s41 = sphi 0, %s53
    %s42 = sphi 0, %s49
    %s43 = sphi 0, %s41
    %s44 = sphi 0, %s42
    %s45 = sphi 0, %s43
    %s46 = sphi 0, %s44
    %s56 = sphi 0, %s58
    %s59 = sphi 0, %s56
    %s60 = sphi 0, %s59
    %s76 = sphi 0, %s60
    %s82 = sphi 0, %s84
    %s85 = sphi 0, %s82
    %s86 = sphi 0, %s85
    %s102 = sphi 0, %s86
    %s106 = sphi 0, %s106
    %s108 = sphi 0, %s106
    %s109 = sphi 0, %s108
    %s123 = sphi 0, %s109
    %s127 = sphi 0, %s127
    %s129 = sphi 0, %s127
    %s130 = sphi 0, %s129
    %s144 = sphi 0, %s130
    %s150 = sphi 0, %s152
    %s153 = sphi 0, %s150
    %s154 = sphi 0, %s153
    %s170 = sphi 0, %s154
    %s176 = sphi 0, %s178
    %s179 = sphi 0, %s176
    %s180 = sphi 0, %s179
    %s196 = sphi 0, %s180
    %s202 = sphi 0, %s204
    %s205 = sphi 0, %s202
    %s206 = sphi 0, %s205
    %s222 = sphi 0, %s206
    %s228 = sphi 0, %s230
    %s231 = sphi 0, %s228
    %s232 = sphi 0, %s231
    %s248 = sphi 0, %s232
    %s254 = sphi 0, %s256
    %s257 = sphi 0, %s254
    %s258 = sphi 0, %s257
    %s274 = sphi 0, %s258
    %s280 = sphi 0, %s282
    %s283 = sphi 0, %s280
    %s284 = sphi 0, %s283
    %s300 = sphi 0, %s284
    %s306 = sphi 0, %s308
    %s309 = sphi 0, %s306
    %s310 = sphi 0, %s309
    %s326 = sphi 0, %s310
    %s332 = sphi 0, %s334
    %s335 = sphi 0, %s332
    %s336 = sphi 0, %s335
    %s352 = sphi 0, %s336
    %s358 = sphi 0, %s360
    %s361 = sphi 0, %s358
    %s362 = sphi 0, %s361
    %s378 = sphi 0, %s362
    %s384 = sphi 0, %s386
    %s387 = sphi 0, %s384
    %s388 = sphi 0, %s387
    %s404 = sphi 0, %s388
    %s410 = sphi 0, %s412
    %s413 = sphi 0, %s410
    %s414 = sphi 0, %s413
    %s430 = sphi 0, %s414
    %s436 = sphi 0, %s438
    %s439 = sphi 0, %s436
    %s440 = sphi 0, %s439
    %s456 = sphi 0, %s440
    %s460 = sphi 0, %s460
    %s462 = sphi 0, %s460
    %s463 = sphi 0, %s462
    %s477 = sphi 0, %s463
    %s481 = sphi 0, %s481
    %s483 = sphi 0, %s481
    %s484 = sphi 0, %s483
    %s498 = sphi 0, %s484
    %s502 = sphi 0, %s502
    %s504 = sphi 0, %s502
    %s505 = sphi 0, %s504
    %s519 = sphi 0, %s505
    %s523 = sphi 0, %s523
    %s525 = sphi 0, %s523
    %s526 = sphi 0, %s525
    %s540 = sphi 0, %s526
    %s544 = sphi 0, %s544
    %s546 = sphi 0, %s544
    %s547 = sphi 0, %s546
    %s561 = sphi 0, %s547
    %s565 = sphi 0, %s565
    %s567 = sphi 0, %s565
    %s568 = sphi 0, %s567
    %s582 = sphi 0, %s568
    %s586 = sphi 0, %s586
    %s588 = sphi 0, %s586
    %s589 = sphi 0, %s588
    %s603 = sphi 0, %s589
    %s607 = sphi 0, %s607
    %s609 = sphi 0, %s607
    %s610 = sphi 0, %s609
    %s624 = sphi 0, %s610
    %s630 = sphi 0, %s632
    %s633 = sphi 0, %s630
    %s634 = sphi 0, %s633
    %s650 = sphi 0, %s634
    %s656 = sphi 0, %s658
    %s659 = sphi 0, %s656
    %s660 = sphi 0, %s659
    %s676 = sphi 0, %s660
    %s682 = sphi 0, %s684
    %s685 = sphi 0, %s682
    %s686 = sphi 0, %s685
    %s702 = sphi 0, %s686
    %s708 = sphi 0, %s710
    %s711 = sphi 0, %s708
    %s712 = sphi 0, %s711
    %s728 = sphi 0, %s712
  $region4: #{qa_model_forward.1} parent=0 // loop_header_branch
    %37 = sbr.rel (%p35) target = $region8
  $region5: #{qa_model_forward.1} parent=0 // loop_body
    %s39 = ssub.s32 %s34, 1
    %s40 = ssub.s32 %s34, 2
    %s47 = sadd.s32 1, %s42
    %p48 = scmp.ge.s32.totalorder %s47, 2
    %s49 = scalar_select %p48, 0, %s47
    %s50 = sadd.s32 1, %s41
    %s51 = scalar_select %p48, %s50, %s41
    %p52 = scmp.ge.s32.totalorder %s51, 2
    %s53 = scalar_select %p52, 0, %s51
    %s54 = ssub.s32 %s41, %s53
    %p55 = scmp.eq.s32.totalorder %s54, 0
    %s57 = sadd.s32 %s56, 1
    %s58 = scalar_select %p55, %s56, %s57
    %p61 = pneg %p55
    %p62 = scmp.eq.s32.totalorder %s34, 3
    %p63 = por %p61, %p62
    %p64 = scmp.ne.s32.totalorder %s56, %s59
    %p65 = scmp.eq.s32.totalorder %s34, 0
    %p66 = por %p64, %p65
    %p67 = scmp.ne.s32.totalorder %s56, %s59
    %p68 = scmp.eq.s32.totalorder %s39, 3
    %p69 = por %p67, %p68
    %p70 = scmp.ne.s32.totalorder %s59, %s60
    %p71 = scmp.eq.s32.totalorder %s39, 0
    %p72 = por %p70, %p71
    %p73 = scmp.ne.s32.totalorder %s59, %s60
    %p74 = scmp.eq.s32.totalorder %s40, 3
    %p75 = por %p73, %p74
    %p77 = scmp.ne.s32.totalorder %s60, %s76
    %p78 = scmp.eq.s32.totalorder %s40, 0
    %p79 = por %p77, %p78
    %s80 = ssub.s32 %s41, %s53
    %p81 = scmp.eq.s32.totalorder %s80, 0
    %s83 = sadd.s32 %s82, 1
    %s84 = scalar_select %p81, %s82, %s83
    %p87 = pneg %p81
    %p88 = scmp.eq.s32.totalorder %s34, 3
    %p89 = por %p87, %p88
    %p90 = scmp.ne.s32.totalorder %s82, %s85
    %p91 = scmp.eq.s32.totalorder %s34, 0
    %p92 = por %p90, %p91
    %p93 = scmp.ne.s32.totalorder %s82, %s85
    %p94 = scmp.eq.s32.totalorder %s39, 3
    %p95 = por %p93, %p94
    %p96 = scmp.ne.s32.totalorder %s85, %s86
    %p97 = scmp.eq.s32.totalorder %s39, 0
    %p98 = por %p96, %p97
    %p99 = scmp.ne.s32.totalorder %s85, %s86
    %p100 = scmp.eq.s32.totalorder %s40, 3
    %p101 = por %p99, %p100
    %p103 = scmp.ne.s32.totalorder %s86, %s102
    %p104 = scmp.eq.s32.totalorder %s40, 0
    %p105 = por %p103, %p104
    %s107 = sadd.s32 %s106, 1
    %p110 = scmp.eq.s32.totalorder %s34, 3
    %p111 = scmp.ne.s32.totalorder %s106, %s108
    %p112 = scmp.eq.s32.totalorder %s34, 0
    %p113 = por %p111, %p112
    %p114 = scmp.ne.s32.totalorder %s106, %s108
    %p115 = scmp.eq.s32.totalorder %s39, 3
    %p116 = por %p114, %p115
    %p117 = scmp.ne.s32.totalorder %s108, %s109
    %p118 = scmp.eq.s32.totalorder %s39, 0
    %p119 = por %p117, %p118
    %p120 = scmp.ne.s32.totalorder %s108, %s109
    %p121 = scmp.eq.s32.totalorder %s40, 3
    %p122 = por %p120, %p121
    %p124 = scmp.ne.s32.totalorder %s109, %s123
    %p125 = scmp.eq.s32.totalorder %s40, 0
    %p126 = por %p124, %p125
    %s128 = sadd.s32 %s127, 1
    %p131 = scmp.eq.s32.totalorder %s34, 3
    %p132 = scmp.ne.s32.totalorder %s127, %s129
    %p133 = scmp.eq.s32.totalorder %s34, 0
    %p134 = por %p132, %p133
    %p135 = scmp.ne.s32.totalorder %s127, %s129
    %p136 = scmp.eq.s32.totalorder %s39, 3
    %p137 = por %p135, %p136
    %p138 = scmp.ne.s32.totalorder %s129, %s130
    %p139 = scmp.eq.s32.totalorder %s39, 0
    %p140 = por %p138, %p139
    %p141 = scmp.ne.s32.totalorder %s129, %s130
    %p142 = scmp.eq.s32.totalorder %s40, 3
    %p143 = por %p141, %p142
    %p145 = scmp.ne.s32.totalorder %s130, %s144
    %p146 = scmp.eq.s32.totalorder %s40, 0
    %p147 = por %p145, %p146
    %s148 = ssub.s32 %s42, %s49
    %p149 = scmp.eq.s32.totalorder %s148, 0
    %s151 = sadd.s32 %s150, 1
    %s152 = scalar_select %p149, %s150, %s151
    %p155 = pneg %p149
    %p156 = scmp.eq.s32.totalorder %s34, 3
    %p157 = por %p155, %p156
    %p158 = scmp.ne.s32.totalorder %s150, %s153
    %p159 = scmp.eq.s32.totalorder %s34, 0
    %p160 = por %p158, %p159
    %p161 = scmp.ne.s32.totalorder %s150, %s153
    %p162 = scmp.eq.s32.totalorder %s39, 3
    %p163 = por %p161, %p162
    %p164 = scmp.ne.s32.totalorder %s153, %s154
    %p165 = scmp.eq.s32.totalorder %s39, 0
    %p166 = por %p164, %p165
    %p167 = scmp.ne.s32.totalorder %s153, %s154
    %p168 = scmp.eq.s32.totalorder %s40, 3
    %p169 = por %p167, %p168
    %p171 = scmp.ne.s32.totalorder %s154, %s170
    %p172 = scmp.eq.s32.totalorder %s40, 0
    %p173 = por %p171, %p172
    %s174 = ssub.s32 %s42, %s49
    %p175 = scmp.eq.s32.totalorder %s174, 0
    %s177 = sadd.s32 %s176, 1
    %s178 = scalar_select %p175, %s176, %s177
    %p181 = pneg %p175
    %p182 = scmp.eq.s32.totalorder %s34, 3
    %p183 = por %p181, %p182
    %p184 = scmp.ne.s32.totalorder %s176, %s179
    %p185 = scmp.eq.s32.totalorder %s34, 0
    %p186 = por %p184, %p185
    %p187 = scmp.ne.s32.totalorder %s176, %s179
    %p188 = scmp.eq.s32.totalorder %s39, 3
    %p189 = por %p187, %p188
    %p190 = scmp.ne.s32.totalorder %s179, %s180
    %p191 = scmp.eq.s32.totalorder %s39, 0
    %p192 = por %p190, %p191
    %p193 = scmp.ne.s32.totalorder %s179, %s180
    %p194 = scmp.eq.s32.totalorder %s40, 3
    %p195 = por %p193, %p194
    %p197 = scmp.ne.s32.totalorder %s180, %s196
    %p198 = scmp.eq.s32.totalorder %s40, 0
    %p199 = por %p197, %p198
    %s200 = ssub.s32 %s42, %s49
    %p201 = scmp.eq.s32.totalorder %s200, 0
    %s203 = sadd.s32 %s202, 1
    %s204 = scalar_select %p201, %s202, %s203
    %p207 = pneg %p201
    %p208 = scmp.eq.s32.totalorder %s34, 3
    %p209 = por %p207, %p208
    %p210 = scmp.ne.s32.totalorder %s202, %s205
    %p211 = scmp.eq.s32.totalorder %s34, 0
    %p212 = por %p210, %p211
    %p213 = scmp.ne.s32.totalorder %s202, %s205
    %p214 = scmp.eq.s32.totalorder %s39, 3
    %p215 = por %p213, %p214
    %p216 = scmp.ne.s32.totalorder %s205, %s206
    %p217 = scmp.eq.s32.totalorder %s39, 0
    %p218 = por %p216, %p217
    %p219 = scmp.ne.s32.totalorder %s205, %s206
    %p220 = scmp.eq.s32.totalorder %s40, 3
    %p221 = por %p219, %p220
    %p223 = scmp.ne.s32.totalorder %s206, %s222
    %p224 = scmp.eq.s32.totalorder %s40, 0
    %p225 = por %p223, %p224
    %s226 = ssub.s32 %s42, %s49
    %p227 = scmp.eq.s32.totalorder %s226, 0
    %s229 = sadd.s32 %s228, 1
    %s230 = scalar_select %p227, %s228, %s229
    %p233 = pneg %p227
    %p234 = scmp.eq.s32.totalorder %s34, 3
    %p235 = por %p233, %p234
    %p236 = scmp.ne.s32.totalorder %s228, %s231
    %p237 = scmp.eq.s32.totalorder %s34, 0
    %p238 = por %p236, %p237
    %p239 = scmp.ne.s32.totalorder %s228, %s231
    %p240 = scmp.eq.s32.totalorder %s39, 3
    %p241 = por %p239, %p240
    %p242 = scmp.ne.s32.totalorder %s231, %s232
    %p243 = scmp.eq.s32.totalorder %s39, 0
    %p244 = por %p242, %p243
    %p245 = scmp.ne.s32.totalorder %s231, %s232
    %p246 = scmp.eq.s32.totalorder %s40, 3
    %p247 = por %p245, %p246
    %p249 = scmp.ne.s32.totalorder %s232, %s248
    %p250 = scmp.eq.s32.totalorder %s40, 0
    %p251 = por %p249, %p250
    %s252 = ssub.s32 %s42, %s49
    %p253 = scmp.eq.s32.totalorder %s252, 0
    %s255 = sadd.s32 %s254, 1
    %s256 = scalar_select %p253, %s254, %s255
    %p259 = pneg %p253
    %p260 = scmp.eq.s32.totalorder %s34, 3
    %p261 = por %p259, %p260
    %p262 = scmp.ne.s32.totalorder %s254, %s257
    %p263 = scmp.eq.s32.totalorder %s34, 0
    %p264 = por %p262, %p263
    %p265 = scmp.ne.s32.totalorder %s254, %s257
    %p266 = scmp.eq.s32.totalorder %s39, 3
    %p267 = por %p265, %p266
    %p268 = scmp.ne.s32.totalorder %s257, %s258
    %p269 = scmp.eq.s32.totalorder %s39, 0
    %p270 = por %p268, %p269
    %p271 = scmp.ne.s32.totalorder %s257, %s258
    %p272 = scmp.eq.s32.totalorder %s40, 3
    %p273 = por %p271, %p272
    %p275 = scmp.ne.s32.totalorder %s258, %s274
    %p276 = scmp.eq.s32.totalorder %s40, 0
    %p277 = por %p275, %p276
    %s278 = ssub.s32 %s42, %s49
    %p279 = scmp.eq.s32.totalorder %s278, 0
    %s281 = sadd.s32 %s280, 1
    %s282 = scalar_select %p279, %s280, %s281
    %p285 = pneg %p279
    %p286 = scmp.eq.s32.totalorder %s34, 3
    %p287 = por %p285, %p286
    %p288 = scmp.ne.s32.totalorder %s280, %s283
    %p289 = scmp.eq.s32.totalorder %s34, 0
    %p290 = por %p288, %p289
    %p291 = scmp.ne.s32.totalorder %s280, %s283
    %p292 = scmp.eq.s32.totalorder %s39, 3
    %p293 = por %p291, %p292
    %p294 = scmp.ne.s32.totalorder %s283, %s284
    %p295 = scmp.eq.s32.totalorder %s39, 0
    %p296 = por %p294, %p295
    %p297 = scmp.ne.s32.totalorder %s283, %s284
    %p298 = scmp.eq.s32.totalorder %s40, 3
    %p299 = por %p297, %p298
    %p301 = scmp.ne.s32.totalorder %s284, %s300
    %p302 = scmp.eq.s32.totalorder %s40, 0
    %p303 = por %p301, %p302
    %s304 = ssub.s32 %s42, %s49
    %p305 = scmp.eq.s32.totalorder %s304, 0
    %s307 = sadd.s32 %s306, 1
    %s308 = scalar_select %p305, %s306, %s307
    %p311 = pneg %p305
    %p312 = scmp.eq.s32.totalorder %s34, 3
    %p313 = por %p311, %p312
    %p314 = scmp.ne.s32.totalorder %s306, %s309
    %p315 = scmp.eq.s32.totalorder %s34, 0
    %p316 = por %p314, %p315
    %p317 = scmp.ne.s32.totalorder %s306, %s309
    %p318 = scmp.eq.s32.totalorder %s39, 3
    %p319 = por %p317, %p318
    %p320 = scmp.ne.s32.totalorder %s309, %s310
    %p321 = scmp.eq.s32.totalorder %s39, 0
    %p322 = por %p320, %p321
    %p323 = scmp.ne.s32.totalorder %s309, %s310
    %p324 = scmp.eq.s32.totalorder %s40, 3
    %p325 = por %p323, %p324
    %p327 = scmp.ne.s32.totalorder %s310, %s326
    %p328 = scmp.eq.s32.totalorder %s40, 0
    %p329 = por %p327, %p328
    %s330 = ssub.s32 %s42, %s49
    %p331 = scmp.eq.s32.totalorder %s330, 0
    %s333 = sadd.s32 %s332, 1
    %s334 = scalar_select %p331, %s332, %s333
    %p337 = pneg %p331
    %p338 = scmp.eq.s32.totalorder %s34, 3
    %p339 = por %p337, %p338
    %p340 = scmp.ne.s32.totalorder %s332, %s335
    %p341 = scmp.eq.s32.totalorder %s34, 0
    %p342 = por %p340, %p341
    %p343 = scmp.ne.s32.totalorder %s332, %s335
    %p344 = scmp.eq.s32.totalorder %s39, 3
    %p345 = por %p343, %p344
    %p346 = scmp.ne.s32.totalorder %s335, %s336
    %p347 = scmp.eq.s32.totalorder %s39, 0
    %p348 = por %p346, %p347
    %p349 = scmp.ne.s32.totalorder %s335, %s336
    %p350 = scmp.eq.s32.totalorder %s40, 3
    %p351 = por %p349, %p350
    %p353 = scmp.ne.s32.totalorder %s336, %s352
    %p354 = scmp.eq.s32.totalorder %s40, 0
    %p355 = por %p353, %p354
    %s356 = ssub.s32 %s42, %s49
    %p357 = scmp.eq.s32.totalorder %s356, 0
    %s359 = sadd.s32 %s358, 1
    %s360 = scalar_select %p357, %s358, %s359
    %p363 = pneg %p357
    %p364 = scmp.eq.s32.totalorder %s34, 3
    %p365 = por %p363, %p364
    %p366 = scmp.ne.s32.totalorder %s358, %s361
    %p367 = scmp.eq.s32.totalorder %s34, 0
    %p368 = por %p366, %p367
    %p369 = scmp.ne.s32.totalorder %s358, %s361
    %p370 = scmp.eq.s32.totalorder %s39, 3
    %p371 = por %p369, %p370
    %p372 = scmp.ne.s32.totalorder %s361, %s362
    %p373 = scmp.eq.s32.totalorder %s39, 0
    %p374 = por %p372, %p373
    %p375 = scmp.ne.s32.totalorder %s361, %s362
    %p376 = scmp.eq.s32.totalorder %s40, 3
    %p377 = por %p375, %p376
    %p379 = scmp.ne.s32.totalorder %s362, %s378
    %p380 = scmp.eq.s32.totalorder %s40, 0
    %p381 = por %p379, %p380
    %s382 = ssub.s32 %s42, %s49
    %p383 = scmp.eq.s32.totalorder %s382, 0
    %s385 = sadd.s32 %s384, 1
    %s386 = scalar_select %p383, %s384, %s385
    %p389 = pneg %p383
    %p390 = scmp.eq.s32.totalorder %s34, 3
    %p391 = por %p389, %p390
    %p392 = scmp.ne.s32.totalorder %s384, %s387
    %p393 = scmp.eq.s32.totalorder %s34, 0
    %p394 = por %p392, %p393
    %p395 = scmp.ne.s32.totalorder %s384, %s387
    %p396 = scmp.eq.s32.totalorder %s39, 3
    %p397 = por %p395, %p396
    %p398 = scmp.ne.s32.totalorder %s387, %s388
    %p399 = scmp.eq.s32.totalorder %s39, 0
    %p400 = por %p398, %p399
    %p401 = scmp.ne.s32.totalorder %s387, %s388
    %p402 = scmp.eq.s32.totalorder %s40, 3
    %p403 = por %p401, %p402
    %p405 = scmp.ne.s32.totalorder %s388, %s404
    %p406 = scmp.eq.s32.totalorder %s40, 0
    %p407 = por %p405, %p406
    %s408 = ssub.s32 %s42, %s49
    %p409 = scmp.eq.s32.totalorder %s408, 0
    %s411 = sadd.s32 %s410, 1
    %s412 = scalar_select %p409, %s410, %s411
    %p415 = pneg %p409
    %p416 = scmp.eq.s32.totalorder %s34, 3
    %p417 = por %p415, %p416
    %p418 = scmp.ne.s32.totalorder %s410, %s413
    %p419 = scmp.eq.s32.totalorder %s34, 0
    %p420 = por %p418, %p419
    %p421 = scmp.ne.s32.totalorder %s410, %s413
    %p422 = scmp.eq.s32.totalorder %s39, 3
    %p423 = por %p421, %p422
    %p424 = scmp.ne.s32.totalorder %s413, %s414
    %p425 = scmp.eq.s32.totalorder %s39, 0
    %p426 = por %p424, %p425
    %p427 = scmp.ne.s32.totalorder %s413, %s414
    %p428 = scmp.eq.s32.totalorder %s40, 3
    %p429 = por %p427, %p428
    %p431 = scmp.ne.s32.totalorder %s414, %s430
    %p432 = scmp.eq.s32.totalorder %s40, 0
    %p433 = por %p431, %p432
    %s434 = ssub.s32 %s42, %s49
    %p435 = scmp.eq.s32.totalorder %s434, 0
    %s437 = sadd.s32 %s436, 1
    %s438 = scalar_select %p435, %s436, %s437
    %p441 = pneg %p435
    %p442 = scmp.eq.s32.totalorder %s34, 3
    %p443 = por %p441, %p442
    %p444 = scmp.ne.s32.totalorder %s436, %s439
    %p445 = scmp.eq.s32.totalorder %s34, 0
    %p446 = por %p444, %p445
    %p447 = scmp.ne.s32.totalorder %s436, %s439
    %p448 = scmp.eq.s32.totalorder %s39, 3
    %p449 = por %p447, %p448
    %p450 = scmp.ne.s32.totalorder %s439, %s440
    %p451 = scmp.eq.s32.totalorder %s39, 0
    %p452 = por %p450, %p451
    %p453 = scmp.ne.s32.totalorder %s439, %s440
    %p454 = scmp.eq.s32.totalorder %s40, 3
    %p455 = por %p453, %p454
    %p457 = scmp.ne.s32.totalorder %s440, %s456
    %p458 = scmp.eq.s32.totalorder %s40, 0
    %p459 = por %p457, %p458
    %s461 = sadd.s32 %s460, 1
    %p464 = scmp.eq.s32.totalorder %s34, 3
    %p465 = scmp.ne.s32.totalorder %s460, %s462
    %p466 = scmp.eq.s32.totalorder %s34, 0
    %p467 = por %p465, %p466
    %p468 = scmp.ne.s32.totalorder %s460, %s462
    %p469 = scmp.eq.s32.totalorder %s39, 3
    %p470 = por %p468, %p469
    %p471 = scmp.ne.s32.totalorder %s462, %s463
    %p472 = scmp.eq.s32.totalorder %s39, 0
    %p473 = por %p471, %p472
    %p474 = scmp.ne.s32.totalorder %s462, %s463
    %p475 = scmp.eq.s32.totalorder %s40, 3
    %p476 = por %p474, %p475
    %p478 = scmp.ne.s32.totalorder %s463, %s477
    %p479 = scmp.eq.s32.totalorder %s40, 0
    %p480 = por %p478, %p479
    %s482 = sadd.s32 %s481, 1
    %p485 = scmp.eq.s32.totalorder %s34, 3
    %p486 = scmp.ne.s32.totalorder %s481, %s483
    %p487 = scmp.eq.s32.totalorder %s34, 0
    %p488 = por %p486, %p487
    %p489 = scmp.ne.s32.totalorder %s481, %s483
    %p490 = scmp.eq.s32.totalorder %s39, 3
    %p491 = por %p489, %p490
    %p492 = scmp.ne.s32.totalorder %s483, %s484
    %p493 = scmp.eq.s32.totalorder %s39, 0
    %p494 = por %p492, %p493
    %p495 = scmp.ne.s32.totalorder %s483, %s484
    %p496 = scmp.eq.s32.totalorder %s40, 3
    %p497 = por %p495, %p496
    %p499 = scmp.ne.s32.totalorder %s484, %s498
    %p500 = scmp.eq.s32.totalorder %s40, 0
    %p501 = por %p499, %p500
    %s503 = sadd.s32 %s502, 1
    %p506 = scmp.eq.s32.totalorder %s34, 3
    %p507 = scmp.ne.s32.totalorder %s502, %s504
    %p508 = scmp.eq.s32.totalorder %s34, 0
    %p509 = por %p507, %p508
    %p510 = scmp.ne.s32.totalorder %s502, %s504
    %p511 = scmp.eq.s32.totalorder %s39, 3
    %p512 = por %p510, %p511
    %p513 = scmp.ne.s32.totalorder %s504, %s505
    %p514 = scmp.eq.s32.totalorder %s39, 0
    %p515 = por %p513, %p514
    %p516 = scmp.ne.s32.totalorder %s504, %s505
    %p517 = scmp.eq.s32.totalorder %s40, 3
    %p518 = por %p516, %p517
    %p520 = scmp.ne.s32.totalorder %s505, %s519
    %p521 = scmp.eq.s32.totalorder %s40, 0
    %p522 = por %p520, %p521
    %s524 = sadd.s32 %s523, 1
    %p527 = scmp.eq.s32.totalorder %s34, 3
    %p528 = scmp.ne.s32.totalorder %s523, %s525
    %p529 = scmp.eq.s32.totalorder %s34, 0
    %p530 = por %p528, %p529
    %p531 = scmp.ne.s32.totalorder %s523, %s525
    %p532 = scmp.eq.s32.totalorder %s39, 3
    %p533 = por %p531, %p532
    %p534 = scmp.ne.s32.totalorder %s525, %s526
    %p535 = scmp.eq.s32.totalorder %s39, 0
    %p536 = por %p534, %p535
    %p537 = scmp.ne.s32.totalorder %s525, %s526
    %p538 = scmp.eq.s32.totalorder %s40, 3
    %p539 = por %p537, %p538
    %p541 = scmp.ne.s32.totalorder %s526, %s540
    %p542 = scmp.eq.s32.totalorder %s40, 0
    %p543 = por %p541, %p542
    %s545 = sadd.s32 %s544, 1
    %p548 = scmp.eq.s32.totalorder %s34, 3
    %p549 = scmp.ne.s32.totalorder %s544, %s546
    %p550 = scmp.eq.s32.totalorder %s34, 0
    %p551 = por %p549, %p550
    %p552 = scmp.ne.s32.totalorder %s544, %s546
    %p553 = scmp.eq.s32.totalorder %s39, 3
    %p554 = por %p552, %p553
    %p555 = scmp.ne.s32.totalorder %s546, %s547
    %p556 = scmp.eq.s32.totalorder %s39, 0
    %p557 = por %p555, %p556
    %p558 = scmp.ne.s32.totalorder %s546, %s547
    %p559 = scmp.eq.s32.totalorder %s40, 3
    %p560 = por %p558, %p559
    %p562 = scmp.ne.s32.totalorder %s547, %s561
    %p563 = scmp.eq.s32.totalorder %s40, 0
    %p564 = por %p562, %p563
    %s566 = sadd.s32 %s565, 1
    %p569 = scmp.eq.s32.totalorder %s34, 3
    %p570 = scmp.ne.s32.totalorder %s565, %s567
    %p571 = scmp.eq.s32.totalorder %s34, 0
    %p572 = por %p570, %p571
    %p573 = scmp.ne.s32.totalorder %s565, %s567
    %p574 = scmp.eq.s32.totalorder %s39, 3
    %p575 = por %p573, %p574
    %p576 = scmp.ne.s32.totalorder %s567, %s568
    %p577 = scmp.eq.s32.totalorder %s39, 0
    %p578 = por %p576, %p577
    %p579 = scmp.ne.s32.totalorder %s567, %s568
    %p580 = scmp.eq.s32.totalorder %s40, 3
    %p581 = por %p579, %p580
    %p583 = scmp.ne.s32.totalorder %s568, %s582
    %p584 = scmp.eq.s32.totalorder %s40, 0
    %p585 = por %p583, %p584
    %s587 = sadd.s32 %s586, 1
    %p590 = scmp.eq.s32.totalorder %s34, 3
    %p591 = scmp.ne.s32.totalorder %s586, %s588
    %p592 = scmp.eq.s32.totalorder %s34, 0
    %p593 = por %p591, %p592
    %p594 = scmp.ne.s32.totalorder %s586, %s588
    %p595 = scmp.eq.s32.totalorder %s39, 3
    %p596 = por %p594, %p595
    %p597 = scmp.ne.s32.totalorder %s588, %s589
    %p598 = scmp.eq.s32.totalorder %s39, 0
    %p599 = por %p597, %p598
    %p600 = scmp.ne.s32.totalorder %s588, %s589
    %p601 = scmp.eq.s32.totalorder %s40, 3
    %p602 = por %p600, %p601
    %p604 = scmp.ne.s32.totalorder %s589, %s603
    %p605 = scmp.eq.s32.totalorder %s40, 0
    %p606 = por %p604, %p605
    %s608 = sadd.s32 %s607, 1
    %p611 = scmp.eq.s32.totalorder %s34, 3
    %p612 = scmp.ne.s32.totalorder %s607, %s609
    %p613 = scmp.eq.s32.totalorder %s34, 0
    %p614 = por %p612, %p613
    %p615 = scmp.ne.s32.totalorder %s607, %s609
    %p616 = scmp.eq.s32.totalorder %s39, 3
    %p617 = por %p615, %p616
    %p618 = scmp.ne.s32.totalorder %s609, %s610
    %p619 = scmp.eq.s32.totalorder %s39, 0
    %p620 = por %p618, %p619
    %p621 = scmp.ne.s32.totalorder %s609, %s610
    %p622 = scmp.eq.s32.totalorder %s40, 3
    %p623 = por %p621, %p622
    %p625 = scmp.ne.s32.totalorder %s610, %s624
    %p626 = scmp.eq.s32.totalorder %s40, 0
    %p627 = por %p625, %p626
    %s628 = ssub.s32 %s41, %s53
    %p629 = scmp.eq.s32.totalorder %s628, 0
    %s631 = sadd.s32 %s630, 1
    %s632 = scalar_select %p629, %s630, %s631
    %p635 = pneg %p629
    %p636 = scmp.eq.s32.totalorder %s34, 3
    %p637 = por %p635, %p636
    %p638 = scmp.ne.s32.totalorder %s630, %s633
    %p639 = scmp.eq.s32.totalorder %s34, 0
    %p640 = por %p638, %p639
    %p641 = scmp.ne.s32.totalorder %s630, %s633
    %p642 = scmp.eq.s32.totalorder %s39, 3
    %p643 = por %p641, %p642
    %p644 = scmp.ne.s32.totalorder %s633, %s634
    %p645 = scmp.eq.s32.totalorder %s39, 0
    %p646 = por %p644, %p645
    %p647 = scmp.ne.s32.totalorder %s633, %s634
    %p648 = scmp.eq.s32.totalorder %s40, 3
    %p649 = por %p647, %p648
    %p651 = scmp.ne.s32.totalorder %s634, %s650
    %p652 = scmp.eq.s32.totalorder %s40, 0
    %p653 = por %p651, %p652
    %s654 = ssub.s32 %s41, %s53
    %p655 = scmp.eq.s32.totalorder %s654, 0
    %s657 = sadd.s32 %s656, 1
    %s658 = scalar_select %p655, %s656, %s657
    %p661 = pneg %p655
    %p662 = scmp.eq.s32.totalorder %s34, 3
    %p663 = por %p661, %p662
    %p664 = scmp.ne.s32.totalorder %s656, %s659
    %p665 = scmp.eq.s32.totalorder %s34, 0
    %p666 = por %p664, %p665
    %p667 = scmp.ne.s32.totalorder %s656, %s659
    %p668 = scmp.eq.s32.totalorder %s39, 3
    %p669 = por %p667, %p668
    %p670 = scmp.ne.s32.totalorder %s659, %s660
    %p671 = scmp.eq.s32.totalorder %s39, 0
    %p672 = por %p670, %p671
    %p673 = scmp.ne.s32.totalorder %s659, %s660
    %p674 = scmp.eq.s32.totalorder %s40, 3
    %p675 = por %p673, %p674
    %p677 = scmp.ne.s32.totalorder %s660, %s676
    %p678 = scmp.eq.s32.totalorder %s40, 0
    %p679 = por %p677, %p678
    %s680 = ssub.s32 %s41, %s53
    %p681 = scmp.eq.s32.totalorder %s680, 0
    %s683 = sadd.s32 %s682, 1
    %s684 = scalar_select %p681, %s682, %s683
    %p687 = pneg %p681
    %p688 = scmp.eq.s32.totalorder %s34, 3
    %p689 = por %p687, %p688
    %p690 = scmp.ne.s32.totalorder %s682, %s685
    %p691 = scmp.eq.s32.totalorder %s34, 0
    %p692 = por %p690, %p691
    %p693 = scmp.ne.s32.totalorder %s682, %s685
    %p694 = scmp.eq.s32.totalorder %s39, 3
    %p695 = por %p693, %p694
    %p696 = scmp.ne.s32.totalorder %s685, %s686
    %p697 = scmp.eq.s32.totalorder %s39, 0
    %p698 = por %p696, %p697
    %p699 = scmp.ne.s32.totalorder %s685, %s686
    %p700 = scmp.eq.s32.totalorder %s40, 3
    %p701 = por %p699, %p700
    %p703 = scmp.ne.s32.totalorder %s686, %s702
    %p704 = scmp.eq.s32.totalorder %s40, 0
    %p705 = por %p703, %p704
    %s706 = ssub.s32 %s41, %s53
    %p707 = scmp.eq.s32.totalorder %s706, 0
    %s709 = sadd.s32 %s708, 1
    %s710 = scalar_select %p707, %s708, %s709
    %p713 = pneg %p707
    %p714 = scmp.eq.s32.totalorder %s34, 3
    %p715 = por %p713, %p714
    %p716 = scmp.ne.s32.totalorder %s708, %s711
    %p717 = scmp.eq.s32.totalorder %s34, 0
    %p718 = por %p716, %p717
    %p719 = scmp.ne.s32.totalorder %s708, %s711
    %p720 = scmp.eq.s32.totalorder %s39, 3
    %p721 = por %p719, %p720
    %p722 = scmp.ne.s32.totalorder %s711, %s712
    %p723 = scmp.eq.s32.totalorder %s39, 0
    %p724 = por %p722, %p723
    %p725 = scmp.ne.s32.totalorder %s711, %s712
    %p726 = scmp.eq.s32.totalorder %s40, 3
    %p727 = por %p725, %p726
    %p729 = scmp.ne.s32.totalorder %s712, %s728
    %p730 = scmp.eq.s32.totalorder %s40, 0
    %p731 = por %p729, %p730
    %p732 = scmp.le.s32.totalorder 1, %s34
    %p733 = scmp.lt.s32.totalorder %s34, 5
    %p734 = pnand %p732, %p733
    %p735 = pneg %p734
    // Predicated region
    $region9: #{qa_model_forward.1} parent=5 // pred_check
      _
    $region10: #{qa_model_forward.1} parent=5 // pred_check_branch
      %737 = sbr.rel (%p734) target = $region12
    $region11: #{qa_model_forward.1} parent=5 // pred_region
      %s738 = ssub.s32 %s34, 1
      // Predicated region
      $region13: #{qa_model_forward.1} parent=11 // pred_check
        %p739 = pneg %p119
      $region14: #{qa_model_forward.1} parent=11 // pred_check_branch
        %741 = sbr.rel (%p739) target = $region16
      $region15: #{qa_model_forward.1} parent=11 // pred_region
        _
      $region16: #{qa_model_forward.1} parent=11 // pred_fallthru
        _
      // Predicated region
      $region17: #{qa_model_forward.1} parent=11 // pred_check
        %p742 = pneg %p140
      $region18: #{qa_model_forward.1} parent=11 // pred_check_branch
        %744 = sbr.rel (%p742) target = $region20
      $region19: #{qa_model_forward.1} parent=11 // pred_region
        _
      $region20: #{qa_model_forward.1} parent=11 // pred_fallthru
        _
      // Predicated region
      $region21: #{qa_model_forward.1} parent=11 // pred_check
        %p745 = pneg %p473
      $region22: #{qa_model_forward.1} parent=11 // pred_check_branch
        %747 = sbr.rel (%p745) target = $region24
      $region23: #{qa_model_forward.1} parent=11 // pred_region
        _
      $region24: #{qa_model_forward.1} parent=11 // pred_fallthru
        _
      // Predicated region
      $region25: #{qa_model_forward.1} parent=11 // pred_check
        %p748 = pneg %p494
      $region26: #{qa_model_forward.1} parent=11 // pred_check_branch
        %750 = sbr.rel (%p748) target = $region28
      $region27: #{qa_model_forward.1} parent=11 // pred_region
        _
      $region28: #{qa_model_forward.1} parent=11 // pred_fallthru
        _
      // Predicated region
      $region29: #{qa_model_forward.1} parent=11 // pred_check
        %p751 = pneg %p515
      $region30: #{qa_model_forward.1} parent=11 // pred_check_branch
        %753 = sbr.rel (%p751) target = $region32
      $region31: #{qa_model_forward.1} parent=11 // pred_region
        _
      $region32: #{qa_model_forward.1} parent=11 // pred_fallthru
        _
      // Predicated region
      $region33: #{qa_model_forward.1} parent=11 // pred_check
        %p754 = pneg %p536
      $region34: #{qa_model_forward.1} parent=11 // pred_check_branch
        %756 = sbr.rel (%p754) target = $region36
      $region35: #{qa_model_forward.1} parent=11 // pred_region
        _
      $region36: #{qa_model_forward.1} parent=11 // pred_fallthru
        _
      // Predicated region
      $region37: #{qa_model_forward.1} parent=11 // pred_check
        %p757 = pneg %p557
      $region38: #{qa_model_forward.1} parent=11 // pred_check_branch
        %759 = sbr.rel (%p757) target = $region40
      $region39: #{qa_model_forward.1} parent=11 // pred_region
        _
      $region40: #{qa_model_forward.1} parent=11 // pred_fallthru
        _
      // Predicated region
      $region41: #{qa_model_forward.1} parent=11 // pred_check
        %p760 = pneg %p578
      $region42: #{qa_model_forward.1} parent=11 // pred_check_branch
        %762 = sbr.rel (%p760) target = $region44
      $region43: #{qa_model_forward.1} parent=11 // pred_region
        _
      $region44: #{qa_model_forward.1} parent=11 // pred_fallthru
        _
      // Predicated region
      $region45: #{qa_model_forward.1} parent=11 // pred_check
        %p763 = pneg %p599
      $region46: #{qa_model_forward.1} parent=11 // pred_check_branch
        %765 = sbr.rel (%p763) target = $region48
      $region47: #{qa_model_forward.1} parent=11 // pred_region
        _
      $region48: #{qa_model_forward.1} parent=11 // pred_fallthru
        _
      // Predicated region
      $region49: #{qa_model_forward.1} parent=11 // pred_check
        %p766 = pneg %p620
      $region50: #{qa_model_forward.1} parent=11 // pred_check_branch
        %768 = sbr.rel (%p766) target = $region52
      $region51: #{qa_model_forward.1} parent=11 // pred_region
        _
      $region52: #{qa_model_forward.1} parent=11 // pred_fallthru
        _
    $region12: #{qa_model_forward.1} parent=5 // pred_fallthru
      _
    %p769 = scmp.lt.s32.totalorder %s34, 4
    // Predicated region
    $region53: #{qa_model_forward.1} parent=5 // pred_check
      %p770 = pneg %p769
    $region54: #{qa_model_forward.1} parent=5 // pred_check_branch
      %772 = sbr.rel (%p770) target = $region56
    $region55: #{qa_model_forward.1} parent=5 // pred_region
      // Predicated region
      $region57: #{qa_model_forward.1} parent=55 // pred_check
        %p773 = pneg %p66
      $region58: #{qa_model_forward.1} parent=55 // pred_check_branch
        %775 = sbr.rel (%p773) target = $region60
      $region59: #{qa_model_forward.1} parent=55 // pred_region
        %p776 = scmp.lt.s32.totalorder %s41, 1
        %s777 = scalar_select %p776, %s41, 1
        %s778 = scalar_lea.vmem %s0, %s777
      $region60: #{qa_model_forward.1} parent=55 // pred_fallthru
        _
      // Predicated region
      $region61: #{qa_model_forward.1} parent=55 // pred_check
        %p779 = pneg %p92
      $region62: #{qa_model_forward.1} parent=55 // pred_check_branch
        %781 = sbr.rel (%p779) target = $region64
      $region63: #{qa_model_forward.1} parent=55 // pred_region
        %p782 = scmp.lt.s32.totalorder %s41, 1
        %s783 = scalar_select %p782, %s41, 1
        %s784 = smul.addr %s783, 8
        %s785 = scalar_lea.vmem %s1, %s784
      $region64: #{qa_model_forward.1} parent=55 // pred_fallthru
        _
      // Predicated region
      $region65: #{qa_model_forward.1} parent=55 // pred_check
        %p786 = pneg %p160
      $region66: #{qa_model_forward.1} parent=55 // pred_check_branch
        %788 = sbr.rel (%p786) target = $region68
      $region67: #{qa_model_forward.1} parent=55 // pred_region
        %p789 = scmp.lt.s32.totalorder %s42, 1
        %s790 = scalar_select %p789, %s42, 1
        %s791 = smul.addr %s790, 48
        %s792 = smul.addr %s791, 4
        %s793 = scalar_lea.vmem %s4, %s792
      $region68: #{qa_model_forward.1} parent=55 // pred_fallthru
        _
      // Predicated region
      $region69: #{qa_model_forward.1} parent=55 // pred_check
        %p794 = pneg %p186
      $region70: #{qa_model_forward.1} parent=55 // pred_check_branch
        %796 = sbr.rel (%p794) target = $region72
      $region71: #{qa_model_forward.1} parent=55 // pred_region
        %p797 = scmp.lt.s32.totalorder %s42, 1
        %s798 = scalar_select %p797, %s42, 1
        %s799 = smul.addr %s798, 3
        %s800 = scalar_lea.vmem %s5, %s799
      $region72: #{qa_model_forward.1} parent=55 // pred_fallthru
        _
      // Predicated region
      $region73: #{qa_model_forward.1} parent=55 // pred_check
        %p801 = pneg %p212
      $region74: #{qa_model_forward.1} parent=55 // pred_check_branch
        %803 = sbr.rel (%p801) target = $region76
      $region75: #{qa_model_forward.1} parent=55 // pred_region
        %p804 = scmp.lt.s32.totalorder %s42, 1
        %s805 = scalar_select %p804, %s42, 1
        %s806 = smul.addr %s805, 16
        %s807 = smul.addr %s806, 4
        %s808 = scalar_lea.vmem %s6, %s807
      $region76: #{qa_model_forward.1} parent=55 // pred_fallthru
        _
      // Predicated region
      $region77: #{qa_model_forward.1} parent=55 // pred_check
        %p809 = pneg %p238
      $region78: #{qa_model_forward.1} parent=55 // pred_check_branch
        %811 = sbr.rel (%p809) target = $region80
      $region79: #{qa_model_forward.1} parent=55 // pred_region
        %p812 = scmp.lt.s32.totalorder %s42, 1
        %s813 = scalar_select %p812, %s42, 1
        %s814 = scalar_lea.vmem %s7, %s813
      $region80: #{qa_model_forward.1} parent=55 // pred_fallthru
        _
      // Predicated region
      $region81: #{qa_model_forward.1} parent=55 // pred_check
        %p815 = pneg %p264
      $region82: #{qa_model_forward.1} parent=55 // pred_check_branch
        %817 = sbr.rel (%p815) target = $region84
      $region83: #{qa_model_forward.1} parent=55 // pred_region
        %p818 = scmp.lt.s32.totalorder %s42, 1
        %s819 = scalar_select %p818, %s42, 1
        %s820 = scalar_lea.vmem %s8, %s819
      $region84: #{qa_model_forward.1} parent=55 // pred_fallthru
        _
      // Predicated region
      $region85: #{qa_model_forward.1} parent=55 // pred_check
        %p821 = pneg %p290
      $region86: #{qa_model_forward.1} parent=55 // pred_check_branch
        %823 = sbr.rel (%p821) target = $region88
      $region87: #{qa_model_forward.1} parent=55 // pred_region
        %p824 = scmp.lt.s32.totalorder %s42, 1
        %s825 = scalar_select %p824, %s42, 1
        %s826 = scalar_lea.vmem %s9, %s825
      $region88: #{qa_model_forward.1} parent=55 // pred_fallthru
        _
      // Predicated region
      $region89: #{qa_model_forward.1} parent=55 // pred_check
        %p827 = pneg %p316
      $region90: #{qa_model_forward.1} parent=55 // pred_check_branch
        %829 = sbr.rel (%p827) target = $region92
      $region91: #{qa_model_forward.1} parent=55 // pred_region
        %p830 = scmp.lt.s32.totalorder %s42, 1
        %s831 = scalar_select %p830, %s42, 1
        %s832 = smul.addr %s831, 64
        %s833 = smul.addr %s832, 4
        %s834 = scalar_lea.vmem %s10, %s833
      $region92: #{qa_model_forward.1} parent=55 // pred_fallthru
        _
      // Predicated region
      $region93: #{qa_model_forward.1} parent=55 // pred_check
        %p835 = pneg %p342
      $region94: #{qa_model_forward.1} parent=55 // pred_check_branch
        %837 = sbr.rel (%p835) target = $region96
      $region95: #{qa_model_forward.1} parent=55 // pred_region
        %p838 = scmp.lt.s32.totalorder %s42, 1
        %s839 = scalar_select %p838, %s42, 1
        %s840 = smul.addr %s839, 4
        %s841 = scalar_lea.vmem %s11, %s840
      $region96: #{qa_model_forward.1} parent=55 // pred_fallthru
        _
      // Predicated region
      $region97: #{qa_model_forward.1} parent=55 // pred_check
        %p842 = pneg %p368
      $region98: #{qa_model_forward.1} parent=55 // pred_check_branch
        %844 = sbr.rel (%p842) target = $region100
      $region99: #{qa_model_forward.1} parent=55 // pred_region
        %p845 = scmp.lt.s32.totalorder %s42, 1
        %s846 = scalar_select %p845, %s42, 1
        %s847 = smul.addr %s846, 64
        %s848 = smul.addr %s847, 4
        %s849 = scalar_lea.vmem %s12, %s848
      $region100: #{qa_model_forward.1} parent=55 // pred_fallthru
        _
      // Predicated region
      $region101: #{qa_model_forward.1} parent=55 // pred_check
        %p850 = pneg %p394
      $region102: #{qa_model_forward.1} parent=55 // pred_check_branch
        %852 = sbr.rel (%p850) target = $region104
      $region103: #{qa_model_forward.1} parent=55 // pred_region
        %p853 = scmp.lt.s32.totalorder %s42, 1
        %s854 = scalar_select %p853, %s42, 1
        %s855 = scalar_lea.vmem %s13, %s854
      $region104: #{qa_model_forward.1} parent=55 // pred_fallthru
        _
      // Predicated region
      $region105: #{qa_model_forward.1} parent=55 // pred_check
        %p856 = pneg %p420
      $region106: #{qa_model_forward.1} parent=55 // pred_check_branch
        %858 = sbr.rel (%p856) target = $region108
      $region107: #{qa_model_forward.1} parent=55 // pred_region
        %p859 = scmp.lt.s32.totalorder %s42, 1
        %s860 = scalar_select %p859, %s42, 1
        %s861 = scalar_lea.vmem %s14, %s860
      $region108: #{qa_model_forward.1} parent=55 // pred_fallthru
        _
      // Predicated region
      $region109: #{qa_model_forward.1} parent=55 // pred_check
        %p862 = pneg %p446
      $region110: #{qa_model_forward.1} parent=55 // pred_check_branch
        %864 = sbr.rel (%p862) target = $region112
      $region111: #{qa_model_forward.1} parent=55 // pred_region
        %p865 = scmp.lt.s32.totalorder %s42, 1
        %s866 = scalar_select %p865, %s42, 1
        %s867 = scalar_lea.vmem %s15, %s866
      $region112: #{qa_model_forward.1} parent=55 // pred_fallthru
        _
    $region56: #{qa_model_forward.1} parent=5 // pred_fallthru
      _
    %p868 = scmp.le.s32.totalorder 1, %s34
    %p869 = scmp.lt.s32.totalorder %s34, 5
    %p870 = pnand %p868, %p869
    %p871 = pneg %p870
    // Predicated region
    $region113: #{qa_model_forward.1} parent=5 // pred_check
      _
    $region114: #{qa_model_forward.1} parent=5 // pred_check_branch
      %873 = sbr.rel (%p870) target = $region116
    $region115: #{qa_model_forward.1} parent=5 // pred_region
      %s874 = ssub.s32 %s34, 1
      %p875 = scmp.lt.s32.totalorder %s43, 1
      %s876 = scalar_select %p875, %s43, 1
      %s877 = scalar_lea.vmem %s0, %s876
      %p878 = pneg %p72
      %p879 = pneg %p69
      %p880 = scmp.lt.s32.totalorder %s43, 1
      %s881 = scalar_select %p880, %s43, 1
      %s882 = smul.addr %s881, 8
      %s883 = scalar_lea.vmem %s1, %s882
      %p884 = pneg %p98
      %p885 = pneg %p95
      %p886 = pneg %p119
      %p887 = pneg %p116
      %p888 = pneg %p140
      %p889 = pneg %p137
      %p890 = scmp.lt.s32.totalorder %s44, 1
      %s891 = scalar_select %p890, %s44, 1
      %s892 = smul.addr %s891, 48
      %s893 = smul.addr %s892, 4
      %s894 = scalar_lea.vmem %s4, %s893
      %p895 = pneg %p166
      %p896 = pneg %p163
      %p897 = scmp.lt.s32.totalorder %s44, 1
      %s898 = scalar_select %p897, %s44, 1
      %s899 = smul.addr %s898, 3
      %s900 = scalar_lea.vmem %s5, %s899
      %p901 = pneg %p192
      %p902 = pneg %p189
      %p903 = scmp.lt.s32.totalorder %s44, 1
      %s904 = scalar_select %p903, %s44, 1
      %s905 = smul.addr %s904, 16
      %s906 = smul.addr %s905, 4
      %s907 = scalar_lea.vmem %s6, %s906
      %p908 = pneg %p218
      %p909 = pneg %p215
      %p910 = scmp.lt.s32.totalorder %s44, 1
      %s911 = scalar_select %p910, %s44, 1
      %s912 = scalar_lea.vmem %s7, %s911
      %p913 = pneg %p244
      %p914 = pneg %p241
      %p915 = scmp.lt.s32.totalorder %s44, 1
      %s916 = scalar_select %p915, %s44, 1
      %s917 = scalar_lea.vmem %s8, %s916
      %p918 = pneg %p270
      %p919 = pneg %p267
      %p920 = scmp.lt.s32.totalorder %s44, 1
      %s921 = scalar_select %p920, %s44, 1
      %s922 = scalar_lea.vmem %s9, %s921
      %p923 = pneg %p296
      %p924 = pneg %p293
      %p925 = scmp.lt.s32.totalorder %s44, 1
      %s926 = scalar_select %p925, %s44, 1
      %s927 = smul.addr %s926, 64
      %s928 = smul.addr %s927, 4
      %s929 = scalar_lea.vmem %s10, %s928
      %p930 = pneg %p322
      %p931 = pneg %p319
      %p932 = scmp.lt.s32.totalorder %s44, 1
      %s933 = scalar_select %p932, %s44, 1
      %s934 = smul.addr %s933, 4
      %s935 = scalar_lea.vmem %s11, %s934
      %p936 = pneg %p348
      %p937 = pneg %p345
      %p938 = scmp.lt.s32.totalorder %s44, 1
      %s939 = scalar_select %p938, %s44, 1
      %s940 = smul.addr %s939, 64
      %s941 = smul.addr %s940, 4
      %s942 = scalar_lea.vmem %s12, %s941
      %p943 = pneg %p374
      %p944 = pneg %p371
      %p945 = scmp.lt.s32.totalorder %s44, 1
      %s946 = scalar_select %p945, %s44, 1
      %s947 = scalar_lea.vmem %s13, %s946
      %p948 = pneg %p400
      %p949 = pneg %p397
      %p950 = scmp.lt.s32.totalorder %s44, 1
      %s951 = scalar_select %p950, %s44, 1
      %s952 = scalar_lea.vmem %s14, %s951
      %p953 = pneg %p426
      %p954 = pneg %p423
      %p955 = scmp.lt.s32.totalorder %s44, 1
      %s956 = scalar_select %p955, %s44, 1
      %s957 = scalar_lea.vmem %s15, %s956
      %p958 = pneg %p452
      %p959 = pneg %p449
      %p960 = pneg %p473
      %p961 = pneg %p470
      %p962 = pneg %p494
      %p963 = pneg %p491
      %p964 = pneg %p515
      %p965 = pneg %p512
      %p966 = pneg %p536
      %p967 = pneg %p533
      %p968 = pneg %p557
      %p969 = pneg %p554
      %p970 = pneg %p578
      %p971 = pneg %p575
      %p972 = pneg %p599
      %p973 = pneg %p596
      %p974 = pneg %p620
      %p975 = pneg %p617
      %p976 = pneg %p646
      %p977 = pneg %p643
      %p978 = scmp.lt.s32.totalorder %s43, 1
      %s979 = scalar_select %p978, %s43, 1
      %s980 = smul.addr %s979, 8
      %s981 = scalar_lea.vmem %s24, %s980
      %p982 = pneg %p672
      %p983 = pneg %p669
      %p984 = scmp.lt.s32.totalorder %s43, 1
      %s985 = scalar_select %p984, %s43, 1
      %s986 = scalar_lea.vmem %s25, %s985
      %p987 = pneg %p698
      %p988 = pneg %p695
      %p989 = scmp.lt.s32.totalorder %s43, 1
      %s990 = scalar_select %p989, %s43, 1
      %s991 = smul.addr %s990, 8
      %s992 = scalar_lea.vmem %s26, %s991
      %p993 = pneg %p724
      %p994 = pneg %p721
      %p995 = scmp.lt.s32.totalorder %s43, 1
      %s996 = scalar_select %p995, %s43, 1
      %s997 = smul.addr %s996, 8
      %s998 = scalar_lea.vmem %s27, %s997
      %p999 = scmp.lt.s32.totalorder %s43, 1
      %s1000 = scalar_select %p999, %s43, 1
      %s1001 = scalar_lea.vmem %s0, %s1000
      %p1002 = scmp.lt.s32.totalorder %s43, 1
      %s1003 = scalar_select %p1002, %s43, 1
      %s1004 = smul.addr %s1003, 8
      %s1005 = scalar_lea.vmem %s1, %s1004
      %p1006 = scmp.lt.s32.totalorder %s44, 1
      %s1007 = scalar_select %p1006, %s44, 1
      %s1008 = smul.addr %s1007, 48
      %s1009 = smul.addr %s1008, 4
      %s1010 = scalar_lea.vmem %s4, %s1009
      %p1011 = scmp.lt.s32.totalorder %s44, 1
      %s1012 = scalar_select %p1011, %s44, 1
      %s1013 = smul.addr %s1012, 3
      %s1014 = scalar_lea.vmem %s5, %s1013
      %p1015 = scmp.lt.s32.totalorder %s44, 1
      %s1016 = scalar_select %p1015, %s44, 1
      %s1017 = smul.addr %s1016, 16
      %s1018 = smul.addr %s1017, 4
      %s1019 = scalar_lea.vmem %s6, %s1018
      %p1020 = scmp.lt.s32.totalorder %s44, 1
      %s1021 = scalar_select %p1020, %s44, 1
      %s1022 = scalar_lea.vmem %s7, %s1021
      %p1023 = scmp.lt.s32.totalorder %s44, 1
      %s1024 = scalar_select %p1023, %s44, 1
      %s1025 = scalar_lea.vmem %s8, %s1024
      %p1026 = scmp.lt.s32.totalorder %s44, 1
      %s1027 = scalar_select %p1026, %s44, 1
      %s1028 = scalar_lea.vmem %s9, %s1027
      %p1029 = scmp.lt.s32.totalorder %s44, 1
      %s1030 = scalar_select %p1029, %s44, 1
      %s1031 = smul.addr %s1030, 64
      %s1032 = smul.addr %s1031, 4
      %s1033 = scalar_lea.vmem %s10, %s1032
      %p1034 = scmp.lt.s32.totalorder %s44, 1
      %s1035 = scalar_select %p1034, %s44, 1
      %s1036 = smul.addr %s1035, 4
      %s1037 = scalar_lea.vmem %s11, %s1036
      %p1038 = scmp.lt.s32.totalorder %s44, 1
      %s1039 = scalar_select %p1038, %s44, 1
      %s1040 = smul.addr %s1039, 64
      %s1041 = smul.addr %s1040, 4
      %s1042 = scalar_lea.vmem %s12, %s1041
      %p1043 = scmp.lt.s32.totalorder %s44, 1
      %s1044 = scalar_select %p1043, %s44, 1
      %s1045 = scalar_lea.vmem %s13, %s1044
      %p1046 = scmp.lt.s32.totalorder %s44, 1
      %s1047 = scalar_select %p1046, %s44, 1
      %s1048 = scalar_lea.vmem %s14, %s1047
      %p1049 = scmp.lt.s32.totalorder %s44, 1
      %s1050 = scalar_select %p1049, %s44, 1
      %s1051 = scalar_lea.vmem %s15, %s1050
      %p1052 = scmp.lt.s32.totalorder %s43, 1
      %s1053 = scalar_select %p1052, %s43, 1
      %s1054 = smul.addr %s1053, 8
      %s1055 = scalar_lea.vmem %s24, %s1054
      %p1056 = scmp.lt.s32.totalorder %s43, 1
      %s1057 = scalar_select %p1056, %s43, 1
      %s1058 = scalar_lea.vmem %s25, %s1057
      %p1059 = scmp.lt.s32.totalorder %s43, 1
      %s1060 = scalar_select %p1059, %s43, 1
      %s1061 = smul.addr %s1060, 8
      %s1062 = scalar_lea.vmem %s26, %s1061
      %p1063 = scmp.lt.s32.totalorder %s43, 1
      %s1064 = scalar_select %p1063, %s43, 1
      %s1065 = smul.addr %s1064, 8
      %s1066 = scalar_lea.vmem %s27, %s1065
      %p1068 = scmp.eq.s32.totalorder %s44, 0
      // Predicated region
      $region117: #{qa_model_forward.1} parent=115 // pred_check
        %p1069 = pneg %p1068
      $region118: #{qa_model_forward.1} parent=115 // pred_check_branch
        %1071 = sbr.rel (%p1069) target = $region120
      $region119: #{qa_model_forward.1} parent=115 // pred_region
        %v1072 = vld [vmem:[%s1005] sm:$0xff]
        %v1073 = vld [vmem:[%s2] sm:$0x1]
        %v1074 = vld [vmem:[%s3] sm:$0x1]
        %1075 = vadd.xlane.f32.xlu0 %v1072
        %v1076 = vpop.xlane.xlu0 %1075
        %v1077 = vrcp.pop 128.0
        %v1078 = vmul.f32 %v1076, %v1077
        %v1079 = vsub.f32 %v1072, %v1078
        %v1080 = vmul.f32 %v1079, %v1079
        %1081 = vadd.xlane.f32.xlu0 %v1080
        %v1082 = vpop.xlane.xlu0 %1081
        %v1083 = vmul.f32 %v1082, %v1077
        %v1084 = vadd.f32 %v1083, 1e-12
        %v1085 = vrsqrt.pop %v1084
        %v1086 = vmul.f32 %v1079, %v1085
        %v1088 = vlaneseq
        %v1089 = vshrl.u32 %v1088, 7
        %v1090 = vsub.s32 0, %v1089
        %v1091 = vrot.slane %v1073, %v1090
        %v1093 = vmul.f32 %v1086, %v1091
        %v1095 = vlaneseq
        %v1096 = vshrl.u32 %v1095, 7
        %v1097 = vsub.s32 0, %v1096
        %v1098 = vrot.slane %v1074, %v1097
        %v1100 = vadd.f32 %v1093, %v1098
        %1101 = vst [vmem:[%s1055] sm:$0xff] %v1100
      $region120: #{qa_model_forward.1} parent=115 // pred_fallthru
        _
      %v1102 = vld [vmem:[%s1055] sm:$0xff]
      %v1103 = vpack.c.bf16 %v1102, %v1102
      %v1104 = vld [vmem:[%s1001] sm:$0x1]
      %v1105 = vld [vmem:[%s1010] sm:$0xff]
      %v1106 = vld [vmem:[%s1010 + $0x8] sm:$0xf]
      %v1107 = vld [vmem:[%s1010 + $0xc] sm:$0xff]
      %v1108 = vld [vmem:[%s1010 + $0x14] sm:$0xf]
      %v1109 = vld [vmem:[%s1010 + $0x18] sm:$0xff]
      %v1110 = vld [vmem:[%s1010 + $0x20] sm:$0xf]
      %v1111 = vld [vmem:[%s1010 + $0x24] sm:$0xff]
      %v1112 = vld [vmem:[%s1010 + $0x2c] sm:$0xf]
      %v1113 = vld [vmem:[%s1010 + $0x30] sm:$0xff]
      %v1114 = vld [vmem:[%s1010 + $0x38] sm:$0xf]
      %v1115 = vld [vmem:[%s1010 + $0x3c] sm:$0xff]
      %v1116 = vld [vmem:[%s1010 + $0x44] sm:$0xf]
      %v1117 = vld [vmem:[%s1010 + $0x48] sm:$0xff]
      %v1118 = vld [vmem:[%s1010 + $0x50] sm:$0xf]
      %v1119 = vld [vmem:[%s1010 + $0x54] sm:$0xff]
      %v1120 = vld [vmem:[%s1010 + $0x5c] sm:$0xf]
      %v1121 = vld [vmem:[%s1010 + $0x60] sm:$0xff]
      %v1122 = vld [vmem:[%s1010 + $0x68] sm:$0xf]
      %v1123 = vld [vmem:[%s1010 + $0x6c] sm:$0xff]
      %v1124 = vld [vmem:[%s1010 + $0x74] sm:$0xf]
      %v1125 = vld [vmem:[%s1010 + $0x78] sm:$0xff]
      %v1126 = vld [vmem:[%s1010 + $0x80] sm:$0xf]
      %v1127 = vld [vmem:[%s1010 + $0x84] sm:$0xff]
      %v1128 = vld [vmem:[%s1010 + $0x8c] sm:$0xf]
      %v1129 = vld [vmem:[%s1010 + $0x90] sm:$0xff]
      %v1130 = vld [vmem:[%s1010 + $0x98] sm:$0xf]
      %v1131 = vld [vmem:[%s1010 + $0x9c] sm:$0xff]
      %v1132 = vld [vmem:[%s1010 + $0xa4] sm:$0xf]
      %v1133 = vld [vmem:[%s1010 + $0xa8] sm:$0xff]
      %v1134 = vld [vmem:[%s1010 + $0xb0] sm:$0xf]
      %v1135 = vld [vmem:[%s1010 + $0xb4] sm:$0xff]
      %v1136 = vld [vmem:[%s1010 + $0xbc] sm:$0xf]
      %v1137 = vld [vmem:[%s1014] sm:$0x7]
      %v1139 = vlaneseq
      %v1140 = vshrl.u32 %v1139, 7
      %v1141 = vsub.s32 0, %v1140
      %v1142 = vrot.slane %v1137, %v1141
      %v1143 = vlaneseq
      %v1144 = vshrl.u32 %v1143, 7
      %v1145 = vsub.s32 1, %v1144
      %v1146 = vrot.slane %v1137, %v1145
      %v1147 = vlaneseq
      %v1148 = vshrl.u32 %v1147, 7
      %v1149 = vsub.s32 2, %v1148
      %v1150 = vrot.slane %v1137, %v1149
      %v1186 = vunpack.c.l.b16 %v1105
      %v1187 = vunpack.c.h.b16 %v1105
      %v1188 = vunpack.c.l.b16 %v1106
      %v1189 = vunpack.c.l.b16 %v1107
      %v1190 = vunpack.c.h.b16 %v1107
      %v1191 = vunpack.c.l.b16 %v1108
      %v1192 = vunpack.c.l.b16 %v1109
      %v1193 = vunpack.c.h.b16 %v1109
      %v1194 = vunpack.c.l.b16 %v1110
      %v1195 = vunpack.c.l.b16 %v1111
      %v1196 = vunpack.c.h.b16 %v1111
      %v1197 = vunpack.c.l.b16 %v1112
      %v1198 = vunpack.c.l.b16 %v1113
      %v1199 = vunpack.c.h.b16 %v1113
      %v1200 = vunpack.c.l.b16 %v1114
      %v1201 = vunpack.c.l.b16 %v1115
      %v1202 = vunpack.c.h.b16 %v1115
      %v1203 = vunpack.c.l.b16 %v1116
      %v1204 = vunpack.c.l.b16 %v1117
      %v1205 = vunpack.c.h.b16 %v1117
      %v1206 = vunpack.c.l.b16 %v1118
      %v1207 = vunpack.c.l.b16 %v1119
      %v1208 = vunpack.c.h.b16 %v1119
      %v1209 = vunpack.c.l.b16 %v1120
      %v1210 = vunpack.c.l.b16 %v1121
      %v1211 = vunpack.c.h.b16 %v1121
      %v1212 = vunpack.c.l.b16 %v1122
      %v1213 = vunpack.c.l.b16 %v1123
      %v1214 = vunpack.c.h.b16 %v1123
      %v1215 = vunpack.c.l.b16 %v1124
      %v1216 = vunpack.c.l.b16 %v1125
      %v1217 = vunpack.c.h.b16 %v1125
      %v1218 = vunpack.c.l.b16 %v1126
      %v1219 = vunpack.c.l.b16 %v1127
      %v1220 = vunpack.c.h.b16 %v1127
      %v1221 = vunpack.c.l.b16 %v1128
      %v1222 = vunpack.c.l.b16 %v1129
      %v1223 = vunpack.c.h.b16 %v1129
      %v1224 = vunpack.c.l.b16 %v1130
      %v1225 = vunpack.c.l.b16 %v1131
      %v1226 = vunpack.c.h.b16 %v1131
      %v1227 = vunpack.c.l.b16 %v1132
      %v1228 = vunpack.c.l.b16 %v1133
      %v1229 = vunpack.c.h.b16 %v1133
      %v1230 = vunpack.c.l.b16 %v1134
      %v1231 = vunpack.c.l.b16 %v1135
      %v1232 = vunpack.c.h.b16 %v1135
      %v1233 = vunpack.c.l.b16 %v1136
      %v1234 = vpack.c.b16 %v1189, %v1186
      %v1235 = vpack.c.b16 %v1190, %v1187
      %v1236 = vpack.c.b16 %v1191, %v1188
      %v1237 = vpack.c.b16 %v1195, %v1192
      %v1238 = vpack.c.b16 %v1196, %v1193
      %v1239 = vpack.c.b16 %v1197, %v1194
      %v1240 = vpack.c.b16 %v1201, %v1198
      %v1241 = vpack.c.b16 %v1202, %v1199
      %v1242 = vpack.c.b16 %v1203, %v1200
      %v1243 = vpack.c.b16 %v1207, %v1204
      %v1244 = vpack.c.b16 %v1208, %v1205
      %v1245 = vpack.c.b16 %v1209, %v1206
      %v1246 = vpack.c.b16 %v1213, %v1210
      %v1247 = vpack.c.b16 %v1214, %v1211
      %v1248 = vpack.c.b16 %v1215, %v1212
      %v1249 = vpack.c.b16 %v1219, %v1216
      %v1250 = vpack.c.b16 %v1220, %v1217
      %v1251 = vpack.c.b16 %v1221, %v1218
      %v1252 = vpack.c.b16 %v1225, %v1222
      %v1253 = vpack.c.b16 %v1226, %v1223
      %v1254 = vpack.c.b16 %v1227, %v1224
      %v1255 = vpack.c.b16 %v1231, %v1228
      %v1256 = vpack.c.b16 %v1232, %v1229
      %v1257 = vpack.c.b16 %v1233, %v1230
      %1282 = vmatprep.subr.bf16.mxu0 %v1235
      %1283 = vmatpush1.bf16.msra.mxu0 %v1234
      %1284 = vmatprep.subr.bf16.mxu0 %v1238
      %1285 = vmatpush1.bf16.msra.mxu0 %v1237
      %1286 = vmatprep.subr.bf16.mxu0 %v1241
      %1287 = vmatpush1.bf16.msra.mxu0 %v1240
      %1288 = vmatprep.subr.bf16.mxu0 %v1244
      %1289 = vmatpush1.bf16.msra.mxu0 %v1243
      %1290 = vmatprep.subr.bf16.mxu0 %v1247
      %1291 = vmatpush1.bf16.msra.mxu0 %v1246
      %1292 = vmatprep.subr.bf16.mxu0 %v1250
      %1293 = vmatpush1.bf16.msra.mxu0 %v1249
      %1294 = vmatprep.subr.bf16.mxu0 %v1253
      %1295 = vmatpush1.bf16.msra.mxu0 %v1252
      %1296 = vmatprep.subr.bf16.mxu0 %v1256
      %1297 = vmatpush1.bf16.msra.mxu0 %v1255
      %1298 = vmatprep.subr.bf16.mxu0 0
      %1299 = vmatpush1.bf16.msra.mxu0 0
      %1300 = vmatprep.subr.bf16.mxu0 0
      %1301 = vmatpush1.bf16.msra.mxu0 0
      %1302 = vmatprep.subr.bf16.mxu0 0
      %1303 = vmatpush1.bf16.msra.mxu0 0
      %1304 = vmatprep.subr.bf16.mxu0 0
      %1305 = vmatpush1.bf16.msra.mxu0 0
      %1306 = vmatprep.subr.bf16.mxu0 0
      %1307 = vmatpush1.bf16.msra.mxu0 0
      %1308 = vmatprep.subr.bf16.mxu0 0
      %1309 = vmatpush1.bf16.msra.mxu0 0
      %1310 = vmatprep.subr.bf16.mxu0 0
      %1311 = vmatpush1.bf16.msra.mxu0 0
      %1312 = vmatprep.subr.bf16.mxu0 0
      %1313 = vmatpush1.bf16.msra.mxu0 0
      %1314 = vmatprep.mubr.bf16.mxu0 0
      %1315 = vmatmul.mubr.bf16.gmra.mrb[0].mxu0 %v1103
      %v1316 = vpop.f32.mrb[0].mxu0
      %v1317 = vadd.f32 %v1142, %v1316
      %v1318 = vpop.f32.mrb[0].mxu0
      %v1319 = vadd.f32 %v1146, %v1318
      %v1320 = vpop.f32.mrb[0].mxu0
      %v1321 = vpop.f32.mrb[0].mxu0
      %1322 = vdwg.mxu0
      %1323 = vmatprep.subr.bf16.mxu0 0
      %1324 = vmatpush1.bf16.msra.mxu0 %v1236
      %1325 = vmatprep.subr.bf16.mxu0 0
      %1326 = vmatpush1.bf16.msra.mxu0 %v1239
      %1327 = vmatprep.subr.bf16.mxu0 0
      %1328 = vmatpush1.bf16.msra.mxu0 %v1242
      %1329 = vmatprep.subr.bf16.mxu0 0
      %1330 = vmatpush1.bf16.msra.mxu0 %v1245
      %1331 = vmatprep.subr.bf16.mxu0 0
      %1332 = vmatpush1.bf16.msra.mxu0 %v1248
      %1333 = vmatprep.subr.bf16.mxu0 0
      %1334 = vmatpush1.bf16.msra.mxu0 %v1251
      %1335 = vmatprep.subr.bf16.mxu0 0
      %1336 = vmatpush1.bf16.msra.mxu0 %v1254
      %1337 = vmatprep.subr.bf16.mxu0 0
      %1338 = vmatpush1.bf16.msra.mxu0 %v1257
      %1339 = vmatprep.subr.bf16.mxu0 0
      %1340 = vmatpush1.bf16.msra.mxu0 0
      %1341 = vmatprep.subr.bf16.mxu0 0
      %1342 = vmatpush1.bf16.msra.mxu0 0
      %1343 = vmatprep.subr.bf16.mxu0 0
      %1344 = vmatpush1.bf16.msra.mxu0 0
      %1345 = vmatprep.subr.bf16.mxu0 0
      %1346 = vmatpush1.bf16.msra.mxu0 0
      %1347 = vmatprep.subr.bf16.mxu0 0
      %1348 = vmatpush1.bf16.msra.mxu0 0
      %1349 = vmatprep.subr.bf16.mxu0 0
      %1350 = vmatpush1.bf16.msra.mxu0 0
      %1351 = vmatprep.subr.bf16.mxu0 0
      %1352 = vmatpush1.bf16.msra.mxu0 0
      %1353 = vmatprep.subr.bf16.mxu0 0
      %1354 = vmatpush1.bf16.msra.mxu0 0
      %1355 = vmatprep.mubr.bf16.mxu0 0
      %1356 = vmatmul.mubr.bf16.gmra.mrb[0].mxu0 %v1103
      %v1357 = vpop.f32.mrb[0].mxu0
      %v1358 = vadd.f32 %v1150, %v1357
      %v1359 = vpop.f32.mrb[0].mxu0
      %v1360 = vpop.f32.mrb[0].mxu0
      %v1361 = vpop.f32.mrb[0].mxu0
      %1362 = vdwg.mxu0
      %1364 = vrot.lane.b32.xlu0 %v1317, 64
      %v1365 = vpop.permute.xlu0 %1364
      %v1367 = vcombine.high %v1317, 0.0
      %v1369 = vunpack.c.l.s4 1983009808
      %v1370 = vunpack.c.0.s8 %v1369
      %v1371 = vlaneseq
      %v1372 = vshrl.u32 %v1371, 7
      %v1373 = vsub.s32 %v1370, %v1372
      %v1374 = vrot.slane %v1317, %v1373
      %v1376 = vunpack.c.l.s4 1983009808
      %v1377 = vunpack.c.0.s8 %v1376
      %v1378 = vlaneseq
      %v1379 = vshrl.u32 %v1378, 7
      %v1380 = vsub.s32 %v1377, %v1379
      %v1381 = vrot.slane %v1367, %v1380
      %v1382 = vcombine.high %v1365, 0.0
      %v1384 = vunpack.c.l.s4 1983009808
      %v1385 = vunpack.c.0.s8 %v1384
      %v1386 = vlaneseq
      %v1387 = vshrl.u32 %v1386, 7
      %v1388 = vsub.s32 %v1385, %v1387
      %v1389 = vrot.slane %v1365, %v1388
      %v1391 = vunpack.c.l.s4 1983009808
      %v1392 = vunpack.c.0.s8 %v1391
      %v1393 = vlaneseq
      %v1394 = vshrl.u32 %v1393, 7
      %v1395 = vsub.s32 %v1392, %v1394
      %v1396 = vrot.slane %v1382, %v1395
      %v1397 = vcombine.low %v1374, %v1389
      %v1398 = vcombine.high %v1374, %v1389
      %v1400 = vunpack.c.l.s4 1934713408
      %v1401 = vunpack.c.0.s8 %v1400
      %v1402 = vlaneseq
      %v1403 = vshrl.u32 %v1402, 7
      %v1404 = vsub.s32 %v1401, %v1403
      %v1405 = vrot.slane %v1397, %v1404
      %v1407 = vunpack.c.l.s4 1934713408
      %v1408 = vunpack.c.0.s8 %v1407
      %v1409 = vlaneseq
      %v1410 = vshrl.u32 %v1409, 7
      %v1411 = vsub.s32 %v1408, %v1410
      %v1412 = vrot.slane %v1398, %v1411
      %v1413 = vcombine.low %v1381, %v1396
      %v1414 = vcombine.high %v1381, %v1396
      %v1416 = vunpack.c.l.s4 1934713408
      %v1417 = vunpack.c.0.s8 %v1416
      %v1418 = vlaneseq
      %v1419 = vshrl.u32 %v1418, 7
      %v1420 = vsub.s32 %v1417, %v1419
      %v1421 = vrot.slane %v1413, %v1420
      %v1423 = vunpack.c.l.s4 1934713408
      %v1424 = vunpack.c.0.s8 %v1423
      %v1425 = vlaneseq
      %v1426 = vshrl.u32 %v1425, 7
      %v1427 = vsub.s32 %v1424, %v1426
      %v1428 = vrot.slane %v1414, %v1427
      %v1429 = vcombine.high %v1405, 0.0
      %v1430 = vcombine.high %v1412, 0.0
      %v1431 = vcombine.high %v1421, 0.0
      %v1432 = vcombine.high %v1428, 0.0
      %v1433 = vpack.c.bf16 %v1405, %v1405
      %v1434 = vpack.c.bf16 %v1429, %v1429
      %v1435 = vpack.c.bf16 %v1412, %v1412
      %v1436 = vpack.c.bf16 %v1430, %v1430
      %v1437 = vpack.c.bf16 %v1421, %v1421
      %v1438 = vpack.c.bf16 %v1431, %v1431
      %v1439 = vpack.c.bf16 %v1428, %v1428
      %v1440 = vpack.c.bf16 %v1432, %v1432
      %1442 = vrot.lane.b32.xlu0 %v1319, 64
      %v1443 = vpop.permute.xlu0 %1442
      %v1445 = vcombine.high %v1319, 0.0
      %v1447 = vunpack.c.l.s4 1983009808
      %v1448 = vunpack.c.0.s8 %v1447
      %v1449 = vlaneseq
      %v1450 = vshrl.u32 %v1449, 7
      %v1451 = vsub.s32 %v1448, %v1450
      %v1452 = vrot.slane %v1319, %v1451
      %v1454 = vunpack.c.l.s4 1983009808
      %v1455 = vunpack.c.0.s8 %v1454
      %v1456 = vlaneseq
      %v1457 = vshrl.u32 %v1456, 7
      %v1458 = vsub.s32 %v1455, %v1457
      %v1459 = vrot.slane %v1445, %v1458
      %v1460 = vcombine.high %v1443, 0.0
      %v1462 = vunpack.c.l.s4 1983009808
      %v1463 = vunpack.c.0.s8 %v1462
      %v1464 = vlaneseq
      %v1465 = vshrl.u32 %v1464, 7
      %v1466 = vsub.s32 %v1463, %v1465
      %v1467 = vrot.slane %v1443, %v1466
      %v1469 = vunpack.c.l.s4 1983009808
      %v1470 = vunpack.c.0.s8 %v1469
      %v1471 = vlaneseq
      %v1472 = vshrl.u32 %v1471, 7
      %v1473 = vsub.s32 %v1470, %v1472
      %v1474 = vrot.slane %v1460, %v1473
      %v1475 = vcombine.low %v1452, %v1467
      %v1476 = vcombine.high %v1452, %v1467
      %v1478 = vunpack.c.l.s4 1934713408
      %v1479 = vunpack.c.0.s8 %v1478
      %v1480 = vlaneseq
      %v1481 = vshrl.u32 %v1480, 7
      %v1482 = vsub.s32 %v1479, %v1481
      %v1483 = vrot.slane %v1475, %v1482
      %v1485 = vunpack.c.l.s4 1934713408
      %v1486 = vunpack.c.0.s8 %v1485
      %v1487 = vlaneseq
      %v1488 = vshrl.u32 %v1487, 7
      %v1489 = vsub.s32 %v1486, %v1488
      %v1490 = vrot.slane %v1476, %v1489
      %v1491 = vcombine.low %v1459, %v1474
      %v1492 = vcombine.high %v1459, %v1474
      %v1494 = vunpack.c.l.s4 1934713408
      %v1495 = vunpack.c.0.s8 %v1494
      %v1496 = vlaneseq
      %v1497 = vshrl.u32 %v1496, 7
      %v1498 = vsub.s32 %v1495, %v1497
      %v1499 = vrot.slane %v1491, %v1498
      %v1501 = vunpack.c.l.s4 1934713408
      %v1502 = vunpack.c.0.s8 %v1501
      %v1503 = vlaneseq
      %v1504 = vshrl.u32 %v1503, 7
      %v1505 = vsub.s32 %v1502, %v1504
      %v1506 = vrot.slane %v1492, %v1505
      %v1507 = vcombine.high %v1483, 0.0
      %v1508 = vcombine.high %v1490, 0.0
      %v1509 = vcombine.high %v1499, 0.0
      %v1510 = vcombine.high %v1506, 0.0
      %v1511 = vpack.c.bf16 %v1483, %v1483
      %v1512 = vpack.c.bf16 %v1507, %v1507
      %v1513 = vpack.c.bf16 %v1490, %v1490
      %v1514 = vpack.c.bf16 %v1508, %v1508
      %v1515 = vpack.c.bf16 %v1499, %v1499
      %v1516 = vpack.c.bf16 %v1509, %v1509
      %v1517 = vpack.c.bf16 %v1506, %v1506
      %v1518 = vpack.c.bf16 %v1510, %v1510
      %1520 = vrot.lane.b32.xlu0 %v1358, 64
      %v1521 = vpop.permute.xlu0 %1520
      %v1523 = vcombine.high %v1358, 0.0
      %v1525 = vunpack.c.l.s4 1983009808
      %v1526 = vunpack.c.0.s8 %v1525
      %v1527 = vlaneseq
      %v1528 = vshrl.u32 %v1527, 7
      %v1529 = vsub.s32 %v1526, %v1528
      %v1530 = vrot.slane %v1358, %v1529
      %v1532 = vunpack.c.l.s4 1983009808
      %v1533 = vunpack.c.0.s8 %v1532
      %v1534 = vlaneseq
      %v1535 = vshrl.u32 %v1534, 7
      %v1536 = vsub.s32 %v1533, %v1535
      %v1537 = vrot.slane %v1523, %v1536
      %v1538 = vcombine.high %v1521, 0.0
      %v1540 = vunpack.c.l.s4 1983009808
      %v1541 = vunpack.c.0.s8 %v1540
      %v1542 = vlaneseq
      %v1543 = vshrl.u32 %v1542, 7
      %v1544 = vsub.s32 %v1541, %v1543
      %v1545 = vrot.slane %v1521, %v1544
      %v1547 = vunpack.c.l.s4 1983009808
      %v1548 = vunpack.c.0.s8 %v1547
      %v1549 = vlaneseq
      %v1550 = vshrl.u32 %v1549, 7
      %v1551 = vsub.s32 %v1548, %v1550
      %v1552 = vrot.slane %v1538, %v1551
      %v1553 = vcombine.low %v1530, %v1545
      %v1554 = vcombine.high %v1530, %v1545
      %v1556 = vunpack.c.l.s4 1934713408
      %v1557 = vunpack.c.0.s8 %v1556
      %v1558 = vlaneseq
      %v1559 = vshrl.u32 %v1558, 7
      %v1560 = vsub.s32 %v1557, %v1559
      %v1561 = vrot.slane %v1553, %v1560
      %v1563 = vunpack.c.l.s4 1934713408
      %v1564 = vunpack.c.0.s8 %v1563
      %v1565 = vlaneseq
      %v1566 = vshrl.u32 %v1565, 7
      %v1567 = vsub.s32 %v1564, %v1566
      %v1568 = vrot.slane %v1554, %v1567
      %v1569 = vcombine.low %v1537, %v1552
      %v1570 = vcombine.high %v1537, %v1552
      %v1572 = vunpack.c.l.s4 1934713408
      %v1573 = vunpack.c.0.s8 %v1572
      %v1574 = vlaneseq
      %v1575 = vshrl.u32 %v1574, 7
      %v1576 = vsub.s32 %v1573, %v1575
      %v1577 = vrot.slane %v1569, %v1576
      %v1579 = vunpack.c.l.s4 1934713408
      %v1580 = vunpack.c.0.s8 %v1579
      %v1581 = vlaneseq
      %v1582 = vshrl.u32 %v1581, 7
      %v1583 = vsub.s32 %v1580, %v1582
      %v1584 = vrot.slane %v1570, %v1583
      %v1585 = vcombine.high %v1561, 0.0
      %v1586 = vcombine.high %v1568, 0.0
      %v1587 = vcombine.high %v1577, 0.0
      %v1588 = vcombine.high %v1584, 0.0
      %v1589 = vpack.c.bf16 %v1561, %v1561
      %v1590 = vpack.c.bf16 %v1585, %v1585
      %v1591 = vpack.c.bf16 %v1568, %v1568
      %v1592 = vpack.c.bf16 %v1586, %v1586
      %v1593 = vpack.c.bf16 %v1577, %v1577
      %v1594 = vpack.c.bf16 %v1587, %v1587
      %v1595 = vpack.c.bf16 %v1584, %v1584
      %v1596 = vpack.c.bf16 %v1588, %v1588
      %v1598 = vlaneseq
      %v1599 = vshrl.u32 %v1598, 7
      %v1600 = vsub.s32 0, %v1599
      %v1601 = vrot.slane %v1104, %v1600
      %v1603 = vcombine.low %v1433, %v1437
      %v1605 = vunpack.c.l.s4 1983009808
      %v1606 = vunpack.c.0.s8 %v1605
      %v1607 = vlaneseq
      %v1608 = vshrl.u32 %v1607, 7
      %v1609 = vsub.s32 %v1606, %v1608
      %v1610 = vrot.slane %v1603, %v1609
      %v1611 = vcombine.low %v1435, %v1439
      %v1613 = vunpack.c.l.s4 1983009808
      %v1614 = vunpack.c.0.s8 %v1613
      %v1615 = vlaneseq
      %v1616 = vshrl.u32 %v1615, 7
      %v1617 = vsub.s32 %v1614, %v1616
      %v1618 = vrot.slane %v1611, %v1617
      %v1619 = vcombine.low %v1610, %v1618
      %v1621 = vunpack.c.l.s4 1934713408
      %v1622 = vunpack.c.0.s8 %v1621
      %v1623 = vlaneseq
      %v1624 = vshrl.u32 %v1623, 7
      %v1625 = vsub.s32 %v1622, %v1624
      %v1626 = vrot.slane %v1619, %v1625
      %v1627 = vcombine.low %v1434, %v1438
      %v1629 = vunpack.c.l.s4 1983009808
      %v1630 = vunpack.c.0.s8 %v1629
      %v1631 = vlaneseq
      %v1632 = vshrl.u32 %v1631, 7
      %v1633 = vsub.s32 %v1630, %v1632
      %v1634 = vrot.slane %v1627, %v1633
      %v1635 = vcombine.low %v1436, %v1440
      %v1637 = vunpack.c.l.s4 1983009808
      %v1638 = vunpack.c.0.s8 %v1637
      %v1639 = vlaneseq
      %v1640 = vshrl.u32 %v1639, 7
      %v1641 = vsub.s32 %v1638, %v1640
      %v1642 = vrot.slane %v1635, %v1641
      %v1643 = vcombine.low %v1634, %v1642
      %v1645 = vunpack.c.l.s4 1934713408
      %v1646 = vunpack.c.0.s8 %v1645
      %v1647 = vlaneseq
      %v1648 = vshrl.u32 %v1647, 7
      %v1649 = vsub.s32 %v1646, %v1648
      %v1650 = vrot.slane %v1643, %v1649
      %v1653 = vpack.i.b16 %v1650, %v1626
      %v1654 = vshrl.u32 %v1626, 16
      %v1655 = vshrl.u32 %v1650, 16
      %v1656 = vpack.i.b16 %v1655, %v1654
      %1657 = vxpose.xlu0.c.b16.start [1/8] %v1511, 128
      %1658 = vxpose.xlu0.c.b16.cont [2/8] 0, 128
      %1659 = vxpose.xlu0.c.b16.cont [3/8] 0, 128
      %1660 = vxpose.xlu0.c.b16.cont [4/8] 0, 128
      %1661 = vxpose.xlu0.c.b16.cont [5/8] 0, 128
      %1662 = vxpose.xlu0.c.b16.cont [6/8] 0, 128
      %1663 = vxpose.xlu0.c.b16.cont [7/8] 0, 128
      %1664 = vxpose.xlu0.c.b16.end [8/8] 0, 128
      %v1665 = vpop.trf.xlu0
      %v1666 = vpop.trf.xlu0
      %v1667 = vpop.trf.xlu0
      %v1668 = vpop.trf.xlu0
      %v1669 = vpop.trf.xlu0
      %v1670 = vpop.trf.xlu0
      %v1671 = vpop.trf.xlu0
      %v1672 = vpop.trf.xlu0
      %1673 = vxpose.xlu0.c.b16.start [1/8] %v1512, 128
      %1674 = vxpose.xlu0.c.b16.cont [2/8] 0, 128
      %1675 = vxpose.xlu0.c.b16.cont [3/8] 0, 128
      %1676 = vxpose.xlu0.c.b16.cont [4/8] 0, 128
      %1677 = vxpose.xlu0.c.b16.cont [5/8] 0, 128
      %1678 = vxpose.xlu0.c.b16.cont [6/8] 0, 128
      %1679 = vxpose.xlu0.c.b16.cont [7/8] 0, 128
      %1680 = vxpose.xlu0.c.b16.end [8/8] 0, 128
      %v1681 = vpop.trf.xlu0
      %v1682 = vpop.trf.xlu0
      %v1683 = vpop.trf.xlu0
      %v1684 = vpop.trf.xlu0
      %v1685 = vpop.trf.xlu0
      %v1686 = vpop.trf.xlu0
      %v1687 = vpop.trf.xlu0
      %v1688 = vpop.trf.xlu0
      %1689 = vxpose.xlu0.c.b16.start [1/8] %v1513, 128
      %1690 = vxpose.xlu0.c.b16.cont [2/8] 0, 128
      %1691 = vxpose.xlu0.c.b16.cont [3/8] 0, 128
      %1692 = vxpose.xlu0.c.b16.cont [4/8] 0, 128
      %1693 = vxpose.xlu0.c.b16.cont [5/8] 0, 128
      %1694 = vxpose.xlu0.c.b16.cont [6/8] 0, 128
      %1695 = vxpose.xlu0.c.b16.cont [7/8] 0, 128
      %1696 = vxpose.xlu0.c.b16.end [8/8] 0, 128
      %v1697 = vpop.trf.xlu0
      %v1698 = vpop.trf.xlu0
      %v1699 = vpop.trf.xlu0
      %v1700 = vpop.trf.xlu0
      %v1701 = vpop.trf.xlu0
      %v1702 = vpop.trf.xlu0
      %v1703 = vpop.trf.xlu0
      %v1704 = vpop.trf.xlu0
      %1705 = vxpose.xlu0.c.b16.start [1/8] %v1514, 128
      %1706 = vxpose.xlu0.c.b16.cont [2/8] 0, 128
      %1707 = vxpose.xlu0.c.b16.cont [3/8] 0, 128
      %1708 = vxpose.xlu0.c.b16.cont [4/8] 0, 128
      %1709 = vxpose.xlu0.c.b16.cont [5/8] 0, 128
      %1710 = vxpose.xlu0.c.b16.cont [6/8] 0, 128
      %1711 = vxpose.xlu0.c.b16.cont [7/8] 0, 128
      %1712 = vxpose.xlu0.c.b16.end [8/8] 0, 128
      %v1713 = vpop.trf.xlu0
      %v1714 = vpop.trf.xlu0
      %v1715 = vpop.trf.xlu0
      %v1716 = vpop.trf.xlu0
      %v1717 = vpop.trf.xlu0
      %v1718 = vpop.trf.xlu0
      %v1719 = vpop.trf.xlu0
      %v1720 = vpop.trf.xlu0
      %1721 = vxpose.xlu0.c.b16.start [1/8] %v1515, 128
      %1722 = vxpose.xlu0.c.b16.cont [2/8] 0, 128
      %1723 = vxpose.xlu0.c.b16.cont [3/8] 0, 128
      %1724 = vxpose.xlu0.c.b16.cont [4/8] 0, 128
      %1725 = vxpose.xlu0.c.b16.cont [5/8] 0, 128
      %1726 = vxpose.xlu0.c.b16.cont [6/8] 0, 128
      %1727 = vxpose.xlu0.c.b16.cont [7/8] 0, 128
      %1728 = vxpose.xlu0.c.b16.end [8/8] 0, 128
      %v1729 = vpop.trf.xlu0
      %v1730 = vpop.trf.xlu0
      %v1731 = vpop.trf.xlu0
      %v1732 = vpop.trf.xlu0
      %v1733 = vpop.trf.xlu0
      %v1734 = vpop.trf.xlu0
      %v1735 = vpop.trf.xlu0
      %v1736 = vpop.trf.xlu0
      %1737 = vxpose.xlu0.c.b16.start [1/8] %v1516, 128
      %1738 = vxpose.xlu0.c.b16.cont [2/8] 0, 128
      %1739 = vxpose.xlu0.c.b16.cont [3/8] 0, 128
      %1740 = vxpose.xlu0.c.b16.cont [4/8] 0, 128
      %1741 = vxpose.xlu0.c.b16.cont [5/8] 0, 128
      %1742 = vxpose.xlu0.c.b16.cont [6/8] 0, 128
      %1743 = vxpose.xlu0.c.b16.cont [7/8] 0, 128
      %1744 = vxpose.xlu0.c.b16.end [8/8] 0, 128
      %v1745 = vpop.trf.xlu0
      %v1746 = vpop.trf.xlu0
      %v1747 = vpop.trf.xlu0
      %v1748 = vpop.trf.xlu0
      %v1749 = vpop.trf.xlu0
      %v1750 = vpop.trf.xlu0
      %v1751 = vpop.trf.xlu0
      %v1752 = vpop.trf.xlu0
      %1753 = vxpose.xlu0.c.b16.start [1/8] %v1517, 128
      %1754 = vxpose.xlu0.c.b16.cont [2/8] 0, 128
      %1755 = vxpose.xlu0.c.b16.cont [3/8] 0, 128
      %1756 = vxpose.xlu0.c.b16.cont [4/8] 0, 128
      %1757 = vxpose.xlu0.c.b16.cont [5/8] 0, 128
      %1758 = vxpose.xlu0.c.b16.cont [6/8] 0, 128
      %1759 = vxpose.xlu0.c.b16.cont [7/8] 0, 128
      %1760 = vxpose.xlu0.c.b16.end [8/8] 0, 128
      %v1761 = vpop.trf.xlu0
      %v1762 = vpop.trf.xlu0
      %v1763 = vpop.trf.xlu0
      %v1764 = vpop.trf.xlu0
      %v1765 = vpop.trf.xlu0
      %v1766 = vpop.trf.xlu0
      %v1767 = vpop.trf.xlu0
      %v1768 = vpop.trf.xlu0
      %1769 = vxpose.xlu0.c.b16.start [1/8] %v1518, 128
      %1770 = vxpose.xlu0.c.b16.cont [2/8] 0, 128
      %1771 = vxpose.xlu0.c.b16.cont [3/8] 0, 128
      %1772 = vxpose.xlu0.c.b16.cont [4/8] 0, 128
      %1773 = vxpose.xlu0.c.b16.cont [5/8] 0, 128
      %1774 = vxpose.xlu0.c.b16.cont [6/8] 0, 128
      %1775 = vxpose.xlu0.c.b16.cont [7/8] 0, 128
      %1776 = vxpose.xlu0.c.b16.end [8/8] 0, 128
      %v1777 = vpop.trf.xlu0
      %v1778 = vpop.trf.xlu0
      %v1779 = vpop.trf.xlu0
      %v1780 = vpop.trf.xlu0
      %v1781 = vpop.trf.xlu0
      %v1782 = vpop.trf.xlu0
      %v1783 = vpop.trf.xlu0
      %v1784 = vpop.trf.xlu0
      %v1787 = vpack.i.b16 %v1681, %v1665
      %v1789 = vshrl.u32 %v1665, 16
      %v1790 = vshrl.u32 %v1681, 16
      %v1791 = vpack.i.b16 %v1790, %v1789
      %v1795 = vpack.i.b16 %v1713, %v1697
      %v1797 = vshrl.u32 %v1697, 16
      %v1798 = vshrl.u32 %v1713, 16
      %v1799 = vpack.i.b16 %v1798, %v1797
      %v1803 = vpack.i.b16 %v1745, %v1729
      %v1805 = vshrl.u32 %v1729, 16
      %v1806 = vshrl.u32 %v1745, 16
      %v1807 = vpack.i.b16 %v1806, %v1805
      %v1811 = vpack.i.b16 %v1777, %v1761
      %v1813 = vshrl.u32 %v1761, 16
      %v1814 = vshrl.u32 %v1777, 16
      %v1815 = vpack.i.b16 %v1814, %v1813
      %v1819 = vpack.i.b16 %v1682, %v1666
      %v1821 = vshrl.u32 %v1666, 16
      %v1822 = vshrl.u32 %v1682, 16
      %v1823 = vpack.i.b16 %v1822, %v1821
      %v1827 = vpack.i.b16 %v1714, %v1698
      %v1829 = vshrl.u32 %v1698, 16
      %v1830 = vshrl.u32 %v1714, 16
      %v1831 = vpack.i.b16 %v1830, %v1829
      %v1835 = vpack.i.b16 %v1746, %v1730
      %v1837 = vshrl.u32 %v1730, 16
      %v1838 = vshrl.u32 %v1746, 16
      %v1839 = vpack.i.b16 %v1838, %v1837
      %v1843 = vpack.i.b16 %v1778, %v1762
      %v1845 = vshrl.u32 %v1762, 16
      %v1846 = vshrl.u32 %v1778, 16
      %v1847 = vpack.i.b16 %v1846, %v1845
      %v1851 = vpack.i.b16 %v1683, %v1667
      %v1853 = vshrl.u32 %v1667, 16
      %v1854 = vshrl.u32 %v1683, 16
      %v1855 = vpack.i.b16 %v1854, %v1853
      %v1859 = vpack.i.b16 %v1715, %v1699
      %v1861 = vshrl.u32 %v1699, 16
      %v1862 = vshrl.u32 %v1715, 16
      %v1863 = vpack.i.b16 %v1862, %v1861
      %v1867 = vpack.i.b16 %v1747, %v1731
      %v1869 = vshrl.u32 %v1731, 16
      %v1870 = vshrl.u32 %v1747, 16
      %v1871 = vpack.i.b16 %v1870, %v1869
      %v1875 = vpack.i.b16 %v1779, %v1763
      %v1877 = vshrl.u32 %v1763, 16
      %v1878 = vshrl.u32 %v1779, 16
      %v1879 = vpack.i.b16 %v1878, %v1877
      %v1883 = vpack.i.b16 %v1684, %v1668
      %v1885 = vshrl.u32 %v1668, 16
      %v1886 = vshrl.u32 %v1684, 16
      %v1887 = vpack.i.b16 %v1886, %v1885
      %v1891 = vpack.i.b16 %v1716, %v1700
      %v1893 = vshrl.u32 %v1700, 16
      %v1894 = vshrl.u32 %v1716, 16
      %v1895 = vpack.i.b16 %v1894, %v1893
      %v1899 = vpack.i.b16 %v1748, %v1732
      %v1901 = vshrl.u32 %v1732, 16
      %v1902 = vshrl.u32 %v1748, 16
      %v1903 = vpack.i.b16 %v1902, %v1901
      %v1907 = vpack.i.b16 %v1780, %v1764
      %v1909 = vshrl.u32 %v1764, 16
      %v1910 = vshrl.u32 %v1780, 16
      %v1911 = vpack.i.b16 %v1910, %v1909
      %v1913 = vcombine.low %v1787, %v1803
      %v1914 = vcombine.high %v1787, %v1803
      %v1916 = vunpack.c.l.s4 1983009808
      %v1917 = vunpack.c.0.s8 %v1916
      %v1918 = vlaneseq
      %v1919 = vshrl.u32 %v1918, 7
      %v1920 = vsub.s32 %v1917, %v1919
      %v1921 = vrot.slane %v1913, %v1920
      %v1923 = vunpack.c.l.s4 1983009808
      %v1924 = vunpack.c.0.s8 %v1923
      %v1925 = vlaneseq
      %v1926 = vshrl.u32 %v1925, 7
      %v1927 = vsub.s32 %v1924, %v1926
      %v1928 = vrot.slane %v1914, %v1927
      %v1929 = vcombine.low %v1795, %v1811
      %v1930 = vcombine.high %v1795, %v1811
      %v1932 = vunpack.c.l.s4 1983009808
      %v1933 = vunpack.c.0.s8 %v1932
      %v1934 = vlaneseq
      %v1935 = vshrl.u32 %v1934, 7
      %v1936 = vsub.s32 %v1933, %v1935
      %v1937 = vrot.slane %v1929, %v1936
      %v1939 = vunpack.c.l.s4 1983009808
      %v1940 = vunpack.c.0.s8 %v1939
      %v1941 = vlaneseq
      %v1942 = vshrl.u32 %v1941, 7
      %v1943 = vsub.s32 %v1940, %v1942
      %v1944 = vrot.slane %v1930, %v1943
      %v1945 = vcombine.low %v1921, %v1937
      %v1946 = vcombine.high %v1921, %v1937
      %v1948 = vunpack.c.l.s4 1934713408
      %v1949 = vunpack.c.0.s8 %v1948
      %v1950 = vlaneseq
      %v1951 = vshrl.u32 %v1950, 7
      %v1952 = vsub.s32 %v1949, %v1951
      %v1953 = vrot.slane %v1945, %v1952
      %v1955 = vunpack.c.l.s4 1934713408
      %v1956 = vunpack.c.0.s8 %v1955
      %v1957 = vlaneseq
      %v1958 = vshrl.u32 %v1957, 7
      %v1959 = vsub.s32 %v1956, %v1958
      %v1960 = vrot.slane %v1946, %v1959
      %v1961 = vcombine.low %v1928, %v1944
      %v1962 = vcombine.high %v1928, %v1944
      %v1964 = vunpack.c.l.s4 1934713408
      %v1965 = vunpack.c.0.s8 %v1964
      %v1966 = vlaneseq
      %v1967 = vshrl.u32 %v1966, 7
      %v1968 = vsub.s32 %v1965, %v1967
      %v1969 = vrot.slane %v1961, %v1968
      %v1971 = vunpack.c.l.s4 1934713408
      %v1972 = vunpack.c.0.s8 %v1971
      %v1973 = vlaneseq
      %v1974 = vshrl.u32 %v1973, 7
      %v1975 = vsub.s32 %v1972, %v1974
      %v1976 = vrot.slane %v1962, %v1975
      %v1977 = vcombine.high %v1953, 0
      %v1978 = vcombine.high %v1960, 0
      %v1979 = vcombine.high %v1969, 0
      %v1980 = vcombine.high %v1976, 0
      %v1981 = vcombine.low %v1791, %v1807
      %v1982 = vcombine.high %v1791, %v1807
      %v1984 = vunpack.c.l.s4 1983009808
      %v1985 = vunpack.c.0.s8 %v1984
      %v1986 = vlaneseq
      %v1987 = vshrl.u32 %v1986, 7
      %v1988 = vsub.s32 %v1985, %v1987
      %v1989 = vrot.slane %v1981, %v1988
      %v1991 = vunpack.c.l.s4 1983009808
      %v1992 = vunpack.c.0.s8 %v1991
      %v1993 = vlaneseq
      %v1994 = vshrl.u32 %v1993, 7
      %v1995 = vsub.s32 %v1992, %v1994
      %v1996 = vrot.slane %v1982, %v1995
      %v1997 = vcombine.low %v1799, %v1815
      %v1998 = vcombine.high %v1799, %v1815
      %v2000 = vunpack.c.l.s4 1983009808
      %v2001 = vunpack.c.0.s8 %v2000
      %v2002 = vlaneseq
      %v2003 = vshrl.u32 %v2002, 7
      %v2004 = vsub.s32 %v2001, %v2003
      %v2005 = vrot.slane %v1997, %v2004
      %v2007 = vunpack.c.l.s4 1983009808
      %v2008 = vunpack.c.0.s8 %v2007
      %v2009 = vlaneseq
      %v2010 = vshrl.u32 %v2009, 7
      %v2011 = vsub.s32 %v2008, %v2010
      %v2012 = vrot.slane %v1998, %v2011
      %v2013 = vcombine.low %v1989, %v2005
      %v2014 = vcombine.high %v1989, %v2005
      %v2016 = vunpack.c.l.s4 1934713408
      %v2017 = vunpack.c.0.s8 %v2016
      %v2018 = vlaneseq
      %v2019 = vshrl.u32 %v2018, 7
      %v2020 = vsub.s32 %v2017, %v2019
      %v2021 = vrot.slane %v2013, %v2020
      %v2023 = vunpack.c.l.s4 1934713408
      %v2024 = vunpack.c.0.s8 %v2023
      %v2025 = vlaneseq
      %v2026 = vshrl.u32 %v2025, 7
      %v2027 = vsub.s32 %v2024, %v2026
      %v2028 = vrot.slane %v2014, %v2027
      %v2029 = vcombine.low %v1996, %v2012
      %v2030 = vcombine.high %v1996, %v2012
      %v2032 = vunpack.c.l.s4 1934713408
      %v2033 = vunpack.c.0.s8 %v2032
      %v2034 = vlaneseq
      %v2035 = vshrl.u32 %v2034, 7
      %v2036 = vsub.s32 %v2033, %v2035
      %v2037 = vrot.slane %v2029, %v2036
      %v2039 = vunpack.c.l.s4 1934713408
      %v2040 = vunpack.c.0.s8 %v2039
      %v2041 = vlaneseq
      %v2042 = vshrl.u32 %v2041, 7
      %v2043 = vsub.s32 %v2040, %v2042
      %v2044 = vrot.slane %v2030, %v2043
      %v2045 = vcombine.high %v2021, 0
      %v2046 = vcombine.high %v2028, 0
      %v2047 = vcombine.high %v2037, 0
      %v2048 = vcombine.high %v2044, 0
      %v2049 = vcombine.low %v1819, %v1835
      %v2050 = vcombine.high %v1819, %v1835
      %v2052 = vunpack.c.l.s4 1983009808
      %v2053 = vunpack.c.0.s8 %v2052
      %v2054 = vlaneseq
      %v2055 = vshrl.u32 %v2054, 7
      %v2056 = vsub.s32 %v2053, %v2055
      %v2057 = vrot.slane %v2049, %v2056
      %v2059 = vunpack.c.l.s4 1983009808
      %v2060 = vunpack.c.0.s8 %v2059
      %v2061 = vlaneseq
      %v2062 = vshrl.u32 %v2061, 7
      %v2063 = vsub.s32 %v2060, %v2062
      %v2064 = vrot.slane %v2050, %v2063
      %v2065 = vcombine.low %v1827, %v1843
      %v2066 = vcombine.high %v1827, %v1843
      %v2068 = vunpack.c.l.s4 1983009808
      %v2069 = vunpack.c.0.s8 %v2068
      %v2070 = vlaneseq
      %v2071 = vshrl.u32 %v2070, 7
      %v2072 = vsub.s32 %v2069, %v2071
      %v2073 = vrot.slane %v2065, %v2072
      %v2075 = vunpack.c.l.s4 1983009808
      %v2076 = vunpack.c.0.s8 %v2075
      %v2077 = vlaneseq
      %v2078 = vshrl.u32 %v2077, 7
      %v2079 = vsub.s32 %v2076, %v2078
      %v2080 = vrot.slane %v2066, %v2079
      %v2081 = vcombine.low %v2057, %v2073
      %v2082 = vcombine.high %v2057, %v2073
      %v2084 = vunpack.c.l.s4 1934713408
      %v2085 = vunpack.c.0.s8 %v2084
      %v2086 = vlaneseq
      %v2087 = vshrl.u32 %v2086, 7
      %v2088 = vsub.s32 %v2085, %v2087
      %v2089 = vrot.slane %v2081, %v2088
      %v2091 = vunpack.c.l.s4 1934713408
      %v2092 = vunpack.c.0.s8 %v2091
      %v2093 = vlaneseq
      %v2094 = vshrl.u32 %v2093, 7
      %v2095 = vsub.s32 %v2092, %v2094
      %v2096 = vrot.slane %v2082, %v2095
      %v2097 = vcombine.low %v2064, %v2080
      %v2098 = vcombine.high %v2064, %v2080
      %v2100 = vunpack.c.l.s4 1934713408
      %v2101 = vunpack.c.0.s8 %v2100
      %v2102 = vlaneseq
      %v2103 = vshrl.u32 %v2102, 7
      %v2104 = vsub.s32 %v2101, %v2103
      %v2105 = vrot.slane %v2097, %v2104
      %v2107 = vunpack.c.l.s4 1934713408
      %v2108 = vunpack.c.0.s8 %v2107
      %v2109 = vlaneseq
      %v2110 = vshrl.u32 %v2109, 7
      %v2111 = vsub.s32 %v2108, %v2110
      %v2112 = vrot.slane %v2098, %v2111
      %v2113 = vcombine.high %v2089, 0
      %v2114 = vcombine.high %v2096, 0
      %v2115 = vcombine.high %v2105, 0
      %v2116 = vcombine.high %v2112, 0
      %v2117 = vcombine.low %v1823, %v1839
      %v2118 = vcombine.high %v1823, %v1839
      %v2120 = vunpack.c.l.s4 1983009808
      %v2121 = vunpack.c.0.s8 %v2120
      %v2122 = vlaneseq
      %v2123 = vshrl.u32 %v2122, 7
      %v2124 = vsub.s32 %v2121, %v2123
      %v2125 = vrot.slane %v2117, %v2124
      %v2127 = vunpack.c.l.s4 1983009808
      %v2128 = vunpack.c.0.s8 %v2127
      %v2129 = vlaneseq
      %v2130 = vshrl.u32 %v2129, 7
      %v2131 = vsub.s32 %v2128, %v2130
      %v2132 = vrot.slane %v2118, %v2131
      %v2133 = vcombine.low %v1831, %v1847
      %v2134 = vcombine.high %v1831, %v1847
      %v2136 = vunpack.c.l.s4 1983009808
      %v2137 = vunpack.c.0.s8 %v2136
      %v2138 = vlaneseq
      %v2139 = vshrl.u32 %v2138, 7
      %v2140 = vsub.s32 %v2137, %v2139
      %v2141 = vrot.slane %v2133, %v2140
      %v2143 = vunpack.c.l.s4 1983009808
      %v2144 = vunpack.c.0.s8 %v2143
      %v2145 = vlaneseq
      %v2146 = vshrl.u32 %v2145, 7
      %v2147 = vsub.s32 %v2144, %v2146
      %v2148 = vrot.slane %v2134, %v2147
      %v2149 = vcombine.low %v2125, %v2141
      %v2150 = vcombine.high %v2125, %v2141
      %v2152 = vunpack.c.l.s4 1934713408
      %v2153 = vunpack.c.0.s8 %v2152
      %v2154 = vlaneseq
      %v2155 = vshrl.u32 %v2154, 7
      %v2156 = vsub.s32 %v2153, %v2155
      %v2157 = vrot.slane %v2149, %v2156
      %v2159 = vunpack.c.l.s4 1934713408
      %v2160 = vunpack.c.0.s8 %v2159
      %v2161 = vlaneseq
      %v2162 = vshrl.u32 %v2161, 7
      %v2163 = vsub.s32 %v2160, %v2162
      %v2164 = vrot.slane %v2150, %v2163
      %v2165 = vcombine.low %v2132, %v2148
      %v2166 = vcombine.high %v2132, %v2148
      %v2168 = vunpack.c.l.s4 1934713408
      %v2169 = vunpack.c.0.s8 %v2168
      %v2170 = vlaneseq
      %v2171 = vshrl.u32 %v2170, 7
      %v2172 = vsub.s32 %v2169, %v2171
      %v2173 = vrot.slane %v2165, %v2172
      %v2175 = vunpack.c.l.s4 1934713408
      %v2176 = vunpack.c.0.s8 %v2175
      %v2177 = vlaneseq
      %v2178 = vshrl.u32 %v2177, 7
      %v2179 = vsub.s32 %v2176, %v2178
      %v2180 = vrot.slane %v2166, %v2179
      %v2181 = vcombine.high %v2157, 0
      %v2182 = vcombine.high %v2164, 0
      %v2183 = vcombine.high %v2173, 0
      %v2184 = vcombine.high %v2180, 0
      %v2185 = vcombine.low %v1851, %v1867
      %v2186 = vcombine.high %v1851, %v1867
      %v2188 = vunpack.c.l.s4 1983009808
      %v2189 = vunpack.c.0.s8 %v2188
      %v2190 = vlaneseq
      %v2191 = vshrl.u32 %v2190, 7
      %v2192 = vsub.s32 %v2189, %v2191
      %v2193 = vrot.slane %v2185, %v2192
      %v2195 = vunpack.c.l.s4 1983009808
      %v2196 = vunpack.c.0.s8 %v2195
      %v2197 = vlaneseq
      %v2198 = vshrl.u32 %v2197, 7
      %v2199 = vsub.s32 %v2196, %v2198
      %v2200 = vrot.slane %v2186, %v2199
      %v2201 = vcombine.low %v1859, %v1875
      %v2202 = vcombine.high %v1859, %v1875
      %v2204 = vunpack.c.l.s4 1983009808
      %v2205 = vunpack.c.0.s8 %v2204
      %v2206 = vlaneseq
      %v2207 = vshrl.u32 %v2206, 7
      %v2208 = vsub.s32 %v2205, %v2207
      %v2209 = vrot.slane %v2201, %v2208
      %v2211 = vunpack.c.l.s4 1983009808
      %v2212 = vunpack.c.0.s8 %v2211
      %v2213 = vlaneseq
      %v2214 = vshrl.u32 %v2213, 7
      %v2215 = vsub.s32 %v2212, %v2214
      %v2216 = vrot.slane %v2202, %v2215
      %v2217 = vcombine.low %v2193, %v2209
      %v2218 = vcombine.high %v2193, %v2209
      %v2220 = vunpack.c.l.s4 1934713408
      %v2221 = vunpack.c.0.s8 %v2220
      %v2222 = vlaneseq
      %v2223 = vshrl.u32 %v2222, 7
      %v2224 = vsub.s32 %v2221, %v2223
      %v2225 = vrot.slane %v2217, %v2224
      %v2227 = vunpack.c.l.s4 1934713408
      %v2228 = vunpack.c.0.s8 %v2227
      %v2229 = vlaneseq
      %v2230 = vshrl.u32 %v2229, 7
      %v2231 = vsub.s32 %v2228, %v2230
      %v2232 = vrot.slane %v2218, %v2231
      %v2233 = vcombine.low %v2200, %v2216
      %v2234 = vcombine.high %v2200, %v2216
      %v2236 = vunpack.c.l.s4 1934713408
      %v2237 = vunpack.c.0.s8 %v2236
      %v2238 = vlaneseq
      %v2239 = vshrl.u32 %v2238, 7
      %v2240 = vsub.s32 %v2237, %v2239
      %v2241 = vrot.slane %v2233, %v2240
      %v2243 = vunpack.c.l.s4 1934713408
      %v2244 = vunpack.c.0.s8 %v2243
      %v2245 = vlaneseq
      %v2246 = vshrl.u32 %v2245, 7
      %v2247 = vsub.s32 %v2244, %v2246
      %v2248 = vrot.slane %v2234, %v2247
      %v2249 = vcombine.high %v2225, 0
      %v2250 = vcombine.high %v2232, 0
      %v2251 = vcombine.high %v2241, 0
      %v2252 = vcombine.high %v2248, 0
      %v2253 = vcombine.low %v1855, %v1871
      %v2254 = vcombine.high %v1855, %v1871
      %v2256 = vunpack.c.l.s4 1983009808
      %v2257 = vunpack.c.0.s8 %v2256
      %v2258 = vlaneseq
      %v2259 = vshrl.u32 %v2258, 7
      %v2260 = vsub.s32 %v2257, %v2259
      %v2261 = vrot.slane %v2253, %v2260
      %v2263 = vunpack.c.l.s4 1983009808
      %v2264 = vunpack.c.0.s8 %v2263
      %v2265 = vlaneseq
      %v2266 = vshrl.u32 %v2265, 7
      %v2267 = vsub.s32 %v2264, %v2266
      %v2268 = vrot.slane %v2254, %v2267
      %v2269 = vcombine.low %v1863, %v1879
      %v2270 = vcombine.high %v1863, %v1879
      %v2272 = vunpack.c.l.s4 1983009808
      %v2273 = vunpack.c.0.s8 %v2272
      %v2274 = vlaneseq
      %v2275 = vshrl.u32 %v2274, 7
      %v2276 = vsub.s32 %v2273, %v2275
      %v2277 = vrot.slane %v2269, %v2276
      %v2279 = vunpack.c.l.s4 1983009808
      %v2280 = vunpack.c.0.s8 %v2279
      %v2281 = vlaneseq
      %v2282 = vshrl.u32 %v2281, 7
      %v2283 = vsub.s32 %v2280, %v2282
      %v2284 = vrot.slane %v2270, %v2283
      %v2285 = vcombine.low %v2261, %v2277
      %v2286 = vcombine.high %v2261, %v2277
      %v2288 = vunpack.c.l.s4 1934713408
      %v2289 = vunpack.c.0.s8 %v2288
      %v2290 = vlaneseq
      %v2291 = vshrl.u32 %v2290, 7
      %v2292 = vsub.s32 %v2289, %v2291
      %v2293 = vrot.slane %v2285, %v2292
      %v2295 = vunpack.c.l.s4 1934713408
      %v2296 = vunpack.c.0.s8 %v2295
      %v2297 = vlaneseq
      %v2298 = vshrl.u32 %v2297, 7
      %v2299 = vsub.s32 %v2296, %v2298
      %v2300 = vrot.slane %v2286, %v2299
      %v2301 = vcombine.low %v2268, %v2284
      %v2302 = vcombine.high %v2268, %v2284
      %v2304 = vunpack.c.l.s4 1934713408
      %v2305 = vunpack.c.0.s8 %v2304
      %v2306 = vlaneseq
      %v2307 = vshrl.u32 %v2306, 7
      %v2308 = vsub.s32 %v2305, %v2307
      %v2309 = vrot.slane %v2301, %v2308
      %v2311 = vunpack.c.l.s4 1934713408
      %v2312 = vunpack.c.0.s8 %v2311
      %v2313 = vlaneseq
      %v2314 = vshrl.u32 %v2313, 7
      %v2315 = vsub.s32 %v2312, %v2314
      %v2316 = vrot.slane %v2302, %v2315
      %v2317 = vcombine.high %v2293, 0
      %v2318 = vcombine.high %v2300, 0
      %v2319 = vcombine.high %v2309, 0
      %v2320 = vcombine.high %v2316, 0
      %v2321 = vcombine.low %v1883, %v1899
      %v2322 = vcombine.high %v1883, %v1899
      %v2324 = vunpack.c.l.s4 1983009808
      %v2325 = vunpack.c.0.s8 %v2324
      %v2326 = vlaneseq
      %v2327 = vshrl.u32 %v2326, 7
      %v2328 = vsub.s32 %v2325, %v2327
      %v2329 = vrot.slane %v2321, %v2328
      %v2331 = vunpack.c.l.s4 1983009808
      %v2332 = vunpack.c.0.s8 %v2331
      %v2333 = vlaneseq
      %v2334 = vshrl.u32 %v2333, 7
      %v2335 = vsub.s32 %v2332, %v2334
      %v2336 = vrot.slane %v2322, %v2335
      %v2337 = vcombine.low %v1891, %v1907
      %v2338 = vcombine.high %v1891, %v1907
      %v2340 = vunpack.c.l.s4 1983009808
      %v2341 = vunpack.c.0.s8 %v2340
      %v2342 = vlaneseq
      %v2343 = vshrl.u32 %v2342, 7
      %v2344 = vsub.s32 %v2341, %v2343
      %v2345 = vrot.slane %v2337, %v2344
      %v2347 = vunpack.c.l.s4 1983009808
      %v2348 = vunpack.c.0.s8 %v2347
      %v2349 = vlaneseq
      %v2350 = vshrl.u32 %v2349, 7
      %v2351 = vsub.s32 %v2348, %v2350
      %v2352 = vrot.slane %v2338, %v2351
      %v2353 = vcombine.low %v2329, %v2345
      %v2354 = vcombine.high %v2329, %v2345
      %v2356 = vunpack.c.l.s4 1934713408
      %v2357 = vunpack.c.0.s8 %v2356
      %v2358 = vlaneseq
      %v2359 = vshrl.u32 %v2358, 7
      %v2360 = vsub.s32 %v2357, %v2359
      %v2361 = vrot.slane %v2353, %v2360
      %v2363 = vunpack.c.l.s4 1934713408
      %v2364 = vunpack.c.0.s8 %v2363
      %v2365 = vlaneseq
      %v2366 = vshrl.u32 %v2365, 7
      %v2367 = vsub.s32 %v2364, %v2366
      %v2368 = vrot.slane %v2354, %v2367
      %v2369 = vcombine.low %v2336, %v2352
      %v2370 = vcombine.high %v2336, %v2352
      %v2372 = vunpack.c.l.s4 1934713408
      %v2373 = vunpack.c.0.s8 %v2372
      %v2374 = vlaneseq
      %v2375 = vshrl.u32 %v2374, 7
      %v2376 = vsub.s32 %v2373, %v2375
      %v2377 = vrot.slane %v2369, %v2376
      %v2379 = vunpack.c.l.s4 1934713408
      %v2380 = vunpack.c.0.s8 %v2379
      %v2381 = vlaneseq
      %v2382 = vshrl.u32 %v2381, 7
      %v2383 = vsub.s32 %v2380, %v2382
      %v2384 = vrot.slane %v2370, %v2383
      %v2385 = vcombine.high %v2361, 0
      %v2386 = vcombine.high %v2368, 0
      %v2387 = vcombine.high %v2377, 0
      %v2388 = vcombine.high %v2384, 0
      %v2389 = vcombine.low %v1887, %v1903
      %v2390 = vcombine.high %v1887, %v1903
      %v2392 = vunpack.c.l.s4 1983009808
      %v2393 = vunpack.c.0.s8 %v2392
      %v2394 = vlaneseq
      %v2395 = vshrl.u32 %v2394, 7
      %v2396 = vsub.s32 %v2393, %v2395
      %v2397 = vrot.slane %v2389, %v2396
      %v2399 = vunpack.c.l.s4 1983009808
      %v2400 = vunpack.c.0.s8 %v2399
      %v2401 = vlaneseq
      %v2402 = vshrl.u32 %v2401, 7
      %v2403 = vsub.s32 %v2400, %v2402
      %v2404 = vrot.slane %v2390, %v2403
      %v2405 = vcombine.low %v1895, %v1911
      %v2406 = vcombine.high %v1895, %v1911
      %v2408 = vunpack.c.l.s4 1983009808
      %v2409 = vunpack.c.0.s8 %v2408
      %v2410 = vlaneseq
      %v2411 = vshrl.u32 %v2410, 7
      %v2412 = vsub.s32 %v2409, %v2411
      %v2413 = vrot.slane %v2405, %v2412
      %v2415 = vunpack.c.l.s4 1983009808
      %v2416 = vunpack.c.0.s8 %v2415
      %v2417 = vlaneseq
      %v2418 = vshrl.u32 %v2417, 7
      %v2419 = vsub.s32 %v2416, %v2418
      %v2420 = vrot.slane %v2406, %v2419
      %v2421 = vcombine.low %v2397, %v2413
      %v2422 = vcombine.high %v2397, %v2413
      %v2424 = vunpack.c.l.s4 1934713408
      %v2425 = vunpack.c.0.s8 %v2424
      %v2426 = vlaneseq
      %v2427 = vshrl.u32 %v2426, 7
      %v2428 = vsub.s32 %v2425, %v2427
      %v2429 = vrot.slane %v2421, %v2428
      %v2431 = vunpack.c.l.s4 1934713408
      %v2432 = vunpack.c.0.s8 %v2431
      %v2433 = vlaneseq
      %v2434 = vshrl.u32 %v2433, 7
      %v2435 = vsub.s32 %v2432, %v2434
      %v2436 = vrot.slane %v2422, %v2435
      %v2437 = vcombine.low %v2404, %v2420
      %v2438 = vcombine.high %v2404, %v2420
      %v2440 = vunpack.c.l.s4 1934713408
      %v2441 = vunpack.c.0.s8 %v2440
      %v2442 = vlaneseq
      %v2443 = vshrl.u32 %v2442, 7
      %v2444 = vsub.s32 %v2441, %v2443
      %v2445 = vrot.slane %v2437, %v2444
      %v2447 = vunpack.c.l.s4 1934713408
      %v2448 = vunpack.c.0.s8 %v2447
      %v2449 = vlaneseq
      %v2450 = vshrl.u32 %v2449, 7
      %v2451 = vsub.s32 %v2448, %v2450
      %v2452 = vrot.slane %v2438, %v2451
      %v2453 = vcombine.high %v2429, 0
      %v2454 = vcombine.high %v2436, 0
      %v2455 = vcombine.high %v2445, 0
      %v2456 = vcombine.high %v2452, 0
      %2457 = vxpose.xlu0.c.b16.start [1/8] %v1953, 128
      %2458 = vxpose.xlu0.c.b16.cont [2/8] 0, 128
      %2459 = vxpose.xlu0.c.b16.cont [3/8] 0, 128
      %2460 = vxpose.xlu0.c.b16.cont [4/8] 0, 128
      %2461 = vxpose.xlu0.c.b16.cont [5/8] 0, 128
      %2462 = vxpose.xlu0.c.b16.cont [6/8] 0, 128
      %2463 = vxpose.xlu0.c.b16.cont [7/8] 0, 128
      %2464 = vxpose.xlu0.c.b16.end [8/8] 0, 128
      %v2465 = vpop.trf.xlu0
      %v2466 = vpop.trf.xlu0
      %v2467 = vpop.trf.xlu0
      %v2468 = vpop.trf.xlu0
      %v2469 = vpop.trf.xlu0
      %v2470 = vpop.trf.xlu0
      %v2471 = vpop.trf.xlu0
      %v2472 = vpop.trf.xlu0
      %2473 = vxpose.xlu0.c.b16.start [1/8] %v2021, 128
      %2474 = vxpose.xlu0.c.b16.cont [2/8] 0, 128
      %2475 = vxpose.xlu0.c.b16.cont [3/8] 0, 128
      %2476 = vxpose.xlu0.c.b16.cont [4/8] 0, 128
      %2477 = vxpose.xlu0.c.b16.cont [5/8] 0, 128
      %2478 = vxpose.xlu0.c.b16.cont [6/8] 0, 128
      %2479 = vxpose.xlu0.c.b16.cont [7/8] 0, 128
      %2480 = vxpose.xlu0.c.b16.end [8/8] 0, 128
      %v2481 = vpop.trf.xlu0
      %v2482 = vpop.trf.xlu0
      %v2483 = vpop.trf.xlu0
      %v2484 = vpop.trf.xlu0
      %v2485 = vpop.trf.xlu0
      %v2486 = vpop.trf.xlu0
      %v2487 = vpop.trf.xlu0
      %v2488 = vpop.trf.xlu0
      %2489 = vxpose.xlu0.c.b16.start [1/8] %v1977, 128
      %2490 = vxpose.xlu0.c.b16.cont [2/8] 0, 128
      %2491 = vxpose.xlu0.c.b16.cont [3/8] 0, 128
      %2492 = vxpose.xlu0.c.b16.cont [4/8] 0, 128
      %2493 = vxpose.xlu0.c.b16.cont [5/8] 0, 128
      %2494 = vxpose.xlu0.c.b16.cont [6/8] 0, 128
      %2495 = vxpose.xlu0.c.b16.cont [7/8] 0, 128
      %2496 = vxpose.xlu0.c.b16.end [8/8] 0, 128
      %v2497 = vpop.trf.xlu0
      %v2498 = vpop.trf.xlu0
      %v2499 = vpop.trf.xlu0
      %v2500 = vpop.trf.xlu0
      %v2501 = vpop.trf.xlu0
      %v2502 = vpop.trf.xlu0
      %v2503 = vpop.trf.xlu0
      %v2504 = vpop.trf.xlu0
      %2505 = vxpose.xlu0.c.b16.start [1/8] %v2045, 128
      %2506 = vxpose.xlu0.c.b16.cont [2/8] 0, 128
      %2507 = vxpose.xlu0.c.b16.cont [3/8] 0, 128
      %2508 = vxpose.xlu0.c.b16.cont [4/8] 0, 128
      %2509 = vxpose.xlu0.c.b16.cont [5/8] 0, 128
      %2510 = vxpose.xlu0.c.b16.cont [6/8] 0, 128
      %2511 = vxpose.xlu0.c.b16.cont [7/8] 0, 128
      %2512 = vxpose.xlu0.c.b16.end [8/8] 0, 128
      %v2513 = vpop.trf.xlu0
      %v2514 = vpop.trf.xlu0
      %v2515 = vpop.trf.xlu0
      %v2516 = vpop.trf.xlu0
      %v2517 = vpop.trf.xlu0
      %v2518 = vpop.trf.xlu0
      %v2519 = vpop.trf.xlu0
      %v2520 = vpop.trf.xlu0
      %2521 = vxpose.xlu0.c.b16.start [1/8] %v1960, 128
      %2522 = vxpose.xlu0.c.b16.cont [2/8] 0, 128
      %2523 = vxpose.xlu0.c.b16.cont [3/8] 0, 128
      %2524 = vxpose.xlu0.c.b16.cont [4/8] 0, 128
      %2525 = vxpose.xlu0.c.b16.cont [5/8] 0, 128
      %2526 = vxpose.xlu0.c.b16.cont [6/8] 0, 128
      %2527 = vxpose.xlu0.c.b16.cont [7/8] 0, 128
      %2528 = vxpose.xlu0.c.b16.end [8/8] 0, 128
      %v2529 = vpop.trf.xlu0
      %v2530 = vpop.trf.xlu0
      %v2531 = vpop.trf.xlu0
      %v2532 = vpop.trf.xlu0
      %v2533 = vpop.trf.xlu0
      %v2534 = vpop.trf.xlu0
      %v2535 = vpop.trf.xlu0
      %v2536 = vpop.trf.xlu0
      %2537 = vxpose.xlu0.c.b16.start [1/8] %v2028, 128
      %2538 = vxpose.xlu0.c.b16.cont [2/8] 0, 128
      %2539 = vxpose.xlu0.c.b16.cont [3/8] 0, 128
      %2540 = vxpose.xlu0.c.b16.cont [4/8] 0, 128
      %2541 = vxpose.xlu0.c.b16.cont [5/8] 0, 128
      %2542 = vxpose.xlu0.c.b16.cont [6/8] 0, 128
      %2543 = vxpose.xlu0.c.b16.cont [7/8] 0, 128
      %2544 = vxpose.xlu0.c.b16.end [8/8] 0, 128
      %v2545 = vpop.trf.xlu0
      %v2546 = vpop.trf.xlu0
      %v2547 = vpop.trf.xlu0
      %v2548 = vpop.trf.xlu0
      %v2549 = vpop.trf.xlu0
      %v2550 = vpop.trf.xlu0
      %v2551 = vpop.trf.xlu0
      %v2552 = vpop.trf.xlu0
      %2553 = vxpose.xlu0.c.b16.start [1/8] %v1978, 128
      %2554 = vxpose.xlu0.c.b16.cont [2/8] 0, 128
      %2555 = vxpose.xlu0.c.b16.cont [3/8] 0, 128
      %2556 = vxpose.xlu0.c.b16.cont [4/8] 0, 128
      %2557 = vxpose.xlu0.c.b16.cont [5/8] 0, 128
      %2558 = vxpose.xlu0.c.b16.cont [6/8] 0, 128
      %2559 = vxpose.xlu0.c.b16.cont [7/8] 0, 128
      %2560 = vxpose.xlu0.c.b16.end [8/8] 0, 128
      %v2561 = vpop.trf.xlu0
      %v2562 = vpop.trf.xlu0
      %v2563 = vpop.trf.xlu0
      %v2564 = vpop.trf.xlu0
      %v2565 = vpop.trf.xlu0
      %v2566 = vpop.trf.xlu0
      %v2567 = vpop.trf.xlu0
      %v2568 = vpop.trf.xlu0
      %2569 = vxpose.xlu0.c.b16.start [1/8] %v2046, 128
      %2570 = vxpose.xlu0.c.b16.cont [2/8] 0, 128
      %2571 = vxpose.xlu0.c.b16.cont [3/8] 0, 128
      %2572 = vxpose.xlu0.c.b16.cont [4/8] 0, 128
      %2573 = vxpose.xlu0.c.b16.cont [5/8] 0, 128
      %2574 = vxpose.xlu0.c.b16.cont [6/8] 0, 128
      %2575 = vxpose.xlu0.c.b16.cont [7/8] 0, 128
      %2576 = vxpose.xlu0.c.b16.end [8/8] 0, 128
      %v2577 = vpop.trf.xlu0
      %v2578 = vpop.trf.xlu0
      %v2579 = vpop.trf.xlu0
      %v2580 = vpop.trf.xlu0
      %v2581 = vpop.trf.xlu0
      %v2582 = vpop.trf.xlu0
      %v2583 = vpop.trf.xlu0
      %v2584 = vpop.trf.xlu0
      %2585 = vxpose.xlu0.c.b16.start [1/8] %v1969, 128
      %2586 = vxpose.xlu0.c.b16.cont [2/8] 0, 128
      %2587 = vxpose.xlu0.c.b16.cont [3/8] 0, 128
      %2588 = vxpose.xlu0.c.b16.cont [4/8] 0, 128
      %2589 = vxpose.xlu0.c.b16.cont [5/8] 0, 128
      %2590 = vxpose.xlu0.c.b16.cont [6/8] 0, 128
      %2591 = vxpose.xlu0.c.b16.cont [7/8] 0, 128
      %2592 = vxpose.xlu0.c.b16.end [8/8] 0, 128
      %v2593 = vpop.trf.xlu0
      %v2594 = vpop.trf.xlu0
      %v2595 = vpop.trf.xlu0
      %v2596 = vpop.trf.xlu0
      %v2597 = vpop.trf.xlu0
      %v2598 = vpop.trf.xlu0
      %v2599 = vpop.trf.xlu0
      %v2600 = vpop.trf.xlu0
      %2601 = vxpose.xlu0.c.b16.start [1/8] %v2037, 128
      %2602 = vxpose.xlu0.c.b16.cont [2/8] 0, 128
      %2603 = vxpose.xlu0.c.b16.cont [3/8] 0, 128
      %2604 = vxpose.xlu0.c.b16.cont [4/8] 0, 128
      %2605 = vxpose.xlu0.c.b16.cont [5/8] 0, 128
      %2606 = vxpose.xlu0.c.b16.cont [6/8] 0, 128
      %2607 = vxpose.xlu0.c.b16.cont [7/8] 0, 128
      %2608 = vxpose.xlu0.c.b16.end [8/8] 0, 128
      %v2609 = vpop.trf.xlu0
      %v2610 = vpop.trf.xlu0
      %v2611 = vpop.trf.xlu0
      %v2612 = vpop.trf.xlu0
      %v2613 = vpop.trf.xlu0
      %v2614 = vpop.trf.xlu0
      %v2615 = vpop.trf.xlu0
      %v2616 = vpop.trf.xlu0
      %2617 = vxpose.xlu0.c.b16.start [1/8] %v1979, 128
      %2618 = vxpose.xlu0.c.b16.cont [2/8] 0, 128
      %2619 = vxpose.xlu0.c.b16.cont [3/8] 0, 128
      %2620 = vxpose.xlu0.c.b16.cont [4/8] 0, 128
      %2621 = vxpose.xlu0.c.b16.cont [5/8] 0, 128
      %2622 = vxpose.xlu0.c.b16.cont [6/8] 0, 128
      %2623 = vxpose.xlu0.c.b16.cont [7/8] 0, 128
      %2624 = vxpose.xlu0.c.b16.end [8/8] 0, 128
      %v2625 = vpop.trf.xlu0
      %v2626 = vpop.trf.xlu0
      %v2627 = vpop.trf.xlu0
      %v2628 = vpop.trf.xlu0
      %v2629 = vpop.trf.xlu0
      %v2630 = vpop.trf.xlu0
      %v2631 = vpop.trf.xlu0
      %v2632 = vpop.trf.xlu0
      %2633 = vxpose.xlu0.c.b16.start [1/8] %v2047, 128
      %2634 = vxpose.xlu0.c.b16.cont [2/8] 0, 128
      %2635 = vxpose.xlu0.c.b16.cont [3/8] 0, 128
      %2636 = vxpose.xlu0.c.b16.cont [4/8] 0, 128
      %2637 = vxpose.xlu0.c.b16.cont [5/8] 0, 128
      %2638 = vxpose.xlu0.c.b16.cont [6/8] 0, 128
      %2639 = vxpose.xlu0.c.b16.cont [7/8] 0, 128
      %2640 = vxpose.xlu0.c.b16.end [8/8] 0, 128
      %v2641 = vpop.trf.xlu0
      %v2642 = vpop.trf.xlu0
      %v2643 = vpop.trf.xlu0
      %v2644 = vpop.trf.xlu0
      %v2645 = vpop.trf.xlu0
      %v2646 = vpop.trf.xlu0
      %v2647 = vpop.trf.xlu0
      %v2648 = vpop.trf.xlu0
      %2649 = vxpose.xlu0.c.b16.start [1/8] %v1976, 128
      %2650 = vxpose.xlu0.c.b16.cont [2/8] 0, 128
      %2651 = vxpose.xlu0.c.b16.cont [3/8] 0, 128
      %2652 = vxpose.xlu0.c.b16.cont [4/8] 0, 128
      %2653 = vxpose.xlu0.c.b16.cont [5/8] 0, 128
      %2654 = vxpose.xlu0.c.b16.cont [6/8] 0, 128
      %2655 = vxpose.xlu0.c.b16.cont [7/8] 0, 128
      %2656 = vxpose.xlu0.c.b16.end [8/8] 0, 128
      %v2657 = vpop.trf.xlu0
      %v2658 = vpop.trf.xlu0
      %v2659 = vpop.trf.xlu0
      %v2660 = vpop.trf.xlu0
      %v2661 = vpop.trf.xlu0
      %v2662 = vpop.trf.xlu0
      %v2663 = vpop.trf.xlu0
      %v2664 = vpop.trf.xlu0
      %2665 = vxpose.xlu0.c.b16.start [1/8] %v2044, 128
      %2666 = vxpose.xlu0.c.b16.cont [2/8] 0, 128
      %2667 = vxpose.xlu0.c.b16.cont [3/8] 0, 128
      %2668 = vxpose.xlu0.c.b16.cont [4/8] 0, 128
      %2669 = vxpose.xlu0.c.b16.cont [5/8] 0, 128
      %2670 = vxpose.xlu0.c.b16.cont [6/8] 0, 128
      %2671 = vxpose.xlu0.c.b16.cont [7/8] 0, 128
      %2672 = vxpose.xlu0.c.b16.end [8/8] 0, 128
      %v2673 = vpop.trf.xlu0
      %v2674 = vpop.trf.xlu0
      %v2675 = vpop.trf.xlu0
      %v2676 = vpop.trf.xlu0
      %v2677 = vpop.trf.xlu0
      %v2678 = vpop.trf.xlu0
      %v2679 = vpop.trf.xlu0
      %v2680 = vpop.trf.xlu0
      %2681 = vxpose.xlu0.c.b16.start [1/8] %v1980, 128
      %2682 = vxpose.xlu0.c.b16.cont [2/8] 0, 128
      %2683 = vxpose.xlu0.c.b16.cont [3/8] 0, 128
      %2684 = vxpose.xlu0.c.b16.cont [4/8] 0, 128
      %2685 = vxpose.xlu0.c.b16.cont [5/8] 0, 128
      %2686 = vxpose.xlu0.c.b16.cont [6/8] 0, 128
      %2687 = vxpose.xlu0.c.b16.cont [7/8] 0, 128
      %2688 = vxpose.xlu0.c.b16.end [8/8] 0, 128
      %v2689 = vpop.trf.xlu0
      %v2690 = vpop.trf.xlu0
      %v2691 = vpop.trf.xlu0
      %v2692 = vpop.trf.xlu0
      %v2693 = vpop.trf.xlu0
      %v2694 = vpop.trf.xlu0
      %v2695 = vpop.trf.xlu0
      %v2696 = vpop.trf.xlu0
      %2697 = vxpose.xlu0.c.b16.start [1/8] %v2048, 128
      %2698 = vxpose.xlu0.c.b16.cont [2/8] 0, 128
      %2699 = vxpose.xlu0.c.b16.cont [3/8] 0, 128
      %2700 = vxpose.xlu0.c.b16.cont [4/8] 0, 128
      %2701 = vxpose.xlu0.c.b16.cont [5/8] 0, 128
      %2702 = vxpose.xlu0.c.b16.cont [6/8] 0, 128
      %2703 = vxpose.xlu0.c.b16.cont [7/8] 0, 128
      %2704 = vxpose.xlu0.c.b16.end [8/8] 0, 128
      %v2705 = vpop.trf.xlu0
      %v2706 = vpop.trf.xlu0
      %v2707 = vpop.trf.xlu0
      %v2708 = vpop.trf.xlu0
      %v2709 = vpop.trf.xlu0
      %v2710 = vpop.trf.xlu0
      %v2711 = vpop.trf.xlu0
      %v2712 = vpop.trf.xlu0
      %2713 = vxpose.xlu0.c.b16.start [1/8] %v2089, 128
      %2714 = vxpose.xlu0.c.b16.cont [2/8] 0, 128
      %2715 = vxpose.xlu0.c.b16.cont [3/8] 0, 128
      %2716 = vxpose.xlu0.c.b16.cont [4/8] 0, 128
      %2717 = vxpose.xlu0.c.b16.cont [5/8] 0, 128
      %2718 = vxpose.xlu0.c.b16.cont [6/8] 0, 128
      %2719 = vxpose.xlu0.c.b16.cont [7/8] 0, 128
      %2720 = vxpose.xlu0.c.b16.end [8/8] 0, 128
      %v2721 = vpop.trf.xlu0
      %v2722 = vpop.trf.xlu0
      %v2723 = vpop.trf.xlu0
      %v2724 = vpop.trf.xlu0
      %v2725 = vpop.trf.xlu0
      %v2726 = vpop.trf.xlu0
      %v2727 = vpop.trf.xlu0
      %v2728 = vpop.trf.xlu0
      %2729 = vxpose.xlu0.c.b16.start [1/8] %v2157, 128
      %2730 = vxpose.xlu0.c.b16.cont [2/8] 0, 128
      %2731 = vxpose.xlu0.c.b16.cont [3/8] 0, 128
      %2732 = vxpose.xlu0.c.b16.cont [4/8] 0, 128
      %2733 = vxpose.xlu0.c.b16.cont [5/8] 0, 128
      %2734 = vxpose.xlu0.c.b16.cont [6/8] 0, 128
      %2735 = vxpose.xlu0.c.b16.cont [7/8] 0, 128
      %2736 = vxpose.xlu0.c.b16.end [8/8] 0, 128
      %v2737 = vpop.trf.xlu0
      %v2738 = vpop.trf.xlu0
      %v2739 = vpop.trf.xlu0
      %v2740 = vpop.trf.xlu0
      %v2741 = vpop.trf.xlu0
      %v2742 = vpop.trf.xlu0
      %v2743 = vpop.trf.xlu0
      %v2744 = vpop.trf.xlu0
      %2745 = vxpose.xlu0.c.b16.start [1/8] %v2113, 128
      %2746 = vxpose.xlu0.c.b16.cont [2/8] 0, 128
      %2747 = vxpose.xlu0.c.b16.cont [3/8] 0, 128
      %2748 = vxpose.xlu0.c.b16.cont [4/8] 0, 128
      %2749 = vxpose.xlu0.c.b16.cont [5/8] 0, 128
      %2750 = vxpose.xlu0.c.b16.cont [6/8] 0, 128
      %2751 = vxpose.xlu0.c.b16.cont [7/8] 0, 128
      %2752 = vxpose.xlu0.c.b16.end [8/8] 0, 128
      %v2753 = vpop.trf.xlu0
      %v2754 = vpop.trf.xlu0
      %v2755 = vpop.trf.xlu0
      %v2756 = vpop.trf.xlu0
      %v2757 = vpop.trf.xlu0
      %v2758 = vpop.trf.xlu0
      %v2759 = vpop.trf.xlu0
      %v2760 = vpop.trf.xlu0
      %2761 = vxpose.xlu0.c.b16.start [1/8] %v2181, 128
      %2762 = vxpose.xlu0.c.b16.cont [2/8] 0, 128
      %2763 = vxpose.xlu0.c.b16.cont [3/8] 0, 128
      %2764 = vxpose.xlu0.c.b16.cont [4/8] 0, 128
      %2765 = vxpose.xlu0.c.b16.cont [5/8] 0, 128
      %2766 = vxpose.xlu0.c.b16.cont [6/8] 0, 128
      %2767 = vxpose.xlu0.c.b16.cont [7/8] 0, 128
      %2768 = vxpose.xlu0.c.b16.end [8/8] 0, 128
      %v2769 = vpop.trf.xlu0
      %v2770 = vpop.trf.xlu0
      %v2771 = vpop.trf.xlu0
      %v2772 = vpop.trf.xlu0
      %v2773 = vpop.trf.xlu0
      %v2774 = vpop.trf.xlu0
      %v2775 = vpop.trf.xlu0
      %v2776 = vpop.trf.xlu0
      %2777 = vxpose.xlu0.c.b16.start [1/8] %v2096, 128
      %2778 = vxpose.xlu0.c.b16.cont [2/8] 0, 128
      %2779 = vxpose.xlu0.c.b16.cont [3/8] 0, 128
      %2780 = vxpose.xlu0.c.b16.cont [4/8] 0, 128
      %2781 = vxpose.xlu0.c.b16.cont [5/8] 0, 128
      %2782 = vxpose.xlu0.c.b16.cont [6/8] 0, 128
      %2783 = vxpose.xlu0.c.b16.cont [7/8] 0, 128
      %2784 = vxpose.xlu0.c.b16.end [8/8] 0, 128
      %v2785 = vpop.trf.xlu0
      %v2786 = vpop.trf.xlu0
      %v2787 = vpop.trf.xlu0
      %v2788 = vpop.trf.xlu0
      %v2789 = vpop.trf.xlu0
      %v2790 = vpop.trf.xlu0
      %v2791 = vpop.trf.xlu0
      %v2792 = vpop.trf.xlu0
      %2793 = vxpose.xlu0.c.b16.start [1/8] %v2164, 128
      %2794 = vxpose.xlu0.c.b16.cont [2/8] 0, 128
      %2795 = vxpose.xlu0.c.b16.cont [3/8] 0, 128
      %2796 = vxpose.xlu0.c.b16.cont [4/8] 0, 128
      %2797 = vxpose.xlu0.c.b16.cont [5/8] 0, 128
      %2798 = vxpose.xlu0.c.b16.cont [6/8] 0, 128
      %2799 = vxpose.xlu0.c.b16.cont [7/8] 0, 128
      %2800 = vxpose.xlu0.c.b16.end [8/8] 0, 128
      %v2801 = vpop.trf.xlu0
      %v2802 = vpop.trf.xlu0
      %v2803 = vpop.trf.xlu0
      %v2804 = vpop.trf.xlu0
      %v2805 = vpop.trf.xlu0
      %v2806 = vpop.trf.xlu0
      %v2807 = vpop.trf.xlu0
      %v2808 = vpop.trf.xlu0
      %2809 = vxpose.xlu0.c.b16.start [1/8] %v2114, 128
      %2810 = vxpose.xlu0.c.b16.cont [2/8] 0, 128
      %2811 = vxpose.xlu0.c.b16.cont [3/8] 0, 128
      %2812 = vxpose.xlu0.c.b16.cont [4/8] 0, 128
      %2813 = vxpose.xlu0.c.b16.cont [5/8] 0, 128
      %2814 = vxpose.xlu0.c.b16.cont [6/8] 0, 128
      %2815 = vxpose.xlu0.c.b16.cont [7/8] 0, 128
      %2816 = vxpose.xlu0.c.b16.end [8/8] 0, 128
      %v2817 = vpop.trf.xlu0
      %v2818 = vpop.trf.xlu0
      %v2819 = vpop.trf.xlu0
      %v2820 = vpop.trf.xlu0
      %v2821 = vpop.trf.xlu0
      %v2822 = vpop.trf.xlu0
      %v2823 = vpop.trf.xlu0
      %v2824 = vpop.trf.xlu0
      %2825 = vxpose.xlu0.c.b16.start [1/8] %v2182, 128
      %2826 = vxpose.xlu0.c.b16.cont [2/8] 0, 128
      %2827 = vxpose.xlu0.c.b16.cont [3/8] 0, 128
      %2828 = vxpose.xlu0.c.b16.cont [4/8] 0, 128
      %2829 = vxpose.xlu0.c.b16.cont [5/8] 0, 128
      %2830 = vxpose.xlu0.c.b16.cont [6/8] 0, 128
      %2831 = vxpose.xlu0.c.b16.cont [7/8] 0, 128
      %2832 = vxpose.xlu0.c.b16.end [8/8] 0, 128
      %v2833 = vpop.trf.xlu0
      %v2834 = vpop.trf.xlu0
      %v2835 = vpop.trf.xlu0
      %v2836 = vpop.trf.xlu0
      %v2837 = vpop.trf.xlu0
      %v2838 = vpop.trf.xlu0
      %v2839 = vpop.trf.xlu0
      %v2840 = vpop.trf.xlu0
      %2841 = vxpose.xlu0.c.b16.start [1/8] %v2105, 128
      %2842 = vxpose.xlu0.c.b16.cont [2/8] 0, 128
      %2843 = vxpose.xlu0.c.b16.cont [3/8] 0, 128
      %2844 = vxpose.xlu0.c.b16.cont [4/8] 0, 128
      %2845 = vxpose.xlu0.c.b16.cont [5/8] 0, 128
      %2846 = vxpose.xlu0.c.b16.cont [6/8] 0, 128
      %2847 = vxpose.xlu0.c.b16.cont [7/8] 0, 128
      %2848 = vxpose.xlu0.c.b16.end [8/8] 0, 128
      %v2849 = vpop.trf.xlu0
      %v2850 = vpop.trf.xlu0
      %v2851 = vpop.trf.xlu0
      %v2852 = vpop.trf.xlu0
      %v2853 = vpop.trf.xlu0
      %v2854 = vpop.trf.xlu0
      %v2855 = vpop.trf.xlu0
      %v2856 = vpop.trf.xlu0
      %2857 = vxpose.xlu0.c.b16.start [1/8] %v2173, 128
      %2858 = vxpose.xlu0.c.b16.cont [2/8] 0, 128
      %2859 = vxpose.xlu0.c.b16.cont [3/8] 0, 128
      %2860 = vxpose.xlu0.c.b16.cont [4/8] 0, 128
      %2861 = vxpose.xlu0.c.b16.cont [5/8] 0, 128
      %2862 = vxpose.xlu0.c.b16.cont [6/8] 0, 128
      %2863 = vxpose.xlu0.c.b16.cont [7/8] 0, 128
      %2864 = vxpose.xlu0.c.b16.end [8/8] 0, 128
      %v2865 = vpop.trf.xlu0
      %v2866 = vpop.trf.xlu0
      %v2867 = vpop.trf.xlu0
      %v2868 = vpop.trf.xlu0
      %v2869 = vpop.trf.xlu0
      %v2870 = vpop.trf.xlu0
      %v2871 = vpop.trf.xlu0
      %v2872 = vpop.trf.xlu0
      %2873 = vxpose.xlu0.c.b16.start [1/8] %v2115, 128
      %2874 = vxpose.xlu0.c.b16.cont [2/8] 0, 128
      %2875 = vxpose.xlu0.c.b16.cont [3/8] 0, 128
      %2876 = vxpose.xlu0.c.b16.cont [4/8] 0, 128
      %2877 = vxpose.xlu0.c.b16.cont [5/8] 0, 128
      %2878 = vxpose.xlu0.c.b16.cont [6/8] 0, 128
      %2879 = vxpose.xlu0.c.b16.cont [7/8] 0, 128
      %2880 = vxpose.xlu0.c.b16.end [8/8] 0, 128
      %v2881 = vpop.trf.xlu0
      %v2882 = vpop.trf.xlu0
      %v2883 = vpop.trf.xlu0
      %v2884 = vpop.trf.xlu0
      %v2885 = vpop.trf.xlu0
      %v2886 = vpop.trf.xlu0
      %v2887 = vpop.trf.xlu0
      %v2888 = vpop.trf.xlu0
      %2889 = vxpose.xlu0.c.b16.start [1/8] %v2183, 128
      %2890 = vxpose.xlu0.c.b16.cont [2/8] 0, 128
      %2891 = vxpose.xlu0.c.b16.cont [3/8] 0, 128
      %2892 = vxpose.xlu0.c.b16.cont [4/8] 0, 128
      %2893 = vxpose.xlu0.c.b16.cont [5/8] 0, 128
      %2894 = vxpose.xlu0.c.b16.cont [6/8] 0, 128
      %2895 = vxpose.xlu0.c.b16.cont [7/8] 0, 128
      %2896 = vxpose.xlu0.c.b16.end [8/8] 0, 128
      %v2897 = vpop.trf.xlu0
      %v2898 = vpop.trf.xlu0
      %v2899 = vpop.trf.xlu0
      %v2900 = vpop.trf.xlu0
      %v2901 = vpop.trf.xlu0
      %v2902 = vpop.trf.xlu0
      %v2903 = vpop.trf.xlu0
      %v2904 = vpop.trf.xlu0
      %2905 = vxpose.xlu0.c.b16.start [1/8] %v2112, 128
      %2906 = vxpose.xlu0.c.b16.cont [2/8] 0, 128
      %2907 = vxpose.xlu0.c.b16.cont [3/8] 0, 128
      %2908 = vxpose.xlu0.c.b16.cont [4/8] 0, 128
      %2909 = vxpose.xlu0.c.b16.cont [5/8] 0, 128
      %2910 = vxpose.xlu0.c.b16.cont [6/8] 0, 128
      %2911 = vxpose.xlu0.c.b16.cont [7/8] 0, 128
      %2912 = vxpose.xlu0.c.b16.end [8/8] 0, 128
      %v2913 = vpop.trf.xlu0
      %v2914 = vpop.trf.xlu0
      %v2915 = vpop.trf.xlu0
      %v2916 = vpop.trf.xlu0
      %v2917 = vpop.trf.xlu0
      %v2918 = vpop.trf.xlu0
      %v2919 = vpop.trf.xlu0
      %v2920 = vpop.trf.xlu0
      %2921 = vxpose.xlu0.c.b16.start [1/8] %v2180, 128
      %2922 = vxpose.xlu0.c.b16.cont [2/8] 0, 128
      %2923 = vxpose.xlu0.c.b16.cont [3/8] 0, 128
      %2924 = vxpose.xlu0.c.b16.cont [4/8] 0, 128
      %2925 = vxpose.xlu0.c.b16.cont [5/8] 0, 128
      %2926 = vxpose.xlu0.c.b16.cont [6/8] 0, 128
      %2927 = vxpose.xlu0.c.b16.cont [7/8] 0, 128
      %2928 = vxpose.xlu0.c.b16.end [8/8] 0, 128
      %v2929 = vpop.trf.xlu0
      %v2930 = vpop.trf.xlu0
      %v2931 = vpop.trf.xlu0
      %v2932 = vpop.trf.xlu0
      %v2933 = vpop.trf.xlu0
      %v2934 = vpop.trf.xlu0
      %v2935 = vpop.trf.xlu0
      %v2936 = vpop.trf.xlu0
      %2937 = vxpose.xlu0.c.b16.start [1/8] %v2116, 128
      %2938 = vxpose.xlu0.c.b16.cont [2/8] 0, 128
      %2939 = vxpose.xlu0.c.b16.cont [3/8] 0, 128
      %2940 = vxpose.xlu0.c.b16.cont [4/8] 0, 128
      %2941 = vxpose.xlu0.c.b16.cont [5/8] 0, 128
      %2942 = vxpose.xlu0.c.b16.cont [6/8] 0, 128
      %2943 = vxpose.xlu0.c.b16.cont [7/8] 0, 128
      %2944 = vxpose.xlu0.c.b16.end [8/8] 0, 128
      %v2945 = vpop.trf.xlu0
      %v2946 = vpop.trf.xlu0
      %v2947 = vpop.trf.xlu0
      %v2948 = vpop.trf.xlu0
      %v2949 = vpop.trf.xlu0
      %v2950 = vpop.trf.xlu0
      %v2951 = vpop.trf.xlu0
      %v2952 = vpop.trf.xlu0
      %2953 = vxpose.xlu0.c.b16.start [1/8] %v2184, 128
      %2954 = vxpose.xlu0.c.b16.cont [2/8] 0, 128
      %2955 = vxpose.xlu0.c.b16.cont [3/8] 0, 128
      %2956 = vxpose.xlu0.c.b16.cont [4/8] 0, 128
      %2957 = vxpose.xlu0.c.b16.cont [5/8] 0, 128
      %2958 = vxpose.xlu0.c.b16.cont [6/8] 0, 128
      %2959 = vxpose.xlu0.c.b16.cont [7/8] 0, 128
      %2960 = vxpose.xlu0.c.b16.end [8/8] 0, 128
      %v2961 = vpop.trf.xlu0
      %v2962 = vpop.trf.xlu0
      %v2963 = vpop.trf.xlu0
      %v2964 = vpop.trf.xlu0
      %v2965 = vpop.trf.xlu0
      %v2966 = vpop.trf.xlu0
      %v2967 = vpop.trf.xlu0
      %v2968 = vpop.trf.xlu0
      %2969 = vxpose.xlu0.c.b16.start [1/8] %v2225, 128
      %2970 = vxpose.xlu0.c.b16.cont [2/8] 0, 128
      %2971 = vxpose.xlu0.c.b16.cont [3/8] 0, 128
      %2972 = vxpose.xlu0.c.b16.cont [4/8] 0, 128
      %2973 = vxpose.xlu0.c.b16.cont [5/8] 0, 128
      %2974 = vxpose.xlu0.c.b16.cont [6/8] 0, 128
      %2975 = vxpose.xlu0.c.b16.cont [7/8] 0, 128
      %2976 = vxpose.xlu0.c.b16.end [8/8] 0, 128
      %v2977 = vpop.trf.xlu0
      %v2978 = vpop.trf.xlu0
      %v2979 = vpop.trf.xlu0
      %v2980 = vpop.trf.xlu0
      %v2981 = vpop.trf.xlu0
      %v2982 = vpop.trf.xlu0
      %v2983 = vpop.trf.xlu0
      %v2984 = vpop.trf.xlu0
      %2985 = vxpose.xlu0.c.b16.start [1/8] %v2293, 128
      %2986 = vxpose.xlu0.c.b16.cont [2/8] 0, 128
      %2987 = vxpose.xlu0.c.b16.cont [3/8] 0, 128
      %2988 = vxpose.xlu0.c.b16.cont [4/8] 0, 128
      %2989 = vxpose.xlu0.c.b16.cont [5/8] 0, 128
      %2990 = vxpose.xlu0.c.b16.cont [6/8] 0, 128
      %2991 = vxpose.xlu0.c.b16.cont [7/8] 0, 128
      %2992 = vxpose.xlu0.c.b16.end [8/8] 0, 128
      %v2993 = vpop.trf.xlu0
      %v2994 = vpop.trf.xlu0
      %v2995 = vpop.trf.xlu0
      %v2996 = vpop.trf.xlu0
      %v2997 = vpop.trf.xlu0
      %v2998 = vpop.trf.xlu0
      %v2999 = vpop.trf.xlu0
      %v3000 = vpop.trf.xlu0
      %3001 = vxpose.xlu0.c.b16.start [1/8] %v2249, 128
      %3002 = vxpose.xlu0.c.b16.cont [2/8] 0, 128
      %3003 = vxpose.xlu0.c.b16.cont [3/8] 0, 128
      %3004 = vxpose.xlu0.c.b16.cont [4/8] 0, 128
      %3005 = vxpose.xlu0.c.b16.cont [5/8] 0, 128
      %3006 = vxpose.xlu0.c.b16.cont [6/8] 0, 128
      %3007 = vxpose.xlu0.c.b16.cont [7/8] 0, 128
      %3008 = vxpose.xlu0.c.b16.end [8/8] 0, 128
      %v3009 = vpop.trf.xlu0
      %v3010 = vpop.trf.xlu0
      %v3011 = vpop.trf.xlu0
      %v3012 = vpop.trf.xlu0
      %v3013 = vpop.trf.xlu0
      %v3014 = vpop.trf.xlu0
      %v3015 = vpop.trf.xlu0
      %v3016 = vpop.trf.xlu0
      %3017 = vxpose.xlu0.c.b16.start [1/8] %v2317, 128
      %3018 = vxpose.xlu0.c.b16.cont [2/8] 0, 128
      %3019 = vxpose.xlu0.c.b16.cont [3/8] 0, 128
      %3020 = vxpose.xlu0.c.b16.cont [4/8] 0, 128
      %3021 = vxpose.xlu0.c.b16.cont [5/8] 0, 128
      %3022 = vxpose.xlu0.c.b16.cont [6/8] 0, 128
      %3023 = vxpose.xlu0.c.b16.cont [7/8] 0, 128
      %3024 = vxpose.xlu0.c.b16.end [8/8] 0, 128
      %v3025 = vpop.trf.xlu0
      %v3026 = vpop.trf.xlu0
      %v3027 = vpop.trf.xlu0
      %v3028 = vpop.trf.xlu0
      %v3029 = vpop.trf.xlu0
      %v3030 = vpop.trf.xlu0
      %v3031 = vpop.trf.xlu0
      %v3032 = vpop.trf.xlu0
      %3033 = vxpose.xlu0.c.b16.start [1/8] %v2232, 128
      %3034 = vxpose.xlu0.c.b16.cont [2/8] 0, 128
      %3035 = vxpose.xlu0.c.b16.cont [3/8] 0, 128
      %3036 = vxpose.xlu0.c.b16.cont [4/8] 0, 128
      %3037 = vxpose.xlu0.c.b16.cont [5/8] 0, 128
      %3038 = vxpose.xlu0.c.b16.cont [6/8] 0, 128
      %3039 = vxpose.xlu0.c.b16.cont [7/8] 0, 128
      %3040 = vxpose.xlu0.c.b16.end [8/8] 0, 128
      %v3041 = vpop.trf.xlu0
      %v3042 = vpop.trf.xlu0
      %v3043 = vpop.trf.xlu0
      %v3044 = vpop.trf.xlu0
      %v3045 = vpop.trf.xlu0
      %v3046 = vpop.trf.xlu0
      %v3047 = vpop.trf.xlu0
      %v3048 = vpop.trf.xlu0
      %3049 = vxpose.xlu0.c.b16.start [1/8] %v2300, 128
      %3050 = vxpose.xlu0.c.b16.cont [2/8] 0, 128
      %3051 = vxpose.xlu0.c.b16.cont [3/8] 0, 128
      %3052 = vxpose.xlu0.c.b16.cont [4/8] 0, 128
      %3053 = vxpose.xlu0.c.b16.cont [5/8] 0, 128
      %3054 = vxpose.xlu0.c.b16.cont [6/8] 0, 128
      %3055 = vxpose.xlu0.c.b16.cont [7/8] 0, 128
      %3056 = vxpose.xlu0.c.b16.end [8/8] 0, 128
      %v3057 = vpop.trf.xlu0
      %v3058 = vpop.trf.xlu0
      %v3059 = vpop.trf.xlu0
      %v3060 = vpop.trf.xlu0
      %v3061 = vpop.trf.xlu0
      %v3062 = vpop.trf.xlu0
      %v3063 = vpop.trf.xlu0
      %v3064 = vpop.trf.xlu0
      %3065 = vxpose.xlu0.c.b16.start [1/8] %v2250, 128
      %3066 = vxpose.xlu0.c.b16.cont [2/8] 0, 128
      %3067 = vxpose.xlu0.c.b16.cont [3/8] 0, 128
      %3068 = vxpose.xlu0.c.b16.cont [4/8] 0, 128
      %3069 = vxpose.xlu0.c.b16.cont [5/8] 0, 128
      %3070 = vxpose.xlu0.c.b16.cont [6/8] 0, 128
      %3071 = vxpose.xlu0.c.b16.cont [7/8] 0, 128
      %3072 = vxpose.xlu0.c.b16.end [8/8] 0, 128
      %v3073 = vpop.trf.xlu0
      %v3074 = vpop.trf.xlu0
      %v3075 = vpop.trf.xlu0
      %v3076 = vpop.trf.xlu0
      %v3077 = vpop.trf.xlu0
      %v3078 = vpop.trf.xlu0
      %v3079 = vpop.trf.xlu0
      %v3080 = vpop.trf.xlu0
      %3081 = vxpose.xlu0.c.b16.start [1/8] %v2318, 128
      %3082 = vxpose.xlu0.c.b16.cont [2/8] 0, 128
      %3083 = vxpose.xlu0.c.b16.cont [3/8] 0, 128
      %3084 = vxpose.xlu0.c.b16.cont [4/8] 0, 128
      %3085 = vxpose.xlu0.c.b16.cont [5/8] 0, 128
      %3086 = vxpose.xlu0.c.b16.cont [6/8] 0, 128
      %3087 = vxpose.xlu0.c.b16.cont [7/8] 0, 128
      %3088 = vxpose.xlu0.c.b16.end [8/8] 0, 128
      %v3089 = vpop.trf.xlu0
      %v3090 = vpop.trf.xlu0
      %v3091 = vpop.trf.xlu0
      %v3092 = vpop.trf.xlu0
      %v3093 = vpop.trf.xlu0
      %v3094 = vpop.trf.xlu0
      %v3095 = vpop.trf.xlu0
      %v3096 = vpop.trf.xlu0
      %3097 = vxpose.xlu0.c.b16.start [1/8] %v2241, 128
      %3098 = vxpose.xlu0.c.b16.cont [2/8] 0, 128
      %3099 = vxpose.xlu0.c.b16.cont [3/8] 0, 128
      %3100 = vxpose.xlu0.c.b16.cont [4/8] 0, 128
      %3101 = vxpose.xlu0.c.b16.cont [5/8] 0, 128
      %3102 = vxpose.xlu0.c.b16.cont [6/8] 0, 128
      %3103 = vxpose.xlu0.c.b16.cont [7/8] 0, 128
      %3104 = vxpose.xlu0.c.b16.end [8/8] 0, 128
      %v3105 = vpop.trf.xlu0
      %v3106 = vpop.trf.xlu0
      %v3107 = vpop.trf.xlu0
      %v3108 = vpop.trf.xlu0
      %v3109 = vpop.trf.xlu0
      %v3110 = vpop.trf.xlu0
      %v3111 = vpop.trf.xlu0
      %v3112 = vpop.trf.xlu0
      %3113 = vxpose.xlu0.c.b16.start [1/8] %v2309, 128
      %3114 = vxpose.xlu0.c.b16.cont [2/8] 0, 128
      %3115 = vxpose.xlu0.c.b16.cont [3/8] 0, 128
      %3116 = vxpose.xlu0.c.b16.cont [4/8] 0, 128
      %3117 = vxpose.xlu0.c.b16.cont [5/8] 0, 128
      %3118 = vxpose.xlu0.c.b16.cont [6/8] 0, 128
      %3119 = vxpose.xlu0.c.b16.cont [7/8] 0, 128
      %3120 = vxpose.xlu0.c.b16.end [8/8] 0, 128
      %v3121 = vpop.trf.xlu0
      %v3122 = vpop.trf.xlu0
      %v3123 = vpop.trf.xlu0
      %v3124 = vpop.trf.xlu0
      %v3125 = vpop.trf.xlu0
      %v3126 = vpop.trf.xlu0
      %v3127 = vpop.trf.xlu0
      %v3128 = vpop.trf.xlu0
      %3129 = vxpose.xlu0.c.b16.start [1/8] %v2251, 128
      %3130 = vxpose.xlu0.c.b16.cont [2/8] 0, 128
      %3131 = vxpose.xlu0.c.b16.cont [3/8] 0, 128
      %3132 = vxpose.xlu0.c.b16.cont [4/8] 0, 128
      %3133 = vxpose.xlu0.c.b16.cont [5/8] 0, 128
      %3134 = vxpose.xlu0.c.b16.cont [6/8] 0, 128
      %3135 = vxpose.xlu0.c.b16.cont [7/8] 0, 128
      %3136 = vxpose.xlu0.c.b16.end [8/8] 0, 128
      %v3137 = vpop.trf.xlu0
      %v3138 = vpop.trf.xlu0
      %v3139 = vpop.trf.xlu0
      %v3140 = vpop.trf.xlu0
      %v3141 = vpop.trf.xlu0
      %v3142 = vpop.trf.xlu0
      %v3143 = vpop.trf.xlu0
      %v3144 = vpop.trf.xlu0
      %3145 = vxpose.xlu0.c.b16.start [1/8] %v2319, 128
      %3146 = vxpose.xlu0.c.b16.cont [2/8] 0, 128
      %3147 = vxpose.xlu0.c.b16.cont [3/8] 0, 128
      %3148 = vxpose.xlu0.c.b16.cont [4/8] 0, 128
      %3149 = vxpose.xlu0.c.b16.cont [5/8] 0, 128
      %3150 = vxpose.xlu0.c.b16.cont [6/8] 0, 128
      %3151 = vxpose.xlu0.c.b16.cont [7/8] 0, 128
      %3152 = vxpose.xlu0.c.b16.end [8/8] 0, 128
      %v3153 = vpop.trf.xlu0
      %v3154 = vpop.trf.xlu0
      %v3155 = vpop.trf.xlu0
      %v3156 = vpop.trf.xlu0
      %v3157 = vpop.trf.xlu0
      %v3158 = vpop.trf.xlu0
      %v3159 = vpop.trf.xlu0
      %v3160 = vpop.trf.xlu0
      %3161 = vxpose.xlu0.c.b16.start [1/8] %v2248, 128
      %3162 = vxpose.xlu0.c.b16.cont [2/8] 0, 128
      %3163 = vxpose.xlu0.c.b16.cont [3/8] 0, 128
      %3164 = vxpose.xlu0.c.b16.cont [4/8] 0, 128
      %3165 = vxpose.xlu0.c.b16.cont [5/8] 0, 128
      %3166 = vxpose.xlu0.c.b16.cont [6/8] 0, 128
      %3167 = vxpose.xlu0.c.b16.cont [7/8] 0, 128
      %3168 = vxpose.xlu0.c.b16.end [8/8] 0, 128
      %v3169 = vpop.trf.xlu0
      %v3170 = vpop.trf.xlu0
      %v3171 = vpop.trf.xlu0
      %v3172 = vpop.trf.xlu0
      %v3173 = vpop.trf.xlu0
      %v3174 = vpop.trf.xlu0
      %v3175 = vpop.trf.xlu0
      %v3176 = vpop.trf.xlu0
      %3177 = vxpose.xlu0.c.b16.start [1/8] %v2316, 128
      %3178 = vxpose.xlu0.c.b16.cont [2/8] 0, 128
      %3179 = vxpose.xlu0.c.b16.cont [3/8] 0, 128
      %3180 = vxpose.xlu0.c.b16.cont [4/8] 0, 128
      %3181 = vxpose.xlu0.c.b16.cont [5/8] 0, 128
      %3182 = vxpose.xlu0.c.b16.cont [6/8] 0, 128
      %3183 = vxpose.xlu0.c.b16.cont [7/8] 0, 128
      %3184 = vxpose.xlu0.c.b16.end [8/8] 0, 128
      %v3185 = vpop.trf.xlu0
      %v3186 = vpop.trf.xlu0
      %v3187 = vpop.trf.xlu0
      %v3188 = vpop.trf.xlu0
      %v3189 = vpop.trf.xlu0
      %v3190 = vpop.trf.xlu0
      %v3191 = vpop.trf.xlu0
      %v3192 = vpop.trf.xlu0
      %3193 = vxpose.xlu0.c.b16.start [1/8] %v2252, 128
      %3194 = vxpose.xlu0.c.b16.cont [2/8] 0, 128
      %3195 = vxpose.xlu0.c.b16.cont [3/8] 0, 128
      %3196 = vxpose.xlu0.c.b16.cont [4/8] 0, 128
      %3197 = vxpose.xlu0.c.b16.cont [5/8] 0, 128
      %3198 = vxpose.xlu0.c.b16.cont [6/8] 0, 128
      %3199 = vxpose.xlu0.c.b16.cont [7/8] 0, 128
      %3200 = vxpose.xlu0.c.b16.end [8/8] 0, 128
      %v3201 = vpop.trf.xlu0
      %v3202 = vpop.trf.xlu0
      %v3203 = vpop.trf.xlu0
      %v3204 = vpop.trf.xlu0
      %v3205 = vpop.trf.xlu0
      %v3206 = vpop.trf.xlu0
      %v3207 = vpop.trf.xlu0
      %v3208 = vpop.trf.xlu0
      %3209 = vxpose.xlu0.c.b16.start [1/8] %v2320, 128
      %3210 = vxpose.xlu0.c.b16.cont [2/8] 0, 128
      %3211 = vxpose.xlu0.c.b16.cont [3/8] 0, 128
      %3212 = vxpose.xlu0.c.b16.cont [4/8] 0, 128
      %3213 = vxpose.xlu0.c.b16.cont [5/8] 0, 128
      %3214 = vxpose.xlu0.c.b16.cont [6/8] 0, 128
      %3215 = vxpose.xlu0.c.b16.cont [7/8] 0, 128
      %3216 = vxpose.xlu0.c.b16.end [8/8] 0, 128
      %v3217 = vpop.trf.xlu0
      %v3218 = vpop.trf.xlu0
      %v3219 = vpop.trf.xlu0
      %v3220 = vpop.trf.xlu0
      %v3221 = vpop.trf.xlu0
      %v3222 = vpop.trf.xlu0
      %v3223 = vpop.trf.xlu0
      %v3224 = vpop.trf.xlu0
      %3225 = vxpose.xlu0.c.b16.start [1/8] %v2361, 128
      %3226 = vxpose.xlu0.c.b16.cont [2/8] 0, 128
      %3227 = vxpose.xlu0.c.b16.cont [3/8] 0, 128
      %3228 = vxpose.xlu0.c.b16.cont [4/8] 0, 128
      %3229 = vxpose.xlu0.c.b16.cont [5/8] 0, 128
      %3230 = vxpose.xlu0.c.b16.cont [6/8] 0, 128
      %3231 = vxpose.xlu0.c.b16.cont [7/8] 0, 128
      %3232 = vxpose.xlu0.c.b16.end [8/8] 0, 128
      %v3233 = vpop.trf.xlu0
      %v3234 = vpop.trf.xlu0
      %v3235 = vpop.trf.xlu0
      %v3236 = vpop.trf.xlu0
      %v3237 = vpop.trf.xlu0
      %v3238 = vpop.trf.xlu0
      %v3239 = vpop.trf.xlu0
      %v3240 = vpop.trf.xlu0
      %3241 = vxpose.xlu0.c.b16.start [1/8] %v2429, 128
      %3242 = vxpose.xlu0.c.b16.cont [2/8] 0, 128
      %3243 = vxpose.xlu0.c.b16.cont [3/8] 0, 128
      %3244 = vxpose.xlu0.c.b16.cont [4/8] 0, 128
      %3245 = vxpose.xlu0.c.b16.cont [5/8] 0, 128
      %3246 = vxpose.xlu0.c.b16.cont [6/8] 0, 128
      %3247 = vxpose.xlu0.c.b16.cont [7/8] 0, 128
      %3248 = vxpose.xlu0.c.b16.end [8/8] 0, 128
      %v3249 = vpop.trf.xlu0
      %v3250 = vpop.trf.xlu0
      %v3251 = vpop.trf.xlu0
      %v3252 = vpop.trf.xlu0
      %v3253 = vpop.trf.xlu0
      %v3254 = vpop.trf.xlu0
      %v3255 = vpop.trf.xlu0
      %v3256 = vpop.trf.xlu0
      %3257 = vxpose.xlu0.c.b16.start [1/8] %v2385, 128
      %3258 = vxpose.xlu0.c.b16.cont [2/8] 0, 128
      %3259 = vxpose.xlu0.c.b16.cont [3/8] 0, 128
      %3260 = vxpose.xlu0.c.b16.cont [4/8] 0, 128
      %3261 = vxpose.xlu0.c.b16.cont [5/8] 0, 128
      %3262 = vxpose.xlu0.c.b16.cont [6/8] 0, 128
      %3263 = vxpose.xlu0.c.b16.cont [7/8] 0, 128
      %3264 = vxpose.xlu0.c.b16.end [8/8] 0, 128
      %v3265 = vpop.trf.xlu0
      %v3266 = vpop.trf.xlu0
      %v3267 = vpop.trf.xlu0
      %v3268 = vpop.trf.xlu0
      %v3269 = vpop.trf.xlu0
      %v3270 = vpop.trf.xlu0
      %v3271 = vpop.trf.xlu0
      %v3272 = vpop.trf.xlu0
      %3273 = vxpose.xlu0.c.b16.start [1/8] %v2453, 128
      %3274 = vxpose.xlu0.c.b16.cont [2/8] 0, 128
      %3275 = vxpose.xlu0.c.b16.cont [3/8] 0, 128
      %3276 = vxpose.xlu0.c.b16.cont [4/8] 0, 128
      %3277 = vxpose.xlu0.c.b16.cont [5/8] 0, 128
      %3278 = vxpose.xlu0.c.b16.cont [6/8] 0, 128
      %3279 = vxpose.xlu0.c.b16.cont [7/8] 0, 128
      %3280 = vxpose.xlu0.c.b16.end [8/8] 0, 128
      %v3281 = vpop.trf.xlu0
      %v3282 = vpop.trf.xlu0
      %v3283 = vpop.trf.xlu0
      %v3284 = vpop.trf.xlu0
      %v3285 = vpop.trf.xlu0
      %v3286 = vpop.trf.xlu0
      %v3287 = vpop.trf.xlu0
      %v3288 = vpop.trf.xlu0
      %3289 = vxpose.xlu0.c.b16.start [1/8] %v2368, 128
      %3290 = vxpose.xlu0.c.b16.cont [2/8] 0, 128
      %3291 = vxpose.xlu0.c.b16.cont [3/8] 0, 128
      %3292 = vxpose.xlu0.c.b16.cont [4/8] 0, 128
      %3293 = vxpose.xlu0.c.b16.cont [5/8] 0, 128
      %3294 = vxpose.xlu0.c.b16.cont [6/8] 0, 128
      %3295 = vxpose.xlu0.c.b16.cont [7/8] 0, 128
      %3296 = vxpose.xlu0.c.b16.end [8/8] 0, 128
      %v3297 = vpop.trf.xlu0
      %v3298 = vpop.trf.xlu0
      %v3299 = vpop.trf.xlu0
      %v3300 = vpop.trf.xlu0
      %v3301 = vpop.trf.xlu0
      %v3302 = vpop.trf.xlu0
      %v3303 = vpop.trf.xlu0
      %v3304 = vpop.trf.xlu0
      %3305 = vxpose.xlu0.c.b16.start [1/8] %v2436, 128
      %3306 = vxpose.xlu0.c.b16.cont [2/8] 0, 128
      %3307 = vxpose.xlu0.c.b16.cont [3/8] 0, 128
      %3308 = vxpose.xlu0.c.b16.cont [4/8] 0, 128
      %3309 = vxpose.xlu0.c.b16.cont [5/8] 0, 128
      %3310 = vxpose.xlu0.c.b16.cont [6/8] 0, 128
      %3311 = vxpose.xlu0.c.b16.cont [7/8] 0, 128
      %3312 = vxpose.xlu0.c.b16.end [8/8] 0, 128
      %v3313 = vpop.trf.xlu0
      %v3314 = vpop.trf.xlu0
      %v3315 = vpop.trf.xlu0
      %v3316 = vpop.trf.xlu0
      %v3317 = vpop.trf.xlu0
      %v3318 = vpop.trf.xlu0
      %v3319 = vpop.trf.xlu0
      %v3320 = vpop.trf.xlu0
      %3321 = vxpose.xlu0.c.b16.start [1/8] %v2386, 128
      %3322 = vxpose.xlu0.c.b16.cont [2/8] 0, 128
      %3323 = vxpose.xlu0.c.b16.cont [3/8] 0, 128
      %3324 = vxpose.xlu0.c.b16.cont [4/8] 0, 128
      %3325 = vxpose.xlu0.c.b16.cont [5/8] 0, 128
      %3326 = vxpose.xlu0.c.b16.cont [6/8] 0, 128
      %3327 = vxpose.xlu0.c.b16.cont [7/8] 0, 128
      %3328 = vxpose.xlu0.c.b16.end [8/8] 0, 128
      %v3329 = vpop.trf.xlu0
      %v3330 = vpop.trf.xlu0
      %v3331 = vpop.trf.xlu0
      %v3332 = vpop.trf.xlu0
      %v3333 = vpop.trf.xlu0
      %v3334 = vpop.trf.xlu0
      %v3335 = vpop.trf.xlu0
      %v3336 = vpop.trf.xlu0
      %3337 = vxpose.xlu0.c.b16.start [1/8] %v2454, 128
      %3338 = vxpose.xlu0.c.b16.cont [2/8] 0, 128
      %3339 = vxpose.xlu0.c.b16.cont [3/8] 0, 128
      %3340 = vxpose.xlu0.c.b16.cont [4/8] 0, 128
      %3341 = vxpose.xlu0.c.b16.cont [5/8] 0, 128
      %3342 = vxpose.xlu0.c.b16.cont [6/8] 0, 128
      %3343 = vxpose.xlu0.c.b16.cont [7/8] 0, 128
      %3344 = vxpose.xlu0.c.b16.end [8/8] 0, 128
      %v3345 = vpop.trf.xlu0
      %v3346 = vpop.trf.xlu0
      %v3347 = vpop.trf.xlu0
      %v3348 = vpop.trf.xlu0
      %v3349 = vpop.trf.xlu0
      %v3350 = vpop.trf.xlu0
      %v3351 = vpop.trf.xlu0
      %v3352 = vpop.trf.xlu0
      %3353 = vxpose.xlu0.c.b16.start [1/8] %v2377, 128
      %3354 = vxpose.xlu0.c.b16.cont [2/8] 0, 128
      %3355 = vxpose.xlu0.c.b16.cont [3/8] 0, 128
      %3356 = vxpose.xlu0.c.b16.cont [4/8] 0, 128
      %3357 = vxpose.xlu0.c.b16.cont [5/8] 0, 128
      %3358 = vxpose.xlu0.c.b16.cont [6/8] 0, 128
      %3359 = vxpose.xlu0.c.b16.cont [7/8] 0, 128
      %3360 = vxpose.xlu0.c.b16.end [8/8] 0, 128
      %v3361 = vpop.trf.xlu0
      %v3362 = vpop.trf.xlu0
      %v3363 = vpop.trf.xlu0
      %v3364 = vpop.trf.xlu0
      %v3365 = vpop.trf.xlu0
      %v3366 = vpop.trf.xlu0
      %v3367 = vpop.trf.xlu0
      %v3368 = vpop.trf.xlu0
      %3369 = vxpose.xlu0.c.b16.start [1/8] %v2445, 128
      %3370 = vxpose.xlu0.c.b16.cont [2/8] 0, 128
      %3371 = vxpose.xlu0.c.b16.cont [3/8] 0, 128
      %3372 = vxpose.xlu0.c.b16.cont [4/8] 0, 128
      %3373 = vxpose.xlu0.c.b16.cont [5/8] 0, 128
      %3374 = vxpose.xlu0.c.b16.cont [6/8] 0, 128
      %3375 = vxpose.xlu0.c.b16.cont [7/8] 0, 128
      %3376 = vxpose.xlu0.c.b16.end [8/8] 0, 128
      %v3377 = vpop.trf.xlu0
      %v3378 = vpop.trf.xlu0
      %v3379 = vpop.trf.xlu0
      %v3380 = vpop.trf.xlu0
      %v3381 = vpop.trf.xlu0
      %v3382 = vpop.trf.xlu0
      %v3383 = vpop.trf.xlu0
      %v3384 = vpop.trf.xlu0
      %3385 = vxpose.xlu0.c.b16.start [1/8] %v2387, 128
      %3386 = vxpose.xlu0.c.b16.cont [2/8] 0, 128
      %3387 = vxpose.xlu0.c.b16.cont [3/8] 0, 128
      %3388 = vxpose.xlu0.c.b16.cont [4/8] 0, 128
      %3389 = vxpose.xlu0.c.b16.cont [5/8] 0, 128
      %3390 = vxpose.xlu0.c.b16.cont [6/8] 0, 128
      %3391 = vxpose.xlu0.c.b16.cont [7/8] 0, 128
      %3392 = vxpose.xlu0.c.b16.end [8/8] 0, 128
      %v3393 = vpop.trf.xlu0
      %v3394 = vpop.trf.xlu0
      %v3395 = vpop.trf.xlu0
      %v3396 = vpop.trf.xlu0
      %v3397 = vpop.trf.xlu0
      %v3398 = vpop.trf.xlu0
      %v3399 = vpop.trf.xlu0
      %v3400 = vpop.trf.xlu0
      %3401 = vxpose.xlu0.c.b16.start [1/8] %v2455, 128
      %3402 = vxpose.xlu0.c.b16.cont [2/8] 0, 128
      %3403 = vxpose.xlu0.c.b16.cont [3/8] 0, 128
      %3404 = vxpose.xlu0.c.b16.cont [4/8] 0, 128
      %3405 = vxpose.xlu0.c.b16.cont [5/8] 0, 128
      %3406 = vxpose.xlu0.c.b16.cont [6/8] 0, 128
      %3407 = vxpose.xlu0.c.b16.cont [7/8] 0, 128
      %3408 = vxpose.xlu0.c.b16.end [8/8] 0, 128
      %v3409 = vpop.trf.xlu0
      %v3410 = vpop.trf.xlu0
      %v3411 = vpop.trf.xlu0
      %v3412 = vpop.trf.xlu0
      %v3413 = vpop.trf.xlu0
      %v3414 = vpop.trf.xlu0
      %v3415 = vpop.trf.xlu0
      %v3416 = vpop.trf.xlu0
      %3417 = vxpose.xlu0.c.b16.start [1/8] %v2384, 128
      %3418 = vxpose.xlu0.c.b16.cont [2/8] 0, 128
      %3419 = vxpose.xlu0.c.b16.cont [3/8] 0, 128
      %3420 = vxpose.xlu0.c.b16.cont [4/8] 0, 128
      %3421 = vxpose.xlu0.c.b16.cont [5/8] 0, 128
      %3422 = vxpose.xlu0.c.b16.cont [6/8] 0, 128
      %3423 = vxpose.xlu0.c.b16.cont [7/8] 0, 128
      %3424 = vxpose.xlu0.c.b16.end [8/8] 0, 128
      %v3425 = vpop.trf.xlu0
      %v3426 = vpop.trf.xlu0
      %v3427 = vpop.trf.xlu0
      %v3428 = vpop.trf.xlu0
      %v3429 = vpop.trf.xlu0
      %v3430 = vpop.trf.xlu0
      %v3431 = vpop.trf.xlu0
      %v3432 = vpop.trf.xlu0
      %3433 = vxpose.xlu0.c.b16.start [1/8] %v2452, 128
      %3434 = vxpose.xlu0.c.b16.cont [2/8] 0, 128
      %3435 = vxpose.xlu0.c.b16.cont [3/8] 0, 128
      %3436 = vxpose.xlu0.c.b16.cont [4/8] 0, 128
      %3437 = vxpose.xlu0.c.b16.cont [5/8] 0, 128
      %3438 = vxpose.xlu0.c.b16.cont [6/8] 0, 128
      %3439 = vxpose.xlu0.c.b16.cont [7/8] 0, 128
      %3440 = vxpose.xlu0.c.b16.end [8/8] 0, 128
      %v3441 = vpop.trf.xlu0
      %v3442 = vpop.trf.xlu0
      %v3443 = vpop.trf.xlu0
      %v3444 = vpop.trf.xlu0
      %v3445 = vpop.trf.xlu0
      %v3446 = vpop.trf.xlu0
      %v3447 = vpop.trf.xlu0
      %v3448 = vpop.trf.xlu0
      %3449 = vxpose.xlu0.c.b16.start [1/8] %v2388, 128
      %3450 = vxpose.xlu0.c.b16.cont [2/8] 0, 128
      %3451 = vxpose.xlu0.c.b16.cont [3/8] 0, 128
      %3452 = vxpose.xlu0.c.b16.cont [4/8] 0, 128
      %3453 = vxpose.xlu0.c.b16.cont [5/8] 0, 128
      %3454 = vxpose.xlu0.c.b16.cont [6/8] 0, 128
      %3455 = vxpose.xlu0.c.b16.cont [7/8] 0, 128
      %3456 = vxpose.xlu0.c.b16.end [8/8] 0, 128
      %v3457 = vpop.trf.xlu0
      %v3458 = vpop.trf.xlu0
      %v3459 = vpop.trf.xlu0
      %v3460 = vpop.trf.xlu0
      %v3461 = vpop.trf.xlu0
      %v3462 = vpop.trf.xlu0
      %v3463 = vpop.trf.xlu0
      %v3464 = vpop.trf.xlu0
      %3465 = vxpose.xlu0.c.b16.start [1/8] %v2456, 128
      %3466 = vxpose.xlu0.c.b16.cont [2/8] 0, 128
      %3467 = vxpose.xlu0.c.b16.cont [3/8] 0, 128
      %3468 = vxpose.xlu0.c.b16.cont [4/8] 0, 128
      %3469 = vxpose.xlu0.c.b16.cont [5/8] 0, 128
      %3470 = vxpose.xlu0.c.b16.cont [6/8] 0, 128
      %3471 = vxpose.xlu0.c.b16.cont [7/8] 0, 128
      %3472 = vxpose.xlu0.c.b16.end [8/8] 0, 128
      %v3473 = vpop.trf.xlu0
      %v3474 = vpop.trf.xlu0
      %v3475 = vpop.trf.xlu0
      %v3476 = vpop.trf.xlu0
      %v3477 = vpop.trf.xlu0
      %v3478 = vpop.trf.xlu0
      %v3479 = vpop.trf.xlu0
      %v3480 = vpop.trf.xlu0
      %v3481 = vcombine.low %v2465, %v2529
      %v3483 = vunpack.c.l.s4 1983009808
      %v3484 = vunpack.c.0.s8 %v3483
      %v3485 = vlaneseq
      %v3486 = vshrl.u32 %v3485, 7
      %v3487 = vsub.s32 %v3484, %v3486
      %v3488 = vrot.slane %v3481, %v3487
      %v3489 = vcombine.low %v2497, %v2561
      %v3491 = vunpack.c.l.s4 1983009808
      %v3492 = vunpack.c.0.s8 %v3491
      %v3493 = vlaneseq
      %v3494 = vshrl.u32 %v3493, 7
      %v3495 = vsub.s32 %v3492, %v3494
      %v3496 = vrot.slane %v3489, %v3495
      %v3497 = vcombine.low %v2593, %v2657
      %v3499 = vunpack.c.l.s4 1983009808
      %v3500 = vunpack.c.0.s8 %v3499
      %v3501 = vlaneseq
      %v3502 = vshrl.u32 %v3501, 7
      %v3503 = vsub.s32 %v3500, %v3502
      %v3504 = vrot.slane %v3497, %v3503
      %v3505 = vcombine.low %v2625, %v2689
      %v3507 = vunpack.c.l.s4 1983009808
      %v3508 = vunpack.c.0.s8 %v3507
      %v3509 = vlaneseq
      %v3510 = vshrl.u32 %v3509, 7
      %v3511 = vsub.s32 %v3508, %v3510
      %v3512 = vrot.slane %v3505, %v3511
      %v3513 = vcombine.low %v3488, %v3496
      %v3515 = vunpack.c.l.s4 1934713408
      %v3516 = vunpack.c.0.s8 %v3515
      %v3517 = vlaneseq
      %v3518 = vshrl.u32 %v3517, 7
      %v3519 = vsub.s32 %v3516, %v3518
      %v3520 = vrot.slane %v3513, %v3519
      %v3521 = vcombine.low %v3504, %v3512
      %v3523 = vunpack.c.l.s4 1934713408
      %v3524 = vunpack.c.0.s8 %v3523
      %v3525 = vlaneseq
      %v3526 = vshrl.u32 %v3525, 7
      %v3527 = vsub.s32 %v3524, %v3526
      %v3528 = vrot.slane %v3521, %v3527
      %v3529 = vcombine.low %v3520, %v3528
      %v3530 = vcombine.low %v2481, %v2545
      %v3532 = vunpack.c.l.s4 1983009808
      %v3533 = vunpack.c.0.s8 %v3532
      %v3534 = vlaneseq
      %v3535 = vshrl.u32 %v3534, 7
      %v3536 = vsub.s32 %v3533, %v3535
      %v3537 = vrot.slane %v3530, %v3536
      %v3538 = vcombine.low %v2513, %v2577
      %v3540 = vunpack.c.l.s4 1983009808
      %v3541 = vunpack.c.0.s8 %v3540
      %v3542 = vlaneseq
      %v3543 = vshrl.u32 %v3542, 7
      %v3544 = vsub.s32 %v3541, %v3543
      %v3545 = vrot.slane %v3538, %v3544
      %v3546 = vcombine.low %v2609, %v2673
      %v3548 = vunpack.c.l.s4 1983009808
      %v3549 = vunpack.c.0.s8 %v3548
      %v3550 = vlaneseq
      %v3551 = vshrl.u32 %v3550, 7
      %v3552 = vsub.s32 %v3549, %v3551
      %v3553 = vrot.slane %v3546, %v3552
      %v3554 = vcombine.low %v2641, %v2705
      %v3556 = vunpack.c.l.s4 1983009808
      %v3557 = vunpack.c.0.s8 %v3556
      %v3558 = vlaneseq
      %v3559 = vshrl.u32 %v3558, 7
      %v3560 = vsub.s32 %v3557, %v3559
      %v3561 = vrot.slane %v3554, %v3560
      %v3562 = vcombine.low %v3537, %v3545
      %v3564 = vunpack.c.l.s4 1934713408
      %v3565 = vunpack.c.0.s8 %v3564
      %v3566 = vlaneseq
      %v3567 = vshrl.u32 %v3566, 7
      %v3568 = vsub.s32 %v3565, %v3567
      %v3569 = vrot.slane %v3562, %v3568
      %v3570 = vcombine.low %v3553, %v3561
      %v3572 = vunpack.c.l.s4 1934713408
      %v3573 = vunpack.c.0.s8 %v3572
      %v3574 = vlaneseq
      %v3575 = vshrl.u32 %v3574, 7
      %v3576 = vsub.s32 %v3573, %v3575
      %v3577 = vrot.slane %v3570, %v3576
      %v3578 = vcombine.low %v3569, %v3577
      %v3579 = vcombine.low %v2721, %v2785
      %v3581 = vunpack.c.l.s4 1983009808
      %v3582 = vunpack.c.0.s8 %v3581
      %v3583 = vlaneseq
      %v3584 = vshrl.u32 %v3583, 7
      %v3585 = vsub.s32 %v3582, %v3584
      %v3586 = vrot.slane %v3579, %v3585
      %v3587 = vcombine.low %v2753, %v2817
      %v3589 = vunpack.c.l.s4 1983009808
      %v3590 = vunpack.c.0.s8 %v3589
      %v3591 = vlaneseq
      %v3592 = vshrl.u32 %v3591, 7
      %v3593 = vsub.s32 %v3590, %v3592
      %v3594 = vrot.slane %v3587, %v3593
      %v3595 = vcombine.low %v2849, %v2913
      %v3597 = vunpack.c.l.s4 1983009808
      %v3598 = vunpack.c.0.s8 %v3597
      %v3599 = vlaneseq
      %v3600 = vshrl.u32 %v3599, 7
      %v3601 = vsub.s32 %v3598, %v3600
      %v3602 = vrot.slane %v3595, %v3601
      %v3603 = vcombine.low %v2881, %v2945
      %v3605 = vunpack.c.l.s4 1983009808
      %v3606 = vunpack.c.0.s8 %v3605
      %v3607 = vlaneseq
      %v3608 = vshrl.u32 %v3607, 7
      %v3609 = vsub.s32 %v3606, %v3608
      %v3610 = vrot.slane %v3603, %v3609
      %v3611 = vcombine.low %v3586, %v3594
      %v3613 = vunpack.c.l.s4 1934713408
      %v3614 = vunpack.c.0.s8 %v3613
      %v3615 = vlaneseq
      %v3616 = vshrl.u32 %v3615, 7
      %v3617 = vsub.s32 %v3614, %v3616
      %v3618 = vrot.slane %v3611, %v3617
      %v3619 = vcombine.low %v3602, %v3610
      %v3621 = vunpack.c.l.s4 1934713408
      %v3622 = vunpack.c.0.s8 %v3621
      %v3623 = vlaneseq
      %v3624 = vshrl.u32 %v3623, 7
      %v3625 = vsub.s32 %v3622, %v3624
      %v3626 = vrot.slane %v3619, %v3625
      %v3627 = vcombine.low %v3618, %v3626
      %v3628 = vcombine.low %v2737, %v2801
      %v3630 = vunpack.c.l.s4 1983009808
      %v3631 = vunpack.c.0.s8 %v3630
      %v3632 = vlaneseq
      %v3633 = vshrl.u32 %v3632, 7
      %v3634 = vsub.s32 %v3631, %v3633
      %v3635 = vrot.slane %v3628, %v3634
      %v3636 = vcombine.low %v2769, %v2833
      %v3638 = vunpack.c.l.s4 1983009808
      %v3639 = vunpack.c.0.s8 %v3638
      %v3640 = vlaneseq
      %v3641 = vshrl.u32 %v3640, 7
      %v3642 = vsub.s32 %v3639, %v3641
      %v3643 = vrot.slane %v3636, %v3642
      %v3644 = vcombine.low %v2865, %v2929
      %v3646 = vunpack.c.l.s4 1983009808
      %v3647 = vunpack.c.0.s8 %v3646
      %v3648 = vlaneseq
      %v3649 = vshrl.u32 %v3648, 7
      %v3650 = vsub.s32 %v3647, %v3649
      %v3651 = vrot.slane %v3644, %v3650
      %v3652 = vcombine.low %v2897, %v2961
      %v3654 = vunpack.c.l.s4 1983009808
      %v3655 = vunpack.c.0.s8 %v3654
      %v3656 = vlaneseq
      %v3657 = vshrl.u32 %v3656, 7
      %v3658 = vsub.s32 %v3655, %v3657
      %v3659 = vrot.slane %v3652, %v3658
      %v3660 = vcombine.low %v3635, %v3643
      %v3662 = vunpack.c.l.s4 1934713408
      %v3663 = vunpack.c.0.s8 %v3662
      %v3664 = vlaneseq
      %v3665 = vshrl.u32 %v3664, 7
      %v3666 = vsub.s32 %v3663, %v3665
      %v3667 = vrot.slane %v3660, %v3666
      %v3668 = vcombine.low %v3651, %v3659
      %v3670 = vunpack.c.l.s4 1934713408
      %v3671 = vunpack.c.0.s8 %v3670
      %v3672 = vlaneseq
      %v3673 = vshrl.u32 %v3672, 7
      %v3674 = vsub.s32 %v3671, %v3673
      %v3675 = vrot.slane %v3668, %v3674
      %v3676 = vcombine.low %v3667, %v3675
      %v3677 = vcombine.low %v2977, %v3041
      %v3679 = vunpack.c.l.s4 1983009808
      %v3680 = vunpack.c.0.s8 %v3679
      %v3681 = vlaneseq
      %v3682 = vshrl.u32 %v3681, 7
      %v3683 = vsub.s32 %v3680, %v3682
      %v3684 = vrot.slane %v3677, %v3683
      %v3685 = vcombine.low %v3009, %v3073
      %v3687 = vunpack.c.l.s4 1983009808
      %v3688 = vunpack.c.0.s8 %v3687
      %v3689 = vlaneseq
      %v3690 = vshrl.u32 %v3689, 7
      %v3691 = vsub.s32 %v3688, %v3690
      %v3692 = vrot.slane %v3685, %v3691
      %v3693 = vcombine.low %v3105, %v3169
      %v3695 = vunpack.c.l.s4 1983009808
      %v3696 = vunpack.c.0.s8 %v3695
      %v3697 = vlaneseq
      %v3698 = vshrl.u32 %v3697, 7
      %v3699 = vsub.s32 %v3696, %v3698
      %v3700 = vrot.slane %v3693, %v3699
      %v3701 = vcombine.low %v3137, %v3201
      %v3703 = vunpack.c.l.s4 1983009808
      %v3704 = vunpack.c.0.s8 %v3703
      %v3705 = vlaneseq
      %v3706 = vshrl.u32 %v3705, 7
      %v3707 = vsub.s32 %v3704, %v3706
      %v3708 = vrot.slane %v3701, %v3707
      %v3709 = vcombine.low %v3684, %v3692
      %v3711 = vunpack.c.l.s4 1934713408
      %v3712 = vunpack.c.0.s8 %v3711
      %v3713 = vlaneseq
      %v3714 = vshrl.u32 %v3713, 7
      %v3715 = vsub.s32 %v3712, %v3714
      %v3716 = vrot.slane %v3709, %v3715
      %v3717 = vcombine.low %v3700, %v3708
      %v3719 = vunpack.c.l.s4 1934713408
      %v3720 = vunpack.c.0.s8 %v3719
      %v3721 = vlaneseq
      %v3722 = vshrl.u32 %v3721, 7
      %v3723 = vsub.s32 %v3720, %v3722
      %v3724 = vrot.slane %v3717, %v3723
      %v3725 = vcombine.low %v3716, %v3724
      %v3726 = vcombine.low %v2993, %v3057
      %v3728 = vunpack.c.l.s4 1983009808
      %v3729 = vunpack.c.0.s8 %v3728
      %v3730 = vlaneseq
      %v3731 = vshrl.u32 %v3730, 7
      %v3732 = vsub.s32 %v3729, %v3731
      %v3733 = vrot.slane %v3726, %v3732
      %v3734 = vcombine.low %v3025, %v3089
      %v3736 = vunpack.c.l.s4 1983009808
      %v3737 = vunpack.c.0.s8 %v3736
      %v3738 = vlaneseq
      %v3739 = vshrl.u32 %v3738, 7
      %v3740 = vsub.s32 %v3737, %v3739
      %v3741 = vrot.slane %v3734, %v3740
      %v3742 = vcombine.low %v3121, %v3185
      %v3744 = vunpack.c.l.s4 1983009808
      %v3745 = vunpack.c.0.s8 %v3744
      %v3746 = vlaneseq
      %v3747 = vshrl.u32 %v3746, 7
      %v3748 = vsub.s32 %v3745, %v3747
      %v3749 = vrot.slane %v3742, %v3748
      %v3750 = vcombine.low %v3153, %v3217
      %v3752 = vunpack.c.l.s4 1983009808
      %v3753 = vunpack.c.0.s8 %v3752
      %v3754 = vlaneseq
      %v3755 = vshrl.u32 %v3754, 7
      %v3756 = vsub.s32 %v3753, %v3755
      %v3757 = vrot.slane %v3750, %v3756
      %v3758 = vcombine.low %v3733, %v3741
      %v3760 = vunpack.c.l.s4 1934713408
      %v3761 = vunpack.c.0.s8 %v3760
      %v3762 = vlaneseq
      %v3763 = vshrl.u32 %v3762, 7
      %v3764 = vsub.s32 %v3761, %v3763
      %v3765 = vrot.slane %v3758, %v3764
      %v3766 = vcombine.low %v3749, %v3757
      %v3768 = vunpack.c.l.s4 1934713408
      %v3769 = vunpack.c.0.s8 %v3768
      %v3770 = vlaneseq
      %v3771 = vshrl.u32 %v3770, 7
      %v3772 = vsub.s32 %v3769, %v3771
      %v3773 = vrot.slane %v3766, %v3772
      %v3774 = vcombine.low %v3765, %v3773
      %v3775 = vcombine.low %v3233, %v3297
      %v3777 = vunpack.c.l.s4 1983009808
      %v3778 = vunpack.c.0.s8 %v3777
      %v3779 = vlaneseq
      %v3780 = vshrl.u32 %v3779, 7
      %v3781 = vsub.s32 %v3778, %v3780
      %v3782 = vrot.slane %v3775, %v3781
      %v3783 = vcombine.low %v3265, %v3329
      %v3785 = vunpack.c.l.s4 1983009808
      %v3786 = vunpack.c.0.s8 %v3785
      %v3787 = vlaneseq
      %v3788 = vshrl.u32 %v3787, 7
      %v3789 = vsub.s32 %v3786, %v3788
      %v3790 = vrot.slane %v3783, %v3789
      %v3791 = vcombine.low %v3361, %v3425
      %v3793 = vunpack.c.l.s4 1983009808
      %v3794 = vunpack.c.0.s8 %v3793
      %v3795 = vlaneseq
      %v3796 = vshrl.u32 %v3795, 7
      %v3797 = vsub.s32 %v3794, %v3796
      %v3798 = vrot.slane %v3791, %v3797
      %v3799 = vcombine.low %v3393, %v3457
      %v3801 = vunpack.c.l.s4 1983009808
      %v3802 = vunpack.c.0.s8 %v3801
      %v3803 = vlaneseq
      %v3804 = vshrl.u32 %v3803, 7
      %v3805 = vsub.s32 %v3802, %v3804
      %v3806 = vrot.slane %v3799, %v3805
      %v3807 = vcombine.low %v3782, %v3790
      %v3809 = vunpack.c.l.s4 1934713408
      %v3810 = vunpack.c.0.s8 %v3809
      %v3811 = vlaneseq
      %v3812 = vshrl.u32 %v3811, 7
      %v3813 = vsub.s32 %v3810, %v3812
      %v3814 = vrot.slane %v3807, %v3813
      %v3815 = vcombine.low %v3798, %v3806
      %v3817 = vunpack.c.l.s4 1934713408
      %v3818 = vunpack.c.0.s8 %v3817
      %v3819 = vlaneseq
      %v3820 = vshrl.u32 %v3819, 7
      %v3821 = vsub.s32 %v3818, %v3820
      %v3822 = vrot.slane %v3815, %v3821
      %v3823 = vcombine.low %v3814, %v3822
      %v3824 = vcombine.low %v3249, %v3313
      %v3826 = vunpack.c.l.s4 1983009808
      %v3827 = vunpack.c.0.s8 %v3826
      %v3828 = vlaneseq
      %v3829 = vshrl.u32 %v3828, 7
      %v3830 = vsub.s32 %v3827, %v3829
      %v3831 = vrot.slane %v3824, %v3830
      %v3832 = vcombine.low %v3281, %v3345
      %v3834 = vunpack.c.l.s4 1983009808
      %v3835 = vunpack.c.0.s8 %v3834
      %v3836 = vlaneseq
      %v3837 = vshrl.u32 %v3836, 7
      %v3838 = vsub.s32 %v3835, %v3837
      %v3839 = vrot.slane %v3832, %v3838
      %v3840 = vcombine.low %v3377, %v3441
      %v3842 = vunpack.c.l.s4 1983009808
      %v3843 = vunpack.c.0.s8 %v3842
      %v3844 = vlaneseq
      %v3845 = vshrl.u32 %v3844, 7
      %v3846 = vsub.s32 %v3843, %v3845
      %v3847 = vrot.slane %v3840, %v3846
      %v3848 = vcombine.low %v3409, %v3473
      %v3850 = vunpack.c.l.s4 1983009808
      %v3851 = vunpack.c.0.s8 %v3850
      %v3852 = vlaneseq
      %v3853 = vshrl.u32 %v3852, 7
      %v3854 = vsub.s32 %v3851, %v3853
      %v3855 = vrot.slane %v3848, %v3854
      %v3856 = vcombine.low %v3831, %v3839
      %v3858 = vunpack.c.l.s4 1934713408
      %v3859 = vunpack.c.0.s8 %v3858
      %v3860 = vlaneseq
      %v3861 = vshrl.u32 %v3860, 7
      %v3862 = vsub.s32 %v3859, %v3861
      %v3863 = vrot.slane %v3856, %v3862
      %v3864 = vcombine.low %v3847, %v3855
      %v3866 = vunpack.c.l.s4 1934713408
      %v3867 = vunpack.c.0.s8 %v3866
      %v3868 = vlaneseq
      %v3869 = vshrl.u32 %v3868, 7
      %v3870 = vsub.s32 %v3867, %v3869
      %v3871 = vrot.slane %v3864, %v3870
      %v3872 = vcombine.low %v3863, %v3871
      %v3875 = vpack.i.b16 %v3578, %v3529
      %v3877 = vshrl.u32 %v3529, 16
      %v3878 = vshrl.u32 %v3578, 16
      %v3879 = vpack.i.b16 %v3878, %v3877
      %v3883 = vpack.i.b16 %v3676, %v3627
      %v3885 = vshrl.u32 %v3627, 16
      %v3886 = vshrl.u32 %v3676, 16
      %v3887 = vpack.i.b16 %v3886, %v3885
      %v3891 = vpack.i.b16 %v3774, %v3725
      %v3893 = vshrl.u32 %v3725, 16
      %v3894 = vshrl.u32 %v3774, 16
      %v3895 = vpack.i.b16 %v3894, %v3893
      %v3899 = vpack.i.b16 %v3872, %v3823
      %v3901 = vshrl.u32 %v3823, 16
      %v3902 = vshrl.u32 %v3872, 16
      %v3903 = vpack.i.b16 %v3902, %v3901
      %vm3905 = vcmask 523264
      %v3907 = vsel %vm3905, %v1653, 0
      %3909 = vmatprep.subr.bf16.mxu0 0
      %3910 = vmatpush1.bf16.msra.mxu0 %v3875
      %3911 = vmatprep.subr.bf16.mxu0 0
      %3912 = vmatpush1.bf16.msra.mxu0 %v3883
      %3913 = vmatprep.subr.bf16.mxu0 0
      %3914 = vmatpush1.bf16.msra.mxu0 %v3891
      %3915 = vmatprep.subr.bf16.mxu0 0
      %3916 = vmatpush1.bf16.msra.mxu0 %v3899
      %3917 = vmatprep.subr.bf16.mxu0 0
      %3918 = vmatpush1.bf16.msra.mxu0 0
      %3919 = vmatprep.subr.bf16.mxu0 0
      %3920 = vmatpush1.bf16.msra.mxu0 0
      %3921 = vmatprep.subr.bf16.mxu0 0
      %3922 = vmatpush1.bf16.msra.mxu0 0
      %3923 = vmatprep.subr.bf16.mxu0 0
      %3924 = vmatpush1.bf16.msra.mxu0 0
      %3925 = vmatprep.subr.bf16.mxu0 0
      %3926 = vmatpush1.bf16.msra.mxu0 0
      %3927 = vmatprep.subr.bf16.mxu0 0
      %3928 = vmatpush1.bf16.msra.mxu0 0
      %3929 = vmatprep.subr.bf16.mxu0 0
      %3930 = vmatpush1.bf16.msra.mxu0 0
      %3931 = vmatprep.subr.bf16.mxu0 0
      %3932 = vmatpush1.bf16.msra.mxu0 0
      %3933 = vmatprep.subr.bf16.mxu0 0
      %3934 = vmatpush1.bf16.msra.mxu0 0
      %3935 = vmatprep.subr.bf16.mxu0 0
      %3936 = vmatpush1.bf16.msra.mxu0 0
      %3937 = vmatprep.subr.bf16.mxu0 0
      %3938 = vmatpush1.bf16.msra.mxu0 0
      %3939 = vmatprep.subr.bf16.mxu0 0
      %3940 = vmatpush1.bf16.msra.mxu0 0
      %3941 = vmatprep.mubr.bf16.mxu0 0
      %3942 = vmatmul.mubr.bf16.gmra.mrb[0].mxu0 %v3907
      %v3943 = vpop.f32.mrb[0].mxu0
      %v3944 = vadd.f32 %v1601, %v3943
      %v3945 = vpop.f32.mrb[0].mxu0
      %v3946 = vpop.f32.mrb[0].mxu0
      %v3947 = vpop.f32.mrb[0].mxu0
      %3948 = vdwg.mxu0
      %v3950 = vsel %vm3905, %v1656, 0
      %3952 = vmatprep.subr.bf16.mxu0 0
      %3953 = vmatpush1.bf16.msra.mxu0 %v3879
      %3954 = vmatprep.subr.bf16.mxu0 0
      %3955 = vmatpush1.bf16.msra.mxu0 %v3887
      %3956 = vmatprep.subr.bf16.mxu0 0
      %3957 = vmatpush1.bf16.msra.mxu0 %v3895
      %3958 = vmatprep.subr.bf16.mxu0 0
      %3959 = vmatpush1.bf16.msra.mxu0 %v3903
      %3960 = vmatprep.subr.bf16.mxu0 0
      %3961 = vmatpush1.bf16.msra.mxu0 0
      %3962 = vmatprep.subr.bf16.mxu0 0
      %3963 = vmatpush1.bf16.msra.mxu0 0
      %3964 = vmatprep.subr.bf16.mxu0 0
      %3965 = vmatpush1.bf16.msra.mxu0 0
      %3966 = vmatprep.subr.bf16.mxu0 0
      %3967 = vmatpush1.bf16.msra.mxu0 0
      %3968 = vmatprep.subr.bf16.mxu0 0
      %3969 = vmatpush1.bf16.msra.mxu0 0
      %3970 = vmatprep.subr.bf16.mxu0 0
      %3971 = vmatpush1.bf16.msra.mxu0 0
      %3972 = vmatprep.subr.bf16.mxu0 0
      %3973 = vmatpush1.bf16.msra.mxu0 0
      %3974 = vmatprep.subr.bf16.mxu0 0
      %3975 = vmatpush1.bf16.msra.mxu0 0
      %3976 = vmatprep.subr.bf16.mxu0 0
      %3977 = vmatpush1.bf16.msra.mxu0 0
      %3978 = vmatprep.subr.bf16.mxu0 0
      %3979 = vmatpush1.bf16.msra.mxu0 0
      %3980 = vmatprep.subr.bf16.mxu0 0
      %3981 = vmatpush1.bf16.msra.mxu0 0
      %3982 = vmatprep.subr.bf16.mxu0 0
      %3983 = vmatpush1.bf16.msra.mxu0 0
      %3984 = vmatprep.mubr.bf16.mxu0 0
      %3985 = vmatmul.mubr.bf16.gmra.mrb[0].mxu0 %v3950
      %v3986 = vpop.f32.mrb[0].mxu0
      %v3987 = vadd.f32 %v1601, %v3986
      %v3988 = vpop.f32.mrb[0].mxu0
      %v3989 = vpop.f32.mrb[0].mxu0
      %v3990 = vpop.f32.mrb[0].mxu0
      %3991 = vdwg.mxu0
      %vm3992 = vcmask 64512
      %v3993 = vsel %vm3992, %v3944, -inf
      %3994 = vmax.xlane.f32.xlu0 %v3993
      %v3995 = vpop.xlane.xlu0 %3994
      %v3996 = vsel %vm3992, %v3987, -inf
      %3997 = vmax.xlane.f32.xlu0 %v3996
      %v3998 = vpop.xlane.xlu0 %3997
      %v3999 = vsub.f32 %v3944, %v3995
      %v4000 = vsub.f32 %v3987, %v3998
      %v4001 = vmul.f32 %v3999, 1.442695
      %v4002 = vpow.pop %v4001
      %v4003 = vmul.f32 %v4000, 1.442695
      %v4004 = vpow.pop %v4003
      %v4005 = vsel %vm3992, %v4002, 0.0
      %4006 = vadd.xlane.f32.xlu0 %v4005
      %v4007 = vpop.xlane.xlu0 %4006
      %v4008 = vsel %vm3992, %v4004, 0.0
      %4009 = vadd.xlane.f32.xlu0 %v4008
      %v4010 = vpop.xlane.xlu0 %4009
      %v4011 = vrcp.pop %v4007
      %v4012 = vrcp.pop %v4010
      %v4013 = vmul.f32 %v4002, %v4011
      %v4014 = vmul.f32 %v4004, %v4012
      %v4015 = vpack.c.bf16 %v4013, %v4013
      %v4016 = vpack.c.bf16 %v4014, %v4014
      %4017 = vxpose.xlu0.c.b16.start [1/8] %v1589, 128
      %4018 = vxpose.xlu0.c.b16.cont [2/8] 0, 128
      %4019 = vxpose.xlu0.c.b16.cont [3/8] 0, 128
      %4020 = vxpose.xlu0.c.b16.cont [4/8] 0, 128
      %4021 = vxpose.xlu0.c.b16.cont [5/8] 0, 128
      %4022 = vxpose.xlu0.c.b16.cont [6/8] 0, 128
      %4023 = vxpose.xlu0.c.b16.cont [7/8] 0, 128
      %4024 = vxpose.xlu0.c.b16.end [8/8] 0, 128
      %v4025 = vpop.trf.xlu0
      %v4026 = vpop.trf.xlu0
      %v4027 = vpop.trf.xlu0
      %v4028 = vpop.trf.xlu0
      %v4029 = vpop.trf.xlu0
      %v4030 = vpop.trf.xlu0
      %v4031 = vpop.trf.xlu0
      %v4032 = vpop.trf.xlu0
      %4033 = vxpose.xlu0.c.b16.start [1/8] %v1590, 128
      %4034 = vxpose.xlu0.c.b16.cont [2/8] 0, 128
      %4035 = vxpose.xlu0.c.b16.cont [3/8] 0, 128
      %4036 = vxpose.xlu0.c.b16.cont [4/8] 0, 128
      %4037 = vxpose.xlu0.c.b16.cont [5/8] 0, 128
      %4038 = vxpose.xlu0.c.b16.cont [6/8] 0, 128
      %4039 = vxpose.xlu0.c.b16.cont [7/8] 0, 128
      %4040 = vxpose.xlu0.c.b16.end [8/8] 0, 128
      %v4041 = vpop.trf.xlu0
      %v4042 = vpop.trf.xlu0
      %v4043 = vpop.trf.xlu0
      %v4044 = vpop.trf.xlu0
      %v4045 = vpop.trf.xlu0
      %v4046 = vpop.trf.xlu0
      %v4047 = vpop.trf.xlu0
      %v4048 = vpop.trf.xlu0
      %4049 = vxpose.xlu0.c.b16.start [1/8] %v1591, 128
      %4050 = vxpose.xlu0.c.b16.cont [2/8] 0, 128
      %4051 = vxpose.xlu0.c.b16.cont [3/8] 0, 128
      %4052 = vxpose.xlu0.c.b16.cont [4/8] 0, 128
      %4053 = vxpose.xlu0.c.b16.cont [5/8] 0, 128
      %4054 = vxpose.xlu0.c.b16.cont [6/8] 0, 128
      %4055 = vxpose.xlu0.c.b16.cont [7/8] 0, 128
      %4056 = vxpose.xlu0.c.b16.end [8/8] 0, 128
      %v4057 = vpop.trf.xlu0
      %v4058 = vpop.trf.xlu0
      %v4059 = vpop.trf.xlu0
      %v4060 = vpop.trf.xlu0
      %v4061 = vpop.trf.xlu0
      %v4062 = vpop.trf.xlu0
      %v4063 = vpop.trf.xlu0
      %v4064 = vpop.trf.xlu0
      %4065 = vxpose.xlu0.c.b16.start [1/8] %v1592, 128
      %4066 = vxpose.xlu0.c.b16.cont [2/8] 0, 128
      %4067 = vxpose.xlu0.c.b16.cont [3/8] 0, 128
      %4068 = vxpose.xlu0.c.b16.cont [4/8] 0, 128
      %4069 = vxpose.xlu0.c.b16.cont [5/8] 0, 128
      %4070 = vxpose.xlu0.c.b16.cont [6/8] 0, 128
      %4071 = vxpose.xlu0.c.b16.cont [7/8] 0, 128
      %4072 = vxpose.xlu0.c.b16.end [8/8] 0, 128
      %v4073 = vpop.trf.xlu0
      %v4074 = vpop.trf.xlu0
      %v4075 = vpop.trf.xlu0
      %v4076 = vpop.trf.xlu0
      %v4077 = vpop.trf.xlu0
      %v4078 = vpop.trf.xlu0
      %v4079 = vpop.trf.xlu0
      %v4080 = vpop.trf.xlu0
      %4081 = vxpose.xlu0.c.b16.start [1/8] %v1593, 128
      %4082 = vxpose.xlu0.c.b16.cont [2/8] 0, 128
      %4083 = vxpose.xlu0.c.b16.cont [3/8] 0, 128
      %4084 = vxpose.xlu0.c.b16.cont [4/8] 0, 128
      %4085 = vxpose.xlu0.c.b16.cont [5/8] 0, 128
      %4086 = vxpose.xlu0.c.b16.cont [6/8] 0, 128
      %4087 = vxpose.xlu0.c.b16.cont [7/8] 0, 128
      %4088 = vxpose.xlu0.c.b16.end [8/8] 0, 128
      %v4089 = vpop.trf.xlu0
      %v4090 = vpop.trf.xlu0
      %v4091 = vpop.trf.xlu0
      %v4092 = vpop.trf.xlu0
      %v4093 = vpop.trf.xlu0
      %v4094 = vpop.trf.xlu0
      %v4095 = vpop.trf.xlu0
      %v4096 = vpop.trf.xlu0
      %4097 = vxpose.xlu0.c.b16.start [1/8] %v1594, 128
      %4098 = vxpose.xlu0.c.b16.cont [2/8] 0, 128
      %4099 = vxpose.xlu0.c.b16.cont [3/8] 0, 128
      %4100 = vxpose.xlu0.c.b16.cont [4/8] 0, 128
      %4101 = vxpose.xlu0.c.b16.cont [5/8] 0, 128
      %4102 = vxpose.xlu0.c.b16.cont [6/8] 0, 128
      %4103 = vxpose.xlu0.c.b16.cont [7/8] 0, 128
      %4104 = vxpose.xlu0.c.b16.end [8/8] 0, 128
      %v4105 = vpop.trf.xlu0
      %v4106 = vpop.trf.xlu0
      %v4107 = vpop.trf.xlu0
      %v4108 = vpop.trf.xlu0
      %v4109 = vpop.trf.xlu0
      %v4110 = vpop.trf.xlu0
      %v4111 = vpop.trf.xlu0
      %v4112 = vpop.trf.xlu0
      %4113 = vxpose.xlu0.c.b16.start [1/8] %v1595, 128
      %4114 = vxpose.xlu0.c.b16.cont [2/8] 0, 128
      %4115 = vxpose.xlu0.c.b16.cont [3/8] 0, 128
      %4116 = vxpose.xlu0.c.b16.cont [4/8] 0, 128
      %4117 = vxpose.xlu0.c.b16.cont [5/8] 0, 128
      %4118 = vxpose.xlu0.c.b16.cont [6/8] 0, 128
      %4119 = vxpose.xlu0.c.b16.cont [7/8] 0, 128
      %4120 = vxpose.xlu0.c.b16.end [8/8] 0, 128
      %v4121 = vpop.trf.xlu0
      %v4122 = vpop.trf.xlu0
      %v4123 = vpop.trf.xlu0
      %v4124 = vpop.trf.xlu0
      %v4125 = vpop.trf.xlu0
      %v4126 = vpop.trf.xlu0
      %v4127 = vpop.trf.xlu0
      %v4128 = vpop.trf.xlu0
      %4129 = vxpose.xlu0.c.b16.start [1/8] %v1596, 128
      %4130 = vxpose.xlu0.c.b16.cont [2/8] 0, 128
      %4131 = vxpose.xlu0.c.b16.cont [3/8] 0, 128
      %4132 = vxpose.xlu0.c.b16.cont [4/8] 0, 128
      %4133 = vxpose.xlu0.c.b16.cont [5/8] 0, 128
      %4134 = vxpose.xlu0.c.b16.cont [6/8] 0, 128
      %4135 = vxpose.xlu0.c.b16.cont [7/8] 0, 128
      %4136 = vxpose.xlu0.c.b16.end [8/8] 0, 128
      %v4137 = vpop.trf.xlu0
      %v4138 = vpop.trf.xlu0
      %v4139 = vpop.trf.xlu0
      %v4140 = vpop.trf.xlu0
      %v4141 = vpop.trf.xlu0
      %v4142 = vpop.trf.xlu0
      %v4143 = vpop.trf.xlu0
      %v4144 = vpop.trf.xlu0
      %v4147 = vpack.i.b16 %v4041, %v4025
      %v4149 = vshrl.u32 %v4025, 16
      %v4150 = vshrl.u32 %v4041, 16
      %v4151 = vpack.i.b16 %v4150, %v4149
      %v4155 = vpack.i.b16 %v4073, %v4057
      %v4157 = vshrl.u32 %v4057, 16
      %v4158 = vshrl.u32 %v4073, 16
      %v4159 = vpack.i.b16 %v4158, %v4157
      %v4163 = vpack.i.b16 %v4105, %v4089
      %v4165 = vshrl.u32 %v4089, 16
      %v4166 = vshrl.u32 %v4105, 16
      %v4167 = vpack.i.b16 %v4166, %v4165
      %v4171 = vpack.i.b16 %v4137, %v4121
      %v4173 = vshrl.u32 %v4121, 16
      %v4174 = vshrl.u32 %v4137, 16
      %v4175 = vpack.i.b16 %v4174, %v4173
      %v4179 = vpack.i.b16 %v4042, %v4026
      %v4181 = vshrl.u32 %v4026, 16
      %v4182 = vshrl.u32 %v4042, 16
      %v4183 = vpack.i.b16 %v4182, %v4181
      %v4187 = vpack.i.b16 %v4074, %v4058
      %v4189 = vshrl.u32 %v4058, 16
      %v4190 = vshrl.u32 %v4074, 16
      %v4191 = vpack.i.b16 %v4190, %v4189
      %v4195 = vpack.i.b16 %v4106, %v4090
      %v4197 = vshrl.u32 %v4090, 16
      %v4198 = vshrl.u32 %v4106, 16
      %v4199 = vpack.i.b16 %v4198, %v4197
      %v4203 = vpack.i.b16 %v4138, %v4122
      %v4205 = vshrl.u32 %v4122, 16
      %v4206 = vshrl.u32 %v4138, 16
      %v4207 = vpack.i.b16 %v4206, %v4205
      %v4211 = vpack.i.b16 %v4043, %v4027
      %v4213 = vshrl.u32 %v4027, 16
      %v4214 = vshrl.u32 %v4043, 16
      %v4215 = vpack.i.b16 %v4214, %v4213
      %v4219 = vpack.i.b16 %v4075, %v4059
      %v4221 = vshrl.u32 %v4059, 16
      %v4222 = vshrl.u32 %v4075, 16
      %v4223 = vpack.i.b16 %v4222, %v4221
      %v4227 = vpack.i.b16 %v4107, %v4091
      %v4229 = vshrl.u32 %v4091, 16
      %v4230 = vshrl.u32 %v4107, 16
      %v4231 = vpack.i.b16 %v4230, %v4229
      %v4235 = vpack.i.b16 %v4139, %v4123
      %v4237 = vshrl.u32 %v4123, 16
      %v4238 = vshrl.u32 %v4139, 16
      %v4239 = vpack.i.b16 %v4238, %v4237
      %v4243 = vpack.i.b16 %v4044, %v4028
      %v4245 = vshrl.u32 %v4028, 16
      %v4246 = vshrl.u32 %v4044, 16
      %v4247 = vpack.i.b16 %v4246, %v4245
      %v4251 = vpack.i.b16 %v4076, %v4060
      %v4253 = vshrl.u32 %v4060, 16
      %v4254 = vshrl.u32 %v4076, 16
      %v4255 = vpack.i.b16 %v4254, %v4253
      %v4259 = vpack.i.b16 %v4108, %v4092
      %v4261 = vshrl.u32 %v4092, 16
      %v4262 = vshrl.u32 %v4108, 16
      %v4263 = vpack.i.b16 %v4262, %v4261
      %v4267 = vpack.i.b16 %v4140, %v4124
      %v4269 = vshrl.u32 %v4124, 16
      %v4270 = vshrl.u32 %v4140, 16
      %v4271 = vpack.i.b16 %v4270, %v4269
      %v4273 = vcombine.low %v4147, %v4163
      %v4274 = vcombine.high %v4147, %v4163
      %v4276 = vunpack.c.l.s4 1983009808
      %v4277 = vunpack.c.0.s8 %v4276
      %v4278 = vlaneseq
      %v4279 = vshrl.u32 %v4278, 7
      %v4280 = vsub.s32 %v4277, %v4279
      %v4281 = vrot.slane %v4273, %v4280
      %v4283 = vunpack.c.l.s4 1983009808
      %v4284 = vunpack.c.0.s8 %v4283
      %v4285 = vlaneseq
      %v4286 = vshrl.u32 %v4285, 7
      %v4287 = vsub.s32 %v4284, %v4286
      %v4288 = vrot.slane %v4274, %v4287
      %v4289 = vcombine.low %v4155, %v4171
      %v4290 = vcombine.high %v4155, %v4171
      %v4292 = vunpack.c.l.s4 1983009808
      %v4293 = vunpack.c.0.s8 %v4292
      %v4294 = vlaneseq
      %v4295 = vshrl.u32 %v4294, 7
      %v4296 = vsub.s32 %v4293, %v4295
      %v4297 = vrot.slane %v4289, %v4296
      %v4299 = vunpack.c.l.s4 1983009808
      %v4300 = vunpack.c.0.s8 %v4299
      %v4301 = vlaneseq
      %v4302 = vshrl.u32 %v4301, 7
      %v4303 = vsub.s32 %v4300, %v4302
      %v4304 = vrot.slane %v4290, %v4303
      %v4305 = vcombine.low %v4281, %v4297
      %v4306 = vcombine.high %v4281, %v4297
      %v4308 = vunpack.c.l.s4 1934713408
      %v4309 = vunpack.c.0.s8 %v4308
      %v4310 = vlaneseq
      %v4311 = vshrl.u32 %v4310, 7
      %v4312 = vsub.s32 %v4309, %v4311
      %v4313 = vrot.slane %v4305, %v4312
      %v4315 = vunpack.c.l.s4 1934713408
      %v4316 = vunpack.c.0.s8 %v4315
      %v4317 = vlaneseq
      %v4318 = vshrl.u32 %v4317, 7
      %v4319 = vsub.s32 %v4316, %v4318
      %v4320 = vrot.slane %v4306, %v4319
      %v4321 = vcombine.low %v4288, %v4304
      %v4322 = vcombine.high %v4288, %v4304
      %v4324 = vunpack.c.l.s4 1934713408
      %v4325 = vunpack.c.0.s8 %v4324
      %v4326 = vlaneseq
      %v4327 = vshrl.u32 %v4326, 7
      %v4328 = vsub.s32 %v4325, %v4327
      %v4329 = vrot.slane %v4321, %v4328
      %v4331 = vunpack.c.l.s4 1934713408
      %v4332 = vunpack.c.0.s8 %v4331
      %v4333 = vlaneseq
      %v4334 = vshrl.u32 %v4333, 7
      %v4335 = vsub.s32 %v4332, %v4334
      %v4336 = vrot.slane %v4322, %v4335
      %v4337 = vcombine.high %v4313, 0
      %v4338 = vcombine.high %v4320, 0
      %v4339 = vcombine.high %v4329, 0
      %v4340 = vcombine.high %v4336, 0
      %v4341 = vcombine.low %v4151, %v4167
      %v4342 = vcombine.high %v4151, %v4167
      %v4344 = vunpack.c.l.s4 1983009808
      %v4345 = vunpack.c.0.s8 %v4344
      %v4346 = vlaneseq
      %v4347 = vshrl.u32 %v4346, 7
      %v4348 = vsub.s32 %v4345, %v4347
      %v4349 = vrot.slane %v4341, %v4348
      %v4351 = vunpack.c.l.s4 1983009808
      %v4352 = vunpack.c.0.s8 %v4351
      %v4353 = vlaneseq
      %v4354 = vshrl.u32 %v4353, 7
      %v4355 = vsub.s32 %v4352, %v4354
      %v4356 = vrot.slane %v4342, %v4355
      %v4357 = vcombine.low %v4159, %v4175
      %v4358 = vcombine.high %v4159, %v4175
      %v4360 = vunpack.c.l.s4 1983009808
      %v4361 = vunpack.c.0.s8 %v4360
      %v4362 = vlaneseq
      %v4363 = vshrl.u32 %v4362, 7
      %v4364 = vsub.s32 %v4361, %v4363
      %v4365 = vrot.slane %v4357, %v4364
      %v4367 = vunpack.c.l.s4 1983009808
      %v4368 = vunpack.c.0.s8 %v4367
      %v4369 = vlaneseq
      %v4370 = vshrl.u32 %v4369, 7
      %v4371 = vsub.s32 %v4368, %v4370
      %v4372 = vrot.slane %v4358, %v4371
      %v4373 = vcombine.low %v4349, %v4365
      %v4374 = vcombine.high %v4349, %v4365
      %v4376 = vunpack.c.l.s4 1934713408
      %v4377 = vunpack.c.0.s8 %v4376
      %v4378 = vlaneseq
      %v4379 = vshrl.u32 %v4378, 7
      %v4380 = vsub.s32 %v4377, %v4379
      %v4381 = vrot.slane %v4373, %v4380
      %v4383 = vunpack.c.l.s4 1934713408
      %v4384 = vunpack.c.0.s8 %v4383
      %v4385 = vlaneseq
      %v4386 = vshrl.u32 %v4385, 7
      %v4387 = vsub.s32 %v4384, %v4386
      %v4388 = vrot.slane %v4374, %v4387
      %v4389 = vcombine.low %v4356, %v4372
      %v4390 = vcombine.high %v4356, %v4372
      %v4392 = vunpack.c.l.s4 1934713408
      %v4393 = vunpack.c.0.s8 %v4392
      %v4394 = vlaneseq
      %v4395 = vshrl.u32 %v4394, 7
      %v4396 = vsub.s32 %v4393, %v4395
      %v4397 = vrot.slane %v4389, %v4396
      %v4399 = vunpack.c.l.s4 1934713408
      %v4400 = vunpack.c.0.s8 %v4399
      %v4401 = vlaneseq
      %v4402 = vshrl.u32 %v4401, 7
      %v4403 = vsub.s32 %v4400, %v4402
      %v4404 = vrot.slane %v4390, %v4403
      %v4405 = vcombine.high %v4381, 0
      %v4406 = vcombine.high %v4388, 0
      %v4407 = vcombine.high %v4397, 0
      %v4408 = vcombine.high %v4404, 0
      %v4409 = vcombine.low %v4179, %v4195
      %v4410 = vcombine.high %v4179, %v4195
      %v4412 = vunpack.c.l.s4 1983009808
      %v4413 = vunpack.c.0.s8 %v4412
      %v4414 = vlaneseq
      %v4415 = vshrl.u32 %v4414, 7
      %v4416 = vsub.s32 %v4413, %v4415
      %v4417 = vrot.slane %v4409, %v4416
      %v4419 = vunpack.c.l.s4 1983009808
      %v4420 = vunpack.c.0.s8 %v4419
      %v4421 = vlaneseq
      %v4422 = vshrl.u32 %v4421, 7
      %v4423 = vsub.s32 %v4420, %v4422
      %v4424 = vrot.slane %v4410, %v4423
      %v4425 = vcombine.low %v4187, %v4203
      %v4426 = vcombine.high %v4187, %v4203
      %v4428 = vunpack.c.l.s4 1983009808
      %v4429 = vunpack.c.0.s8 %v4428
      %v4430 = vlaneseq
      %v4431 = vshrl.u32 %v4430, 7
      %v4432 = vsub.s32 %v4429, %v4431
      %v4433 = vrot.slane %v4425, %v4432
      %v4435 = vunpack.c.l.s4 1983009808
      %v4436 = vunpack.c.0.s8 %v4435
      %v4437 = vlaneseq
      %v4438 = vshrl.u32 %v4437, 7
      %v4439 = vsub.s32 %v4436, %v4438
      %v4440 = vrot.slane %v4426, %v4439
      %v4441 = vcombine.low %v4417, %v4433
      %v4442 = vcombine.high %v4417, %v4433
      %v4444 = vunpack.c.l.s4 1934713408
      %v4445 = vunpack.c.0.s8 %v4444
      %v4446 = vlaneseq
      %v4447 = vshrl.u32 %v4446, 7
      %v4448 = vsub.s32 %v4445, %v4447
      %v4449 = vrot.slane %v4441, %v4448
      %v4451 = vunpack.c.l.s4 1934713408
      %v4452 = vunpack.c.0.s8 %v4451
      %v4453 = vlaneseq
      %v4454 = vshrl.u32 %v4453, 7
      %v4455 = vsub.s32 %v4452, %v4454
      %v4456 = vrot.slane %v4442, %v4455
      %v4457 = vcombine.low %v4424, %v4440
      %v4458 = vcombine.high %v4424, %v4440
      %v4460 = vunpack.c.l.s4 1934713408
      %v4461 = vunpack.c.0.s8 %v4460
      %v4462 = vlaneseq
      %v4463 = vshrl.u32 %v4462, 7
      %v4464 = vsub.s32 %v4461, %v4463
      %v4465 = vrot.slane %v4457, %v4464
      %v4467 = vunpack.c.l.s4 1934713408
      %v4468 = vunpack.c.0.s8 %v4467
      %v4469 = vlaneseq
      %v4470 = vshrl.u32 %v4469, 7
      %v4471 = vsub.s32 %v4468, %v4470
      %v4472 = vrot.slane %v4458, %v4471
      %v4473 = vcombine.high %v4449, 0
      %v4474 = vcombine.high %v4456, 0
      %v4475 = vcombine.high %v4465, 0
      %v4476 = vcombine.high %v4472, 0
      %v4477 = vcombine.low %v4183, %v4199
      %v4478 = vcombine.high %v4183, %v4199
      %v4480 = vunpack.c.l.s4 1983009808
      %v4481 = vunpack.c.0.s8 %v4480
      %v4482 = vlaneseq
      %v4483 = vshrl.u32 %v4482, 7
      %v4484 = vsub.s32 %v4481, %v4483
      %v4485 = vrot.slane %v4477, %v4484
      %v4487 = vunpack.c.l.s4 1983009808
      %v4488 = vunpack.c.0.s8 %v4487
      %v4489 = vlaneseq
      %v4490 = vshrl.u32 %v4489, 7
      %v4491 = vsub.s32 %v4488, %v4490
      %v4492 = vrot.slane %v4478, %v4491
      %v4493 = vcombine.low %v4191, %v4207
      %v4494 = vcombine.high %v4191, %v4207
      %v4496 = vunpack.c.l.s4 1983009808
      %v4497 = vunpack.c.0.s8 %v4496
      %v4498 = vlaneseq
      %v4499 = vshrl.u32 %v4498, 7
      %v4500 = vsub.s32 %v4497, %v4499
      %v4501 = vrot.slane %v4493, %v4500
      %v4503 = vunpack.c.l.s4 1983009808
      %v4504 = vunpack.c.0.s8 %v4503
      %v4505 = vlaneseq
      %v4506 = vshrl.u32 %v4505, 7
      %v4507 = vsub.s32 %v4504, %v4506
      %v4508 = vrot.slane %v4494, %v4507
      %v4509 = vcombine.low %v4485, %v4501
      %v4510 = vcombine.high %v4485, %v4501
      %v4512 = vunpack.c.l.s4 1934713408
      %v4513 = vunpack.c.0.s8 %v4512
      %v4514 = vlaneseq
      %v4515 = vshrl.u32 %v4514, 7
      %v4516 = vsub.s32 %v4513, %v4515
      %v4517 = vrot.slane %v4509, %v4516
      %v4519 = vunpack.c.l.s4 1934713408
      %v4520 = vunpack.c.0.s8 %v4519
      %v4521 = vlaneseq
      %v4522 = vshrl.u32 %v4521, 7
      %v4523 = vsub.s32 %v4520, %v4522
      %v4524 = vrot.slane %v4510, %v4523
      %v4525 = vcombine.low %v4492, %v4508
      %v4526 = vcombine.high %v4492, %v4508
      %v4528 = vunpack.c.l.s4 1934713408
      %v4529 = vunpack.c.0.s8 %v4528
      %v4530 = vlaneseq
      %v4531 = vshrl.u32 %v4530, 7
      %v4532 = vsub.s32 %v4529, %v4531
      %v4533 = vrot.slane %v4525, %v4532
      %v4535 = vunpack.c.l.s4 1934713408
      %v4536 = vunpack.c.0.s8 %v4535
      %v4537 = vlaneseq
      %v4538 = vshrl.u32 %v4537, 7
      %v4539 = vsub.s32 %v4536, %v4538
      %v4540 = vrot.slane %v4526, %v4539
      %v4541 = vcombine.high %v4517, 0
      %v4542 = vcombine.high %v4524, 0
      %v4543 = vcombine.high %v4533, 0
      %v4544 = vcombine.high %v4540, 0
      %v4545 = vcombine.low %v4211, %v4227
      %v4546 = vcombine.high %v4211, %v4227
      %v4548 = vunpack.c.l.s4 1983009808
      %v4549 = vunpack.c.0.s8 %v4548
      %v4550 = vlaneseq
      %v4551 = vshrl.u32 %v4550, 7
      %v4552 = vsub.s32 %v4549, %v4551
      %v4553 = vrot.slane %v4545, %v4552
      %v4555 = vunpack.c.l.s4 1983009808
      %v4556 = vunpack.c.0.s8 %v4555
      %v4557 = vlaneseq
      %v4558 = vshrl.u32 %v4557, 7
      %v4559 = vsub.s32 %v4556, %v4558
      %v4560 = vrot.slane %v4546, %v4559
      %v4561 = vcombine.low %v4219, %v4235
      %v4562 = vcombine.high %v4219, %v4235
      %v4564 = vunpack.c.l.s4 1983009808
      %v4565 = vunpack.c.0.s8 %v4564
      %v4566 = vlaneseq
      %v4567 = vshrl.u32 %v4566, 7
      %v4568 = vsub.s32 %v4565, %v4567
      %v4569 = vrot.slane %v4561, %v4568
      %v4571 = vunpack.c.l.s4 1983009808
      %v4572 = vunpack.c.0.s8 %v4571
      %v4573 = vlaneseq
      %v4574 = vshrl.u32 %v4573, 7
      %v4575 = vsub.s32 %v4572, %v4574
      %v4576 = vrot.slane %v4562, %v4575
      %v4577 = vcombine.low %v4553, %v4569
      %v4578 = vcombine.high %v4553, %v4569
      %v4580 = vunpack.c.l.s4 1934713408
      %v4581 = vunpack.c.0.s8 %v4580
      %v4582 = vlaneseq
      %v4583 = vshrl.u32 %v4582, 7
      %v4584 = vsub.s32 %v4581, %v4583
      %v4585 = vrot.slane %v4577, %v4584
      %v4587 = vunpack.c.l.s4 1934713408
      %v4588 = vunpack.c.0.s8 %v4587
      %v4589 = vlaneseq
      %v4590 = vshrl.u32 %v4589, 7
      %v4591 = vsub.s32 %v4588, %v4590
      %v4592 = vrot.slane %v4578, %v4591
      %v4593 = vcombine.low %v4560, %v4576
      %v4594 = vcombine.high %v4560, %v4576
      %v4596 = vunpack.c.l.s4 1934713408
      %v4597 = vunpack.c.0.s8 %v4596
      %v4598 = vlaneseq
      %v4599 = vshrl.u32 %v4598, 7
      %v4600 = vsub.s32 %v4597, %v4599
      %v4601 = vrot.slane %v4593, %v4600
      %v4603 = vunpack.c.l.s4 1934713408
      %v4604 = vunpack.c.0.s8 %v4603
      %v4605 = vlaneseq
      %v4606 = vshrl.u32 %v4605, 7
      %v4607 = vsub.s32 %v4604, %v4606
      %v4608 = vrot.slane %v4594, %v4607
      %v4609 = vcombine.high %v4585, 0
      %v4610 = vcombine.high %v4592, 0
      %v4611 = vcombine.high %v4601, 0
      %v4612 = vcombine.high %v4608, 0
      %v4613 = vcombine.low %v4215, %v4231
      %v4614 = vcombine.high %v4215, %v4231
      %v4616 = vunpack.c.l.s4 1983009808
      %v4617 = vunpack.c.0.s8 %v4616
      %v4618 = vlaneseq
      %v4619 = vshrl.u32 %v4618, 7
      %v4620 = vsub.s32 %v4617, %v4619
      %v4621 = vrot.slane %v4613, %v4620
      %v4623 = vunpack.c.l.s4 1983009808
      %v4624 = vunpack.c.0.s8 %v4623
      %v4625 = vlaneseq
      %v4626 = vshrl.u32 %v4625, 7
      %v4627 = vsub.s32 %v4624, %v4626
      %v4628 = vrot.slane %v4614, %v4627
      %v4629 = vcombine.low %v4223, %v4239
      %v4630 = vcombine.high %v4223, %v4239
      %v4632 = vunpack.c.l.s4 1983009808
      %v4633 = vunpack.c.0.s8 %v4632
      %v4634 = vlaneseq
      %v4635 = vshrl.u32 %v4634, 7
      %v4636 = vsub.s32 %v4633, %v4635
      %v4637 = vrot.slane %v4629, %v4636
      %v4639 = vunpack.c.l.s4 1983009808
      %v4640 = vunpack.c.0.s8 %v4639
      %v4641 = vlaneseq
      %v4642 = vshrl.u32 %v4641, 7
      %v4643 = vsub.s32 %v4640, %v4642
      %v4644 = vrot.slane %v4630, %v4643
      %v4645 = vcombine.low %v4621, %v4637
      %v4646 = vcombine.high %v4621, %v4637
      %v4648 = vunpack.c.l.s4 1934713408
      %v4649 = vunpack.c.0.s8 %v4648
      %v4650 = vlaneseq
      %v4651 = vshrl.u32 %v4650, 7
      %v4652 = vsub.s32 %v4649, %v4651
      %v4653 = vrot.slane %v4645, %v4652
      %v4655 = vunpack.c.l.s4 1934713408
      %v4656 = vunpack.c.0.s8 %v4655
      %v4657 = vlaneseq
      %v4658 = vshrl.u32 %v4657, 7
      %v4659 = vsub.s32 %v4656, %v4658
      %v4660 = vrot.slane %v4646, %v4659
      %v4661 = vcombine.low %v4628, %v4644
      %v4662 = vcombine.high %v4628, %v4644
      %v4664 = vunpack.c.l.s4 1934713408
      %v4665 = vunpack.c.0.s8 %v4664
      %v4666 = vlaneseq
      %v4667 = vshrl.u32 %v4666, 7
      %v4668 = vsub.s32 %v4665, %v4667
      %v4669 = vrot.slane %v4661, %v4668
      %v4671 = vunpack.c.l.s4 1934713408
      %v4672 = vunpack.c.0.s8 %v4671
      %v4673 = vlaneseq
      %v4674 = vshrl.u32 %v4673, 7
      %v4675 = vsub.s32 %v4672, %v4674
      %v4676 = vrot.slane %v4662, %v4675
      %v4677 = vcombine.high %v4653, 0
      %v4678 = vcombine.high %v4660, 0
      %v4679 = vcombine.high %v4669, 0
      %v4680 = vcombine.high %v4676, 0
      %v4681 = vcombine.low %v4243, %v4259
      %v4682 = vcombine.high %v4243, %v4259
      %v4684 = vunpack.c.l.s4 1983009808
      %v4685 = vunpack.c.0.s8 %v4684
      %v4686 = vlaneseq
      %v4687 = vshrl.u32 %v4686, 7
      %v4688 = vsub.s32 %v4685, %v4687
      %v4689 = vrot.slane %v4681, %v4688
      %v4691 = vunpack.c.l.s4 1983009808
      %v4692 = vunpack.c.0.s8 %v4691
      %v4693 = vlaneseq
      %v4694 = vshrl.u32 %v4693, 7
      %v4695 = vsub.s32 %v4692, %v4694
      %v4696 = vrot.slane %v4682, %v4695
      %v4697 = vcombine.low %v4251, %v4267
      %v4698 = vcombine.high %v4251, %v4267
      %v4700 = vunpack.c.l.s4 1983009808
      %v4701 = vunpack.c.0.s8 %v4700
      %v4702 = vlaneseq
      %v4703 = vshrl.u32 %v4702, 7
      %v4704 = vsub.s32 %v4701, %v4703
      %v4705 = vrot.slane %v4697, %v4704
      %v4707 = vunpack.c.l.s4 1983009808
      %v4708 = vunpack.c.0.s8 %v4707
      %v4709 = vlaneseq
      %v4710 = vshrl.u32 %v4709, 7
      %v4711 = vsub.s32 %v4708, %v4710
      %v4712 = vrot.slane %v4698, %v4711
      %v4713 = vcombine.low %v4689, %v4705
      %v4714 = vcombine.high %v4689, %v4705
      %v4716 = vunpack.c.l.s4 1934713408
      %v4717 = vunpack.c.0.s8 %v4716
      %v4718 = vlaneseq
      %v4719 = vshrl.u32 %v4718, 7
      %v4720 = vsub.s32 %v4717, %v4719
      %v4721 = vrot.slane %v4713, %v4720
      %v4723 = vunpack.c.l.s4 1934713408
      %v4724 = vunpack.c.0.s8 %v4723
      %v4725 = vlaneseq
      %v4726 = vshrl.u32 %v4725, 7
      %v4727 = vsub.s32 %v4724, %v4726
      %v4728 = vrot.slane %v4714, %v4727
      %v4729 = vcombine.low %v4696, %v4712
      %v4730 = vcombine.high %v4696, %v4712
      %v4732 = vunpack.c.l.s4 1934713408
      %v4733 = vunpack.c.0.s8 %v4732
      %v4734 = vlaneseq
      %v4735 = vshrl.u32 %v4734, 7
      %v4736 = vsub.s32 %v4733, %v4735
      %v4737 = vrot.slane %v4729, %v4736
      %v4739 = vunpack.c.l.s4 1934713408
      %v4740 = vunpack.c.0.s8 %v4739
      %v4741 = vlaneseq
      %v4742 = vshrl.u32 %v4741, 7
      %v4743 = vsub.s32 %v4740, %v4742
      %v4744 = vrot.slane %v4730, %v4743
      %v4745 = vcombine.high %v4721, 0
      %v4746 = vcombine.high %v4728, 0
      %v4747 = vcombine.high %v4737, 0
      %v4748 = vcombine.high %v4744, 0
      %v4749 = vcombine.low %v4247, %v4263
      %v4750 = vcombine.high %v4247, %v4263
      %v4752 = vunpack.c.l.s4 1983009808
      %v4753 = vunpack.c.0.s8 %v4752
      %v4754 = vlaneseq
      %v4755 = vshrl.u32 %v4754, 7
      %v4756 = vsub.s32 %v4753, %v4755
      %v4757 = vrot.slane %v4749, %v4756
      %v4759 = vunpack.c.l.s4 1983009808
      %v4760 = vunpack.c.0.s8 %v4759
      %v4761 = vlaneseq
      %v4762 = vshrl.u32 %v4761, 7
      %v4763 = vsub.s32 %v4760, %v4762
      %v4764 = vrot.slane %v4750, %v4763
      %v4765 = vcombine.low %v4255, %v4271
      %v4766 = vcombine.high %v4255, %v4271
      %v4768 = vunpack.c.l.s4 1983009808
      %v4769 = vunpack.c.0.s8 %v4768
      %v4770 = vlaneseq
      %v4771 = vshrl.u32 %v4770, 7
      %v4772 = vsub.s32 %v4769, %v4771
      %v4773 = vrot.slane %v4765, %v4772
      %v4775 = vunpack.c.l.s4 1983009808
      %v4776 = vunpack.c.0.s8 %v4775
      %v4777 = vlaneseq
      %v4778 = vshrl.u32 %v4777, 7
      %v4779 = vsub.s32 %v4776, %v4778
      %v4780 = vrot.slane %v4766, %v4779
      %v4781 = vcombine.low %v4757, %v4773
      %v4782 = vcombine.high %v4757, %v4773
      %v4784 = vunpack.c.l.s4 1934713408
      %v4785 = vunpack.c.0.s8 %v4784
      %v4786 = vlaneseq
      %v4787 = vshrl.u32 %v4786, 7
      %v4788 = vsub.s32 %v4785, %v4787
      %v4789 = vrot.slane %v4781, %v4788
      %v4791 = vunpack.c.l.s4 1934713408
      %v4792 = vunpack.c.0.s8 %v4791
      %v4793 = vlaneseq
      %v4794 = vshrl.u32 %v4793, 7
      %v4795 = vsub.s32 %v4792, %v4794
      %v4796 = vrot.slane %v4782, %v4795
      %v4797 = vcombine.low %v4764, %v4780
      %v4798 = vcombine.high %v4764, %v4780
      %v4800 = vunpack.c.l.s4 1934713408
      %v4801 = vunpack.c.0.s8 %v4800
      %v4802 = vlaneseq
      %v4803 = vshrl.u32 %v4802, 7
      %v4804 = vsub.s32 %v4801, %v4803
      %v4805 = vrot.slane %v4797, %v4804
      %v4807 = vunpack.c.l.s4 1934713408
      %v4808 = vunpack.c.0.s8 %v4807
      %v4809 = vlaneseq
      %v4810 = vshrl.u32 %v4809, 7
      %v4811 = vsub.s32 %v4808, %v4810
      %v4812 = vrot.slane %v4798, %v4811
      %v4813 = vcombine.high %v4789, 0
      %v4814 = vcombine.high %v4796, 0
      %v4815 = vcombine.high %v4805, 0
      %v4816 = vcombine.high %v4812, 0
      %4817 = vxpose.xlu0.c.b16.start [1/8] %v4313, 128
      %4818 = vxpose.xlu0.c.b16.cont [2/8] 0, 128
      %4819 = vxpose.xlu0.c.b16.cont [3/8] 0, 128
      %4820 = vxpose.xlu0.c.b16.cont [4/8] 0, 128
      %4821 = vxpose.xlu0.c.b16.cont [5/8] 0, 128
      %4822 = vxpose.xlu0.c.b16.cont [6/8] 0, 128
      %4823 = vxpose.xlu0.c.b16.cont [7/8] 0, 128
      %4824 = vxpose.xlu0.c.b16.end [8/8] 0, 128
      %v4825 = vpop.trf.xlu0
      %v4826 = vpop.trf.xlu0
      %v4827 = vpop.trf.xlu0
      %v4828 = vpop.trf.xlu0
      %v4829 = vpop.trf.xlu0
      %v4830 = vpop.trf.xlu0
      %v4831 = vpop.trf.xlu0
      %v4832 = vpop.trf.xlu0
      %4833 = vxpose.xlu0.c.b16.start [1/8] %v4381, 128
      %4834 = vxpose.xlu0.c.b16.cont [2/8] 0, 128
      %4835 = vxpose.xlu0.c.b16.cont [3/8] 0, 128
      %4836 = vxpose.xlu0.c.b16.cont [4/8] 0, 128
      %4837 = vxpose.xlu0.c.b16.cont [5/8] 0, 128
      %4838 = vxpose.xlu0.c.b16.cont [6/8] 0, 128
      %4839 = vxpose.xlu0.c.b16.cont [7/8] 0, 128
      %4840 = vxpose.xlu0.c.b16.end [8/8] 0, 128
      %v4841 = vpop.trf.xlu0
      %v4842 = vpop.trf.xlu0
      %v4843 = vpop.trf.xlu0
      %v4844 = vpop.trf.xlu0
      %v4845 = vpop.trf.xlu0
      %v4846 = vpop.trf.xlu0
      %v4847 = vpop.trf.xlu0
      %v4848 = vpop.trf.xlu0
      %4849 = vxpose.xlu0.c.b16.start [1/8] %v4337, 128
      %4850 = vxpose.xlu0.c.b16.cont [2/8] 0, 128
      %4851 = vxpose.xlu0.c.b16.cont [3/8] 0, 128
      %4852 = vxpose.xlu0.c.b16.cont [4/8] 0, 128
      %4853 = vxpose.xlu0.c.b16.cont [5/8] 0, 128
      %4854 = vxpose.xlu0.c.b16.cont [6/8] 0, 128
      %4855 = vxpose.xlu0.c.b16.cont [7/8] 0, 128
      %4856 = vxpose.xlu0.c.b16.end [8/8] 0, 128
      %v4857 = vpop.trf.xlu0
      %v4858 = vpop.trf.xlu0
      %v4859 = vpop.trf.xlu0
      %v4860 = vpop.trf.xlu0
      %v4861 = vpop.trf.xlu0
      %v4862 = vpop.trf.xlu0
      %v4863 = vpop.trf.xlu0
      %v4864 = vpop.trf.xlu0
      %4865 = vxpose.xlu0.c.b16.start [1/8] %v4405, 128
      %4866 = vxpose.xlu0.c.b16.cont [2/8] 0, 128
      %4867 = vxpose.xlu0.c.b16.cont [3/8] 0, 128
      %4868 = vxpose.xlu0.c.b16.cont [4/8] 0, 128
      %4869 = vxpose.xlu0.c.b16.cont [5/8] 0, 128
      %4870 = vxpose.xlu0.c.b16.cont [6/8] 0, 128
      %4871 = vxpose.xlu0.c.b16.cont [7/8] 0, 128
      %4872 = vxpose.xlu0.c.b16.end [8/8] 0, 128
      %v4873 = vpop.trf.xlu0
      %v4874 = vpop.trf.xlu0
      %v4875 = vpop.trf.xlu0
      %v4876 = vpop.trf.xlu0
      %v4877 = vpop.trf.xlu0
      %v4878 = vpop.trf.xlu0
      %v4879 = vpop.trf.xlu0
      %v4880 = vpop.trf.xlu0
      %4881 = vxpose.xlu0.c.b16.start [1/8] %v4320, 128
      %4882 = vxpose.xlu0.c.b16.cont [2/8] 0, 128
      %4883 = vxpose.xlu0.c.b16.cont [3/8] 0, 128
      %4884 = vxpose.xlu0.c.b16.cont [4/8] 0, 128
      %4885 = vxpose.xlu0.c.b16.cont [5/8] 0, 128
      %4886 = vxpose.xlu0.c.b16.cont [6/8] 0, 128
      %4887 = vxpose.xlu0.c.b16.cont [7/8] 0, 128
      %4888 = vxpose.xlu0.c.b16.end [8/8] 0, 128
      %v4889 = vpop.trf.xlu0
      %v4890 = vpop.trf.xlu0
      %v4891 = vpop.trf.xlu0
      %v4892 = vpop.trf.xlu0
      %v4893 = vpop.trf.xlu0
      %v4894 = vpop.trf.xlu0
      %v4895 = vpop.trf.xlu0
      %v4896 = vpop.trf.xlu0
      %4897 = vxpose.xlu0.c.b16.start [1/8] %v4388, 128
      %4898 = vxpose.xlu0.c.b16.cont [2/8] 0, 128
      %4899 = vxpose.xlu0.c.b16.cont [3/8] 0, 128
      %4900 = vxpose.xlu0.c.b16.cont [4/8] 0, 128
      %4901 = vxpose.xlu0.c.b16.cont [5/8] 0, 128
      %4902 = vxpose.xlu0.c.b16.cont [6/8] 0, 128
      %4903 = vxpose.xlu0.c.b16.cont [7/8] 0, 128
      %4904 = vxpose.xlu0.c.b16.end [8/8] 0, 128
      %v4905 = vpop.trf.xlu0
      %v4906 = vpop.trf.xlu0
      %v4907 = vpop.trf.xlu0
      %v4908 = vpop.trf.xlu0
      %v4909 = vpop.trf.xlu0
      %v4910 = vpop.trf.xlu0
      %v4911 = vpop.trf.xlu0
      %v4912 = vpop.trf.xlu0
      %4913 = vxpose.xlu0.c.b16.start [1/8] %v4338, 128
      %4914 = vxpose.xlu0.c.b16.cont [2/8] 0, 128
      %4915 = vxpose.xlu0.c.b16.cont [3/8] 0, 128
      %4916 = vxpose.xlu0.c.b16.cont [4/8] 0, 128
      %4917 = vxpose.xlu0.c.b16.cont [5/8] 0, 128
      %4918 = vxpose.xlu0.c.b16.cont [6/8] 0, 128
      %4919 = vxpose.xlu0.c.b16.cont [7/8] 0, 128
      %4920 = vxpose.xlu0.c.b16.end [8/8] 0, 128
      %v4921 = vpop.trf.xlu0
      %v4922 = vpop.trf.xlu0
      %v4923 = vpop.trf.xlu0
      %v4924 = vpop.trf.xlu0
      %v4925 = vpop.trf.xlu0
      %v4926 = vpop.trf.xlu0
      %v4927 = vpop.trf.xlu0
      %v4928 = vpop.trf.xlu0
      %4929 = vxpose.xlu0.c.b16.start [1/8] %v4406, 128
      %4930 = vxpose.xlu0.c.b16.cont [2/8] 0, 128
      %4931 = vxpose.xlu0.c.b16.cont [3/8] 0, 128
      %4932 = vxpose.xlu0.c.b16.cont [4/8] 0, 128
      %4933 = vxpose.xlu0.c.b16.cont [5/8] 0, 128
      %4934 = vxpose.xlu0.c.b16.cont [6/8] 0, 128
      %4935 = vxpose.xlu0.c.b16.cont [7/8] 0, 128
      %4936 = vxpose.xlu0.c.b16.end [8/8] 0, 128
      %v4937 = vpop.trf.xlu0
      %v4938 = vpop.trf.xlu0
      %v4939 = vpop.trf.xlu0
      %v4940 = vpop.trf.xlu0
      %v4941 = vpop.trf.xlu0
      %v4942 = vpop.trf.xlu0
      %v4943 = vpop.trf.xlu0
      %v4944 = vpop.trf.xlu0
      %4945 = vxpose.xlu0.c.b16.start [1/8] %v4329, 128
      %4946 = vxpose.xlu0.c.b16.cont [2/8] 0, 128
      %4947 = vxpose.xlu0.c.b16.cont [3/8] 0, 128
      %4948 = vxpose.xlu0.c.b16.cont [4/8] 0, 128
      %4949 = vxpose.xlu0.c.b16.cont [5/8] 0, 128
      %4950 = vxpose.xlu0.c.b16.cont [6/8] 0, 128
      %4951 = vxpose.xlu0.c.b16.cont [7/8] 0, 128
      %4952 = vxpose.xlu0.c.b16.end [8/8] 0, 128
      %v4953 = vpop.trf.xlu0
      %v4954 = vpop.trf.xlu0
      %v4955 = vpop.trf.xlu0
      %v4956 = vpop.trf.xlu0
      %v4957 = vpop.trf.xlu0
      %v4958 = vpop.trf.xlu0
      %v4959 = vpop.trf.xlu0
      %v4960 = vpop.trf.xlu0
      %4961 = vxpose.xlu0.c.b16.start [1/8] %v4397, 128
      %4962 = vxpose.xlu0.c.b16.cont [2/8] 0, 128
      %4963 = vxpose.xlu0.c.b16.cont [3/8] 0, 128
      %4964 = vxpose.xlu0.c.b16.cont [4/8] 0, 128
      %4965 = vxpose.xlu0.c.b16.cont [5/8] 0, 128
      %4966 = vxpose.xlu0.c.b16.cont [6/8] 0, 128
      %4967 = vxpose.xlu0.c.b16.cont [7/8] 0, 128
      %4968 = vxpose.xlu0.c.b16.end [8/8] 0, 128
      %v4969 = vpop.trf.xlu0
      %v4970 = vpop.trf.xlu0
      %v4971 = vpop.trf.xlu0
      %v4972 = vpop.trf.xlu0
      %v4973 = vpop.trf.xlu0
      %v4974 = vpop.trf.xlu0
      %v4975 = vpop.trf.xlu0
      %v4976 = vpop.trf.xlu0
      %4977 = vxpose.xlu0.c.b16.start [1/8] %v4339, 128
      %4978 = vxpose.xlu0.c.b16.cont [2/8] 0, 128
      %4979 = vxpose.xlu0.c.b16.cont [3/8] 0, 128
      %4980 = vxpose.xlu0.c.b16.cont [4/8] 0, 128
      %4981 = vxpose.xlu0.c.b16.cont [5/8] 0, 128
      %4982 = vxpose.xlu0.c.b16.cont [6/8] 0, 128
      %4983 = vxpose.xlu0.c.b16.cont [7/8] 0, 128
      %4984 = vxpose.xlu0.c.b16.end [8/8] 0, 128
      %v4985 = vpop.trf.xlu0
      %v4986 = vpop.trf.xlu0
      %v4987 = vpop.trf.xlu0
      %v4988 = vpop.trf.xlu0
      %v4989 = vpop.trf.xlu0
      %v4990 = vpop.trf.xlu0
      %v4991 = vpop.trf.xlu0
      %v4992 = vpop.trf.xlu0
      %4993 = vxpose.xlu0.c.b16.start [1/8] %v4407, 128
      %4994 = vxpose.xlu0.c.b16.cont [2/8] 0, 128
      %4995 = vxpose.xlu0.c.b16.cont [3/8] 0, 128
      %4996 = vxpose.xlu0.c.b16.cont [4/8] 0, 128
      %4997 = vxpose.xlu0.c.b16.cont [5/8] 0, 128
      %4998 = vxpose.xlu0.c.b16.cont [6/8] 0, 128
      %4999 = vxpose.xlu0.c.b16.cont [7/8] 0, 128
      %5000 = vxpose.xlu0.c.b16.end [8/8] 0, 128
      %v5001 = vpop.trf.xlu0
      %v5002 = vpop.trf.xlu0
      %v5003 = vpop.trf.xlu0
      %v5004 = vpop.trf.xlu0
      %v5005 = vpop.trf.xlu0
      %v5006 = vpop.trf.xlu0
      %v5007 = vpop.trf.xlu0
      %v5008 = vpop.trf.xlu0
      %5009 = vxpose.xlu0.c.b16.start [1/8] %v4336, 128
      %5010 = vxpose.xlu0.c.b16.cont [2/8] 0, 128
      %5011 = vxpose.xlu0.c.b16.cont [3/8] 0, 128
      %5012 = vxpose.xlu0.c.b16.cont [4/8] 0, 128
      %5013 = vxpose.xlu0.c.b16.cont [5/8] 0, 128
      %5014 = vxpose.xlu0.c.b16.cont [6/8] 0, 128
      %5015 = vxpose.xlu0.c.b16.cont [7/8] 0, 128
      %5016 = vxpose.xlu0.c.b16.end [8/8] 0, 128
      %v5017 = vpop.trf.xlu0
      %v5018 = vpop.trf.xlu0
      %v5019 = vpop.trf.xlu0
      %v5020 = vpop.trf.xlu0
      %v5021 = vpop.trf.xlu0
      %v5022 = vpop.trf.xlu0
      %v5023 = vpop.trf.xlu0
      %v5024 = vpop.trf.xlu0
      %5025 = vxpose.xlu0.c.b16.start [1/8] %v4404, 128
      %5026 = vxpose.xlu0.c.b16.cont [2/8] 0, 128
      %5027 = vxpose.xlu0.c.b16.cont [3/8] 0, 128
      %5028 = vxpose.xlu0.c.b16.cont [4/8] 0, 128
      %5029 = vxpose.xlu0.c.b16.cont [5/8] 0, 128
      %5030 = vxpose.xlu0.c.b16.cont [6/8] 0, 128
      %5031 = vxpose.xlu0.c.b16.cont [7/8] 0, 128
      %5032 = vxpose.xlu0.c.b16.end [8/8] 0, 128
      %v5033 = vpop.trf.xlu0
      %v5034 = vpop.trf.xlu0
      %v5035 = vpop.trf.xlu0
      %v5036 = vpop.trf.xlu0
      %v5037 = vpop.trf.xlu0
      %v5038 = vpop.trf.xlu0
      %v5039 = vpop.trf.xlu0
      %v5040 = vpop.trf.xlu0
      %5041 = vxpose.xlu0.c.b16.start [1/8] %v4340, 128
      %5042 = vxpose.xlu0.c.b16.cont [2/8] 0, 128
      %5043 = vxpose.xlu0.c.b16.cont [3/8] 0, 128
      %5044 = vxpose.xlu0.c.b16.cont [4/8] 0, 128
      %5045 = vxpose.xlu0.c.b16.cont [5/8] 0, 128
      %5046 = vxpose.xlu0.c.b16.cont [6/8] 0, 128
      %5047 = vxpose.xlu0.c.b16.cont [7/8] 0, 128
      %5048 = vxpose.xlu0.c.b16.end [8/8] 0, 128
      %v5049 = vpop.trf.xlu0
      %v5050 = vpop.trf.xlu0
      %v5051 = vpop.trf.xlu0
      %v5052 = vpop.trf.xlu0
      %v5053 = vpop.trf.xlu0
      %v5054 = vpop.trf.xlu0
      %v5055 = vpop.trf.xlu0
      %v5056 = vpop.trf.xlu0
      %5057 = vxpose.xlu0.c.b16.start [1/8] %v4408, 128
      %5058 = vxpose.xlu0.c.b16.cont [2/8] 0, 128
      %5059 = vxpose.xlu0.c.b16.cont [3/8] 0, 128
      %5060 = vxpose.xlu0.c.b16.cont [4/8] 0, 128
      %5061 = vxpose.xlu0.c.b16.cont [5/8] 0, 128
      %5062 = vxpose.xlu0.c.b16.cont [6/8] 0, 128
      %5063 = vxpose.xlu0.c.b16.cont [7/8] 0, 128
      %5064 = vxpose.xlu0.c.b16.end [8/8] 0, 128
      %v5065 = vpop.trf.xlu0
      %v5066 = vpop.trf.xlu0
      %v5067 = vpop.trf.xlu0
      %v5068 = vpop.trf.xlu0
      %v5069 = vpop.trf.xlu0
      %v5070 = vpop.trf.xlu0
      %v5071 = vpop.trf.xlu0
      %v5072 = vpop.trf.xlu0
      %5073 = vxpose.xlu0.c.b16.start [1/8] %v4449, 128
      %5074 = vxpose.xlu0.c.b16.cont [2/8] 0, 128
      %5075 = vxpose.xlu0.c.b16.cont [3/8] 0, 128
      %5076 = vxpose.xlu0.c.b16.cont [4/8] 0, 128
      %5077 = vxpose.xlu0.c.b16.cont [5/8] 0, 128
      %5078 = vxpose.xlu0.c.b16.cont [6/8] 0, 128
      %5079 = vxpose.xlu0.c.b16.cont [7/8] 0, 128
      %5080 = vxpose.xlu0.c.b16.end [8/8] 0, 128
      %v5081 = vpop.trf.xlu0
      %v5082 = vpop.trf.xlu0
      %v5083 = vpop.trf.xlu0
      %v5084 = vpop.trf.xlu0
      %v5085 = vpop.trf.xlu0
      %v5086 = vpop.trf.xlu0
      %v5087 = vpop.trf.xlu0
      %v5088 = vpop.trf.xlu0
      %5089 = vxpose.xlu0.c.b16.start [1/8] %v4517, 128
      %5090 = vxpose.xlu0.c.b16.cont [2/8] 0, 128
      %5091 = vxpose.xlu0.c.b16.cont [3/8] 0, 128
      %5092 = vxpose.xlu0.c.b16.cont [4/8] 0, 128
      %5093 = vxpose.xlu0.c.b16.cont [5/8] 0, 128
      %5094 = vxpose.xlu0.c.b16.cont [6/8] 0, 128
      %5095 = vxpose.xlu0.c.b16.cont [7/8] 0, 128
      %5096 = vxpose.xlu0.c.b16.end [8/8] 0, 128
      %v5097 = vpop.trf.xlu0
      %v5098 = vpop.trf.xlu0
      %v5099 = vpop.trf.xlu0
      %v5100 = vpop.trf.xlu0
      %v5101 = vpop.trf.xlu0
      %v5102 = vpop.trf.xlu0
      %v5103 = vpop.trf.xlu0
      %v5104 = vpop.trf.xlu0
      %5105 = vxpose.xlu0.c.b16.start [1/8] %v4473, 128
      %5106 = vxpose.xlu0.c.b16.cont [2/8] 0, 128
      %5107 = vxpose.xlu0.c.b16.cont [3/8] 0, 128
      %5108 = vxpose.xlu0.c.b16.cont [4/8] 0, 128
      %5109 = vxpose.xlu0.c.b16.cont [5/8] 0, 128
      %5110 = vxpose.xlu0.c.b16.cont [6/8] 0, 128
      %5111 = vxpose.xlu0.c.b16.cont [7/8] 0, 128
      %5112 = vxpose.xlu0.c.b16.end [8/8] 0, 128
      %v5113 = vpop.trf.xlu0
      %v5114 = vpop.trf.xlu0
      %v5115 = vpop.trf.xlu0
      %v5116 = vpop.trf.xlu0
      %v5117 = vpop.trf.xlu0
      %v5118 = vpop.trf.xlu0
      %v5119 = vpop.trf.xlu0
      %v5120 = vpop.trf.xlu0
      %5121 = vxpose.xlu0.c.b16.start [1/8] %v4541, 128
      %5122 = vxpose.xlu0.c.b16.cont [2/8] 0, 128
      %5123 = vxpose.xlu0.c.b16.cont [3/8] 0, 128
      %5124 = vxpose.xlu0.c.b16.cont [4/8] 0, 128
      %5125 = vxpose.xlu0.c.b16.cont [5/8] 0, 128
      %5126 = vxpose.xlu0.c.b16.cont [6/8] 0, 128
      %5127 = vxpose.xlu0.c.b16.cont [7/8] 0, 128
      %5128 = vxpose.xlu0.c.b16.end [8/8] 0, 128
      %v5129 = vpop.trf.xlu0
      %v5130 = vpop.trf.xlu0
      %v5131 = vpop.trf.xlu0
      %v5132 = vpop.trf.xlu0
      %v5133 = vpop.trf.xlu0
      %v5134 = vpop.trf.xlu0
      %v5135 = vpop.trf.xlu0
      %v5136 = vpop.trf.xlu0
      %5137 = vxpose.xlu0.c.b16.start [1/8] %v4456, 128
      %5138 = vxpose.xlu0.c.b16.cont [2/8] 0, 128
      %5139 = vxpose.xlu0.c.b16.cont [3/8] 0, 128
      %5140 = vxpose.xlu0.c.b16.cont [4/8] 0, 128
      %5141 = vxpose.xlu0.c.b16.cont [5/8] 0, 128
      %5142 = vxpose.xlu0.c.b16.cont [6/8] 0, 128
      %5143 = vxpose.xlu0.c.b16.cont [7/8] 0, 128
      %5144 = vxpose.xlu0.c.b16.end [8/8] 0, 128
      %v5145 = vpop.trf.xlu0
      %v5146 = vpop.trf.xlu0
      %v5147 = vpop.trf.xlu0
      %v5148 = vpop.trf.xlu0
      %v5149 = vpop.trf.xlu0
      %v5150 = vpop.trf.xlu0
      %v5151 = vpop.trf.xlu0
      %v5152 = vpop.trf.xlu0
      %5153 = vxpose.xlu0.c.b16.start [1/8] %v4524, 128
      %5154 = vxpose.xlu0.c.b16.cont [2/8] 0, 128
      %5155 = vxpose.xlu0.c.b16.cont [3/8] 0, 128
      %5156 = vxpose.xlu0.c.b16.cont [4/8] 0, 128
      %5157 = vxpose.xlu0.c.b16.cont [5/8] 0, 128
      %5158 = vxpose.xlu0.c.b16.cont [6/8] 0, 128
      %5159 = vxpose.xlu0.c.b16.cont [7/8] 0, 128
      %5160 = vxpose.xlu0.c.b16.end [8/8] 0, 128
      %v5161 = vpop.trf.xlu0
      %v5162 = vpop.trf.xlu0
      %v5163 = vpop.trf.xlu0
      %v5164 = vpop.trf.xlu0
      %v5165 = vpop.trf.xlu0
      %v5166 = vpop.trf.xlu0
      %v5167 = vpop.trf.xlu0
      %v5168 = vpop.trf.xlu0
      %5169 = vxpose.xlu0.c.b16.start [1/8] %v4474, 128
      %5170 = vxpose.xlu0.c.b16.cont [2/8] 0, 128
      %5171 = vxpose.xlu0.c.b16.cont [3/8] 0, 128
      %5172 = vxpose.xlu0.c.b16.cont [4/8] 0, 128
      %5173 = vxpose.xlu0.c.b16.cont [5/8] 0, 128
      %5174 = vxpose.xlu0.c.b16.cont [6/8] 0, 128
      %5175 = vxpose.xlu0.c.b16.cont [7/8] 0, 128
      %5176 = vxpose.xlu0.c.b16.end [8/8] 0, 128
      %v5177 = vpop.trf.xlu0
      %v5178 = vpop.trf.xlu0
      %v5179 = vpop.trf.xlu0
      %v5180 = vpop.trf.xlu0
      %v5181 = vpop.trf.xlu0
      %v5182 = vpop.trf.xlu0
      %v5183 = vpop.trf.xlu0
      %v5184 = vpop.trf.xlu0
      %5185 = vxpose.xlu0.c.b16.start [1/8] %v4542, 128
      %5186 = vxpose.xlu0.c.b16.cont [2/8] 0, 128
      %5187 = vxpose.xlu0.c.b16.cont [3/8] 0, 128
      %5188 = vxpose.xlu0.c.b16.cont [4/8] 0, 128
      %5189 = vxpose.xlu0.c.b16.cont [5/8] 0, 128
      %5190 = vxpose.xlu0.c.b16.cont [6/8] 0, 128
      %5191 = vxpose.xlu0.c.b16.cont [7/8] 0, 128
      %5192 = vxpose.xlu0.c.b16.end [8/8] 0, 128
      %v5193 = vpop.trf.xlu0
      %v5194 = vpop.trf.xlu0
      %v5195 = vpop.trf.xlu0
      %v5196 = vpop.trf.xlu0
      %v5197 = vpop.trf.xlu0
      %v5198 = vpop.trf.xlu0
      %v5199 = vpop.trf.xlu0
      %v5200 = vpop.trf.xlu0
      %5201 = vxpose.xlu0.c.b16.start [1/8] %v4465, 128
      %5202 = vxpose.xlu0.c.b16.cont [2/8] 0, 128
      %5203 = vxpose.xlu0.c.b16.cont [3/8] 0, 128
      %5204 = vxpose.xlu0.c.b16.cont [4/8] 0, 128
      %5205 = vxpose.xlu0.c.b16.cont [5/8] 0, 128
      %5206 = vxpose.xlu0.c.b16.cont [6/8] 0, 128
      %5207 = vxpose.xlu0.c.b16.cont [7/8] 0, 128
      %5208 = vxpose.xlu0.c.b16.end [8/8] 0, 128
      %v5209 = vpop.trf.xlu0
      %v5210 = vpop.trf.xlu0
      %v5211 = vpop.trf.xlu0
      %v5212 = vpop.trf.xlu0
      %v5213 = vpop.trf.xlu0
      %v5214 = vpop.trf.xlu0
      %v5215 = vpop.trf.xlu0
      %v5216 = vpop.trf.xlu0
      %5217 = vxpose.xlu0.c.b16.start [1/8] %v4533, 128
      %5218 = vxpose.xlu0.c.b16.cont [2/8] 0, 128
      %5219 = vxpose.xlu0.c.b16.cont [3/8] 0, 128
      %5220 = vxpose.xlu0.c.b16.cont [4/8] 0, 128
      %5221 = vxpose.xlu0.c.b16.cont [5/8] 0, 128
      %5222 = vxpose.xlu0.c.b16.cont [6/8] 0, 128
      %5223 = vxpose.xlu0.c.b16.cont [7/8] 0, 128
      %5224 = vxpose.xlu0.c.b16.end [8/8] 0, 128
      %v5225 = vpop.trf.xlu0
      %v5226 = vpop.trf.xlu0
      %v5227 = vpop.trf.xlu0
      %v5228 = vpop.trf.xlu0
      %v5229 = vpop.trf.xlu0
      %v5230 = vpop.trf.xlu0
      %v5231 = vpop.trf.xlu0
      %v5232 = vpop.trf.xlu0
      %5233 = vxpose.xlu0.c.b16.start [1/8] %v4475, 128
      %5234 = vxpose.xlu0.c.b16.cont [2/8] 0, 128
      %5235 = vxpose.xlu0.c.b16.cont [3/8] 0, 128
      %5236 = vxpose.xlu0.c.b16.cont [4/8] 0, 128
      %5237 = vxpose.xlu0.c.b16.cont [5/8] 0, 128
      %5238 = vxpose.xlu0.c.b16.cont [6/8] 0, 128
      %5239 = vxpose.xlu0.c.b16.cont [7/8] 0, 128
      %5240 = vxpose.xlu0.c.b16.end [8/8] 0, 128
      %v5241 = vpop.trf.xlu0
      %v5242 = vpop.trf.xlu0
      %v5243 = vpop.trf.xlu0
      %v5244 = vpop.trf.xlu0
      %v5245 = vpop.trf.xlu0
      %v5246 = vpop.trf.xlu0
      %v5247 = vpop.trf.xlu0
      %v5248 = vpop.trf.xlu0
      %5249 = vxpose.xlu0.c.b16.start [1/8] %v4543, 128
      %5250 = vxpose.xlu0.c.b16.cont [2/8] 0, 128
      %5251 = vxpose.xlu0.c.b16.cont [3/8] 0, 128
      %5252 = vxpose.xlu0.c.b16.cont [4/8] 0, 128
      %5253 = vxpose.xlu0.c.b16.cont [5/8] 0, 128
      %5254 = vxpose.xlu0.c.b16.cont [6/8] 0, 128
      %5255 = vxpose.xlu0.c.b16.cont [7/8] 0, 128
      %5256 = vxpose.xlu0.c.b16.end [8/8] 0, 128
      %v5257 = vpop.trf.xlu0
      %v5258 = vpop.trf.xlu0
      %v5259 = vpop.trf.xlu0
      %v5260 = vpop.trf.xlu0
      %v5261 = vpop.trf.xlu0
      %v5262 = vpop.trf.xlu0
      %v5263 = vpop.trf.xlu0
      %v5264 = vpop.trf.xlu0
      %5265 = vxpose.xlu0.c.b16.start [1/8] %v4472, 128
      %5266 = vxpose.xlu0.c.b16.cont [2/8] 0, 128
      %5267 = vxpose.xlu0.c.b16.cont [3/8] 0, 128
      %5268 = vxpose.xlu0.c.b16.cont [4/8] 0, 128
      %5269 = vxpose.xlu0.c.b16.cont [5/8] 0, 128
      %5270 = vxpose.xlu0.c.b16.cont [6/8] 0, 128
      %5271 = vxpose.xlu0.c.b16.cont [7/8] 0, 128
      %5272 = vxpose.xlu0.c.b16.end [8/8] 0, 128
      %v5273 = vpop.trf.xlu0
      %v5274 = vpop.trf.xlu0
      %v5275 = vpop.trf.xlu0
      %v5276 = vpop.trf.xlu0
      %v5277 = vpop.trf.xlu0
      %v5278 = vpop.trf.xlu0
      %v5279 = vpop.trf.xlu0
      %v5280 = vpop.trf.xlu0
      %5281 = vxpose.xlu0.c.b16.start [1/8] %v4540, 128
      %5282 = vxpose.xlu0.c.b16.cont [2/8] 0, 128
      %5283 = vxpose.xlu0.c.b16.cont [3/8] 0, 128
      %5284 = vxpose.xlu0.c.b16.cont [4/8] 0, 128
      %5285 = vxpose.xlu0.c.b16.cont [5/8] 0, 128
      %5286 = vxpose.xlu0.c.b16.cont [6/8] 0, 128
      %5287 = vxpose.xlu0.c.b16.cont [7/8] 0, 128
      %5288 = vxpose.xlu0.c.b16.end [8/8] 0, 128
      %v5289 = vpop.trf.xlu0
      %v5290 = vpop.trf.xlu0
      %v5291 = vpop.trf.xlu0
      %v5292 = vpop.trf.xlu0
      %v5293 = vpop.trf.xlu0
      %v5294 = vpop.trf.xlu0
      %v5295 = vpop.trf.xlu0
      %v5296 = vpop.trf.xlu0
      %5297 = vxpose.xlu0.c.b16.start [1/8] %v4476, 128
      %5298 = vxpose.xlu0.c.b16.cont [2/8] 0, 128
      %5299 = vxpose.xlu0.c.b16.cont [3/8] 0, 128
      %5300 = vxpose.xlu0.c.b16.cont [4/8] 0, 128
      %5301 = vxpose.xlu0.c.b16.cont [5/8] 0, 128
      %5302 = vxpose.xlu0.c.b16.cont [6/8] 0, 128
      %5303 = vxpose.xlu0.c.b16.cont [7/8] 0, 128
      %5304 = vxpose.xlu0.c.b16.end [8/8] 0, 128
      %v5305 = vpop.trf.xlu0
      %v5306 = vpop.trf.xlu0
      %v5307 = vpop.trf.xlu0
      %v5308 = vpop.trf.xlu0
      %v5309 = vpop.trf.xlu0
      %v5310 = vpop.trf.xlu0
      %v5311 = vpop.trf.xlu0
      %v5312 = vpop.trf.xlu0
      %5313 = vxpose.xlu0.c.b16.start [1/8] %v4544, 128
      %5314 = vxpose.xlu0.c.b16.cont [2/8] 0, 128
      %5315 = vxpose.xlu0.c.b16.cont [3/8] 0, 128
      %5316 = vxpose.xlu0.c.b16.cont [4/8] 0, 128
      %5317 = vxpose.xlu0.c.b16.cont [5/8] 0, 128
      %5318 = vxpose.xlu0.c.b16.cont [6/8] 0, 128
      %5319 = vxpose.xlu0.c.b16.cont [7/8] 0, 128
      %5320 = vxpose.xlu0.c.b16.end [8/8] 0, 128
      %v5321 = vpop.trf.xlu0
      %v5322 = vpop.trf.xlu0
      %v5323 = vpop.trf.xlu0
      %v5324 = vpop.trf.xlu0
      %v5325 = vpop.trf.xlu0
      %v5326 = vpop.trf.xlu0
      %v5327 = vpop.trf.xlu0
      %v5328 = vpop.trf.xlu0
      %5329 = vxpose.xlu0.c.b16.start [1/8] %v4585, 128
      %5330 = vxpose.xlu0.c.b16.cont [2/8] 0, 128
      %5331 = vxpose.xlu0.c.b16.cont [3/8] 0, 128
      %5332 = vxpose.xlu0.c.b16.cont [4/8] 0, 128
      %5333 = vxpose.xlu0.c.b16.cont [5/8] 0, 128
      %5334 = vxpose.xlu0.c.b16.cont [6/8] 0, 128
      %5335 = vxpose.xlu0.c.b16.cont [7/8] 0, 128
      %5336 = vxpose.xlu0.c.b16.end [8/8] 0, 128
      %v5337 = vpop.trf.xlu0
      %v5338 = vpop.trf.xlu0
      %v5339 = vpop.trf.xlu0
      %v5340 = vpop.trf.xlu0
      %v5341 = vpop.trf.xlu0
      %v5342 = vpop.trf.xlu0
      %v5343 = vpop.trf.xlu0
      %v5344 = vpop.trf.xlu0
      %5345 = vxpose.xlu0.c.b16.start [1/8] %v4653, 128
      %5346 = vxpose.xlu0.c.b16.cont [2/8] 0, 128
      %5347 = vxpose.xlu0.c.b16.cont [3/8] 0, 128
      %5348 = vxpose.xlu0.c.b16.cont [4/8] 0, 128
      %5349 = vxpose.xlu0.c.b16.cont [5/8] 0, 128
      %5350 = vxpose.xlu0.c.b16.cont [6/8] 0, 128
      %5351 = vxpose.xlu0.c.b16.cont [7/8] 0, 128
      %5352 = vxpose.xlu0.c.b16.end [8/8] 0, 128
      %v5353 = vpop.trf.xlu0
      %v5354 = vpop.trf.xlu0
      %v5355 = vpop.trf.xlu0
      %v5356 = vpop.trf.xlu0
      %v5357 = vpop.trf.xlu0
      %v5358 = vpop.trf.xlu0
      %v5359 = vpop.trf.xlu0
      %v5360 = vpop.trf.xlu0
      %5361 = vxpose.xlu0.c.b16.start [1/8] %v4609, 128
      %5362 = vxpose.xlu0.c.b16.cont [2/8] 0, 128
      %5363 = vxpose.xlu0.c.b16.cont [3/8] 0, 128
      %5364 = vxpose.xlu0.c.b16.cont [4/8] 0, 128
      %5365 = vxpose.xlu0.c.b16.cont [5/8] 0, 128
      %5366 = vxpose.xlu0.c.b16.cont [6/8] 0, 128
      %5367 = vxpose.xlu0.c.b16.cont [7/8] 0, 128
      %5368 = vxpose.xlu0.c.b16.end [8/8] 0, 128
      %v5369 = vpop.trf.xlu0
      %v5370 = vpop.trf.xlu0
      %v5371 = vpop.trf.xlu0
      %v5372 = vpop.trf.xlu0
      %v5373 = vpop.trf.xlu0
      %v5374 = vpop.trf.xlu0
      %v5375 = vpop.trf.xlu0
      %v5376 = vpop.trf.xlu0
      %5377 = vxpose.xlu0.c.b16.start [1/8] %v4677, 128
      %5378 = vxpose.xlu0.c.b16.cont [2/8] 0, 128
      %5379 = vxpose.xlu0.c.b16.cont [3/8] 0, 128
      %5380 = vxpose.xlu0.c.b16.cont [4/8] 0, 128
      %5381 = vxpose.xlu0.c.b16.cont [5/8] 0, 128
      %5382 = vxpose.xlu0.c.b16.cont [6/8] 0, 128
      %5383 = vxpose.xlu0.c.b16.cont [7/8] 0, 128
      %5384 = vxpose.xlu0.c.b16.end [8/8] 0, 128
      %v5385 = vpop.trf.xlu0
      %v5386 = vpop.trf.xlu0
      %v5387 = vpop.trf.xlu0
      %v5388 = vpop.trf.xlu0
      %v5389 = vpop.trf.xlu0
      %v5390 = vpop.trf.xlu0
      %v5391 = vpop.trf.xlu0
      %v5392 = vpop.trf.xlu0
      %5393 = vxpose.xlu0.c.b16.start [1/8] %v4592, 128
      %5394 = vxpose.xlu0.c.b16.cont [2/8] 0, 128
      %5395 = vxpose.xlu0.c.b16.cont [3/8] 0, 128
      %5396 = vxpose.xlu0.c.b16.cont [4/8] 0, 128
      %5397 = vxpose.xlu0.c.b16.cont [5/8] 0, 128
      %5398 = vxpose.xlu0.c.b16.cont [6/8] 0, 128
      %5399 = vxpose.xlu0.c.b16.cont [7/8] 0, 128
      %5400 = vxpose.xlu0.c.b16.end [8/8] 0, 128
      %v5401 = vpop.trf.xlu0
      %v5402 = vpop.trf.xlu0
      %v5403 = vpop.trf.xlu0
      %v5404 = vpop.trf.xlu0
      %v5405 = vpop.trf.xlu0
      %v5406 = vpop.trf.xlu0
      %v5407 = vpop.trf.xlu0
      %v5408 = vpop.trf.xlu0
      %5409 = vxpose.xlu0.c.b16.start [1/8] %v4660, 128
      %5410 = vxpose.xlu0.c.b16.cont [2/8] 0, 128
      %5411 = vxpose.xlu0.c.b16.cont [3/8] 0, 128
      %5412 = vxpose.xlu0.c.b16.cont [4/8] 0, 128
      %5413 = vxpose.xlu0.c.b16.cont [5/8] 0, 128
      %5414 = vxpose.xlu0.c.b16.cont [6/8] 0, 128
      %5415 = vxpose.xlu0.c.b16.cont [7/8] 0, 128
      %5416 = vxpose.xlu0.c.b16.end [8/8] 0, 128
      %v5417 = vpop.trf.xlu0
      %v5418 = vpop.trf.xlu0
      %v5419 = vpop.trf.xlu0
      %v5420 = vpop.trf.xlu0
      %v5421 = vpop.trf.xlu0
      %v5422 = vpop.trf.xlu0
      %v5423 = vpop.trf.xlu0
      %v5424 = vpop.trf.xlu0
      %5425 = vxpose.xlu0.c.b16.start [1/8] %v4610, 128
      %5426 = vxpose.xlu0.c.b16.cont [2/8] 0, 128
      %5427 = vxpose.xlu0.c.b16.cont [3/8] 0, 128
      %5428 = vxpose.xlu0.c.b16.cont [4/8] 0, 128
      %5429 = vxpose.xlu0.c.b16.cont [5/8] 0, 128
      %5430 = vxpose.xlu0.c.b16.cont [6/8] 0, 128
      %5431 = vxpose.xlu0.c.b16.cont [7/8] 0, 128
      %5432 = vxpose.xlu0.c.b16.end [8/8] 0, 128
      %v5433 = vpop.trf.xlu0
      %v5434 = vpop.trf.xlu0
      %v5435 = vpop.trf.xlu0
      %v5436 = vpop.trf.xlu0
      %v5437 = vpop.trf.xlu0
      %v5438 = vpop.trf.xlu0
      %v5439 = vpop.trf.xlu0
      %v5440 = vpop.trf.xlu0
      %5441 = vxpose.xlu0.c.b16.start [1/8] %v4678, 128
      %5442 = vxpose.xlu0.c.b16.cont [2/8] 0, 128
      %5443 = vxpose.xlu0.c.b16.cont [3/8] 0, 128
      %5444 = vxpose.xlu0.c.b16.cont [4/8] 0, 128
      %5445 = vxpose.xlu0.c.b16.cont [5/8] 0, 128
      %5446 = vxpose.xlu0.c.b16.cont [6/8] 0, 128
      %5447 = vxpose.xlu0.c.b16.cont [7/8] 0, 128
      %5448 = vxpose.xlu0.c.b16.end [8/8] 0, 128
      %v5449 = vpop.trf.xlu0
      %v5450 = vpop.trf.xlu0
      %v5451 = vpop.trf.xlu0
      %v5452 = vpop.trf.xlu0
      %v5453 = vpop.trf.xlu0
      %v5454 = vpop.trf.xlu0
      %v5455 = vpop.trf.xlu0
      %v5456 = vpop.trf.xlu0
      %5457 = vxpose.xlu0.c.b16.start [1/8] %v4601, 128
      %5458 = vxpose.xlu0.c.b16.cont [2/8] 0, 128
      %5459 = vxpose.xlu0.c.b16.cont [3/8] 0, 128
      %5460 = vxpose.xlu0.c.b16.cont [4/8] 0, 128
      %5461 = vxpose.xlu0.c.b16.cont [5/8] 0, 128
      %5462 = vxpose.xlu0.c.b16.cont [6/8] 0, 128
      %5463 = vxpose.xlu0.c.b16.cont [7/8] 0, 128
      %5464 = vxpose.xlu0.c.b16.end [8/8] 0, 128
      %v5465 = vpop.trf.xlu0
      %v5466 = vpop.trf.xlu0
      %v5467 = vpop.trf.xlu0
      %v5468 = vpop.trf.xlu0
      %v5469 = vpop.trf.xlu0
      %v5470 = vpop.trf.xlu0
      %v5471 = vpop.trf.xlu0
      %v5472 = vpop.trf.xlu0
      %5473 = vxpose.xlu0.c.b16.start [1/8] %v4669, 128
      %5474 = vxpose.xlu0.c.b16.cont [2/8] 0, 128
      %5475 = vxpose.xlu0.c.b16.cont [3/8] 0, 128
      %5476 = vxpose.xlu0.c.b16.cont [4/8] 0, 128
      %5477 = vxpose.xlu0.c.b16.cont [5/8] 0, 128
      %5478 = vxpose.xlu0.c.b16.cont [6/8] 0, 128
      %5479 = vxpose.xlu0.c.b16.cont [7/8] 0, 128
      %5480 = vxpose.xlu0.c.b16.end [8/8] 0, 128
      %v5481 = vpop.trf.xlu0
      %v5482 = vpop.trf.xlu0
      %v5483 = vpop.trf.xlu0
      %v5484 = vpop.trf.xlu0
      %v5485 = vpop.trf.xlu0
      %v5486 = vpop.trf.xlu0
      %v5487 = vpop.trf.xlu0
      %v5488 = vpop.trf.xlu0
      %5489 = vxpose.xlu0.c.b16.start [1/8] %v4611, 128
      %5490 = vxpose.xlu0.c.b16.cont [2/8] 0, 128
      %5491 = vxpose.xlu0.c.b16.cont [3/8] 0, 128
      %5492 = vxpose.xlu0.c.b16.cont [4/8] 0, 128
      %5493 = vxpose.xlu0.c.b16.cont [5/8] 0, 128
      %5494 = vxpose.xlu0.c.b16.cont [6/8] 0, 128
      %5495 = vxpose.xlu0.c.b16.cont [7/8] 0, 128
      %5496 = vxpose.xlu0.c.b16.end [8/8] 0, 128
      %v5497 = vpop.trf.xlu0
      %v5498 = vpop.trf.xlu0
      %v5499 = vpop.trf.xlu0
      %v5500 = vpop.trf.xlu0
      %v5501 = vpop.trf.xlu0
      %v5502 = vpop.trf.xlu0
      %v5503 = vpop.trf.xlu0
      %v5504 = vpop.trf.xlu0
      %5505 = vxpose.xlu0.c.b16.start [1/8] %v4679, 128
      %5506 = vxpose.xlu0.c.b16.cont [2/8] 0, 128
      %5507 = vxpose.xlu0.c.b16.cont [3/8] 0, 128
      %5508 = vxpose.xlu0.c.b16.cont [4/8] 0, 128
      %5509 = vxpose.xlu0.c.b16.cont [5/8] 0, 128
      %5510 = vxpose.xlu0.c.b16.cont [6/8] 0, 128
      %5511 = vxpose.xlu0.c.b16.cont [7/8] 0, 128
      %5512 = vxpose.xlu0.c.b16.end [8/8] 0, 128
      %v5513 = vpop.trf.xlu0
      %v5514 = vpop.trf.xlu0
      %v5515 = vpop.trf.xlu0
      %v5516 = vpop.trf.xlu0
      %v5517 = vpop.trf.xlu0
      %v5518 = vpop.trf.xlu0
      %v5519 = vpop.trf.xlu0
      %v5520 = vpop.trf.xlu0
      %5521 = vxpose.xlu0.c.b16.start [1/8] %v4608, 128
      %5522 = vxpose.xlu0.c.b16.cont [2/8] 0, 128
      %5523 = vxpose.xlu0.c.b16.cont [3/8] 0, 128
      %5524 = vxpose.xlu0.c.b16.cont [4/8] 0, 128
      %5525 = vxpose.xlu0.c.b16.cont [5/8] 0, 128
      %5526 = vxpose.xlu0.c.b16.cont [6/8] 0, 128
      %5527 = vxpose.xlu0.c.b16.cont [7/8] 0, 128
      %5528 = vxpose.xlu0.c.b16.end [8/8] 0, 128
      %v5529 = vpop.trf.xlu0
      %v5530 = vpop.trf.xlu0
      %v5531 = vpop.trf.xlu0
      %v5532 = vpop.trf.xlu0
      %v5533 = vpop.trf.xlu0
      %v5534 = vpop.trf.xlu0
      %v5535 = vpop.trf.xlu0
      %v5536 = vpop.trf.xlu0
      %5537 = vxpose.xlu0.c.b16.start [1/8] %v4676, 128
      %5538 = vxpose.xlu0.c.b16.cont [2/8] 0, 128
      %5539 = vxpose.xlu0.c.b16.cont [3/8] 0, 128
      %5540 = vxpose.xlu0.c.b16.cont [4/8] 0, 128
      %5541 = vxpose.xlu0.c.b16.cont [5/8] 0, 128
      %5542 = vxpose.xlu0.c.b16.cont [6/8] 0, 128
      %5543 = vxpose.xlu0.c.b16.cont [7/8] 0, 128
      %5544 = vxpose.xlu0.c.b16.end [8/8] 0, 128
      %v5545 = vpop.trf.xlu0
      %v5546 = vpop.trf.xlu0
      %v5547 = vpop.trf.xlu0
      %v5548 = vpop.trf.xlu0
      %v5549 = vpop.trf.xlu0
      %v5550 = vpop.trf.xlu0
      %v5551 = vpop.trf.xlu0
      %v5552 = vpop.trf.xlu0
      %5553 = vxpose.xlu0.c.b16.start [1/8] %v4612, 128
      %5554 = vxpose.xlu0.c.b16.cont [2/8] 0, 128
      %5555 = vxpose.xlu0.c.b16.cont [3/8] 0, 128
      %5556 = vxpose.xlu0.c.b16.cont [4/8] 0, 128
      %5557 = vxpose.xlu0.c.b16.cont [5/8] 0, 128
      %5558 = vxpose.xlu0.c.b16.cont [6/8] 0, 128
      %5559 = vxpose.xlu0.c.b16.cont [7/8] 0, 128
      %5560 = vxpose.xlu0.c.b16.end [8/8] 0, 128
      %v5561 = vpop.trf.xlu0
      %v5562 = vpop.trf.xlu0
      %v5563 = vpop.trf.xlu0
      %v5564 = vpop.trf.xlu0
      %v5565 = vpop.trf.xlu0
      %v5566 = vpop.trf.xlu0
      %v5567 = vpop.trf.xlu0
      %v5568 = vpop.trf.xlu0
      %5569 = vxpose.xlu0.c.b16.start [1/8] %v4680, 128
      %5570 = vxpose.xlu0.c.b16.cont [2/8] 0, 128
      %5571 = vxpose.xlu0.c.b16.cont [3/8] 0, 128
      %5572 = vxpose.xlu0.c.b16.cont [4/8] 0, 128
      %5573 = vxpose.xlu0.c.b16.cont [5/8] 0, 128
      %5574 = vxpose.xlu0.c.b16.cont [6/8] 0, 128
      %5575 = vxpose.xlu0.c.b16.cont [7/8] 0, 128
      %5576 = vxpose.xlu0.c.b16.end [8/8] 0, 128
      %v5577 = vpop.trf.xlu0
      %v5578 = vpop.trf.xlu0
      %v5579 = vpop.trf.xlu0
      %v5580 = vpop.trf.xlu0
      %v5581 = vpop.trf.xlu0
      %v5582 = vpop.trf.xlu0
      %v5583 = vpop.trf.xlu0
      %v5584 = vpop.trf.xlu0
      %5585 = vxpose.xlu0.c.b16.start [1/8] %v4721, 128
      %5586 = vxpose.xlu0.c.b16.cont [2/8] 0, 128
      %5587 = vxpose.xlu0.c.b16.cont [3/8] 0, 128
      %5588 = vxpose.xlu0.c.b16.cont [4/8] 0, 128
      %5589 = vxpose.xlu0.c.b16.cont [5/8] 0, 128
      %5590 = vxpose.xlu0.c.b16.cont [6/8] 0, 128
      %5591 = vxpose.xlu0.c.b16.cont [7/8] 0, 128
      %5592 = vxpose.xlu0.c.b16.end [8/8] 0, 128
      %v5593 = vpop.trf.xlu0
      %v5594 = vpop.trf.xlu0
      %v5595 = vpop.trf.xlu0
      %v5596 = vpop.trf.xlu0
      %v5597 = vpop.trf.xlu0
      %v5598 = vpop.trf.xlu0
      %v5599 = vpop.trf.xlu0
      %v5600 = vpop.trf.xlu0
      %5601 = vxpose.xlu0.c.b16.start [1/8] %v4789, 128
      %5602 = vxpose.xlu0.c.b16.cont [2/8] 0, 128
      %5603 = vxpose.xlu0.c.b16.cont [3/8] 0, 128
      %5604 = vxpose.xlu0.c.b16.cont [4/8] 0, 128
      %5605 = vxpose.xlu0.c.b16.cont [5/8] 0, 128
      %5606 = vxpose.xlu0.c.b16.cont [6/8] 0, 128
      %5607 = vxpose.xlu0.c.b16.cont [7/8] 0, 128
      %5608 = vxpose.xlu0.c.b16.end [8/8] 0, 128
      %v5609 = vpop.trf.xlu0
      %v5610 = vpop.trf.xlu0
      %v5611 = vpop.trf.xlu0
      %v5612 = vpop.trf.xlu0
      %v5613 = vpop.trf.xlu0
      %v5614 = vpop.trf.xlu0
      %v5615 = vpop.trf.xlu0
      %v5616 = vpop.trf.xlu0
      %5617 = vxpose.xlu0.c.b16.start [1/8] %v4745, 128
      %5618 = vxpose.xlu0.c.b16.cont [2/8] 0, 128
      %5619 = vxpose.xlu0.c.b16.cont [3/8] 0, 128
      %5620 = vxpose.xlu0.c.b16.cont [4/8] 0, 128
      %5621 = vxpose.xlu0.c.b16.cont [5/8] 0, 128
      %5622 = vxpose.xlu0.c.b16.cont [6/8] 0, 128
      %5623 = vxpose.xlu0.c.b16.cont [7/8] 0, 128
      %5624 = vxpose.xlu0.c.b16.end [8/8] 0, 128
      %v5625 = vpop.trf.xlu0
      %v5626 = vpop.trf.xlu0
      %v5627 = vpop.trf.xlu0
      %v5628 = vpop.trf.xlu0
      %v5629 = vpop.trf.xlu0
      %v5630 = vpop.trf.xlu0
      %v5631 = vpop.trf.xlu0
      %v5632 = vpop.trf.xlu0
      %5633 = vxpose.xlu0.c.b16.start [1/8] %v4813, 128
      %5634 = vxpose.xlu0.c.b16.cont [2/8] 0, 128
      %5635 = vxpose.xlu0.c.b16.cont [3/8] 0, 128
      %5636 = vxpose.xlu0.c.b16.cont [4/8] 0, 128
      %5637 = vxpose.xlu0.c.b16.cont [5/8] 0, 128
      %5638 = vxpose.xlu0.c.b16.cont [6/8] 0, 128
      %5639 = vxpose.xlu0.c.b16.cont [7/8] 0, 128
      %5640 = vxpose.xlu0.c.b16.end [8/8] 0, 128
      %v5641 = vpop.trf.xlu0
      %v5642 = vpop.trf.xlu0
      %v5643 = vpop.trf.xlu0
      %v5644 = vpop.trf.xlu0
      %v5645 = vpop.trf.xlu0
      %v5646 = vpop.trf.xlu0
      %v5647 = vpop.trf.xlu0
      %v5648 = vpop.trf.xlu0
      %5649 = vxpose.xlu0.c.b16.start [1/8] %v4728, 128
      %5650 = vxpose.xlu0.c.b16.cont [2/8] 0, 128
      %5651 = vxpose.xlu0.c.b16.cont [3/8] 0, 128
      %5652 = vxpose.xlu0.c.b16.cont [4/8] 0, 128
      %5653 = vxpose.xlu0.c.b16.cont [5/8] 0, 128
      %5654 = vxpose.xlu0.c.b16.cont [6/8] 0, 128
      %5655 = vxpose.xlu0.c.b16.cont [7/8] 0, 128
      %5656 = vxpose.xlu0.c.b16.end [8/8] 0, 128
      %v5657 = vpop.trf.xlu0
      %v5658 = vpop.trf.xlu0
      %v5659 = vpop.trf.xlu0
      %v5660 = vpop.trf.xlu0
      %v5661 = vpop.trf.xlu0
      %v5662 = vpop.trf.xlu0
      %v5663 = vpop.trf.xlu0
      %v5664 = vpop.trf.xlu0
      %5665 = vxpose.xlu0.c.b16.start [1/8] %v4796, 128
      %5666 = vxpose.xlu0.c.b16.cont [2/8] 0, 128
      %5667 = vxpose.xlu0.c.b16.cont [3/8] 0, 128
      %5668 = vxpose.xlu0.c.b16.cont [4/8] 0, 128
      %5669 = vxpose.xlu0.c.b16.cont [5/8] 0, 128
      %5670 = vxpose.xlu0.c.b16.cont [6/8] 0, 128
      %5671 = vxpose.xlu0.c.b16.cont [7/8] 0, 128
      %5672 = vxpose.xlu0.c.b16.end [8/8] 0, 128
      %v5673 = vpop.trf.xlu0
      %v5674 = vpop.trf.xlu0
      %v5675 = vpop.trf.xlu0
      %v5676 = vpop.trf.xlu0
      %v5677 = vpop.trf.xlu0
      %v5678 = vpop.trf.xlu0
      %v5679 = vpop.trf.xlu0
      %v5680 = vpop.trf.xlu0
      %5681 = vxpose.xlu0.c.b16.start [1/8] %v4746, 128
      %5682 = vxpose.xlu0.c.b16.cont [2/8] 0, 128
      %5683 = vxpose.xlu0.c.b16.cont [3/8] 0, 128
      %5684 = vxpose.xlu0.c.b16.cont [4/8] 0, 128
      %5685 = vxpose.xlu0.c.b16.cont [5/8] 0, 128
      %5686 = vxpose.xlu0.c.b16.cont [6/8] 0, 128
      %5687 = vxpose.xlu0.c.b16.cont [7/8] 0, 128
      %5688 = vxpose.xlu0.c.b16.end [8/8] 0, 128
      %v5689 = vpop.trf.xlu0
      %v5690 = vpop.trf.xlu0
      %v5691 = vpop.trf.xlu0
      %v5692 = vpop.trf.xlu0
      %v5693 = vpop.trf.xlu0
      %v5694 = vpop.trf.xlu0
      %v5695 = vpop.trf.xlu0
      %v5696 = vpop.trf.xlu0
      %5697 = vxpose.xlu0.c.b16.start [1/8] %v4814, 128
      %5698 = vxpose.xlu0.c.b16.cont [2/8] 0, 128
      %5699 = vxpose.xlu0.c.b16.cont [3/8] 0, 128
      %5700 = vxpose.xlu0.c.b16.cont [4/8] 0, 128
      %5701 = vxpose.xlu0.c.b16.cont [5/8] 0, 128
      %5702 = vxpose.xlu0.c.b16.cont [6/8] 0, 128
      %5703 = vxpose.xlu0.c.b16.cont [7/8] 0, 128
      %5704 = vxpose.xlu0.c.b16.end [8/8] 0, 128
      %v5705 = vpop.trf.xlu0
      %v5706 = vpop.trf.xlu0
      %v5707 = vpop.trf.xlu0
      %v5708 = vpop.trf.xlu0
      %v5709 = vpop.trf.xlu0
      %v5710 = vpop.trf.xlu0
      %v5711 = vpop.trf.xlu0
      %v5712 = vpop.trf.xlu0
      %5713 = vxpose.xlu0.c.b16.start [1/8] %v4737, 128
      %5714 = vxpose.xlu0.c.b16.cont [2/8] 0, 128
      %5715 = vxpose.xlu0.c.b16.cont [3/8] 0, 128
      %5716 = vxpose.xlu0.c.b16.cont [4/8] 0, 128
      %5717 = vxpose.xlu0.c.b16.cont [5/8] 0, 128
      %5718 = vxpose.xlu0.c.b16.cont [6/8] 0, 128
      %5719 = vxpose.xlu0.c.b16.cont [7/8] 0, 128
      %5720 = vxpose.xlu0.c.b16.end [8/8] 0, 128
      %v5721 = vpop.trf.xlu0
      %v5722 = vpop.trf.xlu0
      %v5723 = vpop.trf.xlu0
      %v5724 = vpop.trf.xlu0
      %v5725 = vpop.trf.xlu0
      %v5726 = vpop.trf.xlu0
      %v5727 = vpop.trf.xlu0
      %v5728 = vpop.trf.xlu0
      %5729 = vxpose.xlu0.c.b16.start [1/8] %v4805, 128
      %5730 = vxpose.xlu0.c.b16.cont [2/8] 0, 128
      %5731 = vxpose.xlu0.c.b16.cont [3/8] 0, 128
      %5732 = vxpose.xlu0.c.b16.cont [4/8] 0, 128
      %5733 = vxpose.xlu0.c.b16.cont [5/8] 0, 128
      %5734 = vxpose.xlu0.c.b16.cont [6/8] 0, 128
      %5735 = vxpose.xlu0.c.b16.cont [7/8] 0, 128
      %5736 = vxpose.xlu0.c.b16.end [8/8] 0, 128
      %v5737 = vpop.trf.xlu0
      %v5738 = vpop.trf.xlu0
      %v5739 = vpop.trf.xlu0
      %v5740 = vpop.trf.xlu0
      %v5741 = vpop.trf.xlu0
      %v5742 = vpop.trf.xlu0
      %v5743 = vpop.trf.xlu0
      %v5744 = vpop.trf.xlu0
      %5745 = vxpose.xlu0.c.b16.start [1/8] %v4747, 128
      %5746 = vxpose.xlu0.c.b16.cont [2/8] 0, 128
      %5747 = vxpose.xlu0.c.b16.cont [3/8] 0, 128
      %5748 = vxpose.xlu0.c.b16.cont [4/8] 0, 128
      %5749 = vxpose.xlu0.c.b16.cont [5/8] 0, 128
      %5750 = vxpose.xlu0.c.b16.cont [6/8] 0, 128
      %5751 = vxpose.xlu0.c.b16.cont [7/8] 0, 128
      %5752 = vxpose.xlu0.c.b16.end [8/8] 0, 128
      %v5753 = vpop.trf.xlu0
      %v5754 = vpop.trf.xlu0
      %v5755 = vpop.trf.xlu0
      %v5756 = vpop.trf.xlu0
      %v5757 = vpop.trf.xlu0
      %v5758 = vpop.trf.xlu0
      %v5759 = vpop.trf.xlu0
      %v5760 = vpop.trf.xlu0
      %5761 = vxpose.xlu0.c.b16.start [1/8] %v4815, 128
      %5762 = vxpose.xlu0.c.b16.cont [2/8] 0, 128
      %5763 = vxpose.xlu0.c.b16.cont [3/8] 0, 128
      %5764 = vxpose.xlu0.c.b16.cont [4/8] 0, 128
      %5765 = vxpose.xlu0.c.b16.cont [5/8] 0, 128
      %5766 = vxpose.xlu0.c.b16.cont [6/8] 0, 128
      %5767 = vxpose.xlu0.c.b16.cont [7/8] 0, 128
      %5768 = vxpose.xlu0.c.b16.end [8/8] 0, 128
      %v5769 = vpop.trf.xlu0
      %v5770 = vpop.trf.xlu0
      %v5771 = vpop.trf.xlu0
      %v5772 = vpop.trf.xlu0
      %v5773 = vpop.trf.xlu0
      %v5774 = vpop.trf.xlu0
      %v5775 = vpop.trf.xlu0
      %v5776 = vpop.trf.xlu0
      %5777 = vxpose.xlu0.c.b16.start [1/8] %v4744, 128
      %5778 = vxpose.xlu0.c.b16.cont [2/8] 0, 128
      %5779 = vxpose.xlu0.c.b16.cont [3/8] 0, 128
      %5780 = vxpose.xlu0.c.b16.cont [4/8] 0, 128
      %5781 = vxpose.xlu0.c.b16.cont [5/8] 0, 128
      %5782 = vxpose.xlu0.c.b16.cont [6/8] 0, 128
      %5783 = vxpose.xlu0.c.b16.cont [7/8] 0, 128
      %5784 = vxpose.xlu0.c.b16.end [8/8] 0, 128
      %v5785 = vpop.trf.xlu0
      %v5786 = vpop.trf.xlu0
      %v5787 = vpop.trf.xlu0
      %v5788 = vpop.trf.xlu0
      %v5789 = vpop.trf.xlu0
      %v5790 = vpop.trf.xlu0
      %v5791 = vpop.trf.xlu0
      %v5792 = vpop.trf.xlu0
      %5793 = vxpose.xlu0.c.b16.start [1/8] %v4812, 128
      %5794 = vxpose.xlu0.c.b16.cont [2/8] 0, 128
      %5795 = vxpose.xlu0.c.b16.cont [3/8] 0, 128
      %5796 = vxpose.xlu0.c.b16.cont [4/8] 0, 128
      %5797 = vxpose.xlu0.c.b16.cont [5/8] 0, 128
      %5798 = vxpose.xlu0.c.b16.cont [6/8] 0, 128
      %5799 = vxpose.xlu0.c.b16.cont [7/8] 0, 128
      %5800 = vxpose.xlu0.c.b16.end [8/8] 0, 128
      %v5801 = vpop.trf.xlu0
      %v5802 = vpop.trf.xlu0
      %v5803 = vpop.trf.xlu0
      %v5804 = vpop.trf.xlu0
      %v5805 = vpop.trf.xlu0
      %v5806 = vpop.trf.xlu0
      %v5807 = vpop.trf.xlu0
      %v5808 = vpop.trf.xlu0
      %5809 = vxpose.xlu0.c.b16.start [1/8] %v4748, 128
      %5810 = vxpose.xlu0.c.b16.cont [2/8] 0, 128
      %5811 = vxpose.xlu0.c.b16.cont [3/8] 0, 128
      %5812 = vxpose.xlu0.c.b16.cont [4/8] 0, 128
      %5813 = vxpose.xlu0.c.b16.cont [5/8] 0, 128
      %5814 = vxpose.xlu0.c.b16.cont [6/8] 0, 128
      %5815 = vxpose.xlu0.c.b16.cont [7/8] 0, 128
      %5816 = vxpose.xlu0.c.b16.end [8/8] 0, 128
      %v5817 = vpop.trf.xlu0
      %v5818 = vpop.trf.xlu0
      %v5819 = vpop.trf.xlu0
      %v5820 = vpop.trf.xlu0
      %v5821 = vpop.trf.xlu0
      %v5822 = vpop.trf.xlu0
      %v5823 = vpop.trf.xlu0
      %v5824 = vpop.trf.xlu0
      %5825 = vxpose.xlu0.c.b16.start [1/8] %v4816, 128
      %5826 = vxpose.xlu0.c.b16.cont [2/8] 0, 128
      %5827 = vxpose.xlu0.c.b16.cont [3/8] 0, 128
      %5828 = vxpose.xlu0.c.b16.cont [4/8] 0, 128
      %5829 = vxpose.xlu0.c.b16.cont [5/8] 0, 128
      %5830 = vxpose.xlu0.c.b16.cont [6/8] 0, 128
      %5831 = vxpose.xlu0.c.b16.cont [7/8] 0, 128
      %5832 = vxpose.xlu0.c.b16.end [8/8] 0, 128
      %v5833 = vpop.trf.xlu0
      %v5834 = vpop.trf.xlu0
      %v5835 = vpop.trf.xlu0
      %v5836 = vpop.trf.xlu0
      %v5837 = vpop.trf.xlu0
      %v5838 = vpop.trf.xlu0
      %v5839 = vpop.trf.xlu0
      %v5840 = vpop.trf.xlu0
      %v5841 = vcombine.low %v4825, %v4889
      %v5843 = vunpack.c.l.s4 1983009808
      %v5844 = vunpack.c.0.s8 %v5843
      %v5845 = vlaneseq
      %v5846 = vshrl.u32 %v5845, 7
      %v5847 = vsub.s32 %v5844, %v5846
      %v5848 = vrot.slane %v5841, %v5847
      %v5849 = vcombine.low %v4857, %v4921
      %v5851 = vunpack.c.l.s4 1983009808
      %v5852 = vunpack.c.0.s8 %v5851
      %v5853 = vlaneseq
      %v5854 = vshrl.u32 %v5853, 7
      %v5855 = vsub.s32 %v5852, %v5854
      %v5856 = vrot.slane %v5849, %v5855
      %v5857 = vcombine.low %v4953, %v5017
      %v5859 = vunpack.c.l.s4 1983009808
      %v5860 = vunpack.c.0.s8 %v5859
      %v5861 = vlaneseq
      %v5862 = vshrl.u32 %v5861, 7
      %v5863 = vsub.s32 %v5860, %v5862
      %v5864 = vrot.slane %v5857, %v5863
      %v5865 = vcombine.low %v4985, %v5049
      %v5867 = vunpack.c.l.s4 1983009808
      %v5868 = vunpack.c.0.s8 %v5867
      %v5869 = vlaneseq
      %v5870 = vshrl.u32 %v5869, 7
      %v5871 = vsub.s32 %v5868, %v5870
      %v5872 = vrot.slane %v5865, %v5871
      %v5873 = vcombine.low %v5848, %v5856
      %v5875 = vunpack.c.l.s4 1934713408
      %v5876 = vunpack.c.0.s8 %v5875
      %v5877 = vlaneseq
      %v5878 = vshrl.u32 %v5877, 7
      %v5879 = vsub.s32 %v5876, %v5878
      %v5880 = vrot.slane %v5873, %v5879
      %v5881 = vcombine.low %v5864, %v5872
      %v5883 = vunpack.c.l.s4 1934713408
      %v5884 = vunpack.c.0.s8 %v5883
      %v5885 = vlaneseq
      %v5886 = vshrl.u32 %v5885, 7
      %v5887 = vsub.s32 %v5884, %v5886
      %v5888 = vrot.slane %v5881, %v5887
      %v5889 = vcombine.low %v5880, %v5888
      %v5890 = vcombine.low %v4841, %v4905
      %v5892 = vunpack.c.l.s4 1983009808
      %v5893 = vunpack.c.0.s8 %v5892
      %v5894 = vlaneseq
      %v5895 = vshrl.u32 %v5894, 7
      %v5896 = vsub.s32 %v5893, %v5895
      %v5897 = vrot.slane %v5890, %v5896
      %v5898 = vcombine.low %v4873, %v4937
      %v5900 = vunpack.c.l.s4 1983009808
      %v5901 = vunpack.c.0.s8 %v5900
      %v5902 = vlaneseq
      %v5903 = vshrl.u32 %v5902, 7
      %v5904 = vsub.s32 %v5901, %v5903
      %v5905 = vrot.slane %v5898, %v5904
      %v5906 = vcombine.low %v4969, %v5033
      %v5908 = vunpack.c.l.s4 1983009808
      %v5909 = vunpack.c.0.s8 %v5908
      %v5910 = vlaneseq
      %v5911 = vshrl.u32 %v5910, 7
      %v5912 = vsub.s32 %v5909, %v5911
      %v5913 = vrot.slane %v5906, %v5912
      %v5914 = vcombine.low %v5001, %v5065
      %v5916 = vunpack.c.l.s4 1983009808
      %v5917 = vunpack.c.0.s8 %v5916
      %v5918 = vlaneseq
      %v5919 = vshrl.u32 %v5918, 7
      %v5920 = vsub.s32 %v5917, %v5919
      %v5921 = vrot.slane %v5914, %v5920
      %v5922 = vcombine.low %v5897, %v5905
      %v5924 = vunpack.c.l.s4 1934713408
      %v5925 = vunpack.c.0.s8 %v5924
      %v5926 = vlaneseq
      %v5927 = vshrl.u32 %v5926, 7
      %v5928 = vsub.s32 %v5925, %v5927
      %v5929 = vrot.slane %v5922, %v5928
      %v5930 = vcombine.low %v5913, %v5921
      %v5932 = vunpack.c.l.s4 1934713408
      %v5933 = vunpack.c.0.s8 %v5932
      %v5934 = vlaneseq
      %v5935 = vshrl.u32 %v5934, 7
      %v5936 = vsub.s32 %v5933, %v5935
      %v5937 = vrot.slane %v5930, %v5936
      %v5938 = vcombine.low %v5929, %v5937
      %v5939 = vcombine.low %v5081, %v5145
      %v5941 = vunpack.c.l.s4 1983009808
      %v5942 = vunpack.c.0.s8 %v5941
      %v5943 = vlaneseq
      %v5944 = vshrl.u32 %v5943, 7
      %v5945 = vsub.s32 %v5942, %v5944
      %v5946 = vrot.slane %v5939, %v5945
      %v5947 = vcombine.low %v5113, %v5177
      %v5949 = vunpack.c.l.s4 1983009808
      %v5950 = vunpack.c.0.s8 %v5949
      %v5951 = vlaneseq
      %v5952 = vshrl.u32 %v5951, 7
      %v5953 = vsub.s32 %v5950, %v5952
      %v5954 = vrot.slane %v5947, %v5953
      %v5955 = vcombine.low %v5209, %v5273
      %v5957 = vunpack.c.l.s4 1983009808
      %v5958 = vunpack.c.0.s8 %v5957
      %v5959 = vlaneseq
      %v5960 = vshrl.u32 %v5959, 7
      %v5961 = vsub.s32 %v5958, %v5960
      %v5962 = vrot.slane %v5955, %v5961
      %v5963 = vcombine.low %v5241, %v5305
      %v5965 = vunpack.c.l.s4 1983009808
      %v5966 = vunpack.c.0.s8 %v5965
      %v5967 = vlaneseq
      %v5968 = vshrl.u32 %v5967, 7
      %v5969 = vsub.s32 %v5966, %v5968
      %v5970 = vrot.slane %v5963, %v5969
      %v5971 = vcombine.low %v5946, %v5954
      %v5973 = vunpack.c.l.s4 1934713408
      %v5974 = vunpack.c.0.s8 %v5973
      %v5975 = vlaneseq
      %v5976 = vshrl.u32 %v5975, 7
      %v5977 = vsub.s32 %v5974, %v5976
      %v5978 = vrot.slane %v5971, %v5977
      %v5979 = vcombine.low %v5962, %v5970
      %v5981 = vunpack.c.l.s4 1934713408
      %v5982 = vunpack.c.0.s8 %v5981
      %v5983 = vlaneseq
      %v5984 = vshrl.u32 %v5983, 7
      %v5985 = vsub.s32 %v5982, %v5984
      %v5986 = vrot.slane %v5979, %v5985
      %v5987 = vcombine.low %v5978, %v5986
      %v5988 = vcombine.low %v5097, %v5161
      %v5990 = vunpack.c.l.s4 1983009808
      %v5991 = vunpack.c.0.s8 %v5990
      %v5992 = vlaneseq
      %v5993 = vshrl.u32 %v5992, 7
      %v5994 = vsub.s32 %v5991, %v5993
      %v5995 = vrot.slane %v5988, %v5994
      %v5996 = vcombine.low %v5129, %v5193
      %v5998 = vunpack.c.l.s4 1983009808
      %v5999 = vunpack.c.0.s8 %v5998
      %v6000 = vlaneseq
      %v6001 = vshrl.u32 %v6000, 7
      %v6002 = vsub.s32 %v5999, %v6001
      %v6003 = vrot.slane %v5996, %v6002
      %v6004 = vcombine.low %v5225, %v5289
      %v6006 = vunpack.c.l.s4 1983009808
      %v6007 = vunpack.c.0.s8 %v6006
      %v6008 = vlaneseq
      %v6009 = vshrl.u32 %v6008, 7
      %v6010 = vsub.s32 %v6007, %v6009
      %v6011 = vrot.slane %v6004, %v6010
      %v6012 = vcombine.low %v5257, %v5321
      %v6014 = vunpack.c.l.s4 1983009808
      %v6015 = vunpack.c.0.s8 %v6014
      %v6016 = vlaneseq
      %v6017 = vshrl.u32 %v6016, 7
      %v6018 = vsub.s32 %v6015, %v6017
      %v6019 = vrot.slane %v6012, %v6018
      %v6020 = vcombine.low %v5995, %v6003
      %v6022 = vunpack.c.l.s4 1934713408
      %v6023 = vunpack.c.0.s8 %v6022
      %v6024 = vlaneseq
      %v6025 = vshrl.u32 %v6024, 7
      %v6026 = vsub.s32 %v6023, %v6025
      %v6027 = vrot.slane %v6020, %v6026
      %v6028 = vcombine.low %v6011, %v6019
      %v6030 = vunpack.c.l.s4 1934713408
      %v6031 = vunpack.c.0.s8 %v6030
      %v6032 = vlaneseq
      %v6033 = vshrl.u32 %v6032, 7
      %v6034 = vsub.s32 %v6031, %v6033
      %v6035 = vrot.slane %v6028, %v6034
      %v6036 = vcombine.low %v6027, %v6035
      %v6037 = vcombine.low %v5337, %v5401
      %v6039 = vunpack.c.l.s4 1983009808
      %v6040 = vunpack.c.0.s8 %v6039
      %v6041 = vlaneseq
      %v6042 = vshrl.u32 %v6041, 7
      %v6043 = vsub.s32 %v6040, %v6042
      %v6044 = vrot.slane %v6037, %v6043
      %v6045 = vcombine.low %v5369, %v5433
      %v6047 = vunpack.c.l.s4 1983009808
      %v6048 = vunpack.c.0.s8 %v6047
      %v6049 = vlaneseq
      %v6050 = vshrl.u32 %v6049, 7
      %v6051 = vsub.s32 %v6048, %v6050
      %v6052 = vrot.slane %v6045, %v6051
      %v6053 = vcombine.low %v5465, %v5529
      %v6055 = vunpack.c.l.s4 1983009808
      %v6056 = vunpack.c.0.s8 %v6055
      %v6057 = vlaneseq
      %v6058 = vshrl.u32 %v6057, 7
      %v6059 = vsub.s32 %v6056, %v6058
      %v6060 = vrot.slane %v6053, %v6059
      %v6061 = vcombine.low %v5497, %v5561
      %v6063 = vunpack.c.l.s4 1983009808
      %v6064 = vunpack.c.0.s8 %v6063
      %v6065 = vlaneseq
      %v6066 = vshrl.u32 %v6065, 7
      %v6067 = vsub.s32 %v6064, %v6066
      %v6068 = vrot.slane %v6061, %v6067
      %v6069 = vcombine.low %v6044, %v6052
      %v6071 = vunpack.c.l.s4 1934713408
      %v6072 = vunpack.c.0.s8 %v6071
      %v6073 = vlaneseq
      %v6074 = vshrl.u32 %v6073, 7
      %v6075 = vsub.s32 %v6072, %v6074
      %v6076 = vrot.slane %v6069, %v6075
      %v6077 = vcombine.low %v6060, %v6068
      %v6079 = vunpack.c.l.s4 1934713408
      %v6080 = vunpack.c.0.s8 %v6079
      %v6081 = vlaneseq
      %v6082 = vshrl.u32 %v6081, 7
      %v6083 = vsub.s32 %v6080, %v6082
      %v6084 = vrot.slane %v6077, %v6083
      %v6085 = vcombine.low %v6076, %v6084
      %v6086 = vcombine.low %v5353, %v5417
      %v6088 = vunpack.c.l.s4 1983009808
      %v6089 = vunpack.c.0.s8 %v6088
      %v6090 = vlaneseq
      %v6091 = vshrl.u32 %v6090, 7
      %v6092 = vsub.s32 %v6089, %v6091
      %v6093 = vrot.slane %v6086, %v6092
      %v6094 = vcombine.low %v5385, %v5449
      %v6096 = vunpack.c.l.s4 1983009808
      %v6097 = vunpack.c.0.s8 %v6096
      %v6098 = vlaneseq
      %v6099 = vshrl.u32 %v6098, 7
      %v6100 = vsub.s32 %v6097, %v6099
      %v6101 = vrot.slane %v6094, %v6100
      %v6102 = vcombine.low %v5481, %v5545
      %v6104 = vunpack.c.l.s4 1983009808
      %v6105 = vunpack.c.0.s8 %v6104
      %v6106 = vlaneseq
      %v6107 = vshrl.u32 %v6106, 7
      %v6108 = vsub.s32 %v6105, %v6107
      %v6109 = vrot.slane %v6102, %v6108
      %v6110 = vcombine.low %v5513, %v5577
      %v6112 = vunpack.c.l.s4 1983009808
      %v6113 = vunpack.c.0.s8 %v6112
      %v6114 = vlaneseq
      %v6115 = vshrl.u32 %v6114, 7
      %v6116 = vsub.s32 %v6113, %v6115
      %v6117 = vrot.slane %v6110, %v6116
      %v6118 = vcombine.low %v6093, %v6101
      %v6120 = vunpack.c.l.s4 1934713408
      %v6121 = vunpack.c.0.s8 %v6120
      %v6122 = vlaneseq
      %v6123 = vshrl.u32 %v6122, 7
      %v6124 = vsub.s32 %v6121, %v6123
      %v6125 = vrot.slane %v6118, %v6124
      %v6126 = vcombine.low %v6109, %v6117
      %v6128 = vunpack.c.l.s4 1934713408
      %v6129 = vunpack.c.0.s8 %v6128
      %v6130 = vlaneseq
      %v6131 = vshrl.u32 %v6130, 7
      %v6132 = vsub.s32 %v6129, %v6131
      %v6133 = vrot.slane %v6126, %v6132
      %v6134 = vcombine.low %v6125, %v6133
      %v6135 = vcombine.low %v5593, %v5657
      %v6137 = vunpack.c.l.s4 1983009808
      %v6138 = vunpack.c.0.s8 %v6137
      %v6139 = vlaneseq
      %v6140 = vshrl.u32 %v6139, 7
      %v6141 = vsub.s32 %v6138, %v6140
      %v6142 = vrot.slane %v6135, %v6141
      %v6143 = vcombine.low %v5625, %v5689
      %v6145 = vunpack.c.l.s4 1983009808
      %v6146 = vunpack.c.0.s8 %v6145
      %v6147 = vlaneseq
      %v6148 = vshrl.u32 %v6147, 7
      %v6149 = vsub.s32 %v6146, %v6148
      %v6150 = vrot.slane %v6143, %v6149
      %v6151 = vcombine.low %v5721, %v5785
      %v6153 = vunpack.c.l.s4 1983009808
      %v6154 = vunpack.c.0.s8 %v6153
      %v6155 = vlaneseq
      %v6156 = vshrl.u32 %v6155, 7
      %v6157 = vsub.s32 %v6154, %v6156
      %v6158 = vrot.slane %v6151, %v6157
      %v6159 = vcombine.low %v5753, %v5817
      %v6161 = vunpack.c.l.s4 1983009808
      %v6162 = vunpack.c.0.s8 %v6161
      %v6163 = vlaneseq
      %v6164 = vshrl.u32 %v6163, 7
      %v6165 = vsub.s32 %v6162, %v6164
      %v6166 = vrot.slane %v6159, %v6165
      %v6167 = vcombine.low %v6142, %v6150
      %v6169 = vunpack.c.l.s4 1934713408
      %v6170 = vunpack.c.0.s8 %v6169
      %v6171 = vlaneseq
      %v6172 = vshrl.u32 %v6171, 7
      %v6173 = vsub.s32 %v6170, %v6172
      %v6174 = vrot.slane %v6167, %v6173
      %v6175 = vcombine.low %v6158, %v6166
      %v6177 = vunpack.c.l.s4 1934713408
      %v6178 = vunpack.c.0.s8 %v6177
      %v6179 = vlaneseq
      %v6180 = vshrl.u32 %v6179, 7
      %v6181 = vsub.s32 %v6178, %v6180
      %v6182 = vrot.slane %v6175, %v6181
      %v6183 = vcombine.low %v6174, %v6182
      %v6184 = vcombine.low %v5609, %v5673
      %v6186 = vunpack.c.l.s4 1983009808
      %v6187 = vunpack.c.0.s8 %v6186
      %v6188 = vlaneseq
      %v6189 = vshrl.u32 %v6188, 7
      %v6190 = vsub.s32 %v6187, %v6189
      %v6191 = vrot.slane %v6184, %v6190
      %v6192 = vcombine.low %v5641, %v5705
      %v6194 = vunpack.c.l.s4 1983009808
      %v6195 = vunpack.c.0.s8 %v6194
      %v6196 = vlaneseq
      %v6197 = vshrl.u32 %v6196, 7
      %v6198 = vsub.s32 %v6195, %v6197
      %v6199 = vrot.slane %v6192, %v6198
      %v6200 = vcombine.low %v5737, %v5801
      %v6202 = vunpack.c.l.s4 1983009808
      %v6203 = vunpack.c.0.s8 %v6202
      %v6204 = vlaneseq
      %v6205 = vshrl.u32 %v6204, 7
      %v6206 = vsub.s32 %v6203, %v6205
      %v6207 = vrot.slane %v6200, %v6206
      %v6208 = vcombine.low %v5769, %v5833
      %v6210 = vunpack.c.l.s4 1983009808
      %v6211 = vunpack.c.0.s8 %v6210
      %v6212 = vlaneseq
      %v6213 = vshrl.u32 %v6212, 7
      %v6214 = vsub.s32 %v6211, %v6213
      %v6215 = vrot.slane %v6208, %v6214
      %v6216 = vcombine.low %v6191, %v6199
      %v6218 = vunpack.c.l.s4 1934713408
      %v6219 = vunpack.c.0.s8 %v6218
      %v6220 = vlaneseq
      %v6221 = vshrl.u32 %v6220, 7
      %v6222 = vsub.s32 %v6219, %v6221
      %v6223 = vrot.slane %v6216, %v6222
      %v6224 = vcombine.low %v6207, %v6215
      %v6226 = vunpack.c.l.s4 1934713408
      %v6227 = vunpack.c.0.s8 %v6226
      %v6228 = vlaneseq
      %v6229 = vshrl.u32 %v6228, 7
      %v6230 = vsub.s32 %v6227, %v6229
      %v6231 = vrot.slane %v6224, %v6230
      %v6232 = vcombine.low %v6223, %v6231
      %v6235 = vpack.i.b16 %v5938, %v5889
      %v6236 = vshrl.u32 %v5889, 16
      %v6237 = vshrl.u32 %v5938, 16
      %v6238 = vpack.i.b16 %v6237, %v6236
      %v6241 = vpack.i.b16 %v6036, %v5987
      %v6242 = vshrl.u32 %v5987, 16
      %v6243 = vshrl.u32 %v6036, 16
      %v6244 = vpack.i.b16 %v6243, %v6242
      %v6247 = vpack.i.b16 %v6134, %v6085
      %v6248 = vshrl.u32 %v6085, 16
      %v6249 = vshrl.u32 %v6134, 16
      %v6250 = vpack.i.b16 %v6249, %v6248
      %v6253 = vpack.i.b16 %v6232, %v6183
      %v6254 = vshrl.u32 %v6183, 16
      %v6255 = vshrl.u32 %v6232, 16
      %v6256 = vpack.i.b16 %v6255, %v6254
      %v6258 = vsel %vm3992, %v6235, 0
      %v6261 = vsel %vm3992, %v6241, 0
      %v6264 = vsel %vm3992, %v6247, 0
      %v6267 = vsel %vm3992, %v6253, 0
      %v6270 = vsel %vm3992, %v4015, 0
      %6272 = vmatprep.subr.bf16.mxu0 0
      %6273 = vmatpush1.bf16.xpose.msra.mxu0 %v6270
      %6274 = vmatprep.subr.bf16.mxu0 0
      %6275 = vmatpush1.bf16.xpose.msra.mxu0 0
      %6276 = vmatprep.subr.bf16.mxu0 0
      %6277 = vmatpush1.bf16.xpose.msra.mxu0 0
      %6278 = vmatprep.subr.bf16.mxu0 0
      %6279 = vmatpush1.bf16.xpose.msra.mxu0 0
      %6280 = vmatprep.subr.bf16.mxu0 0
      %6281 = vmatpush1.bf16.xpose.msra.mxu0 0
      %6282 = vmatprep.subr.bf16.mxu0 0
      %6283 = vmatpush1.bf16.xpose.msra.mxu0 0
      %6284 = vmatprep.subr.bf16.mxu0 0
      %6285 = vmatpush1.bf16.xpose.msra.mxu0 0
      %6286 = vmatprep.subr.bf16.mxu0 0
      %6287 = vmatpush1.bf16.xpose.msra.mxu0 0
      %6288 = vmatprep.subr.bf16.mxu0 0
      %6289 = vmatpush1.bf16.xpose.msra.mxu0 0
      %6290 = vmatprep.subr.bf16.mxu0 0
      %6291 = vmatpush1.bf16.xpose.msra.mxu0 0
      %6292 = vmatprep.subr.bf16.mxu0 0
      %6293 = vmatpush1.bf16.xpose.msra.mxu0 0
      %6294 = vmatprep.subr.bf16.mxu0 0
      %6295 = vmatpush1.bf16.xpose.msra.mxu0 0
      %6296 = vmatprep.subr.bf16.mxu0 0
      %6297 = vmatpush1.bf16.xpose.msra.mxu0 0
      %6298 = vmatprep.subr.bf16.mxu0 0
      %6299 = vmatpush1.bf16.xpose.msra.mxu0 0
      %6300 = vmatprep.subr.bf16.mxu0 0
      %6301 = vmatpush1.bf16.xpose.msra.mxu0 0
      %6302 = vmatprep.subr.bf16.mxu0 0
      %6303 = vmatpush1.bf16.xpose.msra.mxu0 0
      %6304 = vmatprep.mubr.bf16.mxu0 0
      %6305 = vmatmul.mubr.bf16.gmra.mrb[0].mxu0 %v6258
      %v6306 = vpop.f32.mrb[0].mxu0
      %v6307 = vadd.f32 0.0, %v6306
      %v6308 = vpop.f32.mrb[0].mxu0
      %v6309 = vpop.f32.mrb[0].mxu0
      %v6310 = vadd.f32 0.0, %v6309
      %v6311 = vpop.f32.mrb[0].mxu0
      %6312 = vmatprep.mubr.bf16.mxu0 0
      %6313 = vmatmul.mubr.bf16.gmra.mrb[0].mxu0 %v6261
      %v6314 = vpop.f32.mrb[0].mxu0
      %v6315 = vadd.f32 0.0, %v6314
      %v6316 = vpop.f32.mrb[0].mxu0
      %v6317 = vpop.f32.mrb[0].mxu0
      %v6318 = vadd.f32 0.0, %v6317
      %v6319 = vpop.f32.mrb[0].mxu0
      %6320 = vmatprep.mubr.bf16.mxu0 0
      %6321 = vmatmul.mubr.bf16.gmra.mrb[0].mxu0 %v6264
      %v6322 = vpop.f32.mrb[0].mxu0
      %v6323 = vadd.f32 0.0, %v6322
      %v6324 = vpop.f32.mrb[0].mxu0
      %v6325 = vpop.f32.mrb[0].mxu0
      %v6326 = vadd.f32 0.0, %v6325
      %v6327 = vpop.f32.mrb[0].mxu0
      %6328 = vmatprep.mubr.bf16.mxu0 0
      %6329 = vmatmul.mubr.bf16.gmra.mrb[0].mxu0 %v6267
      %v6330 = vpop.f32.mrb[0].mxu0
      %v6331 = vadd.f32 0.0, %v6330
      %v6332 = vpop.f32.mrb[0].mxu0
      %v6333 = vpop.f32.mrb[0].mxu0
      %v6334 = vadd.f32 0.0, %v6333
      %v6335 = vpop.f32.mrb[0].mxu0
      %6336 = vdwg.mxu0
      %v6338 = vsel %vm3992, %v6238, 0
      %v6341 = vsel %vm3992, %v6244, 0
      %v6344 = vsel %vm3992, %v6250, 0
      %v6347 = vsel %vm3992, %v6256, 0
      %v6350 = vsel %vm3992, %v4016, 0
      %6352 = vmatprep.subr.bf16.mxu0 0
      %6353 = vmatpush1.bf16.xpose.msra.mxu0 %v6350
      %6354 = vmatprep.subr.bf16.mxu0 0
      %6355 = vmatpush1.bf16.xpose.msra.mxu0 0
      %6356 = vmatprep.subr.bf16.mxu0 0
      %6357 = vmatpush1.bf16.xpose.msra.mxu0 0
      %6358 = vmatprep.subr.bf16.mxu0 0
      %6359 = vmatpush1.bf16.xpose.msra.mxu0 0
      %6360 = vmatprep.subr.bf16.mxu0 0
      %6361 = vmatpush1.bf16.xpose.msra.mxu0 0
      %6362 = vmatprep.subr.bf16.mxu0 0
      %6363 = vmatpush1.bf16.xpose.msra.mxu0 0
      %6364 = vmatprep.subr.bf16.mxu0 0
      %6365 = vmatpush1.bf16.xpose.msra.mxu0 0
      %6366 = vmatprep.subr.bf16.mxu0 0
      %6367 = vmatpush1.bf16.xpose.msra.mxu0 0
      %6368 = vmatprep.subr.bf16.mxu0 0
      %6369 = vmatpush1.bf16.xpose.msra.mxu0 0
      %6370 = vmatprep.subr.bf16.mxu0 0
      %6371 = vmatpush1.bf16.xpose.msra.mxu0 0
      %6372 = vmatprep.subr.bf16.mxu0 0
      %6373 = vmatpush1.bf16.xpose.msra.mxu0 0
      %6374 = vmatprep.subr.bf16.mxu0 0
      %6375 = vmatpush1.bf16.xpose.msra.mxu0 0
      %6376 = vmatprep.subr.bf16.mxu0 0
      %6377 = vmatpush1.bf16.xpose.msra.mxu0 0
      %6378 = vmatprep.subr.bf16.mxu0 0
      %6379 = vmatpush1.bf16.xpose.msra.mxu0 0
      %6380 = vmatprep.subr.bf16.mxu0 0
      %6381 = vmatpush1.bf16.xpose.msra.mxu0 0
      %6382 = vmatprep.subr.bf16.mxu0 0
      %6383 = vmatpush1.bf16.xpose.msra.mxu0 0
      %6384 = vmatprep.mubr.bf16.mxu0 0
      %6385 = vmatmul.mubr.bf16.gmra.mrb[0].mxu0 %v6338
      %v6386 = vpop.f32.mrb[0].mxu0
      %v6387 = vadd.f32 0.0, %v6386
      %v6388 = vpop.f32.mrb[0].mxu0
      %v6389 = vpop.f32.mrb[0].mxu0
      %v6390 = vadd.f32 0.0, %v6389
      %v6391 = vpop.f32.mrb[0].mxu0
      %6392 = vmatprep.mubr.bf16.mxu0 0
      %6393 = vmatmul.mubr.bf16.gmra.mrb[0].mxu0 %v6341
      %v6394 = vpop.f32.mrb[0].mxu0
      %v6395 = vadd.f32 0.0, %v6394
      %v6396 = vpop.f32.mrb[0].mxu0
      %v6397 = vpop.f32.mrb[0].mxu0
      %v6398 = vadd.f32 0.0, %v6397
      %v6399 = vpop.f32.mrb[0].mxu0
      %6400 = vmatprep.mubr.bf16.mxu0 0
      %6401 = vmatmul.mubr.bf16.gmra.mrb[0].mxu0 %v6344
      %v6402 = vpop.f32.mrb[0].mxu0
      %v6403 = vadd.f32 0.0, %v6402
      %v6404 = vpop.f32.mrb[0].mxu0
      %v6405 = vpop.f32.mrb[0].mxu0
      %v6406 = vadd.f32 0.0, %v6405
      %v6407 = vpop.f32.mrb[0].mxu0
      %6408 = vmatprep.mubr.bf16.mxu0 0
      %6409 = vmatmul.mubr.bf16.gmra.mrb[0].mxu0 %v6347
      %v6410 = vpop.f32.mrb[0].mxu0
      %v6411 = vadd.f32 0.0, %v6410
      %v6412 = vpop.f32.mrb[0].mxu0
      %v6413 = vpop.f32.mrb[0].mxu0
      %v6414 = vadd.f32 0.0, %v6413
      %v6415 = vpop.f32.mrb[0].mxu0
      %6416 = vdwg.mxu0
      %6417 = vxpose.xlu0.b32.start [1/16] %v6307, 128
      %6418 = vxpose.xlu0.b32.cont [2/16] %v6310, 128
      %6419 = vxpose.xlu0.b32.cont [3/16] %v6315, 128
      %6420 = vxpose.xlu0.b32.cont [4/16] %v6318, 128
      %6421 = vxpose.xlu0.b32.cont [5/16] %v6323, 128
      %6422 = vxpose.xlu0.b32.cont [6/16] %v6326, 128
      %6423 = vxpose.xlu0.b32.cont [7/16] %v6331, 128
      %6424 = vxpose.xlu0.b32.cont [8/16] %v6334, 128
      %6425 = vxpose.xlu0.b32.cont [9/16] 0.0, 128
      %6426 = vxpose.xlu0.b32.cont [10/16] 0.0, 128
      %6427 = vxpose.xlu0.b32.cont [11/16] 0.0, 128
      %6428 = vxpose.xlu0.b32.cont [12/16] 0.0, 128
      %6429 = vxpose.xlu0.b32.cont [13/16] 0.0, 128
      %6430 = vxpose.xlu0.b32.cont [14/16] 0.0, 128
      %6431 = vxpose.xlu0.b32.cont [15/16] 0.0, 128
      %6432 = vxpose.xlu0.b32.end [16/16] 0.0, 128
      %v6433 = vpop.trf.xlu0
      %v6434 = vpop.trf.xlu0
      %v6435 = vpop.trf.xlu0
      %v6436 = vpop.trf.xlu0
      %v6437 = vpop.trf.xlu0
      %v6438 = vpop.trf.xlu0
      %v6439 = vpop.trf.xlu0
      %v6440 = vpop.trf.xlu0
      %v6441 = vpop.trf.xlu0
      %v6442 = vpop.trf.xlu0
      %v6443 = vpop.trf.xlu0
      %v6444 = vpop.trf.xlu0
      %v6445 = vpop.trf.xlu0
      %v6446 = vpop.trf.xlu0
      %v6447 = vpop.trf.xlu0
      %v6448 = vpop.trf.xlu0
      %6449 = vxpose.xlu0.b32.start [1/16] %v6387, 128
      %6450 = vxpose.xlu0.b32.cont [2/16] %v6390, 128
      %6451 = vxpose.xlu0.b32.cont [3/16] %v6395, 128
      %6452 = vxpose.xlu0.b32.cont [4/16] %v6398, 128
      %6453 = vxpose.xlu0.b32.cont [5/16] %v6403, 128
      %6454 = vxpose.xlu0.b32.cont [6/16] %v6406, 128
      %6455 = vxpose.xlu0.b32.cont [7/16] %v6411, 128
      %6456 = vxpose.xlu0.b32.cont [8/16] %v6414, 128
      %6457 = vxpose.xlu0.b32.cont [9/16] 0.0, 128
      %6458 = vxpose.xlu0.b32.cont [10/16] 0.0, 128
      %6459 = vxpose.xlu0.b32.cont [11/16] 0.0, 128
      %6460 = vxpose.xlu0.b32.cont [12/16] 0.0, 128
      %6461 = vxpose.xlu0.b32.cont [13/16] 0.0, 128
      %6462 = vxpose.xlu0.b32.cont [14/16] 0.0, 128
      %6463 = vxpose.xlu0.b32.cont [15/16] 0.0, 128
      %6464 = vxpose.xlu0.b32.end [16/16] 0.0, 128
      %v6465 = vpop.trf.xlu0
      %v6466 = vpop.trf.xlu0
      %v6467 = vpop.trf.xlu0
      %v6468 = vpop.trf.xlu0
      %v6469 = vpop.trf.xlu0
      %v6470 = vpop.trf.xlu0
      %v6471 = vpop.trf.xlu0
      %v6472 = vpop.trf.xlu0
      %v6473 = vpop.trf.xlu0
      %v6474 = vpop.trf.xlu0
      %v6475 = vpop.trf.xlu0
      %v6476 = vpop.trf.xlu0
      %v6477 = vpop.trf.xlu0
      %v6478 = vpop.trf.xlu0
      %v6479 = vpop.trf.xlu0
      %v6480 = vpop.trf.xlu0
      %v6481 = vcombine.high %v6433, 0.0
      %v6483 = vunpack.c.l.s4 1983009808
      %v6484 = vunpack.c.0.s8 %v6483
      %v6485 = vlaneseq
      %v6486 = vshrl.u32 %v6485, 7
      %v6487 = vsub.s32 %v6484, %v6486
      %v6488 = vrot.slane %v6433, %v6487
      %v6490 = vunpack.c.l.s4 1983009808
      %v6491 = vunpack.c.0.s8 %v6490
      %v6492 = vlaneseq
      %v6493 = vshrl.u32 %v6492, 7
      %v6494 = vsub.s32 %v6491, %v6493
      %v6495 = vrot.slane %v6481, %v6494
      %v6496 = vcombine.high %v6465, 0.0
      %v6498 = vunpack.c.l.s4 1983009808
      %v6499 = vunpack.c.0.s8 %v6498
      %v6500 = vlaneseq
      %v6501 = vshrl.u32 %v6500, 7
      %v6502 = vsub.s32 %v6499, %v6501
      %v6503 = vrot.slane %v6465, %v6502
      %v6505 = vunpack.c.l.s4 1983009808
      %v6506 = vunpack.c.0.s8 %v6505
      %v6507 = vlaneseq
      %v6508 = vshrl.u32 %v6507, 7
      %v6509 = vsub.s32 %v6506, %v6508
      %v6510 = vrot.slane %v6496, %v6509
      %v6511 = vcombine.low %v6488, %v6503
      %v6512 = vcombine.high %v6488, %v6503
      %v6514 = vunpack.c.l.s4 1934713408
      %v6515 = vunpack.c.0.s8 %v6514
      %v6516 = vlaneseq
      %v6517 = vshrl.u32 %v6516, 7
      %v6518 = vsub.s32 %v6515, %v6517
      %v6519 = vrot.slane %v6511, %v6518
      %v6521 = vunpack.c.l.s4 1934713408
      %v6522 = vunpack.c.0.s8 %v6521
      %v6523 = vlaneseq
      %v6524 = vshrl.u32 %v6523, 7
      %v6525 = vsub.s32 %v6522, %v6524
      %v6526 = vrot.slane %v6512, %v6525
      %v6527 = vcombine.low %v6495, %v6510
      %v6528 = vcombine.high %v6495, %v6510
      %v6530 = vunpack.c.l.s4 1934713408
      %v6531 = vunpack.c.0.s8 %v6530
      %v6532 = vlaneseq
      %v6533 = vshrl.u32 %v6532, 7
      %v6534 = vsub.s32 %v6531, %v6533
      %v6535 = vrot.slane %v6527, %v6534
      %v6537 = vunpack.c.l.s4 1934713408
      %v6538 = vunpack.c.0.s8 %v6537
      %v6539 = vlaneseq
      %v6540 = vshrl.u32 %v6539, 7
      %v6541 = vsub.s32 %v6538, %v6540
      %v6542 = vrot.slane %v6528, %v6541
      %v6543 = vcombine.high %v6519, 0.0
      %v6544 = vcombine.high %v6526, 0.0
      %v6545 = vcombine.high %v6535, 0.0
      %v6546 = vcombine.high %v6542, 0.0
      %v6547 = vcombine.low %v6519, %v6526
      %v6549 = vunpack.c.l.s4 1983009808
      %v6550 = vunpack.c.0.s8 %v6549
      %v6551 = vlaneseq
      %v6552 = vshrl.u32 %v6551, 7
      %v6553 = vsub.s32 %v6550, %v6552
      %v6554 = vrot.slane %v6547, %v6553
      %v6555 = vcombine.low %v6543, %v6544
      %v6557 = vunpack.c.l.s4 1983009808
      %v6558 = vunpack.c.0.s8 %v6557
      %v6559 = vlaneseq
      %v6560 = vshrl.u32 %v6559, 7
      %v6561 = vsub.s32 %v6558, %v6560
      %v6562 = vrot.slane %v6555, %v6561
      %v6563 = vcombine.low %v6535, %v6542
      %v6565 = vunpack.c.l.s4 1983009808
      %v6566 = vunpack.c.0.s8 %v6565
      %v6567 = vlaneseq
      %v6568 = vshrl.u32 %v6567, 7
      %v6569 = vsub.s32 %v6566, %v6568
      %v6570 = vrot.slane %v6563, %v6569
      %v6571 = vcombine.low %v6545, %v6546
      %v6573 = vunpack.c.l.s4 1983009808
      %v6574 = vunpack.c.0.s8 %v6573
      %v6575 = vlaneseq
      %v6576 = vshrl.u32 %v6575, 7
      %v6577 = vsub.s32 %v6574, %v6576
      %v6578 = vrot.slane %v6571, %v6577
      %v6579 = vcombine.low %v6554, %v6562
      %v6581 = vunpack.c.l.s4 1934713408
      %v6582 = vunpack.c.0.s8 %v6581
      %v6583 = vlaneseq
      %v6584 = vshrl.u32 %v6583, 7
      %v6585 = vsub.s32 %v6582, %v6584
      %v6586 = vrot.slane %v6579, %v6585
      %v6587 = vcombine.low %v6570, %v6578
      %v6589 = vunpack.c.l.s4 1934713408
      %v6590 = vunpack.c.0.s8 %v6589
      %v6591 = vlaneseq
      %v6592 = vshrl.u32 %v6591, 7
      %v6593 = vsub.s32 %v6590, %v6592
      %v6594 = vrot.slane %v6587, %v6593
      %v6595 = vcombine.low %v6586, %v6594
      %v6596 = vcombine.high %v6586, %v6594
      %6598 = vrot.lane.b32.xlu0 %v6596, 64
      %v6599 = vpop.permute.xlu0 %6598
      %v6601 = vsel %vm3905, %v6595, %v6599
      %v6602 = vpack.c.bf16 %v6601, %v6601
      %v6603 = vld [vmem:[%s1019] sm:$0xf]
      %v6604 = vld [vmem:[%s1019 + $0x4] sm:$0xf]
      %v6605 = vld [vmem:[%s1019 + $0x8] sm:$0xf]
      %v6606 = vld [vmem:[%s1019 + $0xc] sm:$0xf]
      %v6607 = vld [vmem:[%s1019 + $0x10] sm:$0xf]
      %v6608 = vld [vmem:[%s1019 + $0x14] sm:$0xf]
      %v6609 = vld [vmem:[%s1019 + $0x18] sm:$0xf]
      %v6610 = vld [vmem:[%s1019 + $0x1c] sm:$0xf]
      %v6611 = vld [vmem:[%s1019 + $0x20] sm:$0xf]
      %v6612 = vld [vmem:[%s1019 + $0x24] sm:$0xf]
      %v6613 = vld [vmem:[%s1019 + $0x28] sm:$0xf]
      %v6614 = vld [vmem:[%s1019 + $0x2c] sm:$0xf]
      %v6615 = vld [vmem:[%s1019 + $0x30] sm:$0xf]
      %v6616 = vld [vmem:[%s1019 + $0x34] sm:$0xf]
      %v6617 = vld [vmem:[%s1019 + $0x38] sm:$0xf]
      %v6618 = vld [vmem:[%s1019 + $0x3c] sm:$0xf]
      %v6619 = vld [vmem:[%s1022] sm:$0x1]
      %v6621 = vlaneseq
      %v6622 = vshrl.u32 %v6621, 7
      %v6623 = vsub.s32 0, %v6622
      %v6624 = vrot.slane %v6619, %v6623
      %v6642 = vunpack.c.l.b16 %v6603
      %v6643 = vunpack.c.l.b16 %v6604
      %v6644 = vunpack.c.l.b16 %v6605
      %v6645 = vunpack.c.l.b16 %v6606
      %v6646 = vunpack.c.l.b16 %v6607
      %v6647 = vunpack.c.l.b16 %v6608
      %v6648 = vunpack.c.l.b16 %v6609
      %v6649 = vunpack.c.l.b16 %v6610
      %v6650 = vunpack.c.l.b16 %v6611
      %v6651 = vunpack.c.l.b16 %v6612
      %v6652 = vunpack.c.l.b16 %v6613
      %v6653 = vunpack.c.l.b16 %v6614
      %v6654 = vunpack.c.l.b16 %v6615
      %v6655 = vunpack.c.l.b16 %v6616
      %v6656 = vunpack.c.l.b16 %v6617
      %v6657 = vunpack.c.l.b16 %v6618
      %v6658 = vpack.c.b16 %v6643, %v6642
      %v6659 = vpack.c.b16 %v6645, %v6644
      %v6660 = vpack.c.b16 %v6647, %v6646
      %v6661 = vpack.c.b16 %v6649, %v6648
      %v6662 = vpack.c.b16 %v6651, %v6650
      %v6663 = vpack.c.b16 %v6653, %v6652
      %v6664 = vpack.c.b16 %v6655, %v6654
      %v6665 = vpack.c.b16 %v6657, %v6656
      %6674 = vmatprep.subr.bf16.mxu0 0
      %6675 = vmatpush1.bf16.msra.mxu0 %v6658
      %6676 = vmatprep.subr.bf16.mxu0 0
      %6677 = vmatpush1.bf16.msra.mxu0 %v6659
      %6678 = vmatprep.subr.bf16.mxu0 0
      %6679 = vmatpush1.bf16.msra.mxu0 %v6660
      %6680 = vmatprep.subr.bf16.mxu0 0
      %6681 = vmatpush1.bf16.msra.mxu0 %v6661
      %6682 = vmatprep.subr.bf16.mxu0 0
      %6683 = vmatpush1.bf16.msra.mxu0 %v6662
      %6684 = vmatprep.subr.bf16.mxu0 0
      %6685 = vmatpush1.bf16.msra.mxu0 %v6663
      %6686 = vmatprep.subr.bf16.mxu0 0
      %6687 = vmatpush1.bf16.msra.mxu0 %v6664
      %6688 = vmatprep.subr.bf16.mxu0 0
      %6689 = vmatpush1.bf16.msra.mxu0 %v6665
      %6690 = vmatprep.subr.bf16.mxu0 0
      %6691 = vmatpush1.bf16.msra.mxu0 0
      %6692 = vmatprep.subr.bf16.mxu0 0
      %6693 = vmatpush1.bf16.msra.mxu0 0
      %6694 = vmatprep.subr.bf16.mxu0 0
      %6695 = vmatpush1.bf16.msra.mxu0 0
      %6696 = vmatprep.subr.bf16.mxu0 0
      %6697 = vmatpush1.bf16.msra.mxu0 0
      %6698 = vmatprep.subr.bf16.mxu0 0
      %6699 = vmatpush1.bf16.msra.mxu0 0
      %6700 = vmatprep.subr.bf16.mxu0 0
      %6701 = vmatpush1.bf16.msra.mxu0 0
      %6702 = vmatprep.subr.bf16.mxu0 0
      %6703 = vmatpush1.bf16.msra.mxu0 0
      %6704 = vmatprep.subr.bf16.mxu0 0
      %6705 = vmatpush1.bf16.msra.mxu0 0
      %6706 = vmatprep.mubr.bf16.mxu0 0
      %6707 = vmatmul.mubr.bf16.gmra.mrb[0].mxu0 %v6602
      %v6708 = vpop.f32.mrb[0].mxu0
      %v6709 = vadd.f32 %v6624, %v6708
      %v6710 = vpop.f32.mrb[0].mxu0
      %v6711 = vpop.f32.mrb[0].mxu0
      %v6712 = vpop.f32.mrb[0].mxu0
      %6713 = vdwg.mxu0
      %v6714 = vadd.f32 %v6709, %v1102
      %v6715 = vld [vmem:[%s1025] sm:$0x1]
      %v6716 = vld [vmem:[%s1028] sm:$0x1]
      %6717 = vadd.xlane.f32.xlu0 %v6714
      %v6718 = vpop.xlane.xlu0 %6717
      %v6719 = vrcp.pop 128.0
      %v6720 = vmul.f32 %v6718, %v6719
      %v6721 = vsub.f32 %v6714, %v6720
      %v6722 = vmul.f32 %v6721, %v6721
      %6723 = vadd.xlane.f32.xlu0 %v6722
      %v6724 = vpop.xlane.xlu0 %6723
      %v6725 = vmul.f32 %v6724, %v6719
      %v6726 = vadd.f32 %v6725, 1e-12
      %v6727 = vrsqrt.pop %v6726
      %v6728 = vmul.f32 %v6721, %v6727
      %v6730 = vlaneseq
      %v6731 = vshrl.u32 %v6730, 7
      %v6732 = vsub.s32 0, %v6731
      %v6733 = vrot.slane %v6715, %v6732
      %v6735 = vmul.f32 %v6728, %v6733
      %v6737 = vlaneseq
      %v6738 = vshrl.u32 %v6737, 7
      %v6739 = vsub.s32 0, %v6738
      %v6740 = vrot.slane %v6716, %v6739
      %v6742 = vadd.f32 %v6735, %v6740
      %v6743 = vpack.c.bf16 %v6742, %v6742
      %v6744 = vld [vmem:[%s1033] sm:$0xff]
      %v6745 = vld [vmem:[%s1033 + $0x8] sm:$0xff]
      %v6746 = vld [vmem:[%s1033 + $0x10] sm:$0xff]
      %v6747 = vld [vmem:[%s1033 + $0x18] sm:$0xff]
      %v6748 = vld [vmem:[%s1033 + $0x20] sm:$0xff]
      %v6749 = vld [vmem:[%s1033 + $0x28] sm:$0xff]
      %v6750 = vld [vmem:[%s1033 + $0x30] sm:$0xff]
      %v6751 = vld [vmem:[%s1033 + $0x38] sm:$0xff]
      %v6752 = vld [vmem:[%s1033 + $0x40] sm:$0xff]
      %v6753 = vld [vmem:[%s1033 + $0x48] sm:$0xff]
      %v6754 = vld [vmem:[%s1033 + $0x50] sm:$0xff]
      %v6755 = vld [vmem:[%s1033 + $0x58] sm:$0xff]
      %v6756 = vld [vmem:[%s1033 + $0x60] sm:$0xff]
      %v6757 = vld [vmem:[%s1033 + $0x68] sm:$0xff]
      %v6758 = vld [vmem:[%s1033 + $0x70] sm:$0xff]
      %v6759 = vld [vmem:[%s1033 + $0x78] sm:$0xff]
      %v6760 = vld [vmem:[%s1033 + $0x80] sm:$0xff]
      %v6761 = vld [vmem:[%s1033 + $0x88] sm:$0xff]
      %v6762 = vld [vmem:[%s1033 + $0x90] sm:$0xff]
      %v6763 = vld [vmem:[%s1033 + $0x98] sm:$0xff]
      %v6764 = vld [vmem:[%s1033 + $0xa0] sm:$0xff]
      %v6765 = vld [vmem:[%s1033 + $0xa8] sm:$0xff]
      %v6766 = vld [vmem:[%s1033 + $0xb0] sm:$0xff]
      %v6767 = vld [vmem:[%s1033 + $0xb8] sm:$0xff]
      %v6768 = vld [vmem:[%s1033 + $0xc0] sm:$0xff]
      %v6769 = vld [vmem:[%s1033 + $0xc8] sm:$0xff]
      %v6770 = vld [vmem:[%s1033 + $0xd0] sm:$0xff]
      %v6771 = vld [vmem:[%s1033 + $0xd8] sm:$0xff]
      %v6772 = vld [vmem:[%s1033 + $0xe0] sm:$0xff]
      %v6773 = vld [vmem:[%s1033 + $0xe8] sm:$0xff]
      %v6774 = vld [vmem:[%s1033 + $0xf0] sm:$0xff]
      %v6775 = vld [vmem:[%s1033 + $0xf8] sm:$0xff]
      %v6776 = vld [vmem:[%s1037] sm:$0xf]
      %v6778 = vlaneseq
      %v6779 = vshrl.u32 %v6778, 7
      %v6780 = vsub.s32 0, %v6779
      %v6781 = vrot.slane %v6776, %v6780
      %v6782 = vlaneseq
      %v6783 = vshrl.u32 %v6782, 7
      %v6784 = vsub.s32 1, %v6783
      %v6785 = vrot.slane %v6776, %v6784
      %v6786 = vlaneseq
      %v6787 = vshrl.u32 %v6786, 7
      %v6788 = vsub.s32 2, %v6787
      %v6789 = vrot.slane %v6776, %v6788
      %v6790 = vlaneseq
      %v6791 = vshrl.u32 %v6790, 7
      %v6792 = vsub.s32 3, %v6791
      %v6793 = vrot.slane %v6776, %v6792
      %v6830 = vunpack.c.l.b16 %v6744
      %v6831 = vunpack.c.h.b16 %v6744
      %v6832 = vunpack.c.l.b16 %v6745
      %v6833 = vunpack.c.h.b16 %v6745
      %v6834 = vunpack.c.l.b16 %v6746
      %v6835 = vunpack.c.h.b16 %v6746
      %v6836 = vunpack.c.l.b16 %v6747
      %v6837 = vunpack.c.h.b16 %v6747
      %v6838 = vunpack.c.l.b16 %v6748
      %v6839 = vunpack.c.h.b16 %v6748
      %v6840 = vunpack.c.l.b16 %v6749
      %v6841 = vunpack.c.h.b16 %v6749
      %v6842 = vunpack.c.l.b16 %v6750
      %v6843 = vunpack.c.h.b16 %v6750
      %v6844 = vunpack.c.l.b16 %v6751
      %v6845 = vunpack.c.h.b16 %v6751
      %v6846 = vunpack.c.l.b16 %v6752
      %v6847 = vunpack.c.h.b16 %v6752
      %v6848 = vunpack.c.l.b16 %v6753
      %v6849 = vunpack.c.h.b16 %v6753
      %v6850 = vunpack.c.l.b16 %v6754
      %v6851 = vunpack.c.h.b16 %v6754
      %v6852 = vunpack.c.l.b16 %v6755
      %v6853 = vunpack.c.h.b16 %v6755
      %v6854 = vunpack.c.l.b16 %v6756
      %v6855 = vunpack.c.h.b16 %v6756
      %v6856 = vunpack.c.l.b16 %v6757
      %v6857 = vunpack.c.h.b16 %v6757
      %v6858 = vunpack.c.l.b16 %v6758
      %v6859 = vunpack.c.h.b16 %v6758
      %v6860 = vunpack.c.l.b16 %v6759
      %v6861 = vunpack.c.h.b16 %v6759
      %v6862 = vunpack.c.l.b16 %v6760
      %v6863 = vunpack.c.h.b16 %v6760
      %v6864 = vunpack.c.l.b16 %v6761
      %v6865 = vunpack.c.h.b16 %v6761
      %v6866 = vunpack.c.l.b16 %v6762
      %v6867 = vunpack.c.h.b16 %v6762
      %v6868 = vunpack.c.l.b16 %v6763
      %v6869 = vunpack.c.h.b16 %v6763
      %v6870 = vunpack.c.l.b16 %v6764
      %v6871 = vunpack.c.h.b16 %v6764
      %v6872 = vunpack.c.l.b16 %v6765
      %v6873 = vunpack.c.h.b16 %v6765
      %v6874 = vunpack.c.l.b16 %v6766
      %v6875 = vunpack.c.h.b16 %v6766
      %v6876 = vunpack.c.l.b16 %v6767
      %v6877 = vunpack.c.h.b16 %v6767
      %v6878 = vunpack.c.l.b16 %v6768
      %v6879 = vunpack.c.h.b16 %v6768
      %v6880 = vunpack.c.l.b16 %v6769
      %v6881 = vunpack.c.h.b16 %v6769
      %v6882 = vunpack.c.l.b16 %v6770
      %v6883 = vunpack.c.h.b16 %v6770
      %v6884 = vunpack.c.l.b16 %v6771
      %v6885 = vunpack.c.h.b16 %v6771
      %v6886 = vunpack.c.l.b16 %v6772
      %v6887 = vunpack.c.h.b16 %v6772
      %v6888 = vunpack.c.l.b16 %v6773
      %v6889 = vunpack.c.h.b16 %v6773
      %v6890 = vunpack.c.l.b16 %v6774
      %v6891 = vunpack.c.h.b16 %v6774
      %v6892 = vunpack.c.l.b16 %v6775
      %v6893 = vunpack.c.h.b16 %v6775
      %v6894 = vpack.c.b16 %v6834, %v6830
      %v6895 = vpack.c.b16 %v6835, %v6831
      %v6896 = vpack.c.b16 %v6836, %v6832
      %v6897 = vpack.c.b16 %v6837, %v6833
      %v6898 = vpack.c.b16 %v6842, %v6838
      %v6899 = vpack.c.b16 %v6843, %v6839
      %v6900 = vpack.c.b16 %v6844, %v6840
      %v6901 = vpack.c.b16 %v6845, %v6841
      %v6902 = vpack.c.b16 %v6850, %v6846
      %v6903 = vpack.c.b16 %v6851, %v6847
      %v6904 = vpack.c.b16 %v6852, %v6848
      %v6905 = vpack.c.b16 %v6853, %v6849
      %v6906 = vpack.c.b16 %v6858, %v6854
      %v6907 = vpack.c.b16 %v6859, %v6855
      %v6908 = vpack.c.b16 %v6860, %v6856
      %v6909 = vpack.c.b16 %v6861, %v6857
      %v6910 = vpack.c.b16 %v6866, %v6862
      %v6911 = vpack.c.b16 %v6867, %v6863
      %v6912 = vpack.c.b16 %v6868, %v6864
      %v6913 = vpack.c.b16 %v6869, %v6865
      %v6914 = vpack.c.b16 %v6874, %v6870
      %v6915 = vpack.c.b16 %v6875, %v6871
      %v6916 = vpack.c.b16 %v6876, %v6872
      %v6917 = vpack.c.b16 %v6877, %v6873
      %v6918 = vpack.c.b16 %v6882, %v6878
      %v6919 = vpack.c.b16 %v6883, %v6879
      %v6920 = vpack.c.b16 %v6884, %v6880
      %v6921 = vpack.c.b16 %v6885, %v6881
      %v6922 = vpack.c.b16 %v6890, %v6886
      %v6923 = vpack.c.b16 %v6891, %v6887
      %v6924 = vpack.c.b16 %v6892, %v6888
      %v6925 = vpack.c.b16 %v6893, %v6889
      %6958 = vmatprep.subr.bf16.mxu0 %v6895
      %6959 = vmatpush1.bf16.msra.mxu0 %v6894
      %6960 = vmatprep.subr.bf16.mxu0 %v6899
      %6961 = vmatpush1.bf16.msra.mxu0 %v6898
      %6962 = vmatprep.subr.bf16.mxu0 %v6903
      %6963 = vmatpush1.bf16.msra.mxu0 %v6902
      %6964 = vmatprep.subr.bf16.mxu0 %v6907
      %6965 = vmatpush1.bf16.msra.mxu0 %v6906
      %6966 = vmatprep.subr.bf16.mxu0 %v6911
      %6967 = vmatpush1.bf16.msra.mxu0 %v6910
      %6968 = vmatprep.subr.bf16.mxu0 %v6915
      %6969 = vmatpush1.bf16.msra.mxu0 %v6914
      %6970 = vmatprep.subr.bf16.mxu0 %v6919
      %6971 = vmatpush1.bf16.msra.mxu0 %v6918
      %6972 = vmatprep.subr.bf16.mxu0 %v6923
      %6973 = vmatpush1.bf16.msra.mxu0 %v6922
      %6974 = vmatprep.subr.bf16.mxu0 0
      %6975 = vmatpush1.bf16.msra.mxu0 0
      %6976 = vmatprep.subr.bf16.mxu0 0
      %6977 = vmatpush1.bf16.msra.mxu0 0
      %6978 = vmatprep.subr.bf16.mxu0 0
      %6979 = vmatpush1.bf16.msra.mxu0 0
      %6980 = vmatprep.subr.bf16.mxu0 0
      %6981 = vmatpush1.bf16.msra.mxu0 0
      %6982 = vmatprep.subr.bf16.mxu0 0
      %6983 = vmatpush1.bf16.msra.mxu0 0
      %6984 = vmatprep.subr.bf16.mxu0 0
      %6985 = vmatpush1.bf16.msra.mxu0 0
      %6986 = vmatprep.subr.bf16.mxu0 0
      %6987 = vmatpush1.bf16.msra.mxu0 0
      %6988 = vmatprep.subr.bf16.mxu0 0
      %6989 = vmatpush1.bf16.msra.mxu0 0
      %6990 = vmatprep.mubr.bf16.mxu0 0
      %6991 = vmatmul.mubr.bf16.gmra.mrb[0].mxu0 %v6743
      %v6992 = vpop.f32.mrb[0].mxu0
      %v6993 = vadd.f32 %v6781, %v6992
      %v6994 = vpop.f32.mrb[0].mxu0
      %v6995 = vadd.f32 %v6785, %v6994
      %v6996 = vpop.f32.mrb[0].mxu0
      %v6997 = vpop.f32.mrb[0].mxu0
      %6998 = vdwg.mxu0
      %6999 = vmatprep.subr.bf16.mxu0 %v6897
      %7000 = vmatpush1.bf16.msra.mxu0 %v6896
      %7001 = vmatprep.subr.bf16.mxu0 %v6901
      %7002 = vmatpush1.bf16.msra.mxu0 %v6900
      %7003 = vmatprep.subr.bf16.mxu0 %v6905
      %7004 = vmatpush1.bf16.msra.mxu0 %v6904
      %7005 = vmatprep.subr.bf16.mxu0 %v6909
      %7006 = vmatpush1.bf16.msra.mxu0 %v6908
      %7007 = vmatprep.subr.bf16.mxu0 %v6913
      %7008 = vmatpush1.bf16.msra.mxu0 %v6912
      %7009 = vmatprep.subr.bf16.mxu0 %v6917
      %7010 = vmatpush1.bf16.msra.mxu0 %v6916
      %7011 = vmatprep.subr.bf16.mxu0 %v6921
      %7012 = vmatpush1.bf16.msra.mxu0 %v6920
      %7013 = vmatprep.subr.bf16.mxu0 %v6925
      %7014 = vmatpush1.bf16.msra.mxu0 %v6924
      %7015 = vmatprep.subr.bf16.mxu0 0
      %7016 = vmatpush1.bf16.msra.mxu0 0
      %7017 = vmatprep.subr.bf16.mxu0 0
      %7018 = vmatpush1.bf16.msra.mxu0 0
      %7019 = vmatprep.subr.bf16.mxu0 0
      %7020 = vmatpush1.bf16.msra.mxu0 0
      %7021 = vmatprep.subr.bf16.mxu0 0
      %7022 = vmatpush1.bf16.msra.mxu0 0
      %7023 = vmatprep.subr.bf16.mxu0 0
      %7024 = vmatpush1.bf16.msra.mxu0 0
      %7025 = vmatprep.subr.bf16.mxu0 0
      %7026 = vmatpush1.bf16.msra.mxu0 0
      %7027 = vmatprep.subr.bf16.mxu0 0
      %7028 = vmatpush1.bf16.msra.mxu0 0
      %7029 = vmatprep.subr.bf16.mxu0 0
      %7030 = vmatpush1.bf16.msra.mxu0 0
      %7031 = vmatprep.mubr.bf16.mxu0 0
      %7032 = vmatmul.mubr.bf16.gmra.mrb[0].mxu0 %v6743
      %v7033 = vpop.f32.mrb[0].mxu0
      %v7034 = vadd.f32 %v6789, %v7033
      %v7035 = vpop.f32.mrb[0].mxu0
      %v7036 = vadd.f32 %v6793, %v7035
      %v7037 = vpop.f32.mrb[0].mxu0
      %v7038 = vpop.f32.mrb[0].mxu0
      %7039 = vdwg.mxu0
      %v7040 = vmul.f32 %v6993, 0.5
      %v7041 = vmul.f32 %v6995, 0.5
      %v7042 = vmul.f32 %v7034, 0.5
      %v7043 = vmul.f32 %v7036, 0.5
      %v7044 = vmul.f32 %v6993, 0.70710677
      %v7045 = vmul.f32 %v6995, 0.70710677
      %v7046 = vmul.f32 %v7034, 0.70710677
      %v7047 = vmul.f32 %v7036, 0.70710677
      %v7048 = verf.f32.pop %v7044
      %v7049 = verf.f32.pop %v7045
      %v7050 = verf.f32.pop %v7046
      %v7051 = verf.f32.pop %v7047
      %v7052 = vadd.f32 %v7048, 1.0
      %v7053 = vadd.f32 %v7049, 1.0
      %v7054 = vadd.f32 %v7050, 1.0
      %v7055 = vadd.f32 %v7051, 1.0
      %v7056 = vmul.f32 %v7040, %v7052
      %v7057 = vmul.f32 %v7041, %v7053
      %v7058 = vmul.f32 %v7042, %v7054
      %v7059 = vmul.f32 %v7043, %v7055
      %v7060 = vpack.c.bf16 %v7056, %v7056
      %v7061 = vpack.c.bf16 %v7057, %v7057
      %v7062 = vpack.c.bf16 %v7058, %v7058
      %v7063 = vpack.c.bf16 %v7059, %v7059
      %v7064 = vld [vmem:[%s1042] sm:$0xf]
      %v7065 = vld [vmem:[%s1042 + $0x4] sm:$0xf]
      %v7066 = vld [vmem:[%s1042 + $0x8] sm:$0xf]
      %v7067 = vld [vmem:[%s1042 + $0xc] sm:$0xf]
      %v7068 = vld [vmem:[%s1042 + $0x10] sm:$0xf]
      %v7069 = vld [vmem:[%s1042 + $0x14] sm:$0xf]
      %v7070 = vld [vmem:[%s1042 + $0x18] sm:$0xf]
      %v7071 = vld [vmem:[%s1042 + $0x1c] sm:$0xf]
      %v7072 = vld [vmem:[%s1042 + $0x20] sm:$0xf]
      %v7073 = vld [vmem:[%s1042 + $0x24] sm:$0xf]
      %v7074 = vld [vmem:[%s1042 + $0x28] sm:$0xf]
      %v7075 = vld [vmem:[%s1042 + $0x2c] sm:$0xf]
      %v7076 = vld [vmem:[%s1042 + $0x30] sm:$0xf]
      %v7077 = vld [vmem:[%s1042 + $0x34] sm:$0xf]
      %v7078 = vld [vmem:[%s1042 + $0x38] sm:$0xf]
      %v7079 = vld [vmem:[%s1042 + $0x3c] sm:$0xf]
      %v7080 = vld [vmem:[%s1042 + $0x40] sm:$0xf]
      %v7081 = vld [vmem:[%s1042 + $0x44] sm:$0xf]
      %v7082 = vld [vmem:[%s1042 + $0x48] sm:$0xf]
      %v7083 = vld [vmem:[%s1042 + $0x4c] sm:$0xf]
      %v7084 = vld [vmem:[%s1042 + $0x50] sm:$0xf]
      %v7085 = vld [vmem:[%s1042 + $0x54] sm:$0xf]
      %v7086 = vld [vmem:[%s1042 + $0x58] sm:$0xf]
      %v7087 = vld [vmem:[%s1042 + $0x5c] sm:$0xf]
      %v7088 = vld [vmem:[%s1042 + $0x60] sm:$0xf]
      %v7089 = vld [vmem:[%s1042 + $0x64] sm:$0xf]
      %v7090 = vld [vmem:[%s1042 + $0x68] sm:$0xf]
      %v7091 = vld [vmem:[%s1042 + $0x6c] sm:$0xf]
      %v7092 = vld [vmem:[%s1042 + $0x70] sm:$0xf]
      %v7093 = vld [vmem:[%s1042 + $0x74] sm:$0xf]
      %v7094 = vld [vmem:[%s1042 + $0x78] sm:$0xf]
      %v7095 = vld [vmem:[%s1042 + $0x7c] sm:$0xf]
      %v7096 = vld [vmem:[%s1042 + $0x80] sm:$0xf]
      %v7097 = vld [vmem:[%s1042 + $0x84] sm:$0xf]
      %v7098 = vld [vmem:[%s1042 + $0x88] sm:$0xf]
      %v7099 = vld [vmem:[%s1042 + $0x8c] sm:$0xf]
      %v7100 = vld [vmem:[%s1042 + $0x90] sm:$0xf]
      %v7101 = vld [vmem:[%s1042 + $0x94] sm:$0xf]
      %v7102 = vld [vmem:[%s1042 + $0x98] sm:$0xf]
      %v7103 = vld [vmem:[%s1042 + $0x9c] sm:$0xf]
      %v7104 = vld [vmem:[%s1042 + $0xa0] sm:$0xf]
      %v7105 = vld [vmem:[%s1042 + $0xa4] sm:$0xf]
      %v7106 = vld [vmem:[%s1042 + $0xa8] sm:$0xf]
      %v7107 = vld [vmem:[%s1042 + $0xac] sm:$0xf]
      %v7108 = vld [vmem:[%s1042 + $0xb0] sm:$0xf]
      %v7109 = vld [vmem:[%s1042 + $0xb4] sm:$0xf]
      %v7110 = vld [vmem:[%s1042 + $0xb8] sm:$0xf]
      %v7111 = vld [vmem:[%s1042 + $0xbc] sm:$0xf]
      %v7112 = vld [vmem:[%s1042 + $0xc0] sm:$0xf]
      %v7113 = vld [vmem:[%s1042 + $0xc4] sm:$0xf]
      %v7114 = vld [vmem:[%s1042 + $0xc8] sm:$0xf]
      %v7115 = vld [vmem:[%s1042 + $0xcc] sm:$0xf]
      %v7116 = vld [vmem:[%s1042 + $0xd0] sm:$0xf]
      %v7117 = vld [vmem:[%s1042 + $0xd4] sm:$0xf]
      %v7118 = vld [vmem:[%s1042 + $0xd8] sm:$0xf]
      %v7119 = vld [vmem:[%s1042 + $0xdc] sm:$0xf]
      %v7120 = vld [vmem:[%s1042 + $0xe0] sm:$0xf]
      %v7121 = vld [vmem:[%s1042 + $0xe4] sm:$0xf]
      %v7122 = vld [vmem:[%s1042 + $0xe8] sm:$0xf]
      %v7123 = vld [vmem:[%s1042 + $0xec] sm:$0xf]
      %v7124 = vld [vmem:[%s1042 + $0xf0] sm:$0xf]
      %v7125 = vld [vmem:[%s1042 + $0xf4] sm:$0xf]
      %v7126 = vld [vmem:[%s1042 + $0xf8] sm:$0xf]
      %v7127 = vld [vmem:[%s1042 + $0xfc] sm:$0xf]
      %v7128 = vld [vmem:[%s1045] sm:$0x1]
      %v7130 = vlaneseq
      %v7131 = vshrl.u32 %v7130, 7
      %v7132 = vsub.s32 0, %v7131
      %v7133 = vrot.slane %v7128, %v7132
      %v7199 = vunpack.c.l.b16 %v7064
      %v7200 = vunpack.c.l.b16 %v7065
      %v7201 = vunpack.c.l.b16 %v7066
      %v7202 = vunpack.c.l.b16 %v7067
      %v7203 = vunpack.c.l.b16 %v7068
      %v7204 = vunpack.c.l.b16 %v7069
      %v7205 = vunpack.c.l.b16 %v7070
      %v7206 = vunpack.c.l.b16 %v7071
      %v7207 = vunpack.c.l.b16 %v7072
      %v7208 = vunpack.c.l.b16 %v7073
      %v7209 = vunpack.c.l.b16 %v7074
      %v7210 = vunpack.c.l.b16 %v7075
      %v7211 = vunpack.c.l.b16 %v7076
      %v7212 = vunpack.c.l.b16 %v7077
      %v7213 = vunpack.c.l.b16 %v7078
      %v7214 = vunpack.c.l.b16 %v7079
      %v7215 = vunpack.c.l.b16 %v7080
      %v7216 = vunpack.c.l.b16 %v7081
      %v7217 = vunpack.c.l.b16 %v7082
      %v7218 = vunpack.c.l.b16 %v7083
      %v7219 = vunpack.c.l.b16 %v7084
      %v7220 = vunpack.c.l.b16 %v7085
      %v7221 = vunpack.c.l.b16 %v7086
      %v7222 = vunpack.c.l.b16 %v7087
      %v7223 = vunpack.c.l.b16 %v7088
      %v7224 = vunpack.c.l.b16 %v7089
      %v7225 = vunpack.c.l.b16 %v7090
      %v7226 = vunpack.c.l.b16 %v7091
      %v7227 = vunpack.c.l.b16 %v7092
      %v7228 = vunpack.c.l.b16 %v7093
      %v7229 = vunpack.c.l.b16 %v7094
      %v7230 = vunpack.c.l.b16 %v7095
      %v7231 = vunpack.c.l.b16 %v7096
      %v7232 = vunpack.c.l.b16 %v7097
      %v7233 = vunpack.c.l.b16 %v7098
      %v7234 = vunpack.c.l.b16 %v7099
      %v7235 = vunpack.c.l.b16 %v7100
      %v7236 = vunpack.c.l.b16 %v7101
      %v7237 = vunpack.c.l.b16 %v7102
      %v7238 = vunpack.c.l.b16 %v7103
      %v7239 = vunpack.c.l.b16 %v7104
      %v7240 = vunpack.c.l.b16 %v7105
      %v7241 = vunpack.c.l.b16 %v7106
      %v7242 = vunpack.c.l.b16 %v7107
      %v7243 = vunpack.c.l.b16 %v7108
      %v7244 = vunpack.c.l.b16 %v7109
      %v7245 = vunpack.c.l.b16 %v7110
      %v7246 = vunpack.c.l.b16 %v7111
      %v7247 = vunpack.c.l.b16 %v7112
      %v7248 = vunpack.c.l.b16 %v7113
      %v7249 = vunpack.c.l.b16 %v7114
      %v7250 = vunpack.c.l.b16 %v7115
      %v7251 = vunpack.c.l.b16 %v7116
      %v7252 = vunpack.c.l.b16 %v7117
      %v7253 = vunpack.c.l.b16 %v7118
      %v7254 = vunpack.c.l.b16 %v7119
      %v7255 = vunpack.c.l.b16 %v7120
      %v7256 = vunpack.c.l.b16 %v7121
      %v7257 = vunpack.c.l.b16 %v7122
      %v7258 = vunpack.c.l.b16 %v7123
      %v7259 = vunpack.c.l.b16 %v7124
      %v7260 = vunpack.c.l.b16 %v7125
      %v7261 = vunpack.c.l.b16 %v7126
      %v7262 = vunpack.c.l.b16 %v7127
      %v7263 = vpack.c.b16 %v7200, %v7199
      %v7264 = vpack.c.b16 %v7202, %v7201
      %v7265 = vpack.c.b16 %v7204, %v7203
      %v7266 = vpack.c.b16 %v7206, %v7205
      %v7267 = vpack.c.b16 %v7208, %v7207
      %v7268 = vpack.c.b16 %v7210, %v7209
      %v7269 = vpack.c.b16 %v7212, %v7211
      %v7270 = vpack.c.b16 %v7214, %v7213
      %v7271 = vpack.c.b16 %v7216, %v7215
      %v7272 = vpack.c.b16 %v7218, %v7217
      %v7273 = vpack.c.b16 %v7220, %v7219
      %v7274 = vpack.c.b16 %v7222, %v7221
      %v7275 = vpack.c.b16 %v7224, %v7223
      %v7276 = vpack.c.b16 %v7226, %v7225
      %v7277 = vpack.c.b16 %v7228, %v7227
      %v7278 = vpack.c.b16 %v7230, %v7229
      %v7279 = vpack.c.b16 %v7232, %v7231
      %v7280 = vpack.c.b16 %v7234, %v7233
      %v7281 = vpack.c.b16 %v7236, %v7235
      %v7282 = vpack.c.b16 %v7238, %v7237
      %v7283 = vpack.c.b16 %v7240, %v7239
      %v7284 = vpack.c.b16 %v7242, %v7241
      %v7285 = vpack.c.b16 %v7244, %v7243
      %v7286 = vpack.c.b16 %v7246, %v7245
      %v7287 = vpack.c.b16 %v7248, %v7247
      %v7288 = vpack.c.b16 %v7250, %v7249
      %v7289 = vpack.c.b16 %v7252, %v7251
      %v7290 = vpack.c.b16 %v7254, %v7253
      %v7291 = vpack.c.b16 %v7256, %v7255
      %v7292 = vpack.c.b16 %v7258, %v7257
      %v7293 = vpack.c.b16 %v7260, %v7259
      %v7294 = vpack.c.b16 %v7262, %v7261
      %7327 = vmatprep.subr.bf16.mxu0 0
      %7328 = vmatpush1.bf16.msra.mxu0 %v7263
      %7329 = vmatprep.subr.bf16.mxu0 0
      %7330 = vmatpush1.bf16.msra.mxu0 %v7264
      %7331 = vmatprep.subr.bf16.mxu0 0
      %7332 = vmatpush1.bf16.msra.mxu0 %v7265
      %7333 = vmatprep.subr.bf16.mxu0 0
      %7334 = vmatpush1.bf16.msra.mxu0 %v7266
      %7335 = vmatprep.subr.bf16.mxu0 0
      %7336 = vmatpush1.bf16.msra.mxu0 %v7267
      %7337 = vmatprep.subr.bf16.mxu0 0
      %7338 = vmatpush1.bf16.msra.mxu0 %v7268
      %7339 = vmatprep.subr.bf16.mxu0 0
      %7340 = vmatpush1.bf16.msra.mxu0 %v7269
      %7341 = vmatprep.subr.bf16.mxu0 0
      %7342 = vmatpush1.bf16.msra.mxu0 %v7270
      %7343 = vmatprep.subr.bf16.mxu0 0
      %7344 = vmatpush1.bf16.msra.mxu0 %v7271
      %7345 = vmatprep.subr.bf16.mxu0 0
      %7346 = vmatpush1.bf16.msra.mxu0 %v7272
      %7347 = vmatprep.subr.bf16.mxu0 0
      %7348 = vmatpush1.bf16.msra.mxu0 %v7273
      %7349 = vmatprep.subr.bf16.mxu0 0
      %7350 = vmatpush1.bf16.msra.mxu0 %v7274
      %7351 = vmatprep.subr.bf16.mxu0 0
      %7352 = vmatpush1.bf16.msra.mxu0 %v7275
      %7353 = vmatprep.subr.bf16.mxu0 0
      %7354 = vmatpush1.bf16.msra.mxu0 %v7276
      %7355 = vmatprep.subr.bf16.mxu0 0
      %7356 = vmatpush1.bf16.msra.mxu0 %v7277
      %7357 = vmatprep.subr.bf16.mxu0 0
      %7358 = vmatpush1.bf16.msra.mxu0 %v7278
      %7359 = vmatprep.mubr.bf16.mxu0 %v7061
      %7360 = vmatmul.mubr.bf16.gmra.mrb[0].mxu0 %v7060
      %v7361 = vpop.f32.mrb[0].mxu0
      %v7362 = vadd.f32 %v7133, %v7361
      %v7363 = vpop.f32.mrb[0].mxu0
      %v7364 = vpop.f32.mrb[0].mxu0
      %v7365 = vpop.f32.mrb[0].mxu0
      %7366 = vdwg.mxu0
      %7367 = vmatprep.subr.bf16.mxu0 0
      %7368 = vmatpush1.bf16.msra.mxu0 %v7279
      %7369 = vmatprep.subr.bf16.mxu0 0
      %7370 = vmatpush1.bf16.msra.mxu0 %v7280
      %7371 = vmatprep.subr.bf16.mxu0 0
      %7372 = vmatpush1.bf16.msra.mxu0 %v7281
      %7373 = vmatprep.subr.bf16.mxu0 0
      %7374 = vmatpush1.bf16.msra.mxu0 %v7282
      %7375 = vmatprep.subr.bf16.mxu0 0
      %7376 = vmatpush1.bf16.msra.mxu0 %v7283
      %7377 = vmatprep.subr.bf16.mxu0 0
      %7378 = vmatpush1.bf16.msra.mxu0 %v7284
      %7379 = vmatprep.subr.bf16.mxu0 0
      %7380 = vmatpush1.bf16.msra.mxu0 %v7285
      %7381 = vmatprep.subr.bf16.mxu0 0
      %7382 = vmatpush1.bf16.msra.mxu0 %v7286
      %7383 = vmatprep.subr.bf16.mxu0 0
      %7384 = vmatpush1.bf16.msra.mxu0 %v7287
      %7385 = vmatprep.subr.bf16.mxu0 0
      %7386 = vmatpush1.bf16.msra.mxu0 %v7288
      %7387 = vmatprep.subr.bf16.mxu0 0
      %7388 = vmatpush1.bf16.msra.mxu0 %v7289
      %7389 = vmatprep.subr.bf16.mxu0 0
      %7390 = vmatpush1.bf16.msra.mxu0 %v7290
      %7391 = vmatprep.subr.bf16.mxu0 0
      %7392 = vmatpush1.bf16.msra.mxu0 %v7291
      %7393 = vmatprep.subr.bf16.mxu0 0
      %7394 = vmatpush1.bf16.msra.mxu0 %v7292
      %7395 = vmatprep.subr.bf16.mxu0 0
      %7396 = vmatpush1.bf16.msra.mxu0 %v7293
      %7397 = vmatprep.subr.bf16.mxu0 0
      %7398 = vmatpush1.bf16.msra.mxu0 %v7294
      %7399 = vmatprep.mubr.bf16.mxu0 %v7063
      %7400 = vmatmul.mubr.bf16.gmra.mrb[0].mxu0 %v7062
      %v7401 = vpop.f32.mrb[0].mxu0
      %v7402 = vadd.f32 %v7362, %v7401
      %v7403 = vpop.f32.mrb[0].mxu0
      %v7404 = vpop.f32.mrb[0].mxu0
      %v7405 = vpop.f32.mrb[0].mxu0
      %7406 = vdwg.mxu0
      %v7407 = vadd.f32 %v7402, %v6742
      %v7408 = vld [vmem:[%s1048] sm:$0x1]
      %v7409 = vld [vmem:[%s1051] sm:$0x1]
      %7410 = vadd.xlane.f32.xlu0 %v7407
      %v7411 = vpop.xlane.xlu0 %7410
      %v7412 = vmul.f32 %v7411, %v6719
      %v7413 = vsub.f32 %v7407, %v7412
      %v7414 = vmul.f32 %v7413, %v7413
      %7415 = vadd.xlane.f32.xlu0 %v7414
      %v7416 = vpop.xlane.xlu0 %7415
      %v7417 = vmul.f32 %v7416, %v6719
      %v7418 = vadd.f32 %v7417, 1e-12
      %v7419 = vrsqrt.pop %v7418
      %v7420 = vmul.f32 %v7413, %v7419
      %v7422 = vlaneseq
      %v7423 = vshrl.u32 %v7422, 7
      %v7424 = vsub.s32 0, %v7423
      %v7425 = vrot.slane %v7408, %v7424
      %v7427 = vmul.f32 %v7420, %v7425
      %v7429 = vlaneseq
      %v7430 = vshrl.u32 %v7429, 7
      %v7431 = vsub.s32 0, %v7430
      %v7432 = vrot.slane %v7409, %v7431
      %v7434 = vadd.f32 %v7427, %v7432
      %7435 = vst [vmem:[%s1055] sm:$0xff] %v7434
      %p7436 = scmp.eq.s32.totalorder %s44, 1
      // Predicated region
      $region121: #{qa_model_forward.1} parent=115 // pred_check
        %p7437 = pneg %p7436
      $region122: #{qa_model_forward.1} parent=115 // pred_check_branch
        %7439 = sbr.rel (%p7437) target = $region124
      $region123: #{qa_model_forward.1} parent=115 // pred_region
        %v7440 = vld [vmem:[%s16] sm:$0xff]
        %v7441 = vld [vmem:[%s16 + $0x8] sm:$0xff]
        %v7442 = vld [vmem:[%s16 + $0x10] sm:$0xff]
        %v7443 = vld [vmem:[%s16 + $0x18] sm:$0xff]
        %v7444 = vld [vmem:[%s16 + $0x20] sm:$0xff]
        %v7445 = vld [vmem:[%s16 + $0x28] sm:$0xff]
        %v7446 = vld [vmem:[%s16 + $0x30] sm:$0xff]
        %v7447 = vld [vmem:[%s16 + $0x38] sm:$0xff]
        %v7448 = vld [vmem:[%s16 + $0x40] sm:$0xff]
        %v7449 = vld [vmem:[%s16 + $0x48] sm:$0xff]
        %v7450 = vld [vmem:[%s16 + $0x50] sm:$0xff]
        %v7451 = vld [vmem:[%s16 + $0x58] sm:$0xff]
        %v7452 = vld [vmem:[%s16 + $0x60] sm:$0xff]
        %v7453 = vld [vmem:[%s16 + $0x68] sm:$0xff]
        %v7454 = vld [vmem:[%s16 + $0x70] sm:$0xff]
        %v7455 = vld [vmem:[%s16 + $0x78] sm:$0xff]
        %v7456 = vld [vmem:[%s17] sm:$0x1]
        %7457 = vmatprep.subr.mxu0 0.0
        %7458 = vmatpush1.msra.mxu0 %v7440
        %7459 = vmatprep.subr.mxu0 0.0
        %7460 = vmatpush1.msra.mxu0 %v7441
        %7461 = vmatprep.subr.mxu0 0.0
        %7462 = vmatpush1.msra.mxu0 %v7442
        %7463 = vmatprep.subr.mxu0 0.0
        %7464 = vmatpush1.msra.mxu0 %v7443
        %7465 = vmatprep.subr.mxu0 0.0
        %7466 = vmatpush1.msra.mxu0 %v7444
        %7467 = vmatprep.subr.mxu0 0.0
        %7468 = vmatpush1.msra.mxu0 %v7445
        %7469 = vmatprep.subr.mxu0 0.0
        %7470 = vmatpush1.msra.mxu0 %v7446
        %7471 = vmatprep.subr.mxu0 0.0
        %7472 = vmatpush1.msra.mxu0 %v7447
        %7473 = vmatprep.subr.mxu0 0.0
        %7474 = vmatpush1.msra.mxu0 %v7448
        %7475 = vmatprep.subr.mxu0 0.0
        %7476 = vmatpush1.msra.mxu0 %v7449
        %7477 = vmatprep.subr.mxu0 0.0
        %7478 = vmatpush1.msra.mxu0 %v7450
        %7479 = vmatprep.subr.mxu0 0.0
        %7480 = vmatpush1.msra.mxu0 %v7451
        %7481 = vmatprep.subr.mxu0 0.0
        %7482 = vmatpush1.msra.mxu0 %v7452
        %7483 = vmatprep.subr.mxu0 0.0
        %7484 = vmatpush1.msra.mxu0 %v7453
        %7485 = vmatprep.subr.mxu0 0.0
        %7486 = vmatpush1.msra.mxu0 %v7454
        %7487 = vmatprep.subr.mxu0 0.0
        %7488 = vmatpush1.msra.mxu0 %v7455
        %7489 = vmatprep.subr.mxu0 0.0
        %7490 = vmatpush1.msra.mxu0 0.0
        %7491 = vmatprep.subr.mxu0 0.0
        %7492 = vmatpush1.msra.mxu0 0.0
        %7493 = vmatprep.subr.mxu0 0.0
        %7494 = vmatpush1.msra.mxu0 0.0
        %7495 = vmatprep.subr.mxu0 0.0
        %7496 = vmatpush1.msra.mxu0 0.0
        %7497 = vmatprep.subr.mxu0 0.0
        %7498 = vmatpush1.msra.mxu0 0.0
        %7499 = vmatprep.subr.mxu0 0.0
        %7500 = vmatpush1.msra.mxu0 0.0
        %7501 = vmatprep.subr.mxu0 0.0
        %7502 = vmatpush1.msra.mxu0 0.0
        %7503 = vmatprep.subr.mxu0 0.0
        %7504 = vmatpush1.msra.mxu0 0.0
        %7505 = vmatprep.subr.mxu0 0.0
        %7506 = vmatpush1.msra.mxu0 0.0
        %7507 = vmatprep.subr.mxu0 0.0
        %7508 = vmatpush1.msra.mxu0 0.0
        %7509 = vmatprep.subr.mxu0 0.0
        %7510 = vmatpush1.msra.mxu0 0.0
        %7511 = vmatprep.subr.mxu0 0.0
        %7512 = vmatpush1.msra.mxu0 0.0
        %7513 = vmatprep.subr.mxu0 0.0
        %7514 = vmatpush1.msra.mxu0 0.0
        %7515 = vmatprep.subr.mxu0 0.0
        %7516 = vmatpush1.msra.mxu0 0.0
        %7517 = vmatprep.subr.mxu0 0.0
        %7518 = vmatpush1.msra.mxu0 0.0
        %7519 = vmatprep.subr.mxu0 0.0
        %7520 = vmatpush1.msra.mxu0 0.0
        %7521 = vmatprep.mubr.f32.mxu0 0.0
        %7522 = vmatmul.mubr.f32.gmra.mrb[0].mxu0 %v7434
        %v7523 = vpop.f32.mrb[0].mxu0
        %v7524 = vadd.f32 %v7456, %v7523
        %v7525 = vpop.f32.mrb[0].mxu0
        %7526 = vdwg.mxu0
        %v7527 = vmax.f32 %v7524, 0.0
        %v7528 = vld [vmem:[%s18] sm:$0xff]
        %v7529 = vld [vmem:[%s18 + $0x8] sm:$0xff]
        %v7530 = vld [vmem:[%s18 + $0x10] sm:$0xff]
        %v7531 = vld [vmem:[%s18 + $0x18] sm:$0xff]
        %v7532 = vld [vmem:[%s18 + $0x20] sm:$0xff]
        %v7533 = vld [vmem:[%s18 + $0x28] sm:$0xff]
        %v7534 = vld [vmem:[%s18 + $0x30] sm:$0xff]
        %v7535 = vld [vmem:[%s18 + $0x38] sm:$0xff]
        %v7536 = vld [vmem:[%s19] sm:$0x1]
        %v7538 = vsel %vm3905, %v7527, 0
        %7540 = vmatprep.subr.mxu0 0.0
        %7541 = vmatpush1.msra.mxu0 %v7528
        %7542 = vmatprep.subr.mxu0 0.0
        %7543 = vmatpush1.msra.mxu0 %v7529
        %7544 = vmatprep.subr.mxu0 0.0
        %7545 = vmatpush1.msra.mxu0 %v7530
        %7546 = vmatprep.subr.mxu0 0.0
        %7547 = vmatpush1.msra.mxu0 %v7531
        %7548 = vmatprep.subr.mxu0 0.0
        %7549 = vmatpush1.msra.mxu0 %v7532
        %7550 = vmatprep.subr.mxu0 0.0
        %7551 = vmatpush1.msra.mxu0 %v7533
        %7552 = vmatprep.subr.mxu0 0.0
        %7553 = vmatpush1.msra.mxu0 %v7534
        %7554 = vmatprep.subr.mxu0 0.0
        %7555 = vmatpush1.msra.mxu0 %v7535
        %7556 = vmatprep.subr.mxu0 0.0
        %7557 = vmatpush1.msra.mxu0 0.0
        %7558 = vmatprep.subr.mxu0 0.0
        %7559 = vmatpush1.msra.mxu0 0.0
        %7560 = vmatprep.subr.mxu0 0.0
        %7561 = vmatpush1.msra.mxu0 0.0
        %7562 = vmatprep.subr.mxu0 0.0
        %7563 = vmatpush1.msra.mxu0 0.0
        %7564 = vmatprep.subr.mxu0 0.0
        %7565 = vmatpush1.msra.mxu0 0.0
        %7566 = vmatprep.subr.mxu0 0.0
        %7567 = vmatpush1.msra.mxu0 0.0
        %7568 = vmatprep.subr.mxu0 0.0
        %7569 = vmatpush1.msra.mxu0 0.0
        %7570 = vmatprep.subr.mxu0 0.0
        %7571 = vmatpush1.msra.mxu0 0.0
        %7572 = vmatprep.subr.mxu0 0.0
        %7573 = vmatpush1.msra.mxu0 0.0
        %7574 = vmatprep.subr.mxu0 0.0
        %7575 = vmatpush1.msra.mxu0 0.0
        %7576 = vmatprep.subr.mxu0 0.0
        %7577 = vmatpush1.msra.mxu0 0.0
        %7578 = vmatprep.subr.mxu0 0.0
        %7579 = vmatpush1.msra.mxu0 0.0
        %7580 = vmatprep.subr.mxu0 0.0
        %7581 = vmatpush1.msra.mxu0 0.0
        %7582 = vmatprep.subr.mxu0 0.0
        %7583 = vmatpush1.msra.mxu0 0.0
        %7584 = vmatprep.subr.mxu0 0.0
        %7585 = vmatpush1.msra.mxu0 0.0
        %7586 = vmatprep.subr.mxu0 0.0
        %7587 = vmatpush1.msra.mxu0 0.0
        %7588 = vmatprep.subr.mxu0 0.0
        %7589 = vmatpush1.msra.mxu0 0.0
        %7590 = vmatprep.subr.mxu0 0.0
        %7591 = vmatpush1.msra.mxu0 0.0
        %7592 = vmatprep.subr.mxu0 0.0
        %7593 = vmatpush1.msra.mxu0 0.0
        %7594 = vmatprep.subr.mxu0 0.0
        %7595 = vmatpush1.msra.mxu0 0.0
        %7596 = vmatprep.subr.mxu0 0.0
        %7597 = vmatpush1.msra.mxu0 0.0
        %7598 = vmatprep.subr.mxu0 0.0
        %7599 = vmatpush1.msra.mxu0 0.0
        %7600 = vmatprep.subr.mxu0 0.0
        %7601 = vmatpush1.msra.mxu0 0.0
        %7602 = vmatprep.subr.mxu0 0.0
        %7603 = vmatpush1.msra.mxu0 0.0
        %7604 = vmatprep.mubr.f32.mxu0 0.0
        %7605 = vmatmul.mubr.f32.gmra.mrb[0].mxu0 %v7538
        %v7606 = vpop.f32.mrb[0].mxu0
        %v7607 = vadd.f32 %v7536, %v7606
        %v7608 = vpop.f32.mrb[0].mxu0
        %7609 = vdwg.mxu0
        %v7610 = vmax.f32 %v7607, 0.0
        %v7611 = vld [vmem:[%s20] sm:$0xff]
        %v7612 = vld [vmem:[%s20 + $0x8] sm:$0xff]
        %v7613 = vld [vmem:[%s20 + $0x10] sm:$0xff]
        %v7614 = vld [vmem:[%s20 + $0x18] sm:$0xff]
        %v7615 = vld [vmem:[%s21] sm:$0x1]
        %vm7616 = vcmask 261120
        %v7618 = vsel %vm7616, %v7610, 0
        %7620 = vmatprep.subr.mxu0 0.0
        %7621 = vmatpush1.msra.mxu0 %v7611
        %7622 = vmatprep.subr.mxu0 0.0
        %7623 = vmatpush1.msra.mxu0 %v7612
        %7624 = vmatprep.subr.mxu0 0.0
        %7625 = vmatpush1.msra.mxu0 %v7613
        %7626 = vmatprep.subr.mxu0 0.0
        %7627 = vmatpush1.msra.mxu0 %v7614
        %7628 = vmatprep.subr.mxu0 0.0
        %7629 = vmatpush1.msra.mxu0 0.0
        %7630 = vmatprep.subr.mxu0 0.0
        %7631 = vmatpush1.msra.mxu0 0.0
        %7632 = vmatprep.subr.mxu0 0.0
        %7633 = vmatpush1.msra.mxu0 0.0
        %7634 = vmatprep.subr.mxu0 0.0
        %7635 = vmatpush1.msra.mxu0 0.0
        %7636 = vmatprep.subr.mxu0 0.0
        %7637 = vmatpush1.msra.mxu0 0.0
        %7638 = vmatprep.subr.mxu0 0.0
        %7639 = vmatpush1.msra.mxu0 0.0
        %7640 = vmatprep.subr.mxu0 0.0
        %7641 = vmatpush1.msra.mxu0 0.0
        %7642 = vmatprep.subr.mxu0 0.0
        %7643 = vmatpush1.msra.mxu0 0.0
        %7644 = vmatprep.subr.mxu0 0.0
        %7645 = vmatpush1.msra.mxu0 0.0
        %7646 = vmatprep.subr.mxu0 0.0
        %7647 = vmatpush1.msra.mxu0 0.0
        %7648 = vmatprep.subr.mxu0 0.0
        %7649 = vmatpush1.msra.mxu0 0.0
        %7650 = vmatprep.subr.mxu0 0.0
        %7651 = vmatpush1.msra.mxu0 0.0
        %7652 = vmatprep.subr.mxu0 0.0
        %7653 = vmatpush1.msra.mxu0 0.0
        %7654 = vmatprep.subr.mxu0 0.0
        %7655 = vmatpush1.msra.mxu0 0.0
        %7656 = vmatprep.subr.mxu0 0.0
        %7657 = vmatpush1.msra.mxu0 0.0
        %7658 = vmatprep.subr.mxu0 0.0
        %7659 = vmatpush1.msra.mxu0 0.0
        %7660 = vmatprep.subr.mxu0 0.0
        %7661 = vmatpush1.msra.mxu0 0.0
        %7662 = vmatprep.subr.mxu0 0.0
        %7663 = vmatpush1.msra.mxu0 0.0
        %7664 = vmatprep.subr.mxu0 0.0
        %7665 = vmatpush1.msra.mxu0 0.0
        %7666 = vmatprep.subr.mxu0 0.0
        %7667 = vmatpush1.msra.mxu0 0.0
        %7668 = vmatprep.subr.mxu0 0.0
        %7669 = vmatpush1.msra.mxu0 0.0
        %7670 = vmatprep.subr.mxu0 0.0
        %7671 = vmatpush1.msra.mxu0 0.0
        %7672 = vmatprep.subr.mxu0 0.0
        %7673 = vmatpush1.msra.mxu0 0.0
        %7674 = vmatprep.subr.mxu0 0.0
        %7675 = vmatpush1.msra.mxu0 0.0
        %7676 = vmatprep.subr.mxu0 0.0
        %7677 = vmatpush1.msra.mxu0 0.0
        %7678 = vmatprep.subr.mxu0 0.0
        %7679 = vmatpush1.msra.mxu0 0.0
        %7680 = vmatprep.subr.mxu0 0.0
        %7681 = vmatpush1.msra.mxu0 0.0
        %7682 = vmatprep.subr.mxu0 0.0
        %7683 = vmatpush1.msra.mxu0 0.0
        %7684 = vmatprep.mubr.f32.mxu0 0.0
        %7685 = vmatmul.mubr.f32.gmra.mrb[0].mxu0 %v7618
        %v7686 = vpop.f32.mrb[0].mxu0
        %v7687 = vadd.f32 %v7615, %v7686
        %v7688 = vpop.f32.mrb[0].mxu0
        %7689 = vdwg.mxu0
        %v7690 = vmax.f32 %v7687, 0.0
        %v7691 = vld [vmem:[%s22] sm:$0xff]
        %v7692 = vld [vmem:[%s22 + $0x8] sm:$0xff]
        %v7693 = vld [vmem:[%s23] sm:$0x1]
        %vm7694 = vcmask 130048
        %v7696 = vsel %vm7694, %v7690, 0
        %7698 = vmatprep.subr.mxu0 0.0
        %7699 = vmatpush1.msra.mxu0 %v7691
        %7700 = vmatprep.subr.mxu0 0.0
        %7701 = vmatpush1.msra.mxu0 %v7692
        %7702 = vmatprep.subr.mxu0 0.0
        %7703 = vmatpush1.msra.mxu0 0.0
        %7704 = vmatprep.subr.mxu0 0.0
        %7705 = vmatpush1.msra.mxu0 0.0
        %7706 = vmatprep.subr.mxu0 0.0
        %7707 = vmatpush1.msra.mxu0 0.0
        %7708 = vmatprep.subr.mxu0 0.0
        %7709 = vmatpush1.msra.mxu0 0.0
        %7710 = vmatprep.subr.mxu0 0.0
        %7711 = vmatpush1.msra.mxu0 0.0
        %7712 = vmatprep.subr.mxu0 0.0
        %7713 = vmatpush1.msra.mxu0 0.0
        %7714 = vmatprep.subr.mxu0 0.0
        %7715 = vmatpush1.msra.mxu0 0.0
        %7716 = vmatprep.subr.mxu0 0.0
        %7717 = vmatpush1.msra.mxu0 0.0
        %7718 = vmatprep.subr.mxu0 0.0
        %7719 = vmatpush1.msra.mxu0 0.0
        %7720 = vmatprep.subr.mxu0 0.0
        %7721 = vmatpush1.msra.mxu0 0.0
        %7722 = vmatprep.subr.mxu0 0.0
        %7723 = vmatpush1.msra.mxu0 0.0
        %7724 = vmatprep.subr.mxu0 0.0
        %7725 = vmatpush1.msra.mxu0 0.0
        %7726 = vmatprep.subr.mxu0 0.0
        %7727 = vmatpush1.msra.mxu0 0.0
        %7728 = vmatprep.subr.mxu0 0.0
        %7729 = vmatpush1.msra.mxu0 0.0
        %7730 = vmatprep.subr.mxu0 0.0
        %7731 = vmatpush1.msra.mxu0 0.0
        %7732 = vmatprep.subr.mxu0 0.0
        %7733 = vmatpush1.msra.mxu0 0.0
        %7734 = vmatprep.subr.mxu0 0.0
        %7735 = vmatpush1.msra.mxu0 0.0
        %7736 = vmatprep.subr.mxu0 0.0
        %7737 = vmatpush1.msra.mxu0 0.0
        %7738 = vmatprep.subr.mxu0 0.0
        %7739 = vmatpush1.msra.mxu0 0.0
        %7740 = vmatprep.subr.mxu0 0.0
        %7741 = vmatpush1.msra.mxu0 0.0
        %7742 = vmatprep.subr.mxu0 0.0
        %7743 = vmatpush1.msra.mxu0 0.0
        %7744 = vmatprep.subr.mxu0 0.0
        %7745 = vmatpush1.msra.mxu0 0.0
        %7746 = vmatprep.subr.mxu0 0.0
        %7747 = vmatpush1.msra.mxu0 0.0
        %7748 = vmatprep.subr.mxu0 0.0
        %7749 = vmatpush1.msra.mxu0 0.0
        %7750 = vmatprep.subr.mxu0 0.0
        %7751 = vmatpush1.msra.mxu0 0.0
        %7752 = vmatprep.subr.mxu0 0.0
        %7753 = vmatpush1.msra.mxu0 0.0
        %7754 = vmatprep.subr.mxu0 0.0
        %7755 = vmatpush1.msra.mxu0 0.0
        %7756 = vmatprep.subr.mxu0 0.0
        %7757 = vmatpush1.msra.mxu0 0.0
        %7758 = vmatprep.subr.mxu0 0.0
        %7759 = vmatpush1.msra.mxu0 0.0
        %7760 = vmatprep.subr.mxu0 0.0
        %7761 = vmatpush1.msra.mxu0 0.0
        %7762 = vmatprep.mubr.f32.mxu0 0.0
        %7763 = vmatmul.mubr.f32.gmra.mrb[0].mxu0 %v7696
        %v7764 = vpop.f32.mrb[0].mxu0
        %v7765 = vadd.f32 %v7693, %v7764
        %v7766 = vpop.f32.mrb[0].mxu0
        %7767 = vdwg.mxu0
        %vm7768 = vcmask 0
        %7769 = vst.msk [vmem:[%s1058] sm:$0x1] %vm7768, %v7765
        %s7770 = scalar_lea.vmem %s16, 128
        %v7771 = vld [vmem:[%s7770] sm:$0xff]
        %v7772 = vld [vmem:[%s7770 + $0x8] sm:$0xff]
        %v7773 = vld [vmem:[%s7770 + $0x10] sm:$0xff]
        %v7774 = vld [vmem:[%s7770 + $0x18] sm:$0xff]
        %v7775 = vld [vmem:[%s7770 + $0x20] sm:$0xff]
        %v7776 = vld [vmem:[%s7770 + $0x28] sm:$0xff]
        %v7777 = vld [vmem:[%s7770 + $0x30] sm:$0xff]
        %v7778 = vld [vmem:[%s7770 + $0x38] sm:$0xff]
        %v7779 = vld [vmem:[%s7770 + $0x40] sm:$0xff]
        %v7780 = vld [vmem:[%s7770 + $0x48] sm:$0xff]
        %v7781 = vld [vmem:[%s7770 + $0x50] sm:$0xff]
        %v7782 = vld [vmem:[%s7770 + $0x58] sm:$0xff]
        %v7783 = vld [vmem:[%s7770 + $0x60] sm:$0xff]
        %v7784 = vld [vmem:[%s7770 + $0x68] sm:$0xff]
        %v7785 = vld [vmem:[%s7770 + $0x70] sm:$0xff]
        %v7786 = vld [vmem:[%s7770 + $0x78] sm:$0xff]
        %s7787 = scalar_lea.vmem %s17, 1
        %v7788 = vld [vmem:[%s7787] sm:$0x1]
        %v7790 = vlaneseq
        %v7791 = vshrl.u32 %v7790, 7
        %v7792 = vsub.s32 0, %v7791
        %v7793 = vrot.slane %v7788, %v7792
        %v7796 = vrot.slane %v7434, 1
        %7798 = vmatprep.subr.mxu0 0.0
        %7799 = vmatpush1.msra.mxu0 %v7771
        %7800 = vmatprep.subr.mxu0 0.0
        %7801 = vmatpush1.msra.mxu0 %v7772
        %7802 = vmatprep.subr.mxu0 0.0
        %7803 = vmatpush1.msra.mxu0 %v7773
        %7804 = vmatprep.subr.mxu0 0.0
        %7805 = vmatpush1.msra.mxu0 %v7774
        %7806 = vmatprep.subr.mxu0 0.0
        %7807 = vmatpush1.msra.mxu0 %v7775
        %7808 = vmatprep.subr.mxu0 0.0
        %7809 = vmatpush1.msra.mxu0 %v7776
        %7810 = vmatprep.subr.mxu0 0.0
        %7811 = vmatpush1.msra.mxu0 %v7777
        %7812 = vmatprep.subr.mxu0 0.0
        %7813 = vmatpush1.msra.mxu0 %v7778
        %7814 = vmatprep.subr.mxu0 0.0
        %7815 = vmatpush1.msra.mxu0 %v7779
        %7816 = vmatprep.subr.mxu0 0.0
        %7817 = vmatpush1.msra.mxu0 %v7780
        %7818 = vmatprep.subr.mxu0 0.0
        %7819 = vmatpush1.msra.mxu0 %v7781
        %7820 = vmatprep.subr.mxu0 0.0
        %7821 = vmatpush1.msra.mxu0 %v7782
        %7822 = vmatprep.subr.mxu0 0.0
        %7823 = vmatpush1.msra.mxu0 %v7783
        %7824 = vmatprep.subr.mxu0 0.0
        %7825 = vmatpush1.msra.mxu0 %v7784
        %7826 = vmatprep.subr.mxu0 0.0
        %7827 = vmatpush1.msra.mxu0 %v7785
        %7828 = vmatprep.subr.mxu0 0.0
        %7829 = vmatpush1.msra.mxu0 %v7786
        %7830 = vmatprep.subr.mxu0 0.0
        %7831 = vmatpush1.msra.mxu0 0.0
        %7832 = vmatprep.subr.mxu0 0.0
        %7833 = vmatpush1.msra.mxu0 0.0
        %7834 = vmatprep.subr.mxu0 0.0
        %7835 = vmatpush1.msra.mxu0 0.0
        %7836 = vmatprep.subr.mxu0 0.0
        %7837 = vmatpush1.msra.mxu0 0.0
        %7838 = vmatprep.subr.mxu0 0.0
        %7839 = vmatpush1.msra.mxu0 0.0
        %7840 = vmatprep.subr.mxu0 0.0
        %7841 = vmatpush1.msra.mxu0 0.0
        %7842 = vmatprep.subr.mxu0 0.0
        %7843 = vmatpush1.msra.mxu0 0.0
        %7844 = vmatprep.subr.mxu0 0.0
        %7845 = vmatpush1.msra.mxu0 0.0
        %7846 = vmatprep.subr.mxu0 0.0
        %7847 = vmatpush1.msra.mxu0 0.0
        %7848 = vmatprep.subr.mxu0 0.0
        %7849 = vmatpush1.msra.mxu0 0.0
        %7850 = vmatprep.subr.mxu0 0.0
        %7851 = vmatpush1.msra.mxu0 0.0
        %7852 = vmatprep.subr.mxu0 0.0
        %7853 = vmatpush1.msra.mxu0 0.0
        %7854 = vmatprep.subr.mxu0 0.0
        %7855 = vmatpush1.msra.mxu0 0.0
        %7856 = vmatprep.subr.mxu0 0.0
        %7857 = vmatpush1.msra.mxu0 0.0
        %7858 = vmatprep.subr.mxu0 0.0
        %7859 = vmatpush1.msra.mxu0 0.0
        %7860 = vmatprep.subr.mxu0 0.0
        %7861 = vmatpush1.msra.mxu0 0.0
        %7862 = vmatprep.mubr.f32.mxu0 0.0
        %7863 = vmatmul.mubr.f32.gmra.mrb[0].mxu0 %v7796
        %v7864 = vpop.f32.mrb[0].mxu0
        %v7865 = vadd.f32 %v7793, %v7864
        %v7866 = vpop.f32.mrb[0].mxu0
        %7867 = vdwg.mxu0
        %v7868 = vmax.f32 %v7865, 0.0
        %s7869 = scalar_lea.vmem %s18, 64
        %v7870 = vld [vmem:[%s7869] sm:$0xff]
        %v7871 = vld [vmem:[%s7869 + $0x8] sm:$0xff]
        %v7872 = vld [vmem:[%s7869 + $0x10] sm:$0xff]
        %v7873 = vld [vmem:[%s7869 + $0x18] sm:$0xff]
        %v7874 = vld [vmem:[%s7869 + $0x20] sm:$0xff]
        %v7875 = vld [vmem:[%s7869 + $0x28] sm:$0xff]
        %v7876 = vld [vmem:[%s7869 + $0x30] sm:$0xff]
        %v7877 = vld [vmem:[%s7869 + $0x38] sm:$0xff]
        %s7878 = scalar_lea.vmem %s19, 1
        %v7879 = vld [vmem:[%s7878] sm:$0x1]
        %v7881 = vlaneseq
        %v7882 = vshrl.u32 %v7881, 7
        %v7883 = vsub.s32 0, %v7882
        %v7884 = vrot.slane %v7879, %v7883
        %v7887 = vsel %vm3905, %v7868, 0
        %7889 = vmatprep.subr.mxu0 0.0
        %7890 = vmatpush1.msra.mxu0 %v7870
        %7891 = vmatprep.subr.mxu0 0.0
        %7892 = vmatpush1.msra.mxu0 %v7871
        %7893 = vmatprep.subr.mxu0 0.0
        %7894 = vmatpush1.msra.mxu0 %v7872
        %7895 = vmatprep.subr.mxu0 0.0
        %7896 = vmatpush1.msra.mxu0 %v7873
        %7897 = vmatprep.subr.mxu0 0.0
        %7898 = vmatpush1.msra.mxu0 %v7874
        %7899 = vmatprep.subr.mxu0 0.0
        %7900 = vmatpush1.msra.mxu0 %v7875
        %7901 = vmatprep.subr.mxu0 0.0
        %7902 = vmatpush1.msra.mxu0 %v7876
        %7903 = vmatprep.subr.mxu0 0.0
        %7904 = vmatpush1.msra.mxu0 %v7877
        %7905 = vmatprep.subr.mxu0 0.0
        %7906 = vmatpush1.msra.mxu0 0.0
        %7907 = vmatprep.subr.mxu0 0.0
        %7908 = vmatpush1.msra.mxu0 0.0
        %7909 = vmatprep.subr.mxu0 0.0
        %7910 = vmatpush1.msra.mxu0 0.0
        %7911 = vmatprep.subr.mxu0 0.0
        %7912 = vmatpush1.msra.mxu0 0.0
        %7913 = vmatprep.subr.mxu0 0.0
        %7914 = vmatpush1.msra.mxu0 0.0
        %7915 = vmatprep.subr.mxu0 0.0
        %7916 = vmatpush1.msra.mxu0 0.0
        %7917 = vmatprep.subr.mxu0 0.0
        %7918 = vmatpush1.msra.mxu0 0.0
        %7919 = vmatprep.subr.mxu0 0.0
        %7920 = vmatpush1.msra.mxu0 0.0
        %7921 = vmatprep.subr.mxu0 0.0
        %7922 = vmatpush1.msra.mxu0 0.0
        %7923 = vmatprep.subr.mxu0 0.0
        %7924 = vmatpush1.msra.mxu0 0.0
        %7925 = vmatprep.subr.mxu0 0.0
        %7926 = vmatpush1.msra.mxu0 0.0
        %7927 = vmatprep.subr.mxu0 0.0
        %7928 = vmatpush1.msra.mxu0 0.0
        %7929 = vmatprep.subr.mxu0 0.0
        %7930 = vmatpush1.msra.mxu0 0.0
        %7931 = vmatprep.subr.mxu0 0.0
        %7932 = vmatpush1.msra.mxu0 0.0
        %7933 = vmatprep.subr.mxu0 0.0
        %7934 = vmatpush1.msra.mxu0 0.0
        %7935 = vmatprep.subr.mxu0 0.0
        %7936 = vmatpush1.msra.mxu0 0.0
        %7937 = vmatprep.subr.mxu0 0.0
        %7938 = vmatpush1.msra.mxu0 0.0
        %7939 = vmatprep.subr.mxu0 0.0
        %7940 = vmatpush1.msra.mxu0 0.0
        %7941 = vmatprep.subr.mxu0 0.0
        %7942 = vmatpush1.msra.mxu0 0.0
        %7943 = vmatprep.subr.mxu0 0.0
        %7944 = vmatpush1.msra.mxu0 0.0
        %7945 = vmatprep.subr.mxu0 0.0
        %7946 = vmatpush1.msra.mxu0 0.0
        %7947 = vmatprep.subr.mxu0 0.0
        %7948 = vmatpush1.msra.mxu0 0.0
        %7949 = vmatprep.subr.mxu0 0.0
        %7950 = vmatpush1.msra.mxu0 0.0
        %7951 = vmatprep.subr.mxu0 0.0
        %7952 = vmatpush1.msra.mxu0 0.0
        %7953 = vmatprep.mubr.f32.mxu0 0.0
        %7954 = vmatmul.mubr.f32.gmra.mrb[0].mxu0 %v7887
        %v7955 = vpop.f32.mrb[0].mxu0
        %v7956 = vadd.f32 %v7884, %v7955
        %v7957 = vpop.f32.mrb[0].mxu0
        %7958 = vdwg.mxu0
        %v7959 = vmax.f32 %v7956, 0.0
        %s7960 = scalar_lea.vmem %s20, 32
        %v7961 = vld [vmem:[%s7960] sm:$0xff]
        %v7962 = vld [vmem:[%s7960 + $0x8] sm:$0xff]
        %v7963 = vld [vmem:[%s7960 + $0x10] sm:$0xff]
        %v7964 = vld [vmem:[%s7960 + $0x18] sm:$0xff]
        %s7965 = scalar_lea.vmem %s21, 1
        %v7966 = vld [vmem:[%s7965] sm:$0x1]
        %v7968 = vlaneseq
        %v7969 = vshrl.u32 %v7968, 7
        %v7970 = vsub.s32 0, %v7969
        %v7971 = vrot.slane %v7966, %v7970
        %v7974 = vsel %vm7616, %v7959, 0
        %7976 = vmatprep.subr.mxu0 0.0
        %7977 = vmatpush1.msra.mxu0 %v7961
        %7978 = vmatprep.subr.mxu0 0.0
        %7979 = vmatpush1.msra.mxu0 %v7962
        %7980 = vmatprep.subr.mxu0 0.0
        %7981 = vmatpush1.msra.mxu0 %v7963
        %7982 = vmatprep.subr.mxu0 0.0
        %7983 = vmatpush1.msra.mxu0 %v7964
        %7984 = vmatprep.subr.mxu0 0.0
        %7985 = vmatpush1.msra.mxu0 0.0
        %7986 = vmatprep.subr.mxu0 0.0
        %7987 = vmatpush1.msra.mxu0 0.0
        %7988 = vmatprep.subr.mxu0 0.0
        %7989 = vmatpush1.msra.mxu0 0.0
        %7990 = vmatprep.subr.mxu0 0.0
        %7991 = vmatpush1.msra.mxu0 0.0
        %7992 = vmatprep.subr.mxu0 0.0
        %7993 = vmatpush1.msra.mxu0 0.0
        %7994 = vmatprep.subr.mxu0 0.0
        %7995 = vmatpush1.msra.mxu0 0.0
        %7996 = vmatprep.subr.mxu0 0.0
        %7997 = vmatpush1.msra.mxu0 0.0
        %7998 = vmatprep.subr.mxu0 0.0
        %7999 = vmatpush1.msra.mxu0 0.0
        %8000 = vmatprep.subr.mxu0 0.0
        %8001 = vmatpush1.msra.mxu0 0.0
        %8002 = vmatprep.subr.mxu0 0.0
        %8003 = vmatpush1.msra.mxu0 0.0
        %8004 = vmatprep.subr.mxu0 0.0
        %8005 = vmatpush1.msra.mxu0 0.0
        %8006 = vmatprep.subr.mxu0 0.0
        %8007 = vmatpush1.msra.mxu0 0.0
        %8008 = vmatprep.subr.mxu0 0.0
        %8009 = vmatpush1.msra.mxu0 0.0
        %8010 = vmatprep.subr.mxu0 0.0
        %8011 = vmatpush1.msra.mxu0 0.0
        %8012 = vmatprep.subr.mxu0 0.0
        %8013 = vmatpush1.msra.mxu0 0.0
        %8014 = vmatprep.subr.mxu0 0.0
        %8015 = vmatpush1.msra.mxu0 0.0
        %8016 = vmatprep.subr.mxu0 0.0
        %8017 = vmatpush1.msra.mxu0 0.0
        %8018 = vmatprep.subr.mxu0 0.0
        %8019 = vmatpush1.msra.mxu0 0.0
        %8020 = vmatprep.subr.mxu0 0.0
        %8021 = vmatpush1.msra.mxu0 0.0
        %8022 = vmatprep.subr.mxu0 0.0
        %8023 = vmatpush1.msra.mxu0 0.0
        %8024 = vmatprep.subr.mxu0 0.0
        %8025 = vmatpush1.msra.mxu0 0.0
        %8026 = vmatprep.subr.mxu0 0.0
        %8027 = vmatpush1.msra.mxu0 0.0
        %8028 = vmatprep.subr.mxu0 0.0
        %8029 = vmatpush1.msra.mxu0 0.0
        %8030 = vmatprep.subr.mxu0 0.0
        %8031 = vmatpush1.msra.mxu0 0.0
        %8032 = vmatprep.subr.mxu0 0.0
        %8033 = vmatpush1.msra.mxu0 0.0
        %8034 = vmatprep.subr.mxu0 0.0
        %8035 = vmatpush1.msra.mxu0 0.0
        %8036 = vmatprep.subr.mxu0 0.0
        %8037 = vmatpush1.msra.mxu0 0.0
        %8038 = vmatprep.subr.mxu0 0.0
        %8039 = vmatpush1.msra.mxu0 0.0
        %8040 = vmatprep.mubr.f32.mxu0 0.0
        %8041 = vmatmul.mubr.f32.gmra.mrb[0].mxu0 %v7974
        %v8042 = vpop.f32.mrb[0].mxu0
        %v8043 = vadd.f32 %v7971, %v8042
        %v8044 = vpop.f32.mrb[0].mxu0
        %8045 = vdwg.mxu0
        %v8046 = vmax.f32 %v8043, 0.0
        %s8047 = scalar_lea.vmem %s22, 16
        %v8048 = vld [vmem:[%s8047] sm:$0xff]
        %v8049 = vld [vmem:[%s8047 + $0x8] sm:$0xff]
        %s8050 = scalar_lea.vmem %s23, 1
        %v8051 = vld [vmem:[%s8050] sm:$0x1]
        %v8053 = vlaneseq
        %v8054 = vshrl.u32 %v8053, 7
        %v8055 = vsub.s32 0, %v8054
        %v8056 = vrot.slane %v8051, %v8055
        %v8059 = vsel %vm7694, %v8046, 0
        %8061 = vmatprep.subr.mxu0 0.0
        %8062 = vmatpush1.msra.mxu0 %v8048
        %8063 = vmatprep.subr.mxu0 0.0
        %8064 = vmatpush1.msra.mxu0 %v8049
        %8065 = vmatprep.subr.mxu0 0.0
        %8066 = vmatpush1.msra.mxu0 0.0
        %8067 = vmatprep.subr.mxu0 0.0
        %8068 = vmatpush1.msra.mxu0 0.0
        %8069 = vmatprep.subr.mxu0 0.0
        %8070 = vmatpush1.msra.mxu0 0.0
        %8071 = vmatprep.subr.mxu0 0.0
        %8072 = vmatpush1.msra.mxu0 0.0
        %8073 = vmatprep.subr.mxu0 0.0
        %8074 = vmatpush1.msra.mxu0 0.0
        %8075 = vmatprep.subr.mxu0 0.0
        %8076 = vmatpush1.msra.mxu0 0.0
        %8077 = vmatprep.subr.mxu0 0.0
        %8078 = vmatpush1.msra.mxu0 0.0
        %8079 = vmatprep.subr.mxu0 0.0
        %8080 = vmatpush1.msra.mxu0 0.0
        %8081 = vmatprep.subr.mxu0 0.0
        %8082 = vmatpush1.msra.mxu0 0.0
        %8083 = vmatprep.subr.mxu0 0.0
        %8084 = vmatpush1.msra.mxu0 0.0
        %8085 = vmatprep.subr.mxu0 0.0
        %8086 = vmatpush1.msra.mxu0 0.0
        %8087 = vmatprep.subr.mxu0 0.0
        %8088 = vmatpush1.msra.mxu0 0.0
        %8089 = vmatprep.subr.mxu0 0.0
        %8090 = vmatpush1.msra.mxu0 0.0
        %8091 = vmatprep.subr.mxu0 0.0
        %8092 = vmatpush1.msra.mxu0 0.0
        %8093 = vmatprep.subr.mxu0 0.0
        %8094 = vmatpush1.msra.mxu0 0.0
        %8095 = vmatprep.subr.mxu0 0.0
        %8096 = vmatpush1.msra.mxu0 0.0
        %8097 = vmatprep.subr.mxu0 0.0
        %8098 = vmatpush1.msra.mxu0 0.0
        %8099 = vmatprep.subr.mxu0 0.0
        %8100 = vmatpush1.msra.mxu0 0.0
        %8101 = vmatprep.subr.mxu0 0.0
        %8102 = vmatpush1.msra.mxu0 0.0
        %8103 = vmatprep.subr.mxu0 0.0
        %8104 = vmatpush1.msra.mxu0 0.0
        %8105 = vmatprep.subr.mxu0 0.0
        %8106 = vmatpush1.msra.mxu0 0.0
        %8107 = vmatprep.subr.mxu0 0.0
        %8108 = vmatpush1.msra.mxu0 0.0
        %8109 = vmatprep.subr.mxu0 0.0
        %8110 = vmatpush1.msra.mxu0 0.0
        %8111 = vmatprep.subr.mxu0 0.0
        %8112 = vmatpush1.msra.mxu0 0.0
        %8113 = vmatprep.subr.mxu0 0.0
        %8114 = vmatpush1.msra.mxu0 0.0
        %8115 = vmatprep.subr.mxu0 0.0
        %8116 = vmatpush1.msra.mxu0 0.0
        %8117 = vmatprep.subr.mxu0 0.0
        %8118 = vmatpush1.msra.mxu0 0.0
        %8119 = vmatprep.subr.mxu0 0.0
        %8120 = vmatpush1.msra.mxu0 0.0
        %8121 = vmatprep.subr.mxu0 0.0
        %8122 = vmatpush1.msra.mxu0 0.0
        %8123 = vmatprep.subr.mxu0 0.0
        %8124 = vmatpush1.msra.mxu0 0.0
        %8125 = vmatprep.mubr.f32.mxu0 0.0
        %8126 = vmatmul.mubr.f32.gmra.mrb[0].mxu0 %v8059
        %v8127 = vpop.f32.mrb[0].mxu0
        %v8128 = vadd.f32 %v8056, %v8127
        %v8129 = vpop.f32.mrb[0].mxu0
        %8130 = vdwg.mxu0
        %vm8131 = vcmask 5120
        %8132 = vst.msk [vmem:[%s1062] sm:$0x3f] %vm8131, %v8128
        %s8133 = scalar_lea.vmem %s16, 256
        %v8134 = vld [vmem:[%s8133] sm:$0xff]
        %v8135 = vld [vmem:[%s8133 + $0x8] sm:$0xff]
        %v8136 = vld [vmem:[%s8133 + $0x10] sm:$0xff]
        %v8137 = vld [vmem:[%s8133 + $0x18] sm:$0xff]
        %v8138 = vld [vmem:[%s8133 + $0x20] sm:$0xff]
        %v8139 = vld [vmem:[%s8133 + $0x28] sm:$0xff]
        %v8140 = vld [vmem:[%s8133 + $0x30] sm:$0xff]
        %v8141 = vld [vmem:[%s8133 + $0x38] sm:$0xff]
        %v8142 = vld [vmem:[%s8133 + $0x40] sm:$0xff]
        %v8143 = vld [vmem:[%s8133 + $0x48] sm:$0xff]
        %v8144 = vld [vmem:[%s8133 + $0x50] sm:$0xff]
        %v8145 = vld [vmem:[%s8133 + $0x58] sm:$0xff]
        %v8146 = vld [vmem:[%s8133 + $0x60] sm:$0xff]
        %v8147 = vld [vmem:[%s8133 + $0x68] sm:$0xff]
        %v8148 = vld [vmem:[%s8133 + $0x70] sm:$0xff]
        %v8149 = vld [vmem:[%s8133 + $0x78] sm:$0xff]
        %s8150 = scalar_lea.vmem %s17, 2
        %v8151 = vld [vmem:[%s8150] sm:$0x1]
        %v8153 = vlaneseq
        %v8154 = vshrl.u32 %v8153, 7
        %v8155 = vsub.s32 0, %v8154
        %v8156 = vrot.slane %v8151, %v8155
        %8158 = vmatprep.subr.mxu0 0.0
        %8159 = vmatpush1.msra.mxu0 %v8134
        %8160 = vmatprep.subr.mxu0 0.0
        %8161 = vmatpush1.msra.mxu0 %v8135
        %8162 = vmatprep.subr.mxu0 0.0
        %8163 = vmatpush1.msra.mxu0 %v8136
        %8164 = vmatprep.subr.mxu0 0.0
        %8165 = vmatpush1.msra.mxu0 %v8137
        %8166 = vmatprep.subr.mxu0 0.0
        %8167 = vmatpush1.msra.mxu0 %v8138
        %8168 = vmatprep.subr.mxu0 0.0
        %8169 = vmatpush1.msra.mxu0 %v8139
        %8170 = vmatprep.subr.mxu0 0.0
        %8171 = vmatpush1.msra.mxu0 %v8140
        %8172 = vmatprep.subr.mxu0 0.0
        %8173 = vmatpush1.msra.mxu0 %v8141
        %8174 = vmatprep.subr.mxu0 0.0
        %8175 = vmatpush1.msra.mxu0 %v8142
        %8176 = vmatprep.subr.mxu0 0.0
        %8177 = vmatpush1.msra.mxu0 %v8143
        %8178 = vmatprep.subr.mxu0 0.0
        %8179 = vmatpush1.msra.mxu0 %v8144
        %8180 = vmatprep.subr.mxu0 0.0
        %8181 = vmatpush1.msra.mxu0 %v8145
        %8182 = vmatprep.subr.mxu0 0.0
        %8183 = vmatpush1.msra.mxu0 %v8146
        %8184 = vmatprep.subr.mxu0 0.0
        %8185 = vmatpush1.msra.mxu0 %v8147
        %8186 = vmatprep.subr.mxu0 0.0
        %8187 = vmatpush1.msra.mxu0 %v8148
        %8188 = vmatprep.subr.mxu0 0.0
        %8189 = vmatpush1.msra.mxu0 %v8149
        %8190 = vmatprep.subr.mxu0 0.0
        %8191 = vmatpush1.msra.mxu0 0.0
        %8192 = vmatprep.subr.mxu0 0.0
        %8193 = vmatpush1.msra.mxu0 0.0
        %8194 = vmatprep.subr.mxu0 0.0
        %8195 = vmatpush1.msra.mxu0 0.0
        %8196 = vmatprep.subr.mxu0 0.0
        %8197 = vmatpush1.msra.mxu0 0.0
        %8198 = vmatprep.subr.mxu0 0.0
        %8199 = vmatpush1.msra.mxu0 0.0
        %8200 = vmatprep.subr.mxu0 0.0
        %8201 = vmatpush1.msra.mxu0 0.0
        %8202 = vmatprep.subr.mxu0 0.0
        %8203 = vmatpush1.msra.mxu0 0.0
        %8204 = vmatprep.subr.mxu0 0.0
        %8205 = vmatpush1.msra.mxu0 0.0
        %8206 = vmatprep.subr.mxu0 0.0
        %8207 = vmatpush1.msra.mxu0 0.0
        %8208 = vmatprep.subr.mxu0 0.0
        %8209 = vmatpush1.msra.mxu0 0.0
        %8210 = vmatprep.subr.mxu0 0.0
        %8211 = vmatpush1.msra.mxu0 0.0
        %8212 = vmatprep.subr.mxu0 0.0
        %8213 = vmatpush1.msra.mxu0 0.0
        %8214 = vmatprep.subr.mxu0 0.0
        %8215 = vmatpush1.msra.mxu0 0.0
        %8216 = vmatprep.subr.mxu0 0.0
        %8217 = vmatpush1.msra.mxu0 0.0
        %8218 = vmatprep.subr.mxu0 0.0
        %8219 = vmatpush1.msra.mxu0 0.0
        %8220 = vmatprep.subr.mxu0 0.0
        %8221 = vmatpush1.msra.mxu0 0.0
        %8222 = vmatprep.mubr.f32.mxu0 0.0
        %8223 = vmatmul.mubr.f32.gmra.mrb[0].mxu0 %v7796
        %v8224 = vpop.f32.mrb[0].mxu0
        %v8225 = vadd.f32 %v8156, %v8224
        %v8226 = vpop.f32.mrb[0].mxu0
        %8227 = vdwg.mxu0
        %v8228 = vmax.f32 %v8225, 0.0
        %s8229 = scalar_lea.vmem %s18, 128
        %v8230 = vld [vmem:[%s8229] sm:$0xff]
        %v8231 = vld [vmem:[%s8229 + $0x8] sm:$0xff]
        %v8232 = vld [vmem:[%s8229 + $0x10] sm:$0xff]
        %v8233 = vld [vmem:[%s8229 + $0x18] sm:$0xff]
        %v8234 = vld [vmem:[%s8229 + $0x20] sm:$0xff]
        %v8235 = vld [vmem:[%s8229 + $0x28] sm:$0xff]
        %v8236 = vld [vmem:[%s8229 + $0x30] sm:$0xff]
        %v8237 = vld [vmem:[%s8229 + $0x38] sm:$0xff]
        %s8238 = scalar_lea.vmem %s19, 2
        %v8239 = vld [vmem:[%s8238] sm:$0x1]
        %v8241 = vlaneseq
        %v8242 = vshrl.u32 %v8241, 7
        %v8243 = vsub.s32 0, %v8242
        %v8244 = vrot.slane %v8239, %v8243
        %v8247 = vsel %vm3905, %v8228, 0
        %8249 = vmatprep.subr.mxu0 0.0
        %8250 = vmatpush1.msra.mxu0 %v8230
        %8251 = vmatprep.subr.mxu0 0.0
        %8252 = vmatpush1.msra.mxu0 %v8231
        %8253 = vmatprep.subr.mxu0 0.0
        %8254 = vmatpush1.msra.mxu0 %v8232
        %8255 = vmatprep.subr.mxu0 0.0
        %8256 = vmatpush1.msra.mxu0 %v8233
        %8257 = vmatprep.subr.mxu0 0.0
        %8258 = vmatpush1.msra.mxu0 %v8234
        %8259 = vmatprep.subr.mxu0 0.0
        %8260 = vmatpush1.msra.mxu0 %v8235
        %8261 = vmatprep.subr.mxu0 0.0
        %8262 = vmatpush1.msra.mxu0 %v8236
        %8263 = vmatprep.subr.mxu0 0.0
        %8264 = vmatpush1.msra.mxu0 %v8237
        %8265 = vmatprep.subr.mxu0 0.0
        %8266 = vmatpush1.msra.mxu0 0.0
        %8267 = vmatprep.subr.mxu0 0.0
        %8268 = vmatpush1.msra.mxu0 0.0
        %8269 = vmatprep.subr.mxu0 0.0
        %8270 = vmatpush1.msra.mxu0 0.0
        %8271 = vmatprep.subr.mxu0 0.0
        %8272 = vmatpush1.msra.mxu0 0.0
        %8273 = vmatprep.subr.mxu0 0.0
        %8274 = vmatpush1.msra.mxu0 0.0
        %8275 = vmatprep.subr.mxu0 0.0
        %8276 = vmatpush1.msra.mxu0 0.0
        %8277 = vmatprep.subr.mxu0 0.0
        %8278 = vmatpush1.msra.mxu0 0.0
        %8279 = vmatprep.subr.mxu0 0.0
        %8280 = vmatpush1.msra.mxu0 0.0
        %8281 = vmatprep.subr.mxu0 0.0
        %8282 = vmatpush1.msra.mxu0 0.0
        %8283 = vmatprep.subr.mxu0 0.0
        %8284 = vmatpush1.msra.mxu0 0.0
        %8285 = vmatprep.subr.mxu0 0.0
        %8286 = vmatpush1.msra.mxu0 0.0
        %8287 = vmatprep.subr.mxu0 0.0
        %8288 = vmatpush1.msra.mxu0 0.0
        %8289 = vmatprep.subr.mxu0 0.0
        %8290 = vmatpush1.msra.mxu0 0.0
        %8291 = vmatprep.subr.mxu0 0.0
        %8292 = vmatpush1.msra.mxu0 0.0
        %8293 = vmatprep.subr.mxu0 0.0
        %8294 = vmatpush1.msra.mxu0 0.0
        %8295 = vmatprep.subr.mxu0 0.0
        %8296 = vmatpush1.msra.mxu0 0.0
        %8297 = vmatprep.subr.mxu0 0.0
        %8298 = vmatpush1.msra.mxu0 0.0
        %8299 = vmatprep.subr.mxu0 0.0
        %8300 = vmatpush1.msra.mxu0 0.0
        %8301 = vmatprep.subr.mxu0 0.0
        %8302 = vmatpush1.msra.mxu0 0.0
        %8303 = vmatprep.subr.mxu0 0.0
        %8304 = vmatpush1.msra.mxu0 0.0
        %8305 = vmatprep.subr.mxu0 0.0
        %8306 = vmatpush1.msra.mxu0 0.0
        %8307 = vmatprep.subr.mxu0 0.0
        %8308 = vmatpush1.msra.mxu0 0.0
        %8309 = vmatprep.subr.mxu0 0.0
        %8310 = vmatpush1.msra.mxu0 0.0
        %8311 = vmatprep.subr.mxu0 0.0
        %8312 = vmatpush1.msra.mxu0 0.0
        %8313 = vmatprep.mubr.f32.mxu0 0.0
        %8314 = vmatmul.mubr.f32.gmra.mrb[0].mxu0 %v8247
        %v8315 = vpop.f32.mrb[0].mxu0
        %v8316 = vadd.f32 %v8244, %v8315
        %v8317 = vpop.f32.mrb[0].mxu0
        %8318 = vdwg.mxu0
        %v8319 = vmax.f32 %v8316, 0.0
        %s8320 = scalar_lea.vmem %s20, 64
        %v8321 = vld [vmem:[%s8320] sm:$0xff]
        %v8322 = vld [vmem:[%s8320 + $0x8] sm:$0xff]
        %v8323 = vld [vmem:[%s8320 + $0x10] sm:$0xff]
        %v8324 = vld [vmem:[%s8320 + $0x18] sm:$0xff]
        %s8325 = scalar_lea.vmem %s21, 2
        %v8326 = vld [vmem:[%s8325] sm:$0x1]
        %v8328 = vlaneseq
        %v8329 = vshrl.u32 %v8328, 7
        %v8330 = vsub.s32 0, %v8329
        %v8331 = vrot.slane %v8326, %v8330
        %v8334 = vsel %vm7616, %v8319, 0
        %8336 = vmatprep.subr.mxu0 0.0
        %8337 = vmatpush1.msra.mxu0 %v8321
        %8338 = vmatprep.subr.mxu0 0.0
        %8339 = vmatpush1.msra.mxu0 %v8322
        %8340 = vmatprep.subr.mxu0 0.0
        %8341 = vmatpush1.msra.mxu0 %v8323
        %8342 = vmatprep.subr.mxu0 0.0
        %8343 = vmatpush1.msra.mxu0 %v8324
        %8344 = vmatprep.subr.mxu0 0.0
        %8345 = vmatpush1.msra.mxu0 0.0
        %8346 = vmatprep.subr.mxu0 0.0
        %8347 = vmatpush1.msra.mxu0 0.0
        %8348 = vmatprep.subr.mxu0 0.0
        %8349 = vmatpush1.msra.mxu0 0.0
        %8350 = vmatprep.subr.mxu0 0.0
        %8351 = vmatpush1.msra.mxu0 0.0
        %8352 = vmatprep.subr.mxu0 0.0
        %8353 = vmatpush1.msra.mxu0 0.0
        %8354 = vmatprep.subr.mxu0 0.0
        %8355 = vmatpush1.msra.mxu0 0.0
        %8356 = vmatprep.subr.mxu0 0.0
        %8357 = vmatpush1.msra.mxu0 0.0
        %8358 = vmatprep.subr.mxu0 0.0
        %8359 = vmatpush1.msra.mxu0 0.0
        %8360 = vmatprep.subr.mxu0 0.0
        %8361 = vmatpush1.msra.mxu0 0.0
        %8362 = vmatprep.subr.mxu0 0.0
        %8363 = vmatpush1.msra.mxu0 0.0
        %8364 = vmatprep.subr.mxu0 0.0
        %8365 = vmatpush1.msra.mxu0 0.0
        %8366 = vmatprep.subr.mxu0 0.0
        %8367 = vmatpush1.msra.mxu0 0.0
        %8368 = vmatprep.subr.mxu0 0.0
        %8369 = vmatpush1.msra.mxu0 0.0
        %8370 = vmatprep.subr.mxu0 0.0
        %8371 = vmatpush1.msra.mxu0 0.0
        %8372 = vmatprep.subr.mxu0 0.0
        %8373 = vmatpush1.msra.mxu0 0.0
        %8374 = vmatprep.subr.mxu0 0.0
        %8375 = vmatpush1.msra.mxu0 0.0
        %8376 = vmatprep.subr.mxu0 0.0
        %8377 = vmatpush1.msra.mxu0 0.0
        %8378 = vmatprep.subr.mxu0 0.0
        %8379 = vmatpush1.msra.mxu0 0.0
        %8380 = vmatprep.subr.mxu0 0.0
        %8381 = vmatpush1.msra.mxu0 0.0
        %8382 = vmatprep.subr.mxu0 0.0
        %8383 = vmatpush1.msra.mxu0 0.0
        %8384 = vmatprep.subr.mxu0 0.0
        %8385 = vmatpush1.msra.mxu0 0.0
        %8386 = vmatprep.subr.mxu0 0.0
        %8387 = vmatpush1.msra.mxu0 0.0
        %8388 = vmatprep.subr.mxu0 0.0
        %8389 = vmatpush1.msra.mxu0 0.0
        %8390 = vmatprep.subr.mxu0 0.0
        %8391 = vmatpush1.msra.mxu0 0.0
        %8392 = vmatprep.subr.mxu0 0.0
        %8393 = vmatpush1.msra.mxu0 0.0
        %8394 = vmatprep.subr.mxu0 0.0
        %8395 = vmatpush1.msra.mxu0 0.0
        %8396 = vmatprep.subr.mxu0 0.0
        %8397 = vmatpush1.msra.mxu0 0.0
        %8398 = vmatprep.subr.mxu0 0.0
        %8399 = vmatpush1.msra.mxu0 0.0
        %8400 = vmatprep.mubr.f32.mxu0 0.0
        %8401 = vmatmul.mubr.f32.gmra.mrb[0].mxu0 %v8334
        %v8402 = vpop.f32.mrb[0].mxu0
        %v8403 = vadd.f32 %v8331, %v8402
        %v8404 = vpop.f32.mrb[0].mxu0
        %8405 = vdwg.mxu0
        %v8406 = vmax.f32 %v8403, 0.0
        %s8407 = scalar_lea.vmem %s22, 32
        %v8408 = vld [vmem:[%s8407] sm:$0xff]
        %v8409 = vld [vmem:[%s8407 + $0x8] sm:$0xff]
        %s8410 = scalar_lea.vmem %s23, 2
        %v8411 = vld [vmem:[%s8410] sm:$0x1]
        %v8413 = vlaneseq
        %v8414 = vshrl.u32 %v8413, 7
        %v8415 = vsub.s32 0, %v8414
        %v8416 = vrot.slane %v8411, %v8415
        %v8419 = vsel %vm7694, %v8406, 0
        %8421 = vmatprep.subr.mxu0 0.0
        %8422 = vmatpush1.msra.mxu0 %v8408
        %8423 = vmatprep.subr.mxu0 0.0
        %8424 = vmatpush1.msra.mxu0 %v8409
        %8425 = vmatprep.subr.mxu0 0.0
        %8426 = vmatpush1.msra.mxu0 0.0
        %8427 = vmatprep.subr.mxu0 0.0
        %8428 = vmatpush1.msra.mxu0 0.0
        %8429 = vmatprep.subr.mxu0 0.0
        %8430 = vmatpush1.msra.mxu0 0.0
        %8431 = vmatprep.subr.mxu0 0.0
        %8432 = vmatpush1.msra.mxu0 0.0
        %8433 = vmatprep.subr.mxu0 0.0
        %8434 = vmatpush1.msra.mxu0 0.0
        %8435 = vmatprep.subr.mxu0 0.0
        %8436 = vmatpush1.msra.mxu0 0.0
        %8437 = vmatprep.subr.mxu0 0.0
        %8438 = vmatpush1.msra.mxu0 0.0
        %8439 = vmatprep.subr.mxu0 0.0
        %8440 = vmatpush1.msra.mxu0 0.0
        %8441 = vmatprep.subr.mxu0 0.0
        %8442 = vmatpush1.msra.mxu0 0.0
        %8443 = vmatprep.subr.mxu0 0.0
        %8444 = vmatpush1.msra.mxu0 0.0
        %8445 = vmatprep.subr.mxu0 0.0
        %8446 = vmatpush1.msra.mxu0 0.0
        %8447 = vmatprep.subr.mxu0 0.0
        %8448 = vmatpush1.msra.mxu0 0.0
        %8449 = vmatprep.subr.mxu0 0.0
        %8450 = vmatpush1.msra.mxu0 0.0
        %8451 = vmatprep.subr.mxu0 0.0
        %8452 = vmatpush1.msra.mxu0 0.0
        %8453 = vmatprep.subr.mxu0 0.0
        %8454 = vmatpush1.msra.mxu0 0.0
        %8455 = vmatprep.subr.mxu0 0.0
        %8456 = vmatpush1.msra.mxu0 0.0
        %8457 = vmatprep.subr.mxu0 0.0
        %8458 = vmatpush1.msra.mxu0 0.0
        %8459 = vmatprep.subr.mxu0 0.0
        %8460 = vmatpush1.msra.mxu0 0.0
        %8461 = vmatprep.subr.mxu0 0.0
        %8462 = vmatpush1.msra.mxu0 0.0
        %8463 = vmatprep.subr.mxu0 0.0
        %8464 = vmatpush1.msra.mxu0 0.0
        %8465 = vmatprep.subr.mxu0 0.0
        %8466 = vmatpush1.msra.mxu0 0.0
        %8467 = vmatprep.subr.mxu0 0.0
        %8468 = vmatpush1.msra.mxu0 0.0
        %8469 = vmatprep.subr.mxu0 0.0
        %8470 = vmatpush1.msra.mxu0 0.0
        %8471 = vmatprep.subr.mxu0 0.0
        %8472 = vmatpush1.msra.mxu0 0.0
        %8473 = vmatprep.subr.mxu0 0.0
        %8474 = vmatpush1.msra.mxu0 0.0
        %8475 = vmatprep.subr.mxu0 0.0
        %8476 = vmatpush1.msra.mxu0 0.0
        %8477 = vmatprep.subr.mxu0 0.0
        %8478 = vmatpush1.msra.mxu0 0.0
        %8479 = vmatprep.subr.mxu0 0.0
        %8480 = vmatpush1.msra.mxu0 0.0
        %8481 = vmatprep.subr.mxu0 0.0
        %8482 = vmatpush1.msra.mxu0 0.0
        %8483 = vmatprep.subr.mxu0 0.0
        %8484 = vmatpush1.msra.mxu0 0.0
        %8485 = vmatprep.mubr.f32.mxu0 0.0
        %8486 = vmatmul.mubr.f32.gmra.mrb[0].mxu0 %v8419
        %v8487 = vpop.f32.mrb[0].mxu0
        %v8488 = vadd.f32 %v8416, %v8487
        %v8489 = vpop.f32.mrb[0].mxu0
        %8490 = vdwg.mxu0
        %8491 = vst.msk [vmem:[%s1066] sm:$0x3f] %vm8131, %v8488
      $region124: #{qa_model_forward.1} parent=115 // pred_fallthru
        _
      %p8492 = scmp.lt.s32.totalorder %s43, 1
      %s8493 = scalar_select %p8492, %s43, 1
      %s8494 = smul.addr %s8493, 8
      %s8495 = scalar_lea.vmem %s24, %s8494
      %p8496 = scmp.lt.s32.totalorder %s43, 1
      %s8497 = scalar_select %p8496, %s43, 1
      %s8498 = scalar_lea.vmem %s25, %s8497
      %p8499 = scmp.lt.s32.totalorder %s43, 1
      %s8500 = scalar_select %p8499, %s43, 1
      %s8501 = smul.addr %s8500, 8
      %s8502 = scalar_lea.vmem %s26, %s8501
      %p8503 = scmp.lt.s32.totalorder %s43, 1
      %s8504 = scalar_select %p8503, %s43, 1
      %s8505 = smul.addr %s8504, 8
      %s8506 = scalar_lea.vmem %s27, %s8505
      // Predicated region
      $region125: #{qa_model_forward.1} parent=115 // pred_check
        %p8507 = pneg %p643
      $region126: #{qa_model_forward.1} parent=115 // pred_check_branch
        %8509 = sbr.rel (%p8507) target = $region128
      $region127: #{qa_model_forward.1} parent=115 // pred_region
        _
      $region128: #{qa_model_forward.1} parent=115 // pred_fallthru
        _
      // Predicated region
      $region129: #{qa_model_forward.1} parent=115 // pred_check
        %p8510 = pneg %p669
      $region130: #{qa_model_forward.1} parent=115 // pred_check_branch
        %8512 = sbr.rel (%p8510) target = $region132
      $region131: #{qa_model_forward.1} parent=115 // pred_region
        _
      $region132: #{qa_model_forward.1} parent=115 // pred_fallthru
        _
      // Predicated region
      $region133: #{qa_model_forward.1} parent=115 // pred_check
        %p8513 = pneg %p695
      $region134: #{qa_model_forward.1} parent=115 // pred_check_branch
        %8515 = sbr.rel (%p8513) target = $region136
      $region135: #{qa_model_forward.1} parent=115 // pred_region
        _
      $region136: #{qa_model_forward.1} parent=115 // pred_fallthru
        _
      // Predicated region
      $region137: #{qa_model_forward.1} parent=115 // pred_check
        %p8516 = pneg %p721
      $region138: #{qa_model_forward.1} parent=115 // pred_check_branch
        %8518 = sbr.rel (%p8516) target = $region140
      $region139: #{qa_model_forward.1} parent=115 // pred_region
        _
      $region140: #{qa_model_forward.1} parent=115 // pred_fallthru
        _
    $region116: #{qa_model_forward.1} parent=5 // pred_fallthru
      _
    %p8519 = scmp.le.s32.totalorder 2, %s34
    // Predicated region
    $region141: #{qa_model_forward.1} parent=5 // pred_check
      %p8520 = pneg %p8519
    $region142: #{qa_model_forward.1} parent=5 // pred_check_branch
      %8522 = sbr.rel (%p8520) target = $region144
    $region143: #{qa_model_forward.1} parent=5 // pred_region
      %s8523 = ssub.s32 %s34, 2
      // Predicated region
      $region145: #{qa_model_forward.1} parent=143 // pred_check
        %p8524 = pneg %p649
      $region146: #{qa_model_forward.1} parent=143 // pred_check_branch
        %8526 = sbr.rel (%p8524) target = $region148
      $region147: #{qa_model_forward.1} parent=143 // pred_region
        %p8527 = scmp.lt.s32.totalorder %s45, 1
        %s8528 = scalar_select %p8527, %s45, 1
        %s8529 = smul.addr %s8528, 8
        %s8530 = scalar_lea.vmem %s24, %s8529
      $region148: #{qa_model_forward.1} parent=143 // pred_fallthru
        _
      // Predicated region
      $region149: #{qa_model_forward.1} parent=143 // pred_check
        %p8531 = pneg %p675
      $region150: #{qa_model_forward.1} parent=143 // pred_check_branch
        %8533 = sbr.rel (%p8531) target = $region152
      $region151: #{qa_model_forward.1} parent=143 // pred_region
        %p8534 = scmp.lt.s32.totalorder %s45, 1
        %s8535 = scalar_select %p8534, %s45, 1
        %s8536 = scalar_lea.vmem %s25, %s8535
      $region152: #{qa_model_forward.1} parent=143 // pred_fallthru
        _
      // Predicated region
      $region153: #{qa_model_forward.1} parent=143 // pred_check
        %p8537 = pneg %p701
      $region154: #{qa_model_forward.1} parent=143 // pred_check_branch
        %8539 = sbr.rel (%p8537) target = $region156
      $region155: #{qa_model_forward.1} parent=143 // pred_region
        %p8540 = scmp.lt.s32.totalorder %s45, 1
        %s8541 = scalar_select %p8540, %s45, 1
        %s8542 = smul.addr %s8541, 8
        %s8543 = scalar_lea.vmem %s26, %s8542
      $region156: #{qa_model_forward.1} parent=143 // pred_fallthru
        _
      // Predicated region
      $region157: #{qa_model_forward.1} parent=143 // pred_check
        %p8544 = pneg %p727
      $region158: #{qa_model_forward.1} parent=143 // pred_check_branch
        %8546 = sbr.rel (%p8544) target = $region160
      $region159: #{qa_model_forward.1} parent=143 // pred_region
        %p8547 = scmp.lt.s32.totalorder %s45, 1
        %s8548 = scalar_select %p8547, %s45, 1
        %s8549 = smul.addr %s8548, 8
        %s8550 = scalar_lea.vmem %s27, %s8549
      $region160: #{qa_model_forward.1} parent=143 // pred_fallthru
        _
    $region144: #{qa_model_forward.1} parent=5 // pred_fallthru
      _
  $region6: #{qa_model_forward.1} parent=0 // loop_footer
    %s38 = sadd.s32 1, %s34
  $region7: #{qa_model_forward.1} parent=0 // loop_footer_branch
    %33 = sbr.rel target = $region3
  $region8: #{qa_model_forward.1} parent=0 // loop_exit
    _

</llo_original>
